<compile_context>
chip_gen: v5e
topology: v5e:2x2
jax: 0.10.0
libtpu: 0.0.40
codegen_flags: <defaults>
</compile_context>

<pallas_src>
import jax
import jax.numpy as jnp
from jax import lax
from jax.experimental import pallas as pl
from jax.experimental.pallas import tpu as pltpu

NEG_SLOPE = 0.01               # PyTorch nn.LeakyReLU() default
C1 = 16                        # conv1 output channels (d=16)
ROW = 30                       # padded image row width (28 + 2*pad)
L_IN = ROW * ROW               # 900 real flattened padded-input pixels
XP_W = 1024                    # lane-padded flattened input width (multiple of 128)
Q_W = 896                      # lane-padded flat conv1-output grid (7*128 >= 838)
OFFS = tuple(dy * ROW + dx for dy in range(3) for dx in range(3))   # 3x3 tap offsets
CHUNKS = ((0, 256), (256, 256), (512, 256), (768, 128))             # partition of [0,896)


# ------------------------------------------------------------------ kernel ---
def disc_kernel(x_ref, weff_ref, w1_ref, b1_ref, beff_ref, o_ref, *taps_refs):
    """One batch block per grid step.

    x_ref     : (BLK, 1024) VMEM  flattened, lane-padded padded images
    weff_ref  : (16, 896)   VMEM  fused conv2∘linear weights (zero on pad lanes)
    w1_ref    : (144,)      SMEM  conv1 weights, index [c*9 + dy*3 + dx]
    b1_ref    : (16,)       SMEM  conv1 bias
    beff_ref  : (1,)        SMEM  fused bias  b2*sum(w3) + b3
    o_ref     : (BLK, 1)    VMEM  scores for this block
    taps_refs : 9 x (BLK, 896) VMEM scratch  lane-shifted tap slabs
    """
    nsb = x_ref.shape[0] // 8                              # batch sub-blocks of 8

    # --- one-time per-block tap materialization (the only lane relayout) ---
    x = x_ref[...]                                         # (BLK, 1024)
    for k, off in enumerate(OFFS):
        taps_refs[k][:, :] = x[:, off:off + Q_W]           # (BLK, 896), aligned store

    # --- hoist all scalar weight reads out of the hot loop ---
    w1s = [w1_ref[i] for i in range(C1 * 9)]
    b1s = [b1_ref[c] for c in range(C1)]
    beff = beff_ref[0]

    # --- register-blocked hot loop: (8 sublane) x (<=256 lane) tiles ---
    def sb_body(sb, carry):
        r0 = pl.multiple_of(sb * 8, 8)                     # 8-image batch sub-block
        score = jnp.zeros((8, 1), jnp.float32)
        for q0, cw in CHUNKS:                              # lane chunks of [0, 896)
            taps = [taps_refs[k][pl.ds(r0, 8), pl.ds(q0, cw)] for k in range(9)]
            wchk = weff_ref[:, q0:q0 + cw]                 # (16, cw) fused weights
            acc = jnp.zeros((8, cw), jnp.float32)
            for c in range(C1):                            # conv1 channels, unrolled
                h = taps[0] * w1s[9 * c]
                for k in range(1, 9):
                    h = h + taps[k] * w1s[9 * c + k]
                h = h + b1s[c]
                h = jnp.maximum(h, NEG_SLOPE * h)          # LeakyReLU
                acc = acc + h * wchk[c:c + 1, :]           # fused conv2+linear weight
            score = score + jnp.sum(acc, axis=1, keepdims=True)
        o_ref[pl.ds(r0, 8), :] = score + beff
        return carry

    lax.fori_loop(0, nsb, sb_body, 0)


# ----------------------------------------------------------------- wrapper ---
def _fused_weights(w2, w3):
    """Weff[c,i,j] = sum_{dy,dx} w2[0,c,dy,dx] * w3[i-dy, j-dx]  (0 outside 26x26),
    laid out on the 30-wide flat grid and zero-padded to 896 lanes."""
    w3_sp = w3.reshape(26, 26).astype(jnp.float32)
    w3p = jnp.pad(w3_sp, ((2, 2), (2, 2)))                       # (30, 30)
    weff = jnp.zeros((C1, 28, 28), jnp.float32)
    for dy in range(3):
        for dx in range(3):
            weff = weff + (w2[0, :, dy, dx].astype(jnp.float32)[:, None, None]
                           * w3p[2 - dy:30 - dy, 2 - dx:30 - dx][None, :, :])
    # columns 28/29 of each 30-wide row and lanes >= 840 are garbage -> zero weight
    weff = jnp.pad(weff, ((0, 0), (0, 0), (0, 2))).reshape(C1, 28 * ROW)   # (16, 840)
    return jnp.pad(weff, ((0, 0), (0, Q_W - 28 * ROW)))                    # (16, 896)


@jax.jit
def discriminator_forward(image, params):
    """image: (B, 1, 28, 28) float32 NCHW. Returns (B, 1) float32."""
    w1, b1, w2, b2, w3, b3 = params
    B = image.shape[0]

    weff = _fused_weights(w2, w3)                                 # (16, 896)  VMEM
    w1_flat = w1[:, 0].reshape(C1 * 9).astype(jnp.float32)        # (144,)     SMEM
    b1_flat = b1.astype(jnp.float32)                              # (16,)      SMEM
    beff = (b2[0] * jnp.sum(w3) + b3[0]).astype(jnp.float32).reshape(1)  # (1,) SMEM

    # pad=1 for conv1, flatten to 30-wide rows, pad lanes to 1024 (batch on sublanes)
    xp = jnp.pad(image[:, 0].astype(jnp.float32), ((0, 0), (1, 1), (1, 1)))
    xp = xp.reshape(B, L_IN)                                      # (B, 900)
    xp = jnp.pad(xp, ((0, 0), (0, XP_W - L_IN)))                  # (B, 1024)

    # Block size: at least 2 grid steps when possible so both v7x TCs get work.
    if B >= 256:
        BLK = 128
    else:
        BLK = max(8, min(64, (((B + 1) // 2) + 7) // 8 * 8))
    nblk = (B + BLK - 1) // BLK
    bpad = nblk * BLK
    if bpad != B:
        xp = jnp.pad(xp, ((0, bpad - B), (0, 0)))

    out = pl.pallas_call(
        disc_kernel,
        out_shape=jax.ShapeDtypeStruct((bpad, 1), jnp.float32),
        grid=(nblk,),
        in_specs=[
            pl.BlockSpec((BLK, XP_W), lambda i: (i, 0)),     # image block
            pl.BlockSpec((C1, Q_W), lambda i: (0, 0)),       # fused weights (resident)
            pl.BlockSpec(memory_space=pltpu.SMEM),           # w1 scalars
            pl.BlockSpec(memory_space=pltpu.SMEM),           # b1 scalars
            pl.BlockSpec(memory_space=pltpu.SMEM),           # fused bias
        ],
        out_specs=pl.BlockSpec((BLK, 1), lambda i: (i, 0)),  # per-image scores
        scratch_shapes=[pltpu.VMEM((BLK, Q_W), jnp.float32) for _ in range(9)],
        compiler_params=pltpu.CompilerParams(
            dimension_semantics=("parallel",)),
    )(xp, weff, w1_flat, b1_flat, beff)

    return out[:B]


# --------------------------------------------------------------- reference ---
def reference_forward(image, params):
    w1, b1, w2, b2, w3, b3 = params
    dn = ("NCHW", "OIHW", "NCHW")
    h = jax.lax.conv_general_dilated(image, w1, (1, 1), ((1, 1), (1, 1)),
                                     dimension_numbers=dn)
    h = h + b1.reshape(1, -1, 1, 1)
    h = jnp.where(h > 0, h, NEG_SLOPE * h)
    h = jax.lax.conv_general_dilated(h, w2, (1, 1), ((0, 0), (0, 0)),
                                     dimension_numbers=dn)
    h = h + b2.reshape(1, -1, 1, 1)
    flat = h.reshape(h.shape[0], -1)
    return flat @ w3.T + b3


# --------------------------------------------------------------------- main --
def init_params(key):
    ks = jax.random.split(key, 6)
    w1 = jax.random.normal(ks[0], (16, 1, 3, 3), jnp.float32) * 0.1
    b1 = jax.random.normal(ks[1], (16,), jnp.float32) * 0.1
    w2 = jax.random.normal(ks[2], (1, 16, 3, 3), jnp.float32) * 0.1
    b2 = jax.random.normal(ks[3], (1,), jnp.float32) * 0.1
    w3 = jax.random.normal(ks[4], (1, 26 * 26), jnp.float32) * 0.05
    b3 = jax.random.normal(ks[5], (1,), jnp.float32) * 0.1
    return (w1, b1, w2, b2, w3, b3)


if __name__ == "__main__":
    key = jax.random.PRNGKey(0)
    k_img, k_par = jax.random.split(key)

    # Linear(26*26, 1) fixes the spatial size: input must be (B, 1, 28, 28).
    image = jax.random.normal(k_img, (2, 1, 28, 28), jnp.float32)
    params = init_params(k_par)

    out = jax.block_until_ready(discriminator_forward(image, params))
    ref = reference_forward(image, params)

    assert out.shape == (2, 1)
    assert jnp.allclose(out, ref, atol=1e-3, rtol=1e-3), (out, ref)

    print("KERNEL_OK")
</pallas_src>

<mosaic_0001>
module attributes {stable_mosaic.version = 11 : i64} {
  func.func @disc_kernel(%arg0: i32, %arg1: memref<8x1024xf32, #tpu.memory_space<vmem>>, %arg2: memref<16x896xf32, #tpu.memory_space<vmem>>, %arg3: memref<144xf32, #tpu.memory_space<smem>>, %arg4: memref<16xf32, #tpu.memory_space<smem>>, %arg5: memref<1xf32, #tpu.memory_space<smem>>, %arg6: memref<8x1xf32, #tpu.memory_space<vmem>>, %arg7: memref<8x896xf32, #tpu.memory_space<vmem>>, %arg8: memref<8x896xf32, #tpu.memory_space<vmem>>, %arg9: memref<8x896xf32, #tpu.memory_space<vmem>>, %arg10: memref<8x896xf32, #tpu.memory_space<vmem>>, %arg11: memref<8x896xf32, #tpu.memory_space<vmem>>, %arg12: memref<8x896xf32, #tpu.memory_space<vmem>>, %arg13: memref<8x896xf32, #tpu.memory_space<vmem>>, %arg14: memref<8x896xf32, #tpu.memory_space<vmem>>, %arg15: memref<8x896xf32, #tpu.memory_space<vmem>>) attributes {dimension_semantics = [#tpu.dimension_semantics<parallel>], iteration_bounds = array<i64: 1>, scalar_prefetch = 0 : i64, scratch_operands = 9 : i64, tpu.core_type = #tpu.core_type<tc>, window_params = [{transform_indices = @transform_0, window_bounds = array<i64: 8, 1024>}, {pipeline_mode = #tpu.pipeline_mode<synchronous>, transform_indices = @transform_1, window_bounds = array<i64: 16, 896>}, {transform_indices = @transform_2, window_bounds = array<i64: 144>}, {transform_indices = @transform_3, window_bounds = array<i64: 16>}, {transform_indices = @transform_4, window_bounds = array<i64: 1>}, {transform_indices = @transform_5, window_bounds = array<i64: 8, 1>}]} {
    %c0 = arith.constant 0 : index
    %c0_0 = arith.constant 0 : index
    %0 = vector.load %arg1[%c0, %c0_0] : memref<8x1024xf32, #tpu.memory_space<vmem>>, vector<8x1024xf32>
    %1 = vector.extract_strided_slice %0 {offsets = [0, 0], sizes = [8, 896], strides = [1, 1]} : vector<8x1024xf32> to vector<8x896xf32>
    %c0_1 = arith.constant 0 : index
    %c0_2 = arith.constant 0 : index
    %2 = vector.load %arg7[%c0_1, %c0_2] : memref<8x896xf32, #tpu.memory_space<vmem>>, vector<8x896xf32>
    tpu.vector_store %arg7[%c0_1, %c0_2], %1 {strides = array<i32>} : memref<8x896xf32, #tpu.memory_space<vmem>>, vector<8x896xf32>,
    %3 = vector.extract_strided_slice %0 {offsets = [0, 1], sizes = [8, 896], strides = [1, 1]} : vector<8x1024xf32> to vector<8x896xf32>
    %c0_3 = arith.constant 0 : index
    %c0_4 = arith.constant 0 : index
    %4 = vector.load %arg8[%c0_3, %c0_4] : memref<8x896xf32, #tpu.memory_space<vmem>>, vector<8x896xf32>
    tpu.vector_store %arg8[%c0_3, %c0_4], %3 {strides = array<i32>} : memref<8x896xf32, #tpu.memory_space<vmem>>, vector<8x896xf32>,
    %5 = vector.extract_strided_slice %0 {offsets = [0, 2], sizes = [8, 896], strides = [1, 1]} : vector<8x1024xf32> to vector<8x896xf32>
    %c0_5 = arith.constant 0 : index
    %c0_6 = arith.constant 0 : index
    %6 = vector.load %arg9[%c0_5, %c0_6] : memref<8x896xf32, #tpu.memory_space<vmem>>, vector<8x896xf32>
    tpu.vector_store %arg9[%c0_5, %c0_6], %5 {strides = array<i32>} : memref<8x896xf32, #tpu.memory_space<vmem>>, vector<8x896xf32>,
    %7 = vector.extract_strided_slice %0 {offsets = [0, 30], sizes = [8, 896], strides = [1, 1]} : vector<8x1024xf32> to vector<8x896xf32>
    %c0_7 = arith.constant 0 : index
    %c0_8 = arith.constant 0 : index
    %8 = vector.load %arg10[%c0_7, %c0_8] : memref<8x896xf32, #tpu.memory_space<vmem>>, vector<8x896xf32>
    tpu.vector_store %arg10[%c0_7, %c0_8], %7 {strides = array<i32>} : memref<8x896xf32, #tpu.memory_space<vmem>>, vector<8x896xf32>,
    %9 = vector.extract_strided_slice %0 {offsets = [0, 31], sizes = [8, 896], strides = [1, 1]} : vector<8x1024xf32> to vector<8x896xf32>
    %c0_9 = arith.constant 0 : index
    %c0_10 = arith.constant 0 : index
    %10 = vector.load %arg11[%c0_9, %c0_10] : memref<8x896xf32, #tpu.memory_space<vmem>>, vector<8x896xf32>
    tpu.vector_store %arg11[%c0_9, %c0_10], %9 {strides = array<i32>} : memref<8x896xf32, #tpu.memory_space<vmem>>, vector<8x896xf32>,
    %11 = vector.extract_strided_slice %0 {offsets = [0, 32], sizes = [8, 896], strides = [1, 1]} : vector<8x1024xf32> to vector<8x896xf32>
    %c0_11 = arith.constant 0 : index
    %c0_12 = arith.constant 0 : index
    %12 = vector.load %arg12[%c0_11, %c0_12] : memref<8x896xf32, #tpu.memory_space<vmem>>, vector<8x896xf32>
    tpu.vector_store %arg12[%c0_11, %c0_12], %11 {strides = array<i32>} : memref<8x896xf32, #tpu.memory_space<vmem>>, vector<8x896xf32>,
    %13 = vector.extract_strided_slice %0 {offsets = [0, 60], sizes = [8, 896], strides = [1, 1]} : vector<8x1024xf32> to vector<8x896xf32>
    %c0_13 = arith.constant 0 : index
    %c0_14 = arith.constant 0 : index
    %14 = vector.load %arg13[%c0_13, %c0_14] : memref<8x896xf32, #tpu.memory_space<vmem>>, vector<8x896xf32>
    tpu.vector_store %arg13[%c0_13, %c0_14], %13 {strides = array<i32>} : memref<8x896xf32, #tpu.memory_space<vmem>>, vector<8x896xf32>,
    %15 = vector.extract_strided_slice %0 {offsets = [0, 61], sizes = [8, 896], strides = [1, 1]} : vector<8x1024xf32> to vector<8x896xf32>
    %c0_15 = arith.constant 0 : index
    %c0_16 = arith.constant 0 : index
    %16 = vector.load %arg14[%c0_15, %c0_16] : memref<8x896xf32, #tpu.memory_space<vmem>>, vector<8x896xf32>
    tpu.vector_store %arg14[%c0_15, %c0_16], %15 {strides = array<i32>} : memref<8x896xf32, #tpu.memory_space<vmem>>, vector<8x896xf32>,
    %17 = vector.extract_strided_slice %0 {offsets = [0, 62], sizes = [8, 896], strides = [1, 1]} : vector<8x1024xf32> to vector<8x896xf32>
    %c0_17 = arith.constant 0 : index
    %c0_18 = arith.constant 0 : index
    %18 = vector.load %arg15[%c0_17, %c0_18] : memref<8x896xf32, #tpu.memory_space<vmem>>, vector<8x896xf32>
    tpu.vector_store %arg15[%c0_17, %c0_18], %17 {strides = array<i32>} : memref<8x896xf32, #tpu.memory_space<vmem>>, vector<8x896xf32>,
    %c0_19 = arith.constant 0 : index
    %19 = memref.load %arg3[%c0_19] : memref<144xf32, #tpu.memory_space<smem>>
    %c1 = arith.constant 1 : index
    %20 = memref.load %arg3[%c1] : memref<144xf32, #tpu.memory_space<smem>>
    %c2 = arith.constant 2 : index
    %21 = memref.load %arg3[%c2] : memref<144xf32, #tpu.memory_space<smem>>
    %c3 = arith.constant 3 : index
    %22 = memref.load %arg3[%c3] : memref<144xf32, #tpu.memory_space<smem>>
    %c4 = arith.constant 4 : index
    %23 = memref.load %arg3[%c4] : memref<144xf32, #tpu.memory_space<smem>>
    %c5 = arith.constant 5 : index
    %24 = memref.load %arg3[%c5] : memref<144xf32, #tpu.memory_space<smem>>
    %c6 = arith.constant 6 : index
    %25 = memref.load %arg3[%c6] : memref<144xf32, #tpu.memory_space<smem>>
    %c7 = arith.constant 7 : index
    %26 = memref.load %arg3[%c7] : memref<144xf32, #tpu.memory_space<smem>>
    %c8 = arith.constant 8 : index
    %27 = memref.load %arg3[%c8] : memref<144xf32, #tpu.memory_space<smem>>
    %c9 = arith.constant 9 : index
    %28 = memref.load %arg3[%c9] : memref<144xf32, #tpu.memory_space<smem>>
    %c10 = arith.constant 10 : index
    %29 = memref.load %arg3[%c10] : memref<144xf32, #tpu.memory_space<smem>>
    %c11 = arith.constant 11 : index
    %30 = memref.load %arg3[%c11] : memref<144xf32, #tpu.memory_space<smem>>
    %c12 = arith.constant 12 : index
    %31 = memref.load %arg3[%c12] : memref<144xf32, #tpu.memory_space<smem>>
    %c13 = arith.constant 13 : index
    %32 = memref.load %arg3[%c13] : memref<144xf32, #tpu.memory_space<smem>>
    %c14 = arith.constant 14 : index
    %33 = memref.load %arg3[%c14] : memref<144xf32, #tpu.memory_space<smem>>
    %c15 = arith.constant 15 : index
    %34 = memref.load %arg3[%c15] : memref<144xf32, #tpu.memory_space<smem>>
    %c16 = arith.constant 16 : index
    %35 = memref.load %arg3[%c16] : memref<144xf32, #tpu.memory_space<smem>>
    %c17 = arith.constant 17 : index
    %36 = memref.load %arg3[%c17] : memref<144xf32, #tpu.memory_space<smem>>
    %c18 = arith.constant 18 : index
    %37 = memref.load %arg3[%c18] : memref<144xf32, #tpu.memory_space<smem>>
    %c19 = arith.constant 19 : index
    %38 = memref.load %arg3[%c19] : memref<144xf32, #tpu.memory_space<smem>>
    %c20 = arith.constant 20 : index
    %39 = memref.load %arg3[%c20] : memref<144xf32, #tpu.memory_space<smem>>
    %c21 = arith.constant 21 : index
    %40 = memref.load %arg3[%c21] : memref<144xf32, #tpu.memory_space<smem>>
    %c22 = arith.constant 22 : index
    %41 = memref.load %arg3[%c22] : memref<144xf32, #tpu.memory_space<smem>>
    %c23 = arith.constant 23 : index
    %42 = memref.load %arg3[%c23] : memref<144xf32, #tpu.memory_space<smem>>
    %c24 = arith.constant 24 : index
    %43 = memref.load %arg3[%c24] : memref<144xf32, #tpu.memory_space<smem>>
    %c25 = arith.constant 25 : index
    %44 = memref.load %arg3[%c25] : memref<144xf32, #tpu.memory_space<smem>>
    %c26 = arith.constant 26 : index
    %45 = memref.load %arg3[%c26] : memref<144xf32, #tpu.memory_space<smem>>
    %c27 = arith.constant 27 : index
    %46 = memref.load %arg3[%c27] : memref<144xf32, #tpu.memory_space<smem>>
    %c28 = arith.constant 28 : index
    %47 = memref.load %arg3[%c28] : memref<144xf32, #tpu.memory_space<smem>>
    %c29 = arith.constant 29 : index
    %48 = memref.load %arg3[%c29] : memref<144xf32, #tpu.memory_space<smem>>
    %c30 = arith.constant 30 : index
    %49 = memref.load %arg3[%c30] : memref<144xf32, #tpu.memory_space<smem>>
    %c31 = arith.constant 31 : index
    %50 = memref.load %arg3[%c31] : memref<144xf32, #tpu.memory_space<smem>>
    %c32 = arith.constant 32 : index
    %51 = memref.load %arg3[%c32] : memref<144xf32, #tpu.memory_space<smem>>
    %c33 = arith.constant 33 : index
    %52 = memref.load %arg3[%c33] : memref<144xf32, #tpu.memory_space<smem>>
    %c34 = arith.constant 34 : index
    %53 = memref.load %arg3[%c34] : memref<144xf32, #tpu.memory_space<smem>>
    %c35 = arith.constant 35 : index
    %54 = memref.load %arg3[%c35] : memref<144xf32, #tpu.memory_space<smem>>
    %c36 = arith.constant 36 : index
    %55 = memref.load %arg3[%c36] : memref<144xf32, #tpu.memory_space<smem>>
    %c37 = arith.constant 37 : index
    %56 = memref.load %arg3[%c37] : memref<144xf32, #tpu.memory_space<smem>>
    %c38 = arith.constant 38 : index
    %57 = memref.load %arg3[%c38] : memref<144xf32, #tpu.memory_space<smem>>
    %c39 = arith.constant 39 : index
    %58 = memref.load %arg3[%c39] : memref<144xf32, #tpu.memory_space<smem>>
    %c40 = arith.constant 40 : index
    %59 = memref.load %arg3[%c40] : memref<144xf32, #tpu.memory_space<smem>>
    %c41 = arith.constant 41 : index
    %60 = memref.load %arg3[%c41] : memref<144xf32, #tpu.memory_space<smem>>
    %c42 = arith.constant 42 : index
    %61 = memref.load %arg3[%c42] : memref<144xf32, #tpu.memory_space<smem>>
    %c43 = arith.constant 43 : index
    %62 = memref.load %arg3[%c43] : memref<144xf32, #tpu.memory_space<smem>>
    %c44 = arith.constant 44 : index
    %63 = memref.load %arg3[%c44] : memref<144xf32, #tpu.memory_space<smem>>
    %c45 = arith.constant 45 : index
    %64 = memref.load %arg3[%c45] : memref<144xf32, #tpu.memory_space<smem>>
    %c46 = arith.constant 46 : index
    %65 = memref.load %arg3[%c46] : memref<144xf32, #tpu.memory_space<smem>>
    %c47 = arith.constant 47 : index
    %66 = memref.load %arg3[%c47] : memref<144xf32, #tpu.memory_space<smem>>
    %c48 = arith.constant 48 : index
    %67 = memref.load %arg3[%c48] : memref<144xf32, #tpu.memory_space<smem>>
    %c49 = arith.constant 49 : index
    %68 = memref.load %arg3[%c49] : memref<144xf32, #tpu.memory_space<smem>>
    %c50 = arith.constant 50 : index
    %69 = memref.load %arg3[%c50] : memref<144xf32, #tpu.memory_space<smem>>
    %c51 = arith.constant 51 : index
    %70 = memref.load %arg3[%c51] : memref<144xf32, #tpu.memory_space<smem>>
    %c52 = arith.constant 52 : index
    %71 = memref.load %arg3[%c52] : memref<144xf32, #tpu.memory_space<smem>>
    %c53 = arith.constant 53 : index
    %72 = memref.load %arg3[%c53] : memref<144xf32, #tpu.memory_space<smem>>
    %c54 = arith.constant 54 : index
    %73 = memref.load %arg3[%c54] : memref<144xf32, #tpu.memory_space<smem>>
    %c55 = arith.constant 55 : index
    %74 = memref.load %arg3[%c55] : memref<144xf32, #tpu.memory_space<smem>>
    %c56 = arith.constant 56 : index
    %75 = memref.load %arg3[%c56] : memref<144xf32, #tpu.memory_space<smem>>
    %c57 = arith.constant 57 : index
    %76 = memref.load %arg3[%c57] : memref<144xf32, #tpu.memory_space<smem>>
    %c58 = arith.constant 58 : index
    %77 = memref.load %arg3[%c58] : memref<144xf32, #tpu.memory_space<smem>>
    %c59 = arith.constant 59 : index
    %78 = memref.load %arg3[%c59] : memref<144xf32, #tpu.memory_space<smem>>
    %c60 = arith.constant 60 : index
    %79 = memref.load %arg3[%c60] : memref<144xf32, #tpu.memory_space<smem>>
    %c61 = arith.constant 61 : index
    %80 = memref.load %arg3[%c61] : memref<144xf32, #tpu.memory_space<smem>>
    %c62 = arith.constant 62 : index
    %81 = memref.load %arg3[%c62] : memref<144xf32, #tpu.memory_space<smem>>
    %c63 = arith.constant 63 : index
    %82 = memref.load %arg3[%c63] : memref<144xf32, #tpu.memory_space<smem>>
    %c64 = arith.constant 64 : index
    %83 = memref.load %arg3[%c64] : memref<144xf32, #tpu.memory_space<smem>>
    %c65 = arith.constant 65 : index
    %84 = memref.load %arg3[%c65] : memref<144xf32, #tpu.memory_space<smem>>
    %c66 = arith.constant 66 : index
    %85 = memref.load %arg3[%c66] : memref<144xf32, #tpu.memory_space<smem>>
    %c67 = arith.constant 67 : index
    %86 = memref.load %arg3[%c67] : memref<144xf32, #tpu.memory_space<smem>>
    %c68 = arith.constant 68 : index
    %87 = memref.load %arg3[%c68] : memref<144xf32, #tpu.memory_space<smem>>
    %c69 = arith.constant 69 : index
    %88 = memref.load %arg3[%c69] : memref<144xf32, #tpu.memory_space<smem>>
    %c70 = arith.constant 70 : index
    %89 = memref.load %arg3[%c70] : memref<144xf32, #tpu.memory_space<smem>>
    %c71 = arith.constant 71 : index
    %90 = memref.load %arg3[%c71] : memref<144xf32, #tpu.memory_space<smem>>
    %c72 = arith.constant 72 : index
    %91 = memref.load %arg3[%c72] : memref<144xf32, #tpu.memory_space<smem>>
    %c73 = arith.constant 73 : index
    %92 = memref.load %arg3[%c73] : memref<144xf32, #tpu.memory_space<smem>>
    %c74 = arith.constant 74 : index
    %93 = memref.load %arg3[%c74] : memref<144xf32, #tpu.memory_space<smem>>
    %c75 = arith.constant 75 : index
    %94 = memref.load %arg3[%c75] : memref<144xf32, #tpu.memory_space<smem>>
    %c76 = arith.constant 76 : index
    %95 = memref.load %arg3[%c76] : memref<144xf32, #tpu.memory_space<smem>>
    %c77 = arith.constant 77 : index
    %96 = memref.load %arg3[%c77] : memref<144xf32, #tpu.memory_space<smem>>
    %c78 = arith.constant 78 : index
    %97 = memref.load %arg3[%c78] : memref<144xf32, #tpu.memory_space<smem>>
    %c79 = arith.constant 79 : index
    %98 = memref.load %arg3[%c79] : memref<144xf32, #tpu.memory_space<smem>>
    %c80 = arith.constant 80 : index
    %99 = memref.load %arg3[%c80] : memref<144xf32, #tpu.memory_space<smem>>
    %c81 = arith.constant 81 : index
    %100 = memref.load %arg3[%c81] : memref<144xf32, #tpu.memory_space<smem>>
    %c82 = arith.constant 82 : index
    %101 = memref.load %arg3[%c82] : memref<144xf32, #tpu.memory_space<smem>>
    %c83 = arith.constant 83 : index
    %102 = memref.load %arg3[%c83] : memref<144xf32, #tpu.memory_space<smem>>
    %c84 = arith.constant 84 : index
    %103 = memref.load %arg3[%c84] : memref<144xf32, #tpu.memory_space<smem>>
    %c85 = arith.constant 85 : index
    %104 = memref.load %arg3[%c85] : memref<144xf32, #tpu.memory_space<smem>>
    %c86 = arith.constant 86 : index
    %105 = memref.load %arg3[%c86] : memref<144xf32, #tpu.memory_space<smem>>
    %c87 = arith.constant 87 : index
    %106 = memref.load %arg3[%c87] : memref<144xf32, #tpu.memory_space<smem>>
    %c88 = arith.constant 88 : index
    %107 = memref.load %arg3[%c88] : memref<144xf32, #tpu.memory_space<smem>>
    %c89 = arith.constant 89 : index
    %108 = memref.load %arg3[%c89] : memref<144xf32, #tpu.memory_space<smem>>
    %c90 = arith.constant 90 : index
    %109 = memref.load %arg3[%c90] : memref<144xf32, #tpu.memory_space<smem>>
    %c91 = arith.constant 91 : index
    %110 = memref.load %arg3[%c91] : memref<144xf32, #tpu.memory_space<smem>>
    %c92 = arith.constant 92 : index
    %111 = memref.load %arg3[%c92] : memref<144xf32, #tpu.memory_space<smem>>
    %c93 = arith.constant 93 : index
    %112 = memref.load %arg3[%c93] : memref<144xf32, #tpu.memory_space<smem>>
    %c94 = arith.constant 94 : index
    %113 = memref.load %arg3[%c94] : memref<144xf32, #tpu.memory_space<smem>>
    %c95 = arith.constant 95 : index
    %114 = memref.load %arg3[%c95] : memref<144xf32, #tpu.memory_space<smem>>
    %c96 = arith.constant 96 : index
    %115 = memref.load %arg3[%c96] : memref<144xf32, #tpu.memory_space<smem>>
    %c97 = arith.constant 97 : index
    %116 = memref.load %arg3[%c97] : memref<144xf32, #tpu.memory_space<smem>>
    %c98 = arith.constant 98 : index
    %117 = memref.load %arg3[%c98] : memref<144xf32, #tpu.memory_space<smem>>
    %c99 = arith.constant 99 : index
    %118 = memref.load %arg3[%c99] : memref<144xf32, #tpu.memory_space<smem>>
    %c100 = arith.constant 100 : index
    %119 = memref.load %arg3[%c100] : memref<144xf32, #tpu.memory_space<smem>>
    %c101 = arith.constant 101 : index
    %120 = memref.load %arg3[%c101] : memref<144xf32, #tpu.memory_space<smem>>
    %c102 = arith.constant 102 : index
    %121 = memref.load %arg3[%c102] : memref<144xf32, #tpu.memory_space<smem>>
    %c103 = arith.constant 103 : index
    %122 = memref.load %arg3[%c103] : memref<144xf32, #tpu.memory_space<smem>>
    %c104 = arith.constant 104 : index
    %123 = memref.load %arg3[%c104] : memref<144xf32, #tpu.memory_space<smem>>
    %c105 = arith.constant 105 : index
    %124 = memref.load %arg3[%c105] : memref<144xf32, #tpu.memory_space<smem>>
    %c106 = arith.constant 106 : index
    %125 = memref.load %arg3[%c106] : memref<144xf32, #tpu.memory_space<smem>>
    %c107 = arith.constant 107 : index
    %126 = memref.load %arg3[%c107] : memref<144xf32, #tpu.memory_space<smem>>
    %c108 = arith.constant 108 : index
    %127 = memref.load %arg3[%c108] : memref<144xf32, #tpu.memory_space<smem>>
    %c109 = arith.constant 109 : index
    %128 = memref.load %arg3[%c109] : memref<144xf32, #tpu.memory_space<smem>>
    %c110 = arith.constant 110 : index
    %129 = memref.load %arg3[%c110] : memref<144xf32, #tpu.memory_space<smem>>
    %c111 = arith.constant 111 : index
    %130 = memref.load %arg3[%c111] : memref<144xf32, #tpu.memory_space<smem>>
    %c112 = arith.constant 112 : index
    %131 = memref.load %arg3[%c112] : memref<144xf32, #tpu.memory_space<smem>>
    %c113 = arith.constant 113 : index
    %132 = memref.load %arg3[%c113] : memref<144xf32, #tpu.memory_space<smem>>
    %c114 = arith.constant 114 : index
    %133 = memref.load %arg3[%c114] : memref<144xf32, #tpu.memory_space<smem>>
    %c115 = arith.constant 115 : index
    %134 = memref.load %arg3[%c115] : memref<144xf32, #tpu.memory_space<smem>>
    %c116 = arith.constant 116 : index
    %135 = memref.load %arg3[%c116] : memref<144xf32, #tpu.memory_space<smem>>
    %c117 = arith.constant 117 : index
    %136 = memref.load %arg3[%c117] : memref<144xf32, #tpu.memory_space<smem>>
    %c118 = arith.constant 118 : index
    %137 = memref.load %arg3[%c118] : memref<144xf32, #tpu.memory_space<smem>>
    %c119 = arith.constant 119 : index
    %138 = memref.load %arg3[%c119] : memref<144xf32, #tpu.memory_space<smem>>
    %c120 = arith.constant 120 : index
    %139 = memref.load %arg3[%c120] : memref<144xf32, #tpu.memory_space<smem>>
    %c121 = arith.constant 121 : index
    %140 = memref.load %arg3[%c121] : memref<144xf32, #tpu.memory_space<smem>>
    %c122 = arith.constant 122 : index
    %141 = memref.load %arg3[%c122] : memref<144xf32, #tpu.memory_space<smem>>
    %c123 = arith.constant 123 : index
    %142 = memref.load %arg3[%c123] : memref<144xf32, #tpu.memory_space<smem>>
    %c124 = arith.constant 124 : index
    %143 = memref.load %arg3[%c124] : memref<144xf32, #tpu.memory_space<smem>>
    %c125 = arith.constant 125 : index
    %144 = memref.load %arg3[%c125] : memref<144xf32, #tpu.memory_space<smem>>
    %c126 = arith.constant 126 : index
    %145 = memref.load %arg3[%c126] : memref<144xf32, #tpu.memory_space<smem>>
    %c127 = arith.constant 127 : index
    %146 = memref.load %arg3[%c127] : memref<144xf32, #tpu.memory_space<smem>>
    %c128 = arith.constant 128 : index
    %147 = memref.load %arg3[%c128] : memref<144xf32, #tpu.memory_space<smem>>
    %c129 = arith.constant 129 : index
    %148 = memref.load %arg3[%c129] : memref<144xf32, #tpu.memory_space<smem>>
    %c130 = arith.constant 130 : index
    %149 = memref.load %arg3[%c130] : memref<144xf32, #tpu.memory_space<smem>>
    %c131 = arith.constant 131 : index
    %150 = memref.load %arg3[%c131] : memref<144xf32, #tpu.memory_space<smem>>
    %c132 = arith.constant 132 : index
    %151 = memref.load %arg3[%c132] : memref<144xf32, #tpu.memory_space<smem>>
    %c133 = arith.constant 133 : index
    %152 = memref.load %arg3[%c133] : memref<144xf32, #tpu.memory_space<smem>>
    %c134 = arith.constant 134 : index
    %153 = memref.load %arg3[%c134] : memref<144xf32, #tpu.memory_space<smem>>
    %c135 = arith.constant 135 : index
    %154 = memref.load %arg3[%c135] : memref<144xf32, #tpu.memory_space<smem>>
    %c136 = arith.constant 136 : index
    %155 = memref.load %arg3[%c136] : memref<144xf32, #tpu.memory_space<smem>>
    %c137 = arith.constant 137 : index
    %156 = memref.load %arg3[%c137] : memref<144xf32, #tpu.memory_space<smem>>
    %c138 = arith.constant 138 : index
    %157 = memref.load %arg3[%c138] : memref<144xf32, #tpu.memory_space<smem>>
    %c139 = arith.constant 139 : index
    %158 = memref.load %arg3[%c139] : memref<144xf32, #tpu.memory_space<smem>>
    %c140 = arith.constant 140 : index
    %159 = memref.load %arg3[%c140] : memref<144xf32, #tpu.memory_space<smem>>
    %c141 = arith.constant 141 : index
    %160 = memref.load %arg3[%c141] : memref<144xf32, #tpu.memory_space<smem>>
    %c142 = arith.constant 142 : index
    %161 = memref.load %arg3[%c142] : memref<144xf32, #tpu.memory_space<smem>>
    %c143 = arith.constant 143 : index
    %162 = memref.load %arg3[%c143] : memref<144xf32, #tpu.memory_space<smem>>
    %c0_20 = arith.constant 0 : index
    %163 = memref.load %arg4[%c0_20] : memref<16xf32, #tpu.memory_space<smem>>
    %c1_21 = arith.constant 1 : index
    %164 = memref.load %arg4[%c1_21] : memref<16xf32, #tpu.memory_space<smem>>
    %c2_22 = arith.constant 2 : index
    %165 = memref.load %arg4[%c2_22] : memref<16xf32, #tpu.memory_space<smem>>
    %c3_23 = arith.constant 3 : index
    %166 = memref.load %arg4[%c3_23] : memref<16xf32, #tpu.memory_space<smem>>
    %c4_24 = arith.constant 4 : index
    %167 = memref.load %arg4[%c4_24] : memref<16xf32, #tpu.memory_space<smem>>
    %c5_25 = arith.constant 5 : index
    %168 = memref.load %arg4[%c5_25] : memref<16xf32, #tpu.memory_space<smem>>
    %c6_26 = arith.constant 6 : index
    %169 = memref.load %arg4[%c6_26] : memref<16xf32, #tpu.memory_space<smem>>
    %c7_27 = arith.constant 7 : index
    %170 = memref.load %arg4[%c7_27] : memref<16xf32, #tpu.memory_space<smem>>
    %c8_28 = arith.constant 8 : index
    %171 = memref.load %arg4[%c8_28] : memref<16xf32, #tpu.memory_space<smem>>
    %c9_29 = arith.constant 9 : index
    %172 = memref.load %arg4[%c9_29] : memref<16xf32, #tpu.memory_space<smem>>
    %c10_30 = arith.constant 10 : index
    %173 = memref.load %arg4[%c10_30] : memref<16xf32, #tpu.memory_space<smem>>
    %c11_31 = arith.constant 11 : index
    %174 = memref.load %arg4[%c11_31] : memref<16xf32, #tpu.memory_space<smem>>
    %c12_32 = arith.constant 12 : index
    %175 = memref.load %arg4[%c12_32] : memref<16xf32, #tpu.memory_space<smem>>
    %c13_33 = arith.constant 13 : index
    %176 = memref.load %arg4[%c13_33] : memref<16xf32, #tpu.memory_space<smem>>
    %c14_34 = arith.constant 14 : index
    %177 = memref.load %arg4[%c14_34] : memref<16xf32, #tpu.memory_space<smem>>
    %c15_35 = arith.constant 15 : index
    %178 = memref.load %arg4[%c15_35] : memref<16xf32, #tpu.memory_space<smem>>
    %c0_36 = arith.constant 0 : index
    %179 = memref.load %arg5[%c0_36] : memref<1xf32, #tpu.memory_space<smem>>
    %c0_i32 = arith.constant 0 : i32
    %c8_i32 = arith.constant 8 : i32
    %180 = arith.muli %c0_i32, %c8_i32 : i32
    %181 = tpu.assume_multiple %180, 8 : i32
    %cst = arith.constant 0.000000e+00 : f32
    %182 = vector.broadcast %cst : f32 to vector<8x1xf32>
    %183 = arith.index_cast %181 : i32 to index
    %c0_37 = arith.constant 0 : index
    %184 = vector.load %arg7[%183, %c0_37] : memref<8x896xf32, #tpu.memory_space<vmem>>, vector<8x256xf32>
    %185 = arith.index_cast %181 : i32 to index
    %c0_38 = arith.constant 0 : index
    %186 = vector.load %arg8[%185, %c0_38] : memref<8x896xf32, #tpu.memory_space<vmem>>, vector<8x256xf32>
    %187 = arith.index_cast %181 : i32 to index
    %c0_39 = arith.constant 0 : index
    %188 = vector.load %arg9[%187, %c0_39] : memref<8x896xf32, #tpu.memory_space<vmem>>, vector<8x256xf32>
    %189 = arith.index_cast %181 : i32 to index
    %c0_40 = arith.constant 0 : index
    %190 = vector.load %arg10[%189, %c0_40] : memref<8x896xf32, #tpu.memory_space<vmem>>, vector<8x256xf32>
    %191 = arith.index_cast %181 : i32 to index
    %c0_41 = arith.constant 0 : index
    %192 = vector.load %arg11[%191, %c0_41] : memref<8x896xf32, #tpu.memory_space<vmem>>, vector<8x256xf32>
    %193 = arith.index_cast %181 : i32 to index
    %c0_42 = arith.constant 0 : index
    %194 = vector.load %arg12[%193, %c0_42] : memref<8x896xf32, #tpu.memory_space<vmem>>, vector<8x256xf32>
    %195 = arith.index_cast %181 : i32 to index
    %c0_43 = arith.constant 0 : index
    %196 = vector.load %arg13[%195, %c0_43] : memref<8x896xf32, #tpu.memory_space<vmem>>, vector<8x256xf32>
    %197 = arith.index_cast %181 : i32 to index
    %c0_44 = arith.constant 0 : index
    %198 = vector.load %arg14[%197, %c0_44] : memref<8x896xf32, #tpu.memory_space<vmem>>, vector<8x256xf32>
    %199 = arith.index_cast %181 : i32 to index
    %c0_45 = arith.constant 0 : index
    %200 = vector.load %arg15[%199, %c0_45] : memref<8x896xf32, #tpu.memory_space<vmem>>, vector<8x256xf32>
    %c0_46 = arith.constant 0 : index
    %c0_47 = arith.constant 0 : index
    %201 = vector.load %arg2[%c0_46, %c0_47] : memref<16x896xf32, #tpu.memory_space<vmem>>, vector<16x256xf32>
    %cst_48 = arith.constant 0.000000e+00 : f32
    %202 = vector.broadcast %cst_48 : f32 to vector<8x256xf32>
    %203 = vector.broadcast %19 : f32 to vector<8x256xf32>
    %204 = arith.mulf %184, %203 : vector<8x256xf32>
    %205 = vector.broadcast %20 : f32 to vector<8x256xf32>
    %206 = arith.mulf %186, %205 : vector<8x256xf32>
    %207 = arith.addf %204, %206 : vector<8x256xf32>
    %208 = vector.broadcast %21 : f32 to vector<8x256xf32>
    %209 = arith.mulf %188, %208 : vector<8x256xf32>
    %210 = arith.addf %207, %209 : vector<8x256xf32>
    %211 = vector.broadcast %22 : f32 to vector<8x256xf32>
    %212 = arith.mulf %190, %211 : vector<8x256xf32>
    %213 = arith.addf %210, %212 : vector<8x256xf32>
    %214 = vector.broadcast %23 : f32 to vector<8x256xf32>
    %215 = arith.mulf %192, %214 : vector<8x256xf32>
    %216 = arith.addf %213, %215 : vector<8x256xf32>
    %217 = vector.broadcast %24 : f32 to vector<8x256xf32>
    %218 = arith.mulf %194, %217 : vector<8x256xf32>
    %219 = arith.addf %216, %218 : vector<8x256xf32>
    %220 = vector.broadcast %25 : f32 to vector<8x256xf32>
    %221 = arith.mulf %196, %220 : vector<8x256xf32>
    %222 = arith.addf %219, %221 : vector<8x256xf32>
    %223 = vector.broadcast %26 : f32 to vector<8x256xf32>
    %224 = arith.mulf %198, %223 : vector<8x256xf32>
    %225 = arith.addf %222, %224 : vector<8x256xf32>
    %226 = vector.broadcast %27 : f32 to vector<8x256xf32>
    %227 = arith.mulf %200, %226 : vector<8x256xf32>
    %228 = arith.addf %225, %227 : vector<8x256xf32>
    %229 = vector.broadcast %163 : f32 to vector<8x256xf32>
    %230 = arith.addf %228, %229 : vector<8x256xf32>
    %cst_49 = arith.constant 0.00999999977 : f32
    %231 = vector.broadcast %cst_49 : f32 to vector<8x256xf32>
    %232 = arith.mulf %231, %230 : vector<8x256xf32>
    %233 = arith.maximumf %230, %232 : vector<8x256xf32>
    %234 = vector.extract_strided_slice %201 {offsets = [0, 0], sizes = [1, 256], strides = [1, 1]} : vector<16x256xf32> to vector<1x256xf32>
    %235 = vector.broadcast %234 : vector<1x256xf32> to vector<8x256xf32>
    %236 = arith.mulf %233, %235 : vector<8x256xf32>
    %237 = arith.addf %202, %236 : vector<8x256xf32>
    %238 = vector.broadcast %28 : f32 to vector<8x256xf32>
    %239 = arith.mulf %184, %238 : vector<8x256xf32>
    %240 = vector.broadcast %29 : f32 to vector<8x256xf32>
    %241 = arith.mulf %186, %240 : vector<8x256xf32>
    %242 = arith.addf %239, %241 : vector<8x256xf32>
    %243 = vector.broadcast %30 : f32 to vector<8x256xf32>
    %244 = arith.mulf %188, %243 : vector<8x256xf32>
    %245 = arith.addf %242, %244 : vector<8x256xf32>
    %246 = vector.broadcast %31 : f32 to vector<8x256xf32>
    %247 = arith.mulf %190, %246 : vector<8x256xf32>
    %248 = arith.addf %245, %247 : vector<8x256xf32>
    %249 = vector.broadcast %32 : f32 to vector<8x256xf32>
    %250 = arith.mulf %192, %249 : vector<8x256xf32>
    %251 = arith.addf %248, %250 : vector<8x256xf32>
    %252 = vector.broadcast %33 : f32 to vector<8x256xf32>
    %253 = arith.mulf %194, %252 : vector<8x256xf32>
    %254 = arith.addf %251, %253 : vector<8x256xf32>
    %255 = vector.broadcast %34 : f32 to vector<8x256xf32>
    %256 = arith.mulf %196, %255 : vector<8x256xf32>
    %257 = arith.addf %254, %256 : vector<8x256xf32>
    %258 = vector.broadcast %35 : f32 to vector<8x256xf32>
    %259 = arith.mulf %198, %258 : vector<8x256xf32>
    %260 = arith.addf %257, %259 : vector<8x256xf32>
    %261 = vector.broadcast %36 : f32 to vector<8x256xf32>
    %262 = arith.mulf %200, %261 : vector<8x256xf32>
    %263 = arith.addf %260, %262 : vector<8x256xf32>
    %264 = vector.broadcast %164 : f32 to vector<8x256xf32>
    %265 = arith.addf %263, %264 : vector<8x256xf32>
    %cst_50 = arith.constant 0.00999999977 : f32
    %266 = vector.broadcast %cst_50 : f32 to vector<8x256xf32>
    %267 = arith.mulf %266, %265 : vector<8x256xf32>
    %268 = arith.maximumf %265, %267 : vector<8x256xf32>
    %269 = vector.extract_strided_slice %201 {offsets = [1, 0], sizes = [1, 256], strides = [1, 1]} : vector<16x256xf32> to vector<1x256xf32>
    %270 = vector.broadcast %269 : vector<1x256xf32> to vector<8x256xf32>
    %271 = arith.mulf %268, %270 : vector<8x256xf32>
    %272 = arith.addf %237, %271 : vector<8x256xf32>
    %273 = vector.broadcast %37 : f32 to vector<8x256xf32>
    %274 = arith.mulf %184, %273 : vector<8x256xf32>
    %275 = vector.broadcast %38 : f32 to vector<8x256xf32>
    %276 = arith.mulf %186, %275 : vector<8x256xf32>
    %277 = arith.addf %274, %276 : vector<8x256xf32>
    %278 = vector.broadcast %39 : f32 to vector<8x256xf32>
    %279 = arith.mulf %188, %278 : vector<8x256xf32>
    %280 = arith.addf %277, %279 : vector<8x256xf32>
    %281 = vector.broadcast %40 : f32 to vector<8x256xf32>
    %282 = arith.mulf %190, %281 : vector<8x256xf32>
    %283 = arith.addf %280, %282 : vector<8x256xf32>
    %284 = vector.broadcast %41 : f32 to vector<8x256xf32>
    %285 = arith.mulf %192, %284 : vector<8x256xf32>
    %286 = arith.addf %283, %285 : vector<8x256xf32>
    %287 = vector.broadcast %42 : f32 to vector<8x256xf32>
    %288 = arith.mulf %194, %287 : vector<8x256xf32>
    %289 = arith.addf %286, %288 : vector<8x256xf32>
    %290 = vector.broadcast %43 : f32 to vector<8x256xf32>
    %291 = arith.mulf %196, %290 : vector<8x256xf32>
    %292 = arith.addf %289, %291 : vector<8x256xf32>
    %293 = vector.broadcast %44 : f32 to vector<8x256xf32>
    %294 = arith.mulf %198, %293 : vector<8x256xf32>
    %295 = arith.addf %292, %294 : vector<8x256xf32>
    %296 = vector.broadcast %45 : f32 to vector<8x256xf32>
    %297 = arith.mulf %200, %296 : vector<8x256xf32>
    %298 = arith.addf %295, %297 : vector<8x256xf32>
    %299 = vector.broadcast %165 : f32 to vector<8x256xf32>
    %300 = arith.addf %298, %299 : vector<8x256xf32>
    %cst_51 = arith.constant 0.00999999977 : f32
    %301 = vector.broadcast %cst_51 : f32 to vector<8x256xf32>
    %302 = arith.mulf %301, %300 : vector<8x256xf32>
    %303 = arith.maximumf %300, %302 : vector<8x256xf32>
    %304 = vector.extract_strided_slice %201 {offsets = [2, 0], sizes = [1, 256], strides = [1, 1]} : vector<16x256xf32> to vector<1x256xf32>
    %305 = vector.broadcast %304 : vector<1x256xf32> to vector<8x256xf32>
    %306 = arith.mulf %303, %305 : vector<8x256xf32>
    %307 = arith.addf %272, %306 : vector<8x256xf32>
    %308 = vector.broadcast %46 : f32 to vector<8x256xf32>
    %309 = arith.mulf %184, %308 : vector<8x256xf32>
    %310 = vector.broadcast %47 : f32 to vector<8x256xf32>
    %311 = arith.mulf %186, %310 : vector<8x256xf32>
    %312 = arith.addf %309, %311 : vector<8x256xf32>
    %313 = vector.broadcast %48 : f32 to vector<8x256xf32>
    %314 = arith.mulf %188, %313 : vector<8x256xf32>
    %315 = arith.addf %312, %314 : vector<8x256xf32>
    %316 = vector.broadcast %49 : f32 to vector<8x256xf32>
    %317 = arith.mulf %190, %316 : vector<8x256xf32>
    %318 = arith.addf %315, %317 : vector<8x256xf32>
    %319 = vector.broadcast %50 : f32 to vector<8x256xf32>
    %320 = arith.mulf %192, %319 : vector<8x256xf32>
    %321 = arith.addf %318, %320 : vector<8x256xf32>
    %322 = vector.broadcast %51 : f32 to vector<8x256xf32>
    %323 = arith.mulf %194, %322 : vector<8x256xf32>
    %324 = arith.addf %321, %323 : vector<8x256xf32>
    %325 = vector.broadcast %52 : f32 to vector<8x256xf32>
    %326 = arith.mulf %196, %325 : vector<8x256xf32>
    %327 = arith.addf %324, %326 : vector<8x256xf32>
    %328 = vector.broadcast %53 : f32 to vector<8x256xf32>
    %329 = arith.mulf %198, %328 : vector<8x256xf32>
    %330 = arith.addf %327, %329 : vector<8x256xf32>
    %331 = vector.broadcast %54 : f32 to vector<8x256xf32>
    %332 = arith.mulf %200, %331 : vector<8x256xf32>
    %333 = arith.addf %330, %332 : vector<8x256xf32>
    %334 = vector.broadcast %166 : f32 to vector<8x256xf32>
    %335 = arith.addf %333, %334 : vector<8x256xf32>
    %cst_52 = arith.constant 0.00999999977 : f32
    %336 = vector.broadcast %cst_52 : f32 to vector<8x256xf32>
    %337 = arith.mulf %336, %335 : vector<8x256xf32>
    %338 = arith.maximumf %335, %337 : vector<8x256xf32>
    %339 = vector.extract_strided_slice %201 {offsets = [3, 0], sizes = [1, 256], strides = [1, 1]} : vector<16x256xf32> to vector<1x256xf32>
    %340 = vector.broadcast %339 : vector<1x256xf32> to vector<8x256xf32>
    %341 = arith.mulf %338, %340 : vector<8x256xf32>
    %342 = arith.addf %307, %341 : vector<8x256xf32>
    %343 = vector.broadcast %55 : f32 to vector<8x256xf32>
    %344 = arith.mulf %184, %343 : vector<8x256xf32>
    %345 = vector.broadcast %56 : f32 to vector<8x256xf32>
    %346 = arith.mulf %186, %345 : vector<8x256xf32>
    %347 = arith.addf %344, %346 : vector<8x256xf32>
    %348 = vector.broadcast %57 : f32 to vector<8x256xf32>
    %349 = arith.mulf %188, %348 : vector<8x256xf32>
    %350 = arith.addf %347, %349 : vector<8x256xf32>
    %351 = vector.broadcast %58 : f32 to vector<8x256xf32>
    %352 = arith.mulf %190, %351 : vector<8x256xf32>
    %353 = arith.addf %350, %352 : vector<8x256xf32>
    %354 = vector.broadcast %59 : f32 to vector<8x256xf32>
    %355 = arith.mulf %192, %354 : vector<8x256xf32>
    %356 = arith.addf %353, %355 : vector<8x256xf32>
    %357 = vector.broadcast %60 : f32 to vector<8x256xf32>
    %358 = arith.mulf %194, %357 : vector<8x256xf32>
    %359 = arith.addf %356, %358 : vector<8x256xf32>
    %360 = vector.broadcast %61 : f32 to vector<8x256xf32>
    %361 = arith.mulf %196, %360 : vector<8x256xf32>
    %362 = arith.addf %359, %361 : vector<8x256xf32>
    %363 = vector.broadcast %62 : f32 to vector<8x256xf32>
    %364 = arith.mulf %198, %363 : vector<8x256xf32>
    %365 = arith.addf %362, %364 : vector<8x256xf32>
    %366 = vector.broadcast %63 : f32 to vector<8x256xf32>
    %367 = arith.mulf %200, %366 : vector<8x256xf32>
    %368 = arith.addf %365, %367 : vector<8x256xf32>
    %369 = vector.broadcast %167 : f32 to vector<8x256xf32>
    %370 = arith.addf %368, %369 : vector<8x256xf32>
    %cst_53 = arith.constant 0.00999999977 : f32
    %371 = vector.broadcast %cst_53 : f32 to vector<8x256xf32>
    %372 = arith.mulf %371, %370 : vector<8x256xf32>
    %373 = arith.maximumf %370, %372 : vector<8x256xf32>
    %374 = vector.extract_strided_slice %201 {offsets = [4, 0], sizes = [1, 256], strides = [1, 1]} : vector<16x256xf32> to vector<1x256xf32>
    %375 = vector.broadcast %374 : vector<1x256xf32> to vector<8x256xf32>
    %376 = arith.mulf %373, %375 : vector<8x256xf32>
    %377 = arith.addf %342, %376 : vector<8x256xf32>
    %378 = vector.broadcast %64 : f32 to vector<8x256xf32>
    %379 = arith.mulf %184, %378 : vector<8x256xf32>
    %380 = vector.broadcast %65 : f32 to vector<8x256xf32>
    %381 = arith.mulf %186, %380 : vector<8x256xf32>
    %382 = arith.addf %379, %381 : vector<8x256xf32>
    %383 = vector.broadcast %66 : f32 to vector<8x256xf32>
    %384 = arith.mulf %188, %383 : vector<8x256xf32>
    %385 = arith.addf %382, %384 : vector<8x256xf32>
    %386 = vector.broadcast %67 : f32 to vector<8x256xf32>
    %387 = arith.mulf %190, %386 : vector<8x256xf32>
    %388 = arith.addf %385, %387 : vector<8x256xf32>
    %389 = vector.broadcast %68 : f32 to vector<8x256xf32>
    %390 = arith.mulf %192, %389 : vector<8x256xf32>
    %391 = arith.addf %388, %390 : vector<8x256xf32>
    %392 = vector.broadcast %69 : f32 to vector<8x256xf32>
    %393 = arith.mulf %194, %392 : vector<8x256xf32>
    %394 = arith.addf %391, %393 : vector<8x256xf32>
    %395 = vector.broadcast %70 : f32 to vector<8x256xf32>
    %396 = arith.mulf %196, %395 : vector<8x256xf32>
    %397 = arith.addf %394, %396 : vector<8x256xf32>
    %398 = vector.broadcast %71 : f32 to vector<8x256xf32>
    %399 = arith.mulf %198, %398 : vector<8x256xf32>
    %400 = arith.addf %397, %399 : vector<8x256xf32>
    %401 = vector.broadcast %72 : f32 to vector<8x256xf32>
    %402 = arith.mulf %200, %401 : vector<8x256xf32>
    %403 = arith.addf %400, %402 : vector<8x256xf32>
    %404 = vector.broadcast %168 : f32 to vector<8x256xf32>
    %405 = arith.addf %403, %404 : vector<8x256xf32>
    %cst_54 = arith.constant 0.00999999977 : f32
    %406 = vector.broadcast %cst_54 : f32 to vector<8x256xf32>
    %407 = arith.mulf %406, %405 : vector<8x256xf32>
    %408 = arith.maximumf %405, %407 : vector<8x256xf32>
    %409 = vector.extract_strided_slice %201 {offsets = [5, 0], sizes = [1, 256], strides = [1, 1]} : vector<16x256xf32> to vector<1x256xf32>
    %410 = vector.broadcast %409 : vector<1x256xf32> to vector<8x256xf32>
    %411 = arith.mulf %408, %410 : vector<8x256xf32>
    %412 = arith.addf %377, %411 : vector<8x256xf32>
    %413 = vector.broadcast %73 : f32 to vector<8x256xf32>
    %414 = arith.mulf %184, %413 : vector<8x256xf32>
    %415 = vector.broadcast %74 : f32 to vector<8x256xf32>
    %416 = arith.mulf %186, %415 : vector<8x256xf32>
    %417 = arith.addf %414, %416 : vector<8x256xf32>
    %418 = vector.broadcast %75 : f32 to vector<8x256xf32>
    %419 = arith.mulf %188, %418 : vector<8x256xf32>
    %420 = arith.addf %417, %419 : vector<8x256xf32>
    %421 = vector.broadcast %76 : f32 to vector<8x256xf32>
    %422 = arith.mulf %190, %421 : vector<8x256xf32>
    %423 = arith.addf %420, %422 : vector<8x256xf32>
    %424 = vector.broadcast %77 : f32 to vector<8x256xf32>
    %425 = arith.mulf %192, %424 : vector<8x256xf32>
    %426 = arith.addf %423, %425 : vector<8x256xf32>
    %427 = vector.broadcast %78 : f32 to vector<8x256xf32>
    %428 = arith.mulf %194, %427 : vector<8x256xf32>
    %429 = arith.addf %426, %428 : vector<8x256xf32>
    %430 = vector.broadcast %79 : f32 to vector<8x256xf32>
    %431 = arith.mulf %196, %430 : vector<8x256xf32>
    %432 = arith.addf %429, %431 : vector<8x256xf32>
    %433 = vector.broadcast %80 : f32 to vector<8x256xf32>
    %434 = arith.mulf %198, %433 : vector<8x256xf32>
    %435 = arith.addf %432, %434 : vector<8x256xf32>
    %436 = vector.broadcast %81 : f32 to vector<8x256xf32>
    %437 = arith.mulf %200, %436 : vector<8x256xf32>
    %438 = arith.addf %435, %437 : vector<8x256xf32>
    %439 = vector.broadcast %169 : f32 to vector<8x256xf32>
    %440 = arith.addf %438, %439 : vector<8x256xf32>
    %cst_55 = arith.constant 0.00999999977 : f32
    %441 = vector.broadcast %cst_55 : f32 to vector<8x256xf32>
    %442 = arith.mulf %441, %440 : vector<8x256xf32>
    %443 = arith.maximumf %440, %442 : vector<8x256xf32>
    %444 = vector.extract_strided_slice %201 {offsets = [6, 0], sizes = [1, 256], strides = [1, 1]} : vector<16x256xf32> to vector<1x256xf32>
    %445 = vector.broadcast %444 : vector<1x256xf32> to vector<8x256xf32>
    %446 = arith.mulf %443, %445 : vector<8x256xf32>
    %447 = arith.addf %412, %446 : vector<8x256xf32>
    %448 = vector.broadcast %82 : f32 to vector<8x256xf32>
    %449 = arith.mulf %184, %448 : vector<8x256xf32>
    %450 = vector.broadcast %83 : f32 to vector<8x256xf32>
    %451 = arith.mulf %186, %450 : vector<8x256xf32>
    %452 = arith.addf %449, %451 : vector<8x256xf32>
    %453 = vector.broadcast %84 : f32 to vector<8x256xf32>
    %454 = arith.mulf %188, %453 : vector<8x256xf32>
    %455 = arith.addf %452, %454 : vector<8x256xf32>
    %456 = vector.broadcast %85 : f32 to vector<8x256xf32>
    %457 = arith.mulf %190, %456 : vector<8x256xf32>
    %458 = arith.addf %455, %457 : vector<8x256xf32>
    %459 = vector.broadcast %86 : f32 to vector<8x256xf32>
    %460 = arith.mulf %192, %459 : vector<8x256xf32>
    %461 = arith.addf %458, %460 : vector<8x256xf32>
    %462 = vector.broadcast %87 : f32 to vector<8x256xf32>
    %463 = arith.mulf %194, %462 : vector<8x256xf32>
    %464 = arith.addf %461, %463 : vector<8x256xf32>
    %465 = vector.broadcast %88 : f32 to vector<8x256xf32>
    %466 = arith.mulf %196, %465 : vector<8x256xf32>
    %467 = arith.addf %464, %466 : vector<8x256xf32>
    %468 = vector.broadcast %89 : f32 to vector<8x256xf32>
    %469 = arith.mulf %198, %468 : vector<8x256xf32>
    %470 = arith.addf %467, %469 : vector<8x256xf32>
    %471 = vector.broadcast %90 : f32 to vector<8x256xf32>
    %472 = arith.mulf %200, %471 : vector<8x256xf32>
    %473 = arith.addf %470, %472 : vector<8x256xf32>
    %474 = vector.broadcast %170 : f32 to vector<8x256xf32>
    %475 = arith.addf %473, %474 : vector<8x256xf32>
    %cst_56 = arith.constant 0.00999999977 : f32
    %476 = vector.broadcast %cst_56 : f32 to vector<8x256xf32>
    %477 = arith.mulf %476, %475 : vector<8x256xf32>
    %478 = arith.maximumf %475, %477 : vector<8x256xf32>
    %479 = vector.extract_strided_slice %201 {offsets = [7, 0], sizes = [1, 256], strides = [1, 1]} : vector<16x256xf32> to vector<1x256xf32>
    %480 = vector.broadcast %479 : vector<1x256xf32> to vector<8x256xf32>
    %481 = arith.mulf %478, %480 : vector<8x256xf32>
    %482 = arith.addf %447, %481 : vector<8x256xf32>
    %483 = vector.broadcast %91 : f32 to vector<8x256xf32>
    %484 = arith.mulf %184, %483 : vector<8x256xf32>
    %485 = vector.broadcast %92 : f32 to vector<8x256xf32>
    %486 = arith.mulf %186, %485 : vector<8x256xf32>
    %487 = arith.addf %484, %486 : vector<8x256xf32>
    %488 = vector.broadcast %93 : f32 to vector<8x256xf32>
    %489 = arith.mulf %188, %488 : vector<8x256xf32>
    %490 = arith.addf %487, %489 : vector<8x256xf32>
    %491 = vector.broadcast %94 : f32 to vector<8x256xf32>
    %492 = arith.mulf %190, %491 : vector<8x256xf32>
    %493 = arith.addf %490, %492 : vector<8x256xf32>
    %494 = vector.broadcast %95 : f32 to vector<8x256xf32>
    %495 = arith.mulf %192, %494 : vector<8x256xf32>
    %496 = arith.addf %493, %495 : vector<8x256xf32>
    %497 = vector.broadcast %96 : f32 to vector<8x256xf32>
    %498 = arith.mulf %194, %497 : vector<8x256xf32>
    %499 = arith.addf %496, %498 : vector<8x256xf32>
    %500 = vector.broadcast %97 : f32 to vector<8x256xf32>
    %501 = arith.mulf %196, %500 : vector<8x256xf32>
    %502 = arith.addf %499, %501 : vector<8x256xf32>
    %503 = vector.broadcast %98 : f32 to vector<8x256xf32>
    %504 = arith.mulf %198, %503 : vector<8x256xf32>
    %505 = arith.addf %502, %504 : vector<8x256xf32>
    %506 = vector.broadcast %99 : f32 to vector<8x256xf32>
    %507 = arith.mulf %200, %506 : vector<8x256xf32>
    %508 = arith.addf %505, %507 : vector<8x256xf32>
    %509 = vector.broadcast %171 : f32 to vector<8x256xf32>
    %510 = arith.addf %508, %509 : vector<8x256xf32>
    %cst_57 = arith.constant 0.00999999977 : f32
    %511 = vector.broadcast %cst_57 : f32 to vector<8x256xf32>
    %512 = arith.mulf %511, %510 : vector<8x256xf32>
    %513 = arith.maximumf %510, %512 : vector<8x256xf32>
    %514 = vector.extract_strided_slice %201 {offsets = [8, 0], sizes = [1, 256], strides = [1, 1]} : vector<16x256xf32> to vector<1x256xf32>
    %515 = vector.broadcast %514 : vector<1x256xf32> to vector<8x256xf32>
    %516 = arith.mulf %513, %515 : vector<8x256xf32>
    %517 = arith.addf %482, %516 : vector<8x256xf32>
    %518 = vector.broadcast %100 : f32 to vector<8x256xf32>
    %519 = arith.mulf %184, %518 : vector<8x256xf32>
    %520 = vector.broadcast %101 : f32 to vector<8x256xf32>
    %521 = arith.mulf %186, %520 : vector<8x256xf32>
    %522 = arith.addf %519, %521 : vector<8x256xf32>
    %523 = vector.broadcast %102 : f32 to vector<8x256xf32>
    %524 = arith.mulf %188, %523 : vector<8x256xf32>
    %525 = arith.addf %522, %524 : vector<8x256xf32>
    %526 = vector.broadcast %103 : f32 to vector<8x256xf32>
    %527 = arith.mulf %190, %526 : vector<8x256xf32>
    %528 = arith.addf %525, %527 : vector<8x256xf32>
    %529 = vector.broadcast %104 : f32 to vector<8x256xf32>
    %530 = arith.mulf %192, %529 : vector<8x256xf32>
    %531 = arith.addf %528, %530 : vector<8x256xf32>
    %532 = vector.broadcast %105 : f32 to vector<8x256xf32>
    %533 = arith.mulf %194, %532 : vector<8x256xf32>
    %534 = arith.addf %531, %533 : vector<8x256xf32>
    %535 = vector.broadcast %106 : f32 to vector<8x256xf32>
    %536 = arith.mulf %196, %535 : vector<8x256xf32>
    %537 = arith.addf %534, %536 : vector<8x256xf32>
    %538 = vector.broadcast %107 : f32 to vector<8x256xf32>
    %539 = arith.mulf %198, %538 : vector<8x256xf32>
    %540 = arith.addf %537, %539 : vector<8x256xf32>
    %541 = vector.broadcast %108 : f32 to vector<8x256xf32>
    %542 = arith.mulf %200, %541 : vector<8x256xf32>
    %543 = arith.addf %540, %542 : vector<8x256xf32>
    %544 = vector.broadcast %172 : f32 to vector<8x256xf32>
    %545 = arith.addf %543, %544 : vector<8x256xf32>
    %cst_58 = arith.constant 0.00999999977 : f32
    %546 = vector.broadcast %cst_58 : f32 to vector<8x256xf32>
    %547 = arith.mulf %546, %545 : vector<8x256xf32>
    %548 = arith.maximumf %545, %547 : vector<8x256xf32>
    %549 = vector.extract_strided_slice %201 {offsets = [9, 0], sizes = [1, 256], strides = [1, 1]} : vector<16x256xf32> to vector<1x256xf32>
    %550 = vector.broadcast %549 : vector<1x256xf32> to vector<8x256xf32>
    %551 = arith.mulf %548, %550 : vector<8x256xf32>
    %552 = arith.addf %517, %551 : vector<8x256xf32>
    %553 = vector.broadcast %109 : f32 to vector<8x256xf32>
    %554 = arith.mulf %184, %553 : vector<8x256xf32>
    %555 = vector.broadcast %110 : f32 to vector<8x256xf32>
    %556 = arith.mulf %186, %555 : vector<8x256xf32>
    %557 = arith.addf %554, %556 : vector<8x256xf32>
    %558 = vector.broadcast %111 : f32 to vector<8x256xf32>
    %559 = arith.mulf %188, %558 : vector<8x256xf32>
    %560 = arith.addf %557, %559 : vector<8x256xf32>
    %561 = vector.broadcast %112 : f32 to vector<8x256xf32>
    %562 = arith.mulf %190, %561 : vector<8x256xf32>
    %563 = arith.addf %560, %562 : vector<8x256xf32>
    %564 = vector.broadcast %113 : f32 to vector<8x256xf32>
    %565 = arith.mulf %192, %564 : vector<8x256xf32>
    %566 = arith.addf %563, %565 : vector<8x256xf32>
    %567 = vector.broadcast %114 : f32 to vector<8x256xf32>
    %568 = arith.mulf %194, %567 : vector<8x256xf32>
    %569 = arith.addf %566, %568 : vector<8x256xf32>
    %570 = vector.broadcast %115 : f32 to vector<8x256xf32>
    %571 = arith.mulf %196, %570 : vector<8x256xf32>
    %572 = arith.addf %569, %571 : vector<8x256xf32>
    %573 = vector.broadcast %116 : f32 to vector<8x256xf32>
    %574 = arith.mulf %198, %573 : vector<8x256xf32>
    %575 = arith.addf %572, %574 : vector<8x256xf32>
    %576 = vector.broadcast %117 : f32 to vector<8x256xf32>
    %577 = arith.mulf %200, %576 : vector<8x256xf32>
    %578 = arith.addf %575, %577 : vector<8x256xf32>
    %579 = vector.broadcast %173 : f32 to vector<8x256xf32>
    %580 = arith.addf %578, %579 : vector<8x256xf32>
    %cst_59 = arith.constant 0.00999999977 : f32
    %581 = vector.broadcast %cst_59 : f32 to vector<8x256xf32>
    %582 = arith.mulf %581, %580 : vector<8x256xf32>
    %583 = arith.maximumf %580, %582 : vector<8x256xf32>
    %584 = vector.extract_strided_slice %201 {offsets = [10, 0], sizes = [1, 256], strides = [1, 1]} : vector<16x256xf32> to vector<1x256xf32>
    %585 = vector.broadcast %584 : vector<1x256xf32> to vector<8x256xf32>
    %586 = arith.mulf %583, %585 : vector<8x256xf32>
    %587 = arith.addf %552, %586 : vector<8x256xf32>
    %588 = vector.broadcast %118 : f32 to vector<8x256xf32>
    %589 = arith.mulf %184, %588 : vector<8x256xf32>
    %590 = vector.broadcast %119 : f32 to vector<8x256xf32>
    %591 = arith.mulf %186, %590 : vector<8x256xf32>
    %592 = arith.addf %589, %591 : vector<8x256xf32>
    %593 = vector.broadcast %120 : f32 to vector<8x256xf32>
    %594 = arith.mulf %188, %593 : vector<8x256xf32>
    %595 = arith.addf %592, %594 : vector<8x256xf32>
    %596 = vector.broadcast %121 : f32 to vector<8x256xf32>
    %597 = arith.mulf %190, %596 : vector<8x256xf32>
    %598 = arith.addf %595, %597 : vector<8x256xf32>
    %599 = vector.broadcast %122 : f32 to vector<8x256xf32>
    %600 = arith.mulf %192, %599 : vector<8x256xf32>
    %601 = arith.addf %598, %600 : vector<8x256xf32>
    %602 = vector.broadcast %123 : f32 to vector<8x256xf32>
    %603 = arith.mulf %194, %602 : vector<8x256xf32>
    %604 = arith.addf %601, %603 : vector<8x256xf32>
    %605 = vector.broadcast %124 : f32 to vector<8x256xf32>
    %606 = arith.mulf %196, %605 : vector<8x256xf32>
    %607 = arith.addf %604, %606 : vector<8x256xf32>
    %608 = vector.broadcast %125 : f32 to vector<8x256xf32>
    %609 = arith.mulf %198, %608 : vector<8x256xf32>
    %610 = arith.addf %607, %609 : vector<8x256xf32>
    %611 = vector.broadcast %126 : f32 to vector<8x256xf32>
    %612 = arith.mulf %200, %611 : vector<8x256xf32>
    %613 = arith.addf %610, %612 : vector<8x256xf32>
    %614 = vector.broadcast %174 : f32 to vector<8x256xf32>
    %615 = arith.addf %613, %614 : vector<8x256xf32>
    %cst_60 = arith.constant 0.00999999977 : f32
    %616 = vector.broadcast %cst_60 : f32 to vector<8x256xf32>
    %617 = arith.mulf %616, %615 : vector<8x256xf32>
    %618 = arith.maximumf %615, %617 : vector<8x256xf32>
    %619 = vector.extract_strided_slice %201 {offsets = [11, 0], sizes = [1, 256], strides = [1, 1]} : vector<16x256xf32> to vector<1x256xf32>
    %620 = vector.broadcast %619 : vector<1x256xf32> to vector<8x256xf32>
    %621 = arith.mulf %618, %620 : vector<8x256xf32>
    %622 = arith.addf %587, %621 : vector<8x256xf32>
    %623 = vector.broadcast %127 : f32 to vector<8x256xf32>
    %624 = arith.mulf %184, %623 : vector<8x256xf32>
    %625 = vector.broadcast %128 : f32 to vector<8x256xf32>
    %626 = arith.mulf %186, %625 : vector<8x256xf32>
    %627 = arith.addf %624, %626 : vector<8x256xf32>
    %628 = vector.broadcast %129 : f32 to vector<8x256xf32>
    %629 = arith.mulf %188, %628 : vector<8x256xf32>
    %630 = arith.addf %627, %629 : vector<8x256xf32>
    %631 = vector.broadcast %130 : f32 to vector<8x256xf32>
    %632 = arith.mulf %190, %631 : vector<8x256xf32>
    %633 = arith.addf %630, %632 : vector<8x256xf32>
    %634 = vector.broadcast %131 : f32 to vector<8x256xf32>
    %635 = arith.mulf %192, %634 : vector<8x256xf32>
    %636 = arith.addf %633, %635 : vector<8x256xf32>
    %637 = vector.broadcast %132 : f32 to vector<8x256xf32>
    %638 = arith.mulf %194, %637 : vector<8x256xf32>
    %639 = arith.addf %636, %638 : vector<8x256xf32>
    %640 = vector.broadcast %133 : f32 to vector<8x256xf32>
    %641 = arith.mulf %196, %640 : vector<8x256xf32>
    %642 = arith.addf %639, %641 : vector<8x256xf32>
    %643 = vector.broadcast %134 : f32 to vector<8x256xf32>
    %644 = arith.mulf %198, %643 : vector<8x256xf32>
    %645 = arith.addf %642, %644 : vector<8x256xf32>
    %646 = vector.broadcast %135 : f32 to vector<8x256xf32>
    %647 = arith.mulf %200, %646 : vector<8x256xf32>
    %648 = arith.addf %645, %647 : vector<8x256xf32>
    %649 = vector.broadcast %175 : f32 to vector<8x256xf32>
    %650 = arith.addf %648, %649 : vector<8x256xf32>
    %cst_61 = arith.constant 0.00999999977 : f32
    %651 = vector.broadcast %cst_61 : f32 to vector<8x256xf32>
    %652 = arith.mulf %651, %650 : vector<8x256xf32>
    %653 = arith.maximumf %650, %652 : vector<8x256xf32>
    %654 = vector.extract_strided_slice %201 {offsets = [12, 0], sizes = [1, 256], strides = [1, 1]} : vector<16x256xf32> to vector<1x256xf32>
    %655 = vector.broadcast %654 : vector<1x256xf32> to vector<8x256xf32>
    %656 = arith.mulf %653, %655 : vector<8x256xf32>
    %657 = arith.addf %622, %656 : vector<8x256xf32>
    %658 = vector.broadcast %136 : f32 to vector<8x256xf32>
    %659 = arith.mulf %184, %658 : vector<8x256xf32>
    %660 = vector.broadcast %137 : f32 to vector<8x256xf32>
    %661 = arith.mulf %186, %660 : vector<8x256xf32>
    %662 = arith.addf %659, %661 : vector<8x256xf32>
    %663 = vector.broadcast %138 : f32 to vector<8x256xf32>
    %664 = arith.mulf %188, %663 : vector<8x256xf32>
    %665 = arith.addf %662, %664 : vector<8x256xf32>
    %666 = vector.broadcast %139 : f32 to vector<8x256xf32>
    %667 = arith.mulf %190, %666 : vector<8x256xf32>
    %668 = arith.addf %665, %667 : vector<8x256xf32>
    %669 = vector.broadcast %140 : f32 to vector<8x256xf32>
    %670 = arith.mulf %192, %669 : vector<8x256xf32>
    %671 = arith.addf %668, %670 : vector<8x256xf32>
    %672 = vector.broadcast %141 : f32 to vector<8x256xf32>
    %673 = arith.mulf %194, %672 : vector<8x256xf32>
    %674 = arith.addf %671, %673 : vector<8x256xf32>
    %675 = vector.broadcast %142 : f32 to vector<8x256xf32>
    %676 = arith.mulf %196, %675 : vector<8x256xf32>
    %677 = arith.addf %674, %676 : vector<8x256xf32>
    %678 = vector.broadcast %143 : f32 to vector<8x256xf32>
    %679 = arith.mulf %198, %678 : vector<8x256xf32>
    %680 = arith.addf %677, %679 : vector<8x256xf32>
    %681 = vector.broadcast %144 : f32 to vector<8x256xf32>
    %682 = arith.mulf %200, %681 : vector<8x256xf32>
    %683 = arith.addf %680, %682 : vector<8x256xf32>
    %684 = vector.broadcast %176 : f32 to vector<8x256xf32>
    %685 = arith.addf %683, %684 : vector<8x256xf32>
    %cst_62 = arith.constant 0.00999999977 : f32
    %686 = vector.broadcast %cst_62 : f32 to vector<8x256xf32>
    %687 = arith.mulf %686, %685 : vector<8x256xf32>
    %688 = arith.maximumf %685, %687 : vector<8x256xf32>
    %689 = vector.extract_strided_slice %201 {offsets = [13, 0], sizes = [1, 256], strides = [1, 1]} : vector<16x256xf32> to vector<1x256xf32>
    %690 = vector.broadcast %689 : vector<1x256xf32> to vector<8x256xf32>
    %691 = arith.mulf %688, %690 : vector<8x256xf32>
    %692 = arith.addf %657, %691 : vector<8x256xf32>
    %693 = vector.broadcast %145 : f32 to vector<8x256xf32>
    %694 = arith.mulf %184, %693 : vector<8x256xf32>
    %695 = vector.broadcast %146 : f32 to vector<8x256xf32>
    %696 = arith.mulf %186, %695 : vector<8x256xf32>
    %697 = arith.addf %694, %696 : vector<8x256xf32>
    %698 = vector.broadcast %147 : f32 to vector<8x256xf32>
    %699 = arith.mulf %188, %698 : vector<8x256xf32>
    %700 = arith.addf %697, %699 : vector<8x256xf32>
    %701 = vector.broadcast %148 : f32 to vector<8x256xf32>
    %702 = arith.mulf %190, %701 : vector<8x256xf32>
    %703 = arith.addf %700, %702 : vector<8x256xf32>
    %704 = vector.broadcast %149 : f32 to vector<8x256xf32>
    %705 = arith.mulf %192, %704 : vector<8x256xf32>
    %706 = arith.addf %703, %705 : vector<8x256xf32>
    %707 = vector.broadcast %150 : f32 to vector<8x256xf32>
    %708 = arith.mulf %194, %707 : vector<8x256xf32>
    %709 = arith.addf %706, %708 : vector<8x256xf32>
    %710 = vector.broadcast %151 : f32 to vector<8x256xf32>
    %711 = arith.mulf %196, %710 : vector<8x256xf32>
    %712 = arith.addf %709, %711 : vector<8x256xf32>
    %713 = vector.broadcast %152 : f32 to vector<8x256xf32>
    %714 = arith.mulf %198, %713 : vector<8x256xf32>
    %715 = arith.addf %712, %714 : vector<8x256xf32>
    %716 = vector.broadcast %153 : f32 to vector<8x256xf32>
    %717 = arith.mulf %200, %716 : vector<8x256xf32>
    %718 = arith.addf %715, %717 : vector<8x256xf32>
    %719 = vector.broadcast %177 : f32 to vector<8x256xf32>
    %720 = arith.addf %718, %719 : vector<8x256xf32>
    %cst_63 = arith.constant 0.00999999977 : f32
    %721 = vector.broadcast %cst_63 : f32 to vector<8x256xf32>
    %722 = arith.mulf %721, %720 : vector<8x256xf32>
    %723 = arith.maximumf %720, %722 : vector<8x256xf32>
    %724 = vector.extract_strided_slice %201 {offsets = [14, 0], sizes = [1, 256], strides = [1, 1]} : vector<16x256xf32> to vector<1x256xf32>
    %725 = vector.broadcast %724 : vector<1x256xf32> to vector<8x256xf32>
    %726 = arith.mulf %723, %725 : vector<8x256xf32>
    %727 = arith.addf %692, %726 : vector<8x256xf32>
    %728 = vector.broadcast %154 : f32 to vector<8x256xf32>
    %729 = arith.mulf %184, %728 : vector<8x256xf32>
    %730 = vector.broadcast %155 : f32 to vector<8x256xf32>
    %731 = arith.mulf %186, %730 : vector<8x256xf32>
    %732 = arith.addf %729, %731 : vector<8x256xf32>
    %733 = vector.broadcast %156 : f32 to vector<8x256xf32>
    %734 = arith.mulf %188, %733 : vector<8x256xf32>
    %735 = arith.addf %732, %734 : vector<8x256xf32>
    %736 = vector.broadcast %157 : f32 to vector<8x256xf32>
    %737 = arith.mulf %190, %736 : vector<8x256xf32>
    %738 = arith.addf %735, %737 : vector<8x256xf32>
    %739 = vector.broadcast %158 : f32 to vector<8x256xf32>
    %740 = arith.mulf %192, %739 : vector<8x256xf32>
    %741 = arith.addf %738, %740 : vector<8x256xf32>
    %742 = vector.broadcast %159 : f32 to vector<8x256xf32>
    %743 = arith.mulf %194, %742 : vector<8x256xf32>
    %744 = arith.addf %741, %743 : vector<8x256xf32>
    %745 = vector.broadcast %160 : f32 to vector<8x256xf32>
    %746 = arith.mulf %196, %745 : vector<8x256xf32>
    %747 = arith.addf %744, %746 : vector<8x256xf32>
    %748 = vector.broadcast %161 : f32 to vector<8x256xf32>
    %749 = arith.mulf %198, %748 : vector<8x256xf32>
    %750 = arith.addf %747, %749 : vector<8x256xf32>
    %751 = vector.broadcast %162 : f32 to vector<8x256xf32>
    %752 = arith.mulf %200, %751 : vector<8x256xf32>
    %753 = arith.addf %750, %752 : vector<8x256xf32>
    %754 = vector.broadcast %178 : f32 to vector<8x256xf32>
    %755 = arith.addf %753, %754 : vector<8x256xf32>
    %cst_64 = arith.constant 0.00999999977 : f32
    %756 = vector.broadcast %cst_64 : f32 to vector<8x256xf32>
    %757 = arith.mulf %756, %755 : vector<8x256xf32>
    %758 = arith.maximumf %755, %757 : vector<8x256xf32>
    %759 = vector.extract_strided_slice %201 {offsets = [15, 0], sizes = [1, 256], strides = [1, 1]} : vector<16x256xf32> to vector<1x256xf32>
    %760 = vector.broadcast %759 : vector<1x256xf32> to vector<8x256xf32>
    %761 = arith.mulf %758, %760 : vector<8x256xf32>
    %762 = arith.addf %727, %761 : vector<8x256xf32>
    %cst_65 = arith.constant dense<0.000000e+00> : vector<8xf32>
    %763 = vector.multi_reduction <add>, %762, %cst_65 [1] : vector<8x256xf32> to vector<8xf32>
    %764 = vector.shape_cast %763 : vector<8xf32> to vector<8x1xf32>
    %765 = arith.addf %182, %764 : vector<8x1xf32>
    %766 = arith.index_cast %181 : i32 to index
    %c256 = arith.constant 256 : index
    %767 = vector.load %arg7[%766, %c256] : memref<8x896xf32, #tpu.memory_space<vmem>>, vector<8x256xf32>
    %768 = arith.index_cast %181 : i32 to index
    %c256_66 = arith.constant 256 : index
    %769 = vector.load %arg8[%768, %c256_66] : memref<8x896xf32, #tpu.memory_space<vmem>>, vector<8x256xf32>
    %770 = arith.index_cast %181 : i32 to index
    %c256_67 = arith.constant 256 : index
    %771 = vector.load %arg9[%770, %c256_67] : memref<8x896xf32, #tpu.memory_space<vmem>>, vector<8x256xf32>
    %772 = arith.index_cast %181 : i32 to index
    %c256_68 = arith.constant 256 : index
    %773 = vector.load %arg10[%772, %c256_68] : memref<8x896xf32, #tpu.memory_space<vmem>>, vector<8x256xf32>
    %774 = arith.index_cast %181 : i32 to index
    %c256_69 = arith.constant 256 : index
    %775 = vector.load %arg11[%774, %c256_69] : memref<8x896xf32, #tpu.memory_space<vmem>>, vector<8x256xf32>
    %776 = arith.index_cast %181 : i32 to index
    %c256_70 = arith.constant 256 : index
    %777 = vector.load %arg12[%776, %c256_70] : memref<8x896xf32, #tpu.memory_space<vmem>>, vector<8x256xf32>
    %778 = arith.index_cast %181 : i32 to index
    %c256_71 = arith.constant 256 : index
    %779 = vector.load %arg13[%778, %c256_71] : memref<8x896xf32, #tpu.memory_space<vmem>>, vector<8x256xf32>
    %780 = arith.index_cast %181 : i32 to index
    %c256_72 = arith.constant 256 : index
    %781 = vector.load %arg14[%780, %c256_72] : memref<8x896xf32, #tpu.memory_space<vmem>>, vector<8x256xf32>
    %782 = arith.index_cast %181 : i32 to index
    %c256_73 = arith.constant 256 : index
    %783 = vector.load %arg15[%782, %c256_73] : memref<8x896xf32, #tpu.memory_space<vmem>>, vector<8x256xf32>
    %c0_74 = arith.constant 0 : index
    %c256_75 = arith.constant 256 : index
    %784 = vector.load %arg2[%c0_74, %c256_75] : memref<16x896xf32, #tpu.memory_space<vmem>>, vector<16x256xf32>
    %cst_76 = arith.constant 0.000000e+00 : f32
    %785 = vector.broadcast %cst_76 : f32 to vector<8x256xf32>
    %786 = vector.broadcast %19 : f32 to vector<8x256xf32>
    %787 = arith.mulf %767, %786 : vector<8x256xf32>
    %788 = vector.broadcast %20 : f32 to vector<8x256xf32>
    %789 = arith.mulf %769, %788 : vector<8x256xf32>
    %790 = arith.addf %787, %789 : vector<8x256xf32>
    %791 = vector.broadcast %21 : f32 to vector<8x256xf32>
    %792 = arith.mulf %771, %791 : vector<8x256xf32>
    %793 = arith.addf %790, %792 : vector<8x256xf32>
    %794 = vector.broadcast %22 : f32 to vector<8x256xf32>
    %795 = arith.mulf %773, %794 : vector<8x256xf32>
    %796 = arith.addf %793, %795 : vector<8x256xf32>
    %797 = vector.broadcast %23 : f32 to vector<8x256xf32>
    %798 = arith.mulf %775, %797 : vector<8x256xf32>
    %799 = arith.addf %796, %798 : vector<8x256xf32>
    %800 = vector.broadcast %24 : f32 to vector<8x256xf32>
    %801 = arith.mulf %777, %800 : vector<8x256xf32>
    %802 = arith.addf %799, %801 : vector<8x256xf32>
    %803 = vector.broadcast %25 : f32 to vector<8x256xf32>
    %804 = arith.mulf %779, %803 : vector<8x256xf32>
    %805 = arith.addf %802, %804 : vector<8x256xf32>
    %806 = vector.broadcast %26 : f32 to vector<8x256xf32>
    %807 = arith.mulf %781, %806 : vector<8x256xf32>
    %808 = arith.addf %805, %807 : vector<8x256xf32>
    %809 = vector.broadcast %27 : f32 to vector<8x256xf32>
    %810 = arith.mulf %783, %809 : vector<8x256xf32>
    %811 = arith.addf %808, %810 : vector<8x256xf32>
    %812 = vector.broadcast %163 : f32 to vector<8x256xf32>
    %813 = arith.addf %811, %812 : vector<8x256xf32>
    %cst_77 = arith.constant 0.00999999977 : f32
    %814 = vector.broadcast %cst_77 : f32 to vector<8x256xf32>
    %815 = arith.mulf %814, %813 : vector<8x256xf32>
    %816 = arith.maximumf %813, %815 : vector<8x256xf32>
    %817 = vector.extract_strided_slice %784 {offsets = [0, 0], sizes = [1, 256], strides = [1, 1]} : vector<16x256xf32> to vector<1x256xf32>
    %818 = vector.broadcast %817 : vector<1x256xf32> to vector<8x256xf32>
    %819 = arith.mulf %816, %818 : vector<8x256xf32>
    %820 = arith.addf %785, %819 : vector<8x256xf32>
    %821 = vector.broadcast %28 : f32 to vector<8x256xf32>
    %822 = arith.mulf %767, %821 : vector<8x256xf32>
    %823 = vector.broadcast %29 : f32 to vector<8x256xf32>
    %824 = arith.mulf %769, %823 : vector<8x256xf32>
    %825 = arith.addf %822, %824 : vector<8x256xf32>
    %826 = vector.broadcast %30 : f32 to vector<8x256xf32>
    %827 = arith.mulf %771, %826 : vector<8x256xf32>
    %828 = arith.addf %825, %827 : vector<8x256xf32>
    %829 = vector.broadcast %31 : f32 to vector<8x256xf32>
    %830 = arith.mulf %773, %829 : vector<8x256xf32>
    %831 = arith.addf %828, %830 : vector<8x256xf32>
    %832 = vector.broadcast %32 : f32 to vector<8x256xf32>
    %833 = arith.mulf %775, %832 : vector<8x256xf32>
    %834 = arith.addf %831, %833 : vector<8x256xf32>
    %835 = vector.broadcast %33 : f32 to vector<8x256xf32>
    %836 = arith.mulf %777, %835 : vector<8x256xf32>
    %837 = arith.addf %834, %836 : vector<8x256xf32>
    %838 = vector.broadcast %34 : f32 to vector<8x256xf32>
    %839 = arith.mulf %779, %838 : vector<8x256xf32>
    %840 = arith.addf %837, %839 : vector<8x256xf32>
    %841 = vector.broadcast %35 : f32 to vector<8x256xf32>
    %842 = arith.mulf %781, %841 : vector<8x256xf32>
    %843 = arith.addf %840, %842 : vector<8x256xf32>
    %844 = vector.broadcast %36 : f32 to vector<8x256xf32>
    %845 = arith.mulf %783, %844 : vector<8x256xf32>
    %846 = arith.addf %843, %845 : vector<8x256xf32>
    %847 = vector.broadcast %164 : f32 to vector<8x256xf32>
    %848 = arith.addf %846, %847 : vector<8x256xf32>
    %cst_78 = arith.constant 0.00999999977 : f32
    %849 = vector.broadcast %cst_78 : f32 to vector<8x256xf32>
    %850 = arith.mulf %849, %848 : vector<8x256xf32>
    %851 = arith.maximumf %848, %850 : vector<8x256xf32>
    %852 = vector.extract_strided_slice %784 {offsets = [1, 0], sizes = [1, 256], strides = [1, 1]} : vector<16x256xf32> to vector<1x256xf32>
    %853 = vector.broadcast %852 : vector<1x256xf32> to vector<8x256xf32>
    %854 = arith.mulf %851, %853 : vector<8x256xf32>
    %855 = arith.addf %820, %854 : vector<8x256xf32>
    %856 = vector.broadcast %37 : f32 to vector<8x256xf32>
    %857 = arith.mulf %767, %856 : vector<8x256xf32>
    %858 = vector.broadcast %38 : f32 to vector<8x256xf32>
    %859 = arith.mulf %769, %858 : vector<8x256xf32>
    %860 = arith.addf %857, %859 : vector<8x256xf32>
    %861 = vector.broadcast %39 : f32 to vector<8x256xf32>
    %862 = arith.mulf %771, %861 : vector<8x256xf32>
    %863 = arith.addf %860, %862 : vector<8x256xf32>
    %864 = vector.broadcast %40 : f32 to vector<8x256xf32>
    %865 = arith.mulf %773, %864 : vector<8x256xf32>
    %866 = arith.addf %863, %865 : vector<8x256xf32>
    %867 = vector.broadcast %41 : f32 to vector<8x256xf32>
    %868 = arith.mulf %775, %867 : vector<8x256xf32>
    %869 = arith.addf %866, %868 : vector<8x256xf32>
    %870 = vector.broadcast %42 : f32 to vector<8x256xf32>
    %871 = arith.mulf %777, %870 : vector<8x256xf32>
    %872 = arith.addf %869, %871 : vector<8x256xf32>
    %873 = vector.broadcast %43 : f32 to vector<8x256xf32>
    %874 = arith.mulf %779, %873 : vector<8x256xf32>
    %875 = arith.addf %872, %874 : vector<8x256xf32>
    %876 = vector.broadcast %44 : f32 to vector<8x256xf32>
    %877 = arith.mulf %781, %876 : vector<8x256xf32>
    %878 = arith.addf %875, %877 : vector<8x256xf32>
    %879 = vector.broadcast %45 : f32 to vector<8x256xf32>
    %880 = arith.mulf %783, %879 : vector<8x256xf32>
    %881 = arith.addf %878, %880 : vector<8x256xf32>
    %882 = vector.broadcast %165 : f32 to vector<8x256xf32>
    %883 = arith.addf %881, %882 : vector<8x256xf32>
    %cst_79 = arith.constant 0.00999999977 : f32
    %884 = vector.broadcast %cst_79 : f32 to vector<8x256xf32>
    %885 = arith.mulf %884, %883 : vector<8x256xf32>
    %886 = arith.maximumf %883, %885 : vector<8x256xf32>
    %887 = vector.extract_strided_slice %784 {offsets = [2, 0], sizes = [1, 256], strides = [1, 1]} : vector<16x256xf32> to vector<1x256xf32>
    %888 = vector.broadcast %887 : vector<1x256xf32> to vector<8x256xf32>
    %889 = arith.mulf %886, %888 : vector<8x256xf32>
    %890 = arith.addf %855, %889 : vector<8x256xf32>
    %891 = vector.broadcast %46 : f32 to vector<8x256xf32>
    %892 = arith.mulf %767, %891 : vector<8x256xf32>
    %893 = vector.broadcast %47 : f32 to vector<8x256xf32>
    %894 = arith.mulf %769, %893 : vector<8x256xf32>
    %895 = arith.addf %892, %894 : vector<8x256xf32>
    %896 = vector.broadcast %48 : f32 to vector<8x256xf32>
    %897 = arith.mulf %771, %896 : vector<8x256xf32>
    %898 = arith.addf %895, %897 : vector<8x256xf32>
    %899 = vector.broadcast %49 : f32 to vector<8x256xf32>
    %900 = arith.mulf %773, %899 : vector<8x256xf32>
    %901 = arith.addf %898, %900 : vector<8x256xf32>
    %902 = vector.broadcast %50 : f32 to vector<8x256xf32>
    %903 = arith.mulf %775, %902 : vector<8x256xf32>
    %904 = arith.addf %901, %903 : vector<8x256xf32>
    %905 = vector.broadcast %51 : f32 to vector<8x256xf32>
    %906 = arith.mulf %777, %905 : vector<8x256xf32>
    %907 = arith.addf %904, %906 : vector<8x256xf32>
    %908 = vector.broadcast %52 : f32 to vector<8x256xf32>
    %909 = arith.mulf %779, %908 : vector<8x256xf32>
    %910 = arith.addf %907, %909 : vector<8x256xf32>
    %911 = vector.broadcast %53 : f32 to vector<8x256xf32>
    %912 = arith.mulf %781, %911 : vector<8x256xf32>
    %913 = arith.addf %910, %912 : vector<8x256xf32>
    %914 = vector.broadcast %54 : f32 to vector<8x256xf32>
    %915 = arith.mulf %783, %914 : vector<8x256xf32>
    %916 = arith.addf %913, %915 : vector<8x256xf32>
    %917 = vector.broadcast %166 : f32 to vector<8x256xf32>
    %918 = arith.addf %916, %917 : vector<8x256xf32>
    %cst_80 = arith.constant 0.00999999977 : f32
    %919 = vector.broadcast %cst_80 : f32 to vector<8x256xf32>
    %920 = arith.mulf %919, %918 : vector<8x256xf32>
    %921 = arith.maximumf %918, %920 : vector<8x256xf32>
    %922 = vector.extract_strided_slice %784 {offsets = [3, 0], sizes = [1, 256], strides = [1, 1]} : vector<16x256xf32> to vector<1x256xf32>
    %923 = vector.broadcast %922 : vector<1x256xf32> to vector<8x256xf32>
    %924 = arith.mulf %921, %923 : vector<8x256xf32>
    %925 = arith.addf %890, %924 : vector<8x256xf32>
    %926 = vector.broadcast %55 : f32 to vector<8x256xf32>
    %927 = arith.mulf %767, %926 : vector<8x256xf32>
    %928 = vector.broadcast %56 : f32 to vector<8x256xf32>
    %929 = arith.mulf %769, %928 : vector<8x256xf32>
    %930 = arith.addf %927, %929 : vector<8x256xf32>
    %931 = vector.broadcast %57 : f32 to vector<8x256xf32>
    %932 = arith.mulf %771, %931 : vector<8x256xf32>
    %933 = arith.addf %930, %932 : vector<8x256xf32>
    %934 = vector.broadcast %58 : f32 to vector<8x256xf32>
    %935 = arith.mulf %773, %934 : vector<8x256xf32>
    %936 = arith.addf %933, %935 : vector<8x256xf32>
    %937 = vector.broadcast %59 : f32 to vector<8x256xf32>
    %938 = arith.mulf %775, %937 : vector<8x256xf32>
    %939 = arith.addf %936, %938 : vector<8x256xf32>
    %940 = vector.broadcast %60 : f32 to vector<8x256xf32>
    %941 = arith.mulf %777, %940 : vector<8x256xf32>
    %942 = arith.addf %939, %941 : vector<8x256xf32>
    %943 = vector.broadcast %61 : f32 to vector<8x256xf32>
    %944 = arith.mulf %779, %943 : vector<8x256xf32>
    %945 = arith.addf %942, %944 : vector<8x256xf32>
    %946 = vector.broadcast %62 : f32 to vector<8x256xf32>
    %947 = arith.mulf %781, %946 : vector<8x256xf32>
    %948 = arith.addf %945, %947 : vector<8x256xf32>
    %949 = vector.broadcast %63 : f32 to vector<8x256xf32>
    %950 = arith.mulf %783, %949 : vector<8x256xf32>
    %951 = arith.addf %948, %950 : vector<8x256xf32>
    %952 = vector.broadcast %167 : f32 to vector<8x256xf32>
    %953 = arith.addf %951, %952 : vector<8x256xf32>
    %cst_81 = arith.constant 0.00999999977 : f32
    %954 = vector.broadcast %cst_81 : f32 to vector<8x256xf32>
    %955 = arith.mulf %954, %953 : vector<8x256xf32>
    %956 = arith.maximumf %953, %955 : vector<8x256xf32>
    %957 = vector.extract_strided_slice %784 {offsets = [4, 0], sizes = [1, 256], strides = [1, 1]} : vector<16x256xf32> to vector<1x256xf32>
    %958 = vector.broadcast %957 : vector<1x256xf32> to vector<8x256xf32>
    %959 = arith.mulf %956, %958 : vector<8x256xf32>
    %960 = arith.addf %925, %959 : vector<8x256xf32>
    %961 = vector.broadcast %64 : f32 to vector<8x256xf32>
    %962 = arith.mulf %767, %961 : vector<8x256xf32>
    %963 = vector.broadcast %65 : f32 to vector<8x256xf32>
    %964 = arith.mulf %769, %963 : vector<8x256xf32>
    %965 = arith.addf %962, %964 : vector<8x256xf32>
    %966 = vector.broadcast %66 : f32 to vector<8x256xf32>
    %967 = arith.mulf %771, %966 : vector<8x256xf32>
    %968 = arith.addf %965, %967 : vector<8x256xf32>
    %969 = vector.broadcast %67 : f32 to vector<8x256xf32>
    %970 = arith.mulf %773, %969 : vector<8x256xf32>
    %971 = arith.addf %968, %970 : vector<8x256xf32>
    %972 = vector.broadcast %68 : f32 to vector<8x256xf32>
    %973 = arith.mulf %775, %972 : vector<8x256xf32>
    %974 = arith.addf %971, %973 : vector<8x256xf32>
    %975 = vector.broadcast %69 : f32 to vector<8x256xf32>
    %976 = arith.mulf %777, %975 : vector<8x256xf32>
    %977 = arith.addf %974, %976 : vector<8x256xf32>
    %978 = vector.broadcast %70 : f32 to vector<8x256xf32>
    %979 = arith.mulf %779, %978 : vector<8x256xf32>
    %980 = arith.addf %977, %979 : vector<8x256xf32>
    %981 = vector.broadcast %71 : f32 to vector<8x256xf32>
    %982 = arith.mulf %781, %981 : vector<8x256xf32>
    %983 = arith.addf %980, %982 : vector<8x256xf32>
    %984 = vector.broadcast %72 : f32 to vector<8x256xf32>
    %985 = arith.mulf %783, %984 : vector<8x256xf32>
    %986 = arith.addf %983, %985 : vector<8x256xf32>
    %987 = vector.broadcast %168 : f32 to vector<8x256xf32>
    %988 = arith.addf %986, %987 : vector<8x256xf32>
    %cst_82 = arith.constant 0.00999999977 : f32
    %989 = vector.broadcast %cst_82 : f32 to vector<8x256xf32>
    %990 = arith.mulf %989, %988 : vector<8x256xf32>
    %991 = arith.maximumf %988, %990 : vector<8x256xf32>
    %992 = vector.extract_strided_slice %784 {offsets = [5, 0], sizes = [1, 256], strides = [1, 1]} : vector<16x256xf32> to vector<1x256xf32>
    %993 = vector.broadcast %992 : vector<1x256xf32> to vector<8x256xf32>
    %994 = arith.mulf %991, %993 : vector<8x256xf32>
    %995 = arith.addf %960, %994 : vector<8x256xf32>
    %996 = vector.broadcast %73 : f32 to vector<8x256xf32>
    %997 = arith.mulf %767, %996 : vector<8x256xf32>
    %998 = vector.broadcast %74 : f32 to vector<8x256xf32>
    %999 = arith.mulf %769, %998 : vector<8x256xf32>
    %1000 = arith.addf %997, %999 : vector<8x256xf32>
    %1001 = vector.broadcast %75 : f32 to vector<8x256xf32>
    %1002 = arith.mulf %771, %1001 : vector<8x256xf32>
    %1003 = arith.addf %1000, %1002 : vector<8x256xf32>
    %1004 = vector.broadcast %76 : f32 to vector<8x256xf32>
    %1005 = arith.mulf %773, %1004 : vector<8x256xf32>
    %1006 = arith.addf %1003, %1005 : vector<8x256xf32>
    %1007 = vector.broadcast %77 : f32 to vector<8x256xf32>
    %1008 = arith.mulf %775, %1007 : vector<8x256xf32>
    %1009 = arith.addf %1006, %1008 : vector<8x256xf32>
    %1010 = vector.broadcast %78 : f32 to vector<8x256xf32>
    %1011 = arith.mulf %777, %1010 : vector<8x256xf32>
    %1012 = arith.addf %1009, %1011 : vector<8x256xf32>
    %1013 = vector.broadcast %79 : f32 to vector<8x256xf32>
    %1014 = arith.mulf %779, %1013 : vector<8x256xf32>
    %1015 = arith.addf %1012, %1014 : vector<8x256xf32>
    %1016 = vector.broadcast %80 : f32 to vector<8x256xf32>
    %1017 = arith.mulf %781, %1016 : vector<8x256xf32>
    %1018 = arith.addf %1015, %1017 : vector<8x256xf32>
    %1019 = vector.broadcast %81 : f32 to vector<8x256xf32>
    %1020 = arith.mulf %783, %1019 : vector<8x256xf32>
    %1021 = arith.addf %1018, %1020 : vector<8x256xf32>
    %1022 = vector.broadcast %169 : f32 to vector<8x256xf32>
    %1023 = arith.addf %1021, %1022 : vector<8x256xf32>
    %cst_83 = arith.constant 0.00999999977 : f32
    %1024 = vector.broadcast %cst_83 : f32 to vector<8x256xf32>
    %1025 = arith.mulf %1024, %1023 : vector<8x256xf32>
    %1026 = arith.maximumf %1023, %1025 : vector<8x256xf32>
    %1027 = vector.extract_strided_slice %784 {offsets = [6, 0], sizes = [1, 256], strides = [1, 1]} : vector<16x256xf32> to vector<1x256xf32>
    %1028 = vector.broadcast %1027 : vector<1x256xf32> to vector<8x256xf32>
    %1029 = arith.mulf %1026, %1028 : vector<8x256xf32>
    %1030 = arith.addf %995, %1029 : vector<8x256xf32>
    %1031 = vector.broadcast %82 : f32 to vector<8x256xf32>
    %1032 = arith.mulf %767, %1031 : vector<8x256xf32>
    %1033 = vector.broadcast %83 : f32 to vector<8x256xf32>
    %1034 = arith.mulf %769, %1033 : vector<8x256xf32>
    %1035 = arith.addf %1032, %1034 : vector<8x256xf32>
    %1036 = vector.broadcast %84 : f32 to vector<8x256xf32>
    %1037 = arith.mulf %771, %1036 : vector<8x256xf32>
    %1038 = arith.addf %1035, %1037 : vector<8x256xf32>
    %1039 = vector.broadcast %85 : f32 to vector<8x256xf32>
    %1040 = arith.mulf %773, %1039 : vector<8x256xf32>
    %1041 = arith.addf %1038, %1040 : vector<8x256xf32>
    %1042 = vector.broadcast %86 : f32 to vector<8x256xf32>
    %1043 = arith.mulf %775, %1042 : vector<8x256xf32>
    %1044 = arith.addf %1041, %1043 : vector<8x256xf32>
    %1045 = vector.broadcast %87 : f32 to vector<8x256xf32>
    %1046 = arith.mulf %777, %1045 : vector<8x256xf32>
    %1047 = arith.addf %1044, %1046 : vector<8x256xf32>
    %1048 = vector.broadcast %88 : f32 to vector<8x256xf32>
    %1049 = arith.mulf %779, %1048 : vector<8x256xf32>
    %1050 = arith.addf %1047, %1049 : vector<8x256xf32>
    %1051 = vector.broadcast %89 : f32 to vector<8x256xf32>
    %1052 = arith.mulf %781, %1051 : vector<8x256xf32>
    %1053 = arith.addf %1050, %1052 : vector<8x256xf32>
    %1054 = vector.broadcast %90 : f32 to vector<8x256xf32>
    %1055 = arith.mulf %783, %1054 : vector<8x256xf32>
    %1056 = arith.addf %1053, %1055 : vector<8x256xf32>
    %1057 = vector.broadcast %170 : f32 to vector<8x256xf32>
    %1058 = arith.addf %1056, %1057 : vector<8x256xf32>
    %cst_84 = arith.constant 0.00999999977 : f32
    %1059 = vector.broadcast %cst_84 : f32 to vector<8x256xf32>
    %1060 = arith.mulf %1059, %1058 : vector<8x256xf32>
    %1061 = arith.maximumf %1058, %1060 : vector<8x256xf32>
    %1062 = vector.extract_strided_slice %784 {offsets = [7, 0], sizes = [1, 256], strides = [1, 1]} : vector<16x256xf32> to vector<1x256xf32>
    %1063 = vector.broadcast %1062 : vector<1x256xf32> to vector<8x256xf32>
    %1064 = arith.mulf %1061, %1063 : vector<8x256xf32>
    %1065 = arith.addf %1030, %1064 : vector<8x256xf32>
    %1066 = vector.broadcast %91 : f32 to vector<8x256xf32>
    %1067 = arith.mulf %767, %1066 : vector<8x256xf32>
    %1068 = vector.broadcast %92 : f32 to vector<8x256xf32>
    %1069 = arith.mulf %769, %1068 : vector<8x256xf32>
    %1070 = arith.addf %1067, %1069 : vector<8x256xf32>
    %1071 = vector.broadcast %93 : f32 to vector<8x256xf32>
    %1072 = arith.mulf %771, %1071 : vector<8x256xf32>
    %1073 = arith.addf %1070, %1072 : vector<8x256xf32>
    %1074 = vector.broadcast %94 : f32 to vector<8x256xf32>
    %1075 = arith.mulf %773, %1074 : vector<8x256xf32>
    %1076 = arith.addf %1073, %1075 : vector<8x256xf32>
    %1077 = vector.broadcast %95 : f32 to vector<8x256xf32>
    %1078 = arith.mulf %775, %1077 : vector<8x256xf32>
    %1079 = arith.addf %1076, %1078 : vector<8x256xf32>
    %1080 = vector.broadcast %96 : f32 to vector<8x256xf32>
    %1081 = arith.mulf %777, %1080 : vector<8x256xf32>
    %1082 = arith.addf %1079, %1081 : vector<8x256xf32>
    %1083 = vector.broadcast %97 : f32 to vector<8x256xf32>
    %1084 = arith.mulf %779, %1083 : vector<8x256xf32>
    %1085 = arith.addf %1082, %1084 : vector<8x256xf32>
    %1086 = vector.broadcast %98 : f32 to vector<8x256xf32>
    %1087 = arith.mulf %781, %1086 : vector<8x256xf32>
    %1088 = arith.addf %1085, %1087 : vector<8x256xf32>
    %1089 = vector.broadcast %99 : f32 to vector<8x256xf32>
    %1090 = arith.mulf %783, %1089 : vector<8x256xf32>
    %1091 = arith.addf %1088, %1090 : vector<8x256xf32>
    %1092 = vector.broadcast %171 : f32 to vector<8x256xf32>
    %1093 = arith.addf %1091, %1092 : vector<8x256xf32>
    %cst_85 = arith.constant 0.00999999977 : f32
    %1094 = vector.broadcast %cst_85 : f32 to vector<8x256xf32>
    %1095 = arith.mulf %1094, %1093 : vector<8x256xf32>
    %1096 = arith.maximumf %1093, %1095 : vector<8x256xf32>
    %1097 = vector.extract_strided_slice %784 {offsets = [8, 0], sizes = [1, 256], strides = [1, 1]} : vector<16x256xf32> to vector<1x256xf32>
    %1098 = vector.broadcast %1097 : vector<1x256xf32> to vector<8x256xf32>
    %1099 = arith.mulf %1096, %1098 : vector<8x256xf32>
    %1100 = arith.addf %1065, %1099 : vector<8x256xf32>
    %1101 = vector.broadcast %100 : f32 to vector<8x256xf32>
    %1102 = arith.mulf %767, %1101 : vector<8x256xf32>
    %1103 = vector.broadcast %101 : f32 to vector<8x256xf32>
    %1104 = arith.mulf %769, %1103 : vector<8x256xf32>
    %1105 = arith.addf %1102, %1104 : vector<8x256xf32>
    %1106 = vector.broadcast %102 : f32 to vector<8x256xf32>
    %1107 = arith.mulf %771, %1106 : vector<8x256xf32>
    %1108 = arith.addf %1105, %1107 : vector<8x256xf32>
    %1109 = vector.broadcast %103 : f32 to vector<8x256xf32>
    %1110 = arith.mulf %773, %1109 : vector<8x256xf32>
    %1111 = arith.addf %1108, %1110 : vector<8x256xf32>
    %1112 = vector.broadcast %104 : f32 to vector<8x256xf32>
    %1113 = arith.mulf %775, %1112 : vector<8x256xf32>
    %1114 = arith.addf %1111, %1113 : vector<8x256xf32>
    %1115 = vector.broadcast %105 : f32 to vector<8x256xf32>
    %1116 = arith.mulf %777, %1115 : vector<8x256xf32>
    %1117 = arith.addf %1114, %1116 : vector<8x256xf32>
    %1118 = vector.broadcast %106 : f32 to vector<8x256xf32>
    %1119 = arith.mulf %779, %1118 : vector<8x256xf32>
    %1120 = arith.addf %1117, %1119 : vector<8x256xf32>
    %1121 = vector.broadcast %107 : f32 to vector<8x256xf32>
    %1122 = arith.mulf %781, %1121 : vector<8x256xf32>
    %1123 = arith.addf %1120, %1122 : vector<8x256xf32>
    %1124 = vector.broadcast %108 : f32 to vector<8x256xf32>
    %1125 = arith.mulf %783, %1124 : vector<8x256xf32>
    %1126 = arith.addf %1123, %1125 : vector<8x256xf32>
    %1127 = vector.broadcast %172 : f32 to vector<8x256xf32>
    %1128 = arith.addf %1126, %1127 : vector<8x256xf32>
    %cst_86 = arith.constant 0.00999999977 : f32
    %1129 = vector.broadcast %cst_86 : f32 to vector<8x256xf32>
    %1130 = arith.mulf %1129, %1128 : vector<8x256xf32>
    %1131 = arith.maximumf %1128, %1130 : vector<8x256xf32>
    %1132 = vector.extract_strided_slice %784 {offsets = [9, 0], sizes = [1, 256], strides = [1, 1]} : vector<16x256xf32> to vector<1x256xf32>
    %1133 = vector.broadcast %1132 : vector<1x256xf32> to vector<8x256xf32>
    %1134 = arith.mulf %1131, %1133 : vector<8x256xf32>
    %1135 = arith.addf %1100, %1134 : vector<8x256xf32>
    %1136 = vector.broadcast %109 : f32 to vector<8x256xf32>
    %1137 = arith.mulf %767, %1136 : vector<8x256xf32>
    %1138 = vector.broadcast %110 : f32 to vector<8x256xf32>
    %1139 = arith.mulf %769, %1138 : vector<8x256xf32>
    %1140 = arith.addf %1137, %1139 : vector<8x256xf32>
    %1141 = vector.broadcast %111 : f32 to vector<8x256xf32>
    %1142 = arith.mulf %771, %1141 : vector<8x256xf32>
    %1143 = arith.addf %1140, %1142 : vector<8x256xf32>
    %1144 = vector.broadcast %112 : f32 to vector<8x256xf32>
    %1145 = arith.mulf %773, %1144 : vector<8x256xf32>
    %1146 = arith.addf %1143, %1145 : vector<8x256xf32>
    %1147 = vector.broadcast %113 : f32 to vector<8x256xf32>
    %1148 = arith.mulf %775, %1147 : vector<8x256xf32>
    %1149 = arith.addf %1146, %1148 : vector<8x256xf32>
    %1150 = vector.broadcast %114 : f32 to vector<8x256xf32>
    %1151 = arith.mulf %777, %1150 : vector<8x256xf32>
    %1152 = arith.addf %1149, %1151 : vector<8x256xf32>
    %1153 = vector.broadcast %115 : f32 to vector<8x256xf32>
    %1154 = arith.mulf %779, %1153 : vector<8x256xf32>
    %1155 = arith.addf %1152, %1154 : vector<8x256xf32>
    %1156 = vector.broadcast %116 : f32 to vector<8x256xf32>
    %1157 = arith.mulf %781, %1156 : vector<8x256xf32>
    %1158 = arith.addf %1155, %1157 : vector<8x256xf32>
    %1159 = vector.broadcast %117 : f32 to vector<8x256xf32>
    %1160 = arith.mulf %783, %1159 : vector<8x256xf32>
    %1161 = arith.addf %1158, %1160 : vector<8x256xf32>
    %1162 = vector.broadcast %173 : f32 to vector<8x256xf32>
    %1163 = arith.addf %1161, %1162 : vector<8x256xf32>
    %cst_87 = arith.constant 0.00999999977 : f32
    %1164 = vector.broadcast %cst_87 : f32 to vector<8x256xf32>
    %1165 = arith.mulf %1164, %1163 : vector<8x256xf32>
    %1166 = arith.maximumf %1163, %1165 : vector<8x256xf32>
    %1167 = vector.extract_strided_slice %784 {offsets = [10, 0], sizes = [1, 256], strides = [1, 1]} : vector<16x256xf32> to vector<1x256xf32>
    %1168 = vector.broadcast %1167 : vector<1x256xf32> to vector<8x256xf32>
    %1169 = arith.mulf %1166, %1168 : vector<8x256xf32>
    %1170 = arith.addf %1135, %1169 : vector<8x256xf32>
    %1171 = vector.broadcast %118 : f32 to vector<8x256xf32>
    %1172 = arith.mulf %767, %1171 : vector<8x256xf32>
    %1173 = vector.broadcast %119 : f32 to vector<8x256xf32>
    %1174 = arith.mulf %769, %1173 : vector<8x256xf32>
    %1175 = arith.addf %1172, %1174 : vector<8x256xf32>
    %1176 = vector.broadcast %120 : f32 to vector<8x256xf32>
    %1177 = arith.mulf %771, %1176 : vector<8x256xf32>
    %1178 = arith.addf %1175, %1177 : vector<8x256xf32>
    %1179 = vector.broadcast %121 : f32 to vector<8x256xf32>
    %1180 = arith.mulf %773, %1179 : vector<8x256xf32>
    %1181 = arith.addf %1178, %1180 : vector<8x256xf32>
    %1182 = vector.broadcast %122 : f32 to vector<8x256xf32>
    %1183 = arith.mulf %775, %1182 : vector<8x256xf32>
    %1184 = arith.addf %1181, %1183 : vector<8x256xf32>
    %1185 = vector.broadcast %123 : f32 to vector<8x256xf32>
    %1186 = arith.mulf %777, %1185 : vector<8x256xf32>
    %1187 = arith.addf %1184, %1186 : vector<8x256xf32>
    %1188 = vector.broadcast %124 : f32 to vector<8x256xf32>
    %1189 = arith.mulf %779, %1188 : vector<8x256xf32>
    %1190 = arith.addf %1187, %1189 : vector<8x256xf32>
    %1191 = vector.broadcast %125 : f32 to vector<8x256xf32>
    %1192 = arith.mulf %781, %1191 : vector<8x256xf32>
    %1193 = arith.addf %1190, %1192 : vector<8x256xf32>
    %1194 = vector.broadcast %126 : f32 to vector<8x256xf32>
    %1195 = arith.mulf %783, %1194 : vector<8x256xf32>
    %1196 = arith.addf %1193, %1195 : vector<8x256xf32>
    %1197 = vector.broadcast %174 : f32 to vector<8x256xf32>
    %1198 = arith.addf %1196, %1197 : vector<8x256xf32>
    %cst_88 = arith.constant 0.00999999977 : f32
    %1199 = vector.broadcast %cst_88 : f32 to vector<8x256xf32>
    %1200 = arith.mulf %1199, %1198 : vector<8x256xf32>
    %1201 = arith.maximumf %1198, %1200 : vector<8x256xf32>
    %1202 = vector.extract_strided_slice %784 {offsets = [11, 0], sizes = [1, 256], strides = [1, 1]} : vector<16x256xf32> to vector<1x256xf32>
    %1203 = vector.broadcast %1202 : vector<1x256xf32> to vector<8x256xf32>
    %1204 = arith.mulf %1201, %1203 : vector<8x256xf32>
    %1205 = arith.addf %1170, %1204 : vector<8x256xf32>
    %1206 = vector.broadcast %127 : f32 to vector<8x256xf32>
    %1207 = arith.mulf %767, %1206 : vector<8x256xf32>
    %1208 = vector.broadcast %128 : f32 to vector<8x256xf32>
    %1209 = arith.mulf %769, %1208 : vector<8x256xf32>
    %1210 = arith.addf %1207, %1209 : vector<8x256xf32>
    %1211 = vector.broadcast %129 : f32 to vector<8x256xf32>
    %1212 = arith.mulf %771, %1211 : vector<8x256xf32>
    %1213 = arith.addf %1210, %1212 : vector<8x256xf32>
    %1214 = vector.broadcast %130 : f32 to vector<8x256xf32>
    %1215 = arith.mulf %773, %1214 : vector<8x256xf32>
    %1216 = arith.addf %1213, %1215 : vector<8x256xf32>
    %1217 = vector.broadcast %131 : f32 to vector<8x256xf32>
    %1218 = arith.mulf %775, %1217 : vector<8x256xf32>
    %1219 = arith.addf %1216, %1218 : vector<8x256xf32>
    %1220 = vector.broadcast %132 : f32 to vector<8x256xf32>
    %1221 = arith.mulf %777, %1220 : vector<8x256xf32>
    %1222 = arith.addf %1219, %1221 : vector<8x256xf32>
    %1223 = vector.broadcast %133 : f32 to vector<8x256xf32>
    %1224 = arith.mulf %779, %1223 : vector<8x256xf32>
    %1225 = arith.addf %1222, %1224 : vector<8x256xf32>
    %1226 = vector.broadcast %134 : f32 to vector<8x256xf32>
    %1227 = arith.mulf %781, %1226 : vector<8x256xf32>
    %1228 = arith.addf %1225, %1227 : vector<8x256xf32>
    %1229 = vector.broadcast %135 : f32 to vector<8x256xf32>
    %1230 = arith.mulf %783, %1229 : vector<8x256xf32>
    %1231 = arith.addf %1228, %1230 : vector<8x256xf32>
    %1232 = vector.broadcast %175 : f32 to vector<8x256xf32>
    %1233 = arith.addf %1231, %1232 : vector<8x256xf32>
    %cst_89 = arith.constant 0.00999999977 : f32
    %1234 = vector.broadcast %cst_89 : f32 to vector<8x256xf32>
    %1235 = arith.mulf %1234, %1233 : vector<8x256xf32>
    %1236 = arith.maximumf %1233, %1235 : vector<8x256xf32>
    %1237 = vector.extract_strided_slice %784 {offsets = [12, 0], sizes = [1, 256], strides = [1, 1]} : vector<16x256xf32> to vector<1x256xf32>
    %1238 = vector.broadcast %1237 : vector<1x256xf32> to vector<8x256xf32>
    %1239 = arith.mulf %1236, %1238 : vector<8x256xf32>
    %1240 = arith.addf %1205, %1239 : vector<8x256xf32>
    %1241 = vector.broadcast %136 : f32 to vector<8x256xf32>
    %1242 = arith.mulf %767, %1241 : vector<8x256xf32>
    %1243 = vector.broadcast %137 : f32 to vector<8x256xf32>
    %1244 = arith.mulf %769, %1243 : vector<8x256xf32>
    %1245 = arith.addf %1242, %1244 : vector<8x256xf32>
    %1246 = vector.broadcast %138 : f32 to vector<8x256xf32>
    %1247 = arith.mulf %771, %1246 : vector<8x256xf32>
    %1248 = arith.addf %1245, %1247 : vector<8x256xf32>
    %1249 = vector.broadcast %139 : f32 to vector<8x256xf32>
    %1250 = arith.mulf %773, %1249 : vector<8x256xf32>
    %1251 = arith.addf %1248, %1250 : vector<8x256xf32>
    %1252 = vector.broadcast %140 : f32 to vector<8x256xf32>
    %1253 = arith.mulf %775, %1252 : vector<8x256xf32>
    %1254 = arith.addf %1251, %1253 : vector<8x256xf32>
    %1255 = vector.broadcast %141 : f32 to vector<8x256xf32>
    %1256 = arith.mulf %777, %1255 : vector<8x256xf32>
    %1257 = arith.addf %1254, %1256 : vector<8x256xf32>
    %1258 = vector.broadcast %142 : f32 to vector<8x256xf32>
    %1259 = arith.mulf %779, %1258 : vector<8x256xf32>
    %1260 = arith.addf %1257, %1259 : vector<8x256xf32>
    %1261 = vector.broadcast %143 : f32 to vector<8x256xf32>
    %1262 = arith.mulf %781, %1261 : vector<8x256xf32>
    %1263 = arith.addf %1260, %1262 : vector<8x256xf32>
    %1264 = vector.broadcast %144 : f32 to vector<8x256xf32>
    %1265 = arith.mulf %783, %1264 : vector<8x256xf32>
    %1266 = arith.addf %1263, %1265 : vector<8x256xf32>
    %1267 = vector.broadcast %176 : f32 to vector<8x256xf32>
    %1268 = arith.addf %1266, %1267 : vector<8x256xf32>
    %cst_90 = arith.constant 0.00999999977 : f32
    %1269 = vector.broadcast %cst_90 : f32 to vector<8x256xf32>
    %1270 = arith.mulf %1269, %1268 : vector<8x256xf32>
    %1271 = arith.maximumf %1268, %1270 : vector<8x256xf32>
    %1272 = vector.extract_strided_slice %784 {offsets = [13, 0], sizes = [1, 256], strides = [1, 1]} : vector<16x256xf32> to vector<1x256xf32>
    %1273 = vector.broadcast %1272 : vector<1x256xf32> to vector<8x256xf32>
    %1274 = arith.mulf %1271, %1273 : vector<8x256xf32>
    %1275 = arith.addf %1240, %1274 : vector<8x256xf32>
    %1276 = vector.broadcast %145 : f32 to vector<8x256xf32>
    %1277 = arith.mulf %767, %1276 : vector<8x256xf32>
    %1278 = vector.broadcast %146 : f32 to vector<8x256xf32>
    %1279 = arith.mulf %769, %1278 : vector<8x256xf32>
    %1280 = arith.addf %1277, %1279 : vector<8x256xf32>
    %1281 = vector.broadcast %147 : f32 to vector<8x256xf32>
    %1282 = arith.mulf %771, %1281 : vector<8x256xf32>
    %1283 = arith.addf %1280, %1282 : vector<8x256xf32>
    %1284 = vector.broadcast %148 : f32 to vector<8x256xf32>
    %1285 = arith.mulf %773, %1284 : vector<8x256xf32>
    %1286 = arith.addf %1283, %1285 : vector<8x256xf32>
    %1287 = vector.broadcast %149 : f32 to vector<8x256xf32>
    %1288 = arith.mulf %775, %1287 : vector<8x256xf32>
    %1289 = arith.addf %1286, %1288 : vector<8x256xf32>
    %1290 = vector.broadcast %150 : f32 to vector<8x256xf32>
    %1291 = arith.mulf %777, %1290 : vector<8x256xf32>
    %1292 = arith.addf %1289, %1291 : vector<8x256xf32>
    %1293 = vector.broadcast %151 : f32 to vector<8x256xf32>
    %1294 = arith.mulf %779, %1293 : vector<8x256xf32>
    %1295 = arith.addf %1292, %1294 : vector<8x256xf32>
    %1296 = vector.broadcast %152 : f32 to vector<8x256xf32>
    %1297 = arith.mulf %781, %1296 : vector<8x256xf32>
    %1298 = arith.addf %1295, %1297 : vector<8x256xf32>
    %1299 = vector.broadcast %153 : f32 to vector<8x256xf32>
    %1300 = arith.mulf %783, %1299 : vector<8x256xf32>
    %1301 = arith.addf %1298, %1300 : vector<8x256xf32>
    %1302 = vector.broadcast %177 : f32 to vector<8x256xf32>
    %1303 = arith.addf %1301, %1302 : vector<8x256xf32>
    %cst_91 = arith.constant 0.00999999977 : f32
    %1304 = vector.broadcast %cst_91 : f32 to vector<8x256xf32>
    %1305 = arith.mulf %1304, %1303 : vector<8x256xf32>
    %1306 = arith.maximumf %1303, %1305 : vector<8x256xf32>
    %1307 = vector.extract_strided_slice %784 {offsets = [14, 0], sizes = [1, 256], strides = [1, 1]} : vector<16x256xf32> to vector<1x256xf32>
    %1308 = vector.broadcast %1307 : vector<1x256xf32> to vector<8x256xf32>
    %1309 = arith.mulf %1306, %1308 : vector<8x256xf32>
    %1310 = arith.addf %1275, %1309 : vector<8x256xf32>
    %1311 = vector.broadcast %154 : f32 to vector<8x256xf32>
    %1312 = arith.mulf %767, %1311 : vector<8x256xf32>
    %1313 = vector.broadcast %155 : f32 to vector<8x256xf32>
    %1314 = arith.mulf %769, %1313 : vector<8x256xf32>
    %1315 = arith.addf %1312, %1314 : vector<8x256xf32>
    %1316 = vector.broadcast %156 : f32 to vector<8x256xf32>
    %1317 = arith.mulf %771, %1316 : vector<8x256xf32>
    %1318 = arith.addf %1315, %1317 : vector<8x256xf32>
    %1319 = vector.broadcast %157 : f32 to vector<8x256xf32>
    %1320 = arith.mulf %773, %1319 : vector<8x256xf32>
    %1321 = arith.addf %1318, %1320 : vector<8x256xf32>
    %1322 = vector.broadcast %158 : f32 to vector<8x256xf32>
    %1323 = arith.mulf %775, %1322 : vector<8x256xf32>
    %1324 = arith.addf %1321, %1323 : vector<8x256xf32>
    %1325 = vector.broadcast %159 : f32 to vector<8x256xf32>
    %1326 = arith.mulf %777, %1325 : vector<8x256xf32>
    %1327 = arith.addf %1324, %1326 : vector<8x256xf32>
    %1328 = vector.broadcast %160 : f32 to vector<8x256xf32>
    %1329 = arith.mulf %779, %1328 : vector<8x256xf32>
    %1330 = arith.addf %1327, %1329 : vector<8x256xf32>
    %1331 = vector.broadcast %161 : f32 to vector<8x256xf32>
    %1332 = arith.mulf %781, %1331 : vector<8x256xf32>
    %1333 = arith.addf %1330, %1332 : vector<8x256xf32>
    %1334 = vector.broadcast %162 : f32 to vector<8x256xf32>
    %1335 = arith.mulf %783, %1334 : vector<8x256xf32>
    %1336 = arith.addf %1333, %1335 : vector<8x256xf32>
    %1337 = vector.broadcast %178 : f32 to vector<8x256xf32>
    %1338 = arith.addf %1336, %1337 : vector<8x256xf32>
    %cst_92 = arith.constant 0.00999999977 : f32
    %1339 = vector.broadcast %cst_92 : f32 to vector<8x256xf32>
    %1340 = arith.mulf %1339, %1338 : vector<8x256xf32>
    %1341 = arith.maximumf %1338, %1340 : vector<8x256xf32>
    %1342 = vector.extract_strided_slice %784 {offsets = [15, 0], sizes = [1, 256], strides = [1, 1]} : vector<16x256xf32> to vector<1x256xf32>
    %1343 = vector.broadcast %1342 : vector<1x256xf32> to vector<8x256xf32>
    %1344 = arith.mulf %1341, %1343 : vector<8x256xf32>
    %1345 = arith.addf %1310, %1344 : vector<8x256xf32>
    %cst_93 = arith.constant dense<0.000000e+00> : vector<8xf32>
    %1346 = vector.multi_reduction <add>, %1345, %cst_93 [1] : vector<8x256xf32> to vector<8xf32>
    %1347 = vector.shape_cast %1346 : vector<8xf32> to vector<8x1xf32>
    %1348 = arith.addf %765, %1347 : vector<8x1xf32>
    %1349 = arith.index_cast %181 : i32 to index
    %c512 = arith.constant 512 : index
    %1350 = vector.load %arg7[%1349, %c512] : memref<8x896xf32, #tpu.memory_space<vmem>>, vector<8x256xf32>
    %1351 = arith.index_cast %181 : i32 to index
    %c512_94 = arith.constant 512 : index
    %1352 = vector.load %arg8[%1351, %c512_94] : memref<8x896xf32, #tpu.memory_space<vmem>>, vector<8x256xf32>
    %1353 = arith.index_cast %181 : i32 to index
    %c512_95 = arith.constant 512 : index
    %1354 = vector.load %arg9[%1353, %c512_95] : memref<8x896xf32, #tpu.memory_space<vmem>>, vector<8x256xf32>
    %1355 = arith.index_cast %181 : i32 to index
    %c512_96 = arith.constant 512 : index
    %1356 = vector.load %arg10[%1355, %c512_96] : memref<8x896xf32, #tpu.memory_space<vmem>>, vector<8x256xf32>
    %1357 = arith.index_cast %181 : i32 to index
    %c512_97 = arith.constant 512 : index
    %1358 = vector.load %arg11[%1357, %c512_97] : memref<8x896xf32, #tpu.memory_space<vmem>>, vector<8x256xf32>
    %1359 = arith.index_cast %181 : i32 to index
    %c512_98 = arith.constant 512 : index
    %1360 = vector.load %arg12[%1359, %c512_98] : memref<8x896xf32, #tpu.memory_space<vmem>>, vector<8x256xf32>
    %1361 = arith.index_cast %181 : i32 to index
    %c512_99 = arith.constant 512 : index
    %1362 = vector.load %arg13[%1361, %c512_99] : memref<8x896xf32, #tpu.memory_space<vmem>>, vector<8x256xf32>
    %1363 = arith.index_cast %181 : i32 to index
    %c512_100 = arith.constant 512 : index
    %1364 = vector.load %arg14[%1363, %c512_100] : memref<8x896xf32, #tpu.memory_space<vmem>>, vector<8x256xf32>
    %1365 = arith.index_cast %181 : i32 to index
    %c512_101 = arith.constant 512 : index
    %1366 = vector.load %arg15[%1365, %c512_101] : memref<8x896xf32, #tpu.memory_space<vmem>>, vector<8x256xf32>
    %c0_102 = arith.constant 0 : index
    %c512_103 = arith.constant 512 : index
    %1367 = vector.load %arg2[%c0_102, %c512_103] : memref<16x896xf32, #tpu.memory_space<vmem>>, vector<16x256xf32>
    %cst_104 = arith.constant 0.000000e+00 : f32
    %1368 = vector.broadcast %cst_104 : f32 to vector<8x256xf32>
    %1369 = vector.broadcast %19 : f32 to vector<8x256xf32>
    %1370 = arith.mulf %1350, %1369 : vector<8x256xf32>
    %1371 = vector.broadcast %20 : f32 to vector<8x256xf32>
    %1372 = arith.mulf %1352, %1371 : vector<8x256xf32>
    %1373 = arith.addf %1370, %1372 : vector<8x256xf32>
    %1374 = vector.broadcast %21 : f32 to vector<8x256xf32>
    %1375 = arith.mulf %1354, %1374 : vector<8x256xf32>
    %1376 = arith.addf %1373, %1375 : vector<8x256xf32>
    %1377 = vector.broadcast %22 : f32 to vector<8x256xf32>
    %1378 = arith.mulf %1356, %1377 : vector<8x256xf32>
    %1379 = arith.addf %1376, %1378 : vector<8x256xf32>
    %1380 = vector.broadcast %23 : f32 to vector<8x256xf32>
    %1381 = arith.mulf %1358, %1380 : vector<8x256xf32>
    %1382 = arith.addf %1379, %1381 : vector<8x256xf32>
    %1383 = vector.broadcast %24 : f32 to vector<8x256xf32>
    %1384 = arith.mulf %1360, %1383 : vector<8x256xf32>
    %1385 = arith.addf %1382, %1384 : vector<8x256xf32>
    %1386 = vector.broadcast %25 : f32 to vector<8x256xf32>
    %1387 = arith.mulf %1362, %1386 : vector<8x256xf32>
    %1388 = arith.addf %1385, %1387 : vector<8x256xf32>
    %1389 = vector.broadcast %26 : f32 to vector<8x256xf32>
    %1390 = arith.mulf %1364, %1389 : vector<8x256xf32>
    %1391 = arith.addf %1388, %1390 : vector<8x256xf32>
    %1392 = vector.broadcast %27 : f32 to vector<8x256xf32>
    %1393 = arith.mulf %1366, %1392 : vector<8x256xf32>
    %1394 = arith.addf %1391, %1393 : vector<8x256xf32>
    %1395 = vector.broadcast %163 : f32 to vector<8x256xf32>
    %1396 = arith.addf %1394, %1395 : vector<8x256xf32>
    %cst_105 = arith.constant 0.00999999977 : f32
    %1397 = vector.broadcast %cst_105 : f32 to vector<8x256xf32>
    %1398 = arith.mulf %1397, %1396 : vector<8x256xf32>
    %1399 = arith.maximumf %1396, %1398 : vector<8x256xf32>
    %1400 = vector.extract_strided_slice %1367 {offsets = [0, 0], sizes = [1, 256], strides = [1, 1]} : vector<16x256xf32> to vector<1x256xf32>
    %1401 = vector.broadcast %1400 : vector<1x256xf32> to vector<8x256xf32>
    %1402 = arith.mulf %1399, %1401 : vector<8x256xf32>
    %1403 = arith.addf %1368, %1402 : vector<8x256xf32>
    %1404 = vector.broadcast %28 : f32 to vector<8x256xf32>
    %1405 = arith.mulf %1350, %1404 : vector<8x256xf32>
    %1406 = vector.broadcast %29 : f32 to vector<8x256xf32>
    %1407 = arith.mulf %1352, %1406 : vector<8x256xf32>
    %1408 = arith.addf %1405, %1407 : vector<8x256xf32>
    %1409 = vector.broadcast %30 : f32 to vector<8x256xf32>
    %1410 = arith.mulf %1354, %1409 : vector<8x256xf32>
    %1411 = arith.addf %1408, %1410 : vector<8x256xf32>
    %1412 = vector.broadcast %31 : f32 to vector<8x256xf32>
    %1413 = arith.mulf %1356, %1412 : vector<8x256xf32>
    %1414 = arith.addf %1411, %1413 : vector<8x256xf32>
    %1415 = vector.broadcast %32 : f32 to vector<8x256xf32>
    %1416 = arith.mulf %1358, %1415 : vector<8x256xf32>
    %1417 = arith.addf %1414, %1416 : vector<8x256xf32>
    %1418 = vector.broadcast %33 : f32 to vector<8x256xf32>
    %1419 = arith.mulf %1360, %1418 : vector<8x256xf32>
    %1420 = arith.addf %1417, %1419 : vector<8x256xf32>
    %1421 = vector.broadcast %34 : f32 to vector<8x256xf32>
    %1422 = arith.mulf %1362, %1421 : vector<8x256xf32>
    %1423 = arith.addf %1420, %1422 : vector<8x256xf32>
    %1424 = vector.broadcast %35 : f32 to vector<8x256xf32>
    %1425 = arith.mulf %1364, %1424 : vector<8x256xf32>
    %1426 = arith.addf %1423, %1425 : vector<8x256xf32>
    %1427 = vector.broadcast %36 : f32 to vector<8x256xf32>
    %1428 = arith.mulf %1366, %1427 : vector<8x256xf32>
    %1429 = arith.addf %1426, %1428 : vector<8x256xf32>
    %1430 = vector.broadcast %164 : f32 to vector<8x256xf32>
    %1431 = arith.addf %1429, %1430 : vector<8x256xf32>
    %cst_106 = arith.constant 0.00999999977 : f32
    %1432 = vector.broadcast %cst_106 : f32 to vector<8x256xf32>
    %1433 = arith.mulf %1432, %1431 : vector<8x256xf32>
    %1434 = arith.maximumf %1431, %1433 : vector<8x256xf32>
    %1435 = vector.extract_strided_slice %1367 {offsets = [1, 0], sizes = [1, 256], strides = [1, 1]} : vector<16x256xf32> to vector<1x256xf32>
    %1436 = vector.broadcast %1435 : vector<1x256xf32> to vector<8x256xf32>
    %1437 = arith.mulf %1434, %1436 : vector<8x256xf32>
    %1438 = arith.addf %1403, %1437 : vector<8x256xf32>
    %1439 = vector.broadcast %37 : f32 to vector<8x256xf32>
    %1440 = arith.mulf %1350, %1439 : vector<8x256xf32>
    %1441 = vector.broadcast %38 : f32 to vector<8x256xf32>
    %1442 = arith.mulf %1352, %1441 : vector<8x256xf32>
    %1443 = arith.addf %1440, %1442 : vector<8x256xf32>
    %1444 = vector.broadcast %39 : f32 to vector<8x256xf32>
    %1445 = arith.mulf %1354, %1444 : vector<8x256xf32>
    %1446 = arith.addf %1443, %1445 : vector<8x256xf32>
    %1447 = vector.broadcast %40 : f32 to vector<8x256xf32>
    %1448 = arith.mulf %1356, %1447 : vector<8x256xf32>
    %1449 = arith.addf %1446, %1448 : vector<8x256xf32>
    %1450 = vector.broadcast %41 : f32 to vector<8x256xf32>
    %1451 = arith.mulf %1358, %1450 : vector<8x256xf32>
    %1452 = arith.addf %1449, %1451 : vector<8x256xf32>
    %1453 = vector.broadcast %42 : f32 to vector<8x256xf32>
    %1454 = arith.mulf %1360, %1453 : vector<8x256xf32>
    %1455 = arith.addf %1452, %1454 : vector<8x256xf32>
    %1456 = vector.broadcast %43 : f32 to vector<8x256xf32>
    %1457 = arith.mulf %1362, %1456 : vector<8x256xf32>
    %1458 = arith.addf %1455, %1457 : vector<8x256xf32>
    %1459 = vector.broadcast %44 : f32 to vector<8x256xf32>
    %1460 = arith.mulf %1364, %1459 : vector<8x256xf32>
    %1461 = arith.addf %1458, %1460 : vector<8x256xf32>
    %1462 = vector.broadcast %45 : f32 to vector<8x256xf32>
    %1463 = arith.mulf %1366, %1462 : vector<8x256xf32>
    %1464 = arith.addf %1461, %1463 : vector<8x256xf32>
    %1465 = vector.broadcast %165 : f32 to vector<8x256xf32>
    %1466 = arith.addf %1464, %1465 : vector<8x256xf32>
    %cst_107 = arith.constant 0.00999999977 : f32
    %1467 = vector.broadcast %cst_107 : f32 to vector<8x256xf32>
    %1468 = arith.mulf %1467, %1466 : vector<8x256xf32>
    %1469 = arith.maximumf %1466, %1468 : vector<8x256xf32>
    %1470 = vector.extract_strided_slice %1367 {offsets = [2, 0], sizes = [1, 256], strides = [1, 1]} : vector<16x256xf32> to vector<1x256xf32>
    %1471 = vector.broadcast %1470 : vector<1x256xf32> to vector<8x256xf32>
    %1472 = arith.mulf %1469, %1471 : vector<8x256xf32>
    %1473 = arith.addf %1438, %1472 : vector<8x256xf32>
    %1474 = vector.broadcast %46 : f32 to vector<8x256xf32>
    %1475 = arith.mulf %1350, %1474 : vector<8x256xf32>
    %1476 = vector.broadcast %47 : f32 to vector<8x256xf32>
    %1477 = arith.mulf %1352, %1476 : vector<8x256xf32>
    %1478 = arith.addf %1475, %1477 : vector<8x256xf32>
    %1479 = vector.broadcast %48 : f32 to vector<8x256xf32>
    %1480 = arith.mulf %1354, %1479 : vector<8x256xf32>
    %1481 = arith.addf %1478, %1480 : vector<8x256xf32>
    %1482 = vector.broadcast %49 : f32 to vector<8x256xf32>
    %1483 = arith.mulf %1356, %1482 : vector<8x256xf32>
    %1484 = arith.addf %1481, %1483 : vector<8x256xf32>
    %1485 = vector.broadcast %50 : f32 to vector<8x256xf32>
    %1486 = arith.mulf %1358, %1485 : vector<8x256xf32>
    %1487 = arith.addf %1484, %1486 : vector<8x256xf32>
    %1488 = vector.broadcast %51 : f32 to vector<8x256xf32>
    %1489 = arith.mulf %1360, %1488 : vector<8x256xf32>
    %1490 = arith.addf %1487, %1489 : vector<8x256xf32>
    %1491 = vector.broadcast %52 : f32 to vector<8x256xf32>
    %1492 = arith.mulf %1362, %1491 : vector<8x256xf32>
    %1493 = arith.addf %1490, %1492 : vector<8x256xf32>
    %1494 = vector.broadcast %53 : f32 to vector<8x256xf32>
    %1495 = arith.mulf %1364, %1494 : vector<8x256xf32>
    %1496 = arith.addf %1493, %1495 : vector<8x256xf32>
    %1497 = vector.broadcast %54 : f32 to vector<8x256xf32>
    %1498 = arith.mulf %1366, %1497 : vector<8x256xf32>
    %1499 = arith.addf %1496, %1498 : vector<8x256xf32>
    %1500 = vector.broadcast %166 : f32 to vector<8x256xf32>
    %1501 = arith.addf %1499, %1500 : vector<8x256xf32>
    %cst_108 = arith.constant 0.00999999977 : f32
    %1502 = vector.broadcast %cst_108 : f32 to vector<8x256xf32>
    %1503 = arith.mulf %1502, %1501 : vector<8x256xf32>
    %1504 = arith.maximumf %1501, %1503 : vector<8x256xf32>
    %1505 = vector.extract_strided_slice %1367 {offsets = [3, 0], sizes = [1, 256], strides = [1, 1]} : vector<16x256xf32> to vector<1x256xf32>
    %1506 = vector.broadcast %1505 : vector<1x256xf32> to vector<8x256xf32>
    %1507 = arith.mulf %1504, %1506 : vector<8x256xf32>
    %1508 = arith.addf %1473, %1507 : vector<8x256xf32>
    %1509 = vector.broadcast %55 : f32 to vector<8x256xf32>
    %1510 = arith.mulf %1350, %1509 : vector<8x256xf32>
    %1511 = vector.broadcast %56 : f32 to vector<8x256xf32>
    %1512 = arith.mulf %1352, %1511 : vector<8x256xf32>
    %1513 = arith.addf %1510, %1512 : vector<8x256xf32>
    %1514 = vector.broadcast %57 : f32 to vector<8x256xf32>
    %1515 = arith.mulf %1354, %1514 : vector<8x256xf32>
    %1516 = arith.addf %1513, %1515 : vector<8x256xf32>
    %1517 = vector.broadcast %58 : f32 to vector<8x256xf32>
    %1518 = arith.mulf %1356, %1517 : vector<8x256xf32>
    %1519 = arith.addf %1516, %1518 : vector<8x256xf32>
    %1520 = vector.broadcast %59 : f32 to vector<8x256xf32>
    %1521 = arith.mulf %1358, %1520 : vector<8x256xf32>
    %1522 = arith.addf %1519, %1521 : vector<8x256xf32>
    %1523 = vector.broadcast %60 : f32 to vector<8x256xf32>
    %1524 = arith.mulf %1360, %1523 : vector<8x256xf32>
    %1525 = arith.addf %1522, %1524 : vector<8x256xf32>
    %1526 = vector.broadcast %61 : f32 to vector<8x256xf32>
    %1527 = arith.mulf %1362, %1526 : vector<8x256xf32>
    %1528 = arith.addf %1525, %1527 : vector<8x256xf32>
    %1529 = vector.broadcast %62 : f32 to vector<8x256xf32>
    %1530 = arith.mulf %1364, %1529 : vector<8x256xf32>
    %1531 = arith.addf %1528, %1530 : vector<8x256xf32>
    %1532 = vector.broadcast %63 : f32 to vector<8x256xf32>
    %1533 = arith.mulf %1366, %1532 : vector<8x256xf32>
    %1534 = arith.addf %1531, %1533 : vector<8x256xf32>
    %1535 = vector.broadcast %167 : f32 to vector<8x256xf32>
    %1536 = arith.addf %1534, %1535 : vector<8x256xf32>
    %cst_109 = arith.constant 0.00999999977 : f32
    %1537 = vector.broadcast %cst_109 : f32 to vector<8x256xf32>
    %1538 = arith.mulf %1537, %1536 : vector<8x256xf32>
    %1539 = arith.maximumf %1536, %1538 : vector<8x256xf32>
    %1540 = vector.extract_strided_slice %1367 {offsets = [4, 0], sizes = [1, 256], strides = [1, 1]} : vector<16x256xf32> to vector<1x256xf32>
    %1541 = vector.broadcast %1540 : vector<1x256xf32> to vector<8x256xf32>
    %1542 = arith.mulf %1539, %1541 : vector<8x256xf32>
    %1543 = arith.addf %1508, %1542 : vector<8x256xf32>
    %1544 = vector.broadcast %64 : f32 to vector<8x256xf32>
    %1545 = arith.mulf %1350, %1544 : vector<8x256xf32>
    %1546 = vector.broadcast %65 : f32 to vector<8x256xf32>
    %1547 = arith.mulf %1352, %1546 : vector<8x256xf32>
    %1548 = arith.addf %1545, %1547 : vector<8x256xf32>
    %1549 = vector.broadcast %66 : f32 to vector<8x256xf32>
    %1550 = arith.mulf %1354, %1549 : vector<8x256xf32>
    %1551 = arith.addf %1548, %1550 : vector<8x256xf32>
    %1552 = vector.broadcast %67 : f32 to vector<8x256xf32>
    %1553 = arith.mulf %1356, %1552 : vector<8x256xf32>
    %1554 = arith.addf %1551, %1553 : vector<8x256xf32>
    %1555 = vector.broadcast %68 : f32 to vector<8x256xf32>
    %1556 = arith.mulf %1358, %1555 : vector<8x256xf32>
    %1557 = arith.addf %1554, %1556 : vector<8x256xf32>
    %1558 = vector.broadcast %69 : f32 to vector<8x256xf32>
    %1559 = arith.mulf %1360, %1558 : vector<8x256xf32>
    %1560 = arith.addf %1557, %1559 : vector<8x256xf32>
    %1561 = vector.broadcast %70 : f32 to vector<8x256xf32>
    %1562 = arith.mulf %1362, %1561 : vector<8x256xf32>
    %1563 = arith.addf %1560, %1562 : vector<8x256xf32>
    %1564 = vector.broadcast %71 : f32 to vector<8x256xf32>
    %1565 = arith.mulf %1364, %1564 : vector<8x256xf32>
    %1566 = arith.addf %1563, %1565 : vector<8x256xf32>
    %1567 = vector.broadcast %72 : f32 to vector<8x256xf32>
    %1568 = arith.mulf %1366, %1567 : vector<8x256xf32>
    %1569 = arith.addf %1566, %1568 : vector<8x256xf32>
    %1570 = vector.broadcast %168 : f32 to vector<8x256xf32>
    %1571 = arith.addf %1569, %1570 : vector<8x256xf32>
    %cst_110 = arith.constant 0.00999999977 : f32
    %1572 = vector.broadcast %cst_110 : f32 to vector<8x256xf32>
    %1573 = arith.mulf %1572, %1571 : vector<8x256xf32>
    %1574 = arith.maximumf %1571, %1573 : vector<8x256xf32>
    %1575 = vector.extract_strided_slice %1367 {offsets = [5, 0], sizes = [1, 256], strides = [1, 1]} : vector<16x256xf32> to vector<1x256xf32>
    %1576 = vector.broadcast %1575 : vector<1x256xf32> to vector<8x256xf32>
    %1577 = arith.mulf %1574, %1576 : vector<8x256xf32>
    %1578 = arith.addf %1543, %1577 : vector<8x256xf32>
    %1579 = vector.broadcast %73 : f32 to vector<8x256xf32>
    %1580 = arith.mulf %1350, %1579 : vector<8x256xf32>
    %1581 = vector.broadcast %74 : f32 to vector<8x256xf32>
    %1582 = arith.mulf %1352, %1581 : vector<8x256xf32>
    %1583 = arith.addf %1580, %1582 : vector<8x256xf32>
    %1584 = vector.broadcast %75 : f32 to vector<8x256xf32>
    %1585 = arith.mulf %1354, %1584 : vector<8x256xf32>
    %1586 = arith.addf %1583, %1585 : vector<8x256xf32>
    %1587 = vector.broadcast %76 : f32 to vector<8x256xf32>
    %1588 = arith.mulf %1356, %1587 : vector<8x256xf32>
    %1589 = arith.addf %1586, %1588 : vector<8x256xf32>
    %1590 = vector.broadcast %77 : f32 to vector<8x256xf32>
    %1591 = arith.mulf %1358, %1590 : vector<8x256xf32>
    %1592 = arith.addf %1589, %1591 : vector<8x256xf32>
    %1593 = vector.broadcast %78 : f32 to vector<8x256xf32>
    %1594 = arith.mulf %1360, %1593 : vector<8x256xf32>
    %1595 = arith.addf %1592, %1594 : vector<8x256xf32>
    %1596 = vector.broadcast %79 : f32 to vector<8x256xf32>
    %1597 = arith.mulf %1362, %1596 : vector<8x256xf32>
    %1598 = arith.addf %1595, %1597 : vector<8x256xf32>
    %1599 = vector.broadcast %80 : f32 to vector<8x256xf32>
    %1600 = arith.mulf %1364, %1599 : vector<8x256xf32>
    %1601 = arith.addf %1598, %1600 : vector<8x256xf32>
    %1602 = vector.broadcast %81 : f32 to vector<8x256xf32>
    %1603 = arith.mulf %1366, %1602 : vector<8x256xf32>
    %1604 = arith.addf %1601, %1603 : vector<8x256xf32>
    %1605 = vector.broadcast %169 : f32 to vector<8x256xf32>
    %1606 = arith.addf %1604, %1605 : vector<8x256xf32>
    %cst_111 = arith.constant 0.00999999977 : f32
    %1607 = vector.broadcast %cst_111 : f32 to vector<8x256xf32>
    %1608 = arith.mulf %1607, %1606 : vector<8x256xf32>
    %1609 = arith.maximumf %1606, %1608 : vector<8x256xf32>
    %1610 = vector.extract_strided_slice %1367 {offsets = [6, 0], sizes = [1, 256], strides = [1, 1]} : vector<16x256xf32> to vector<1x256xf32>
    %1611 = vector.broadcast %1610 : vector<1x256xf32> to vector<8x256xf32>
    %1612 = arith.mulf %1609, %1611 : vector<8x256xf32>
    %1613 = arith.addf %1578, %1612 : vector<8x256xf32>
    %1614 = vector.broadcast %82 : f32 to vector<8x256xf32>
    %1615 = arith.mulf %1350, %1614 : vector<8x256xf32>
    %1616 = vector.broadcast %83 : f32 to vector<8x256xf32>
    %1617 = arith.mulf %1352, %1616 : vector<8x256xf32>
    %1618 = arith.addf %1615, %1617 : vector<8x256xf32>
    %1619 = vector.broadcast %84 : f32 to vector<8x256xf32>
    %1620 = arith.mulf %1354, %1619 : vector<8x256xf32>
    %1621 = arith.addf %1618, %1620 : vector<8x256xf32>
    %1622 = vector.broadcast %85 : f32 to vector<8x256xf32>
    %1623 = arith.mulf %1356, %1622 : vector<8x256xf32>
    %1624 = arith.addf %1621, %1623 : vector<8x256xf32>
    %1625 = vector.broadcast %86 : f32 to vector<8x256xf32>
    %1626 = arith.mulf %1358, %1625 : vector<8x256xf32>
    %1627 = arith.addf %1624, %1626 : vector<8x256xf32>
    %1628 = vector.broadcast %87 : f32 to vector<8x256xf32>
    %1629 = arith.mulf %1360, %1628 : vector<8x256xf32>
    %1630 = arith.addf %1627, %1629 : vector<8x256xf32>
    %1631 = vector.broadcast %88 : f32 to vector<8x256xf32>
    %1632 = arith.mulf %1362, %1631 : vector<8x256xf32>
    %1633 = arith.addf %1630, %1632 : vector<8x256xf32>
    %1634 = vector.broadcast %89 : f32 to vector<8x256xf32>
    %1635 = arith.mulf %1364, %1634 : vector<8x256xf32>
    %1636 = arith.addf %1633, %1635 : vector<8x256xf32>
    %1637 = vector.broadcast %90 : f32 to vector<8x256xf32>
    %1638 = arith.mulf %1366, %1637 : vector<8x256xf32>
    %1639 = arith.addf %1636, %1638 : vector<8x256xf32>
    %1640 = vector.broadcast %170 : f32 to vector<8x256xf32>
    %1641 = arith.addf %1639, %1640 : vector<8x256xf32>
    %cst_112 = arith.constant 0.00999999977 : f32
    %1642 = vector.broadcast %cst_112 : f32 to vector<8x256xf32>
    %1643 = arith.mulf %1642, %1641 : vector<8x256xf32>
    %1644 = arith.maximumf %1641, %1643 : vector<8x256xf32>
    %1645 = vector.extract_strided_slice %1367 {offsets = [7, 0], sizes = [1, 256], strides = [1, 1]} : vector<16x256xf32> to vector<1x256xf32>
    %1646 = vector.broadcast %1645 : vector<1x256xf32> to vector<8x256xf32>
    %1647 = arith.mulf %1644, %1646 : vector<8x256xf32>
    %1648 = arith.addf %1613, %1647 : vector<8x256xf32>
    %1649 = vector.broadcast %91 : f32 to vector<8x256xf32>
    %1650 = arith.mulf %1350, %1649 : vector<8x256xf32>
    %1651 = vector.broadcast %92 : f32 to vector<8x256xf32>
    %1652 = arith.mulf %1352, %1651 : vector<8x256xf32>
    %1653 = arith.addf %1650, %1652 : vector<8x256xf32>
    %1654 = vector.broadcast %93 : f32 to vector<8x256xf32>
    %1655 = arith.mulf %1354, %1654 : vector<8x256xf32>
    %1656 = arith.addf %1653, %1655 : vector<8x256xf32>
    %1657 = vector.broadcast %94 : f32 to vector<8x256xf32>
    %1658 = arith.mulf %1356, %1657 : vector<8x256xf32>
    %1659 = arith.addf %1656, %1658 : vector<8x256xf32>
    %1660 = vector.broadcast %95 : f32 to vector<8x256xf32>
    %1661 = arith.mulf %1358, %1660 : vector<8x256xf32>
    %1662 = arith.addf %1659, %1661 : vector<8x256xf32>
    %1663 = vector.broadcast %96 : f32 to vector<8x256xf32>
    %1664 = arith.mulf %1360, %1663 : vector<8x256xf32>
    %1665 = arith.addf %1662, %1664 : vector<8x256xf32>
    %1666 = vector.broadcast %97 : f32 to vector<8x256xf32>
    %1667 = arith.mulf %1362, %1666 : vector<8x256xf32>
    %1668 = arith.addf %1665, %1667 : vector<8x256xf32>
    %1669 = vector.broadcast %98 : f32 to vector<8x256xf32>
    %1670 = arith.mulf %1364, %1669 : vector<8x256xf32>
    %1671 = arith.addf %1668, %1670 : vector<8x256xf32>
    %1672 = vector.broadcast %99 : f32 to vector<8x256xf32>
    %1673 = arith.mulf %1366, %1672 : vector<8x256xf32>
    %1674 = arith.addf %1671, %1673 : vector<8x256xf32>
    %1675 = vector.broadcast %171 : f32 to vector<8x256xf32>
    %1676 = arith.addf %1674, %1675 : vector<8x256xf32>
    %cst_113 = arith.constant 0.00999999977 : f32
    %1677 = vector.broadcast %cst_113 : f32 to vector<8x256xf32>
    %1678 = arith.mulf %1677, %1676 : vector<8x256xf32>
    %1679 = arith.maximumf %1676, %1678 : vector<8x256xf32>
    %1680 = vector.extract_strided_slice %1367 {offsets = [8, 0], sizes = [1, 256], strides = [1, 1]} : vector<16x256xf32> to vector<1x256xf32>
    %1681 = vector.broadcast %1680 : vector<1x256xf32> to vector<8x256xf32>
    %1682 = arith.mulf %1679, %1681 : vector<8x256xf32>
    %1683 = arith.addf %1648, %1682 : vector<8x256xf32>
    %1684 = vector.broadcast %100 : f32 to vector<8x256xf32>
    %1685 = arith.mulf %1350, %1684 : vector<8x256xf32>
    %1686 = vector.broadcast %101 : f32 to vector<8x256xf32>
    %1687 = arith.mulf %1352, %1686 : vector<8x256xf32>
    %1688 = arith.addf %1685, %1687 : vector<8x256xf32>
    %1689 = vector.broadcast %102 : f32 to vector<8x256xf32>
    %1690 = arith.mulf %1354, %1689 : vector<8x256xf32>
    %1691 = arith.addf %1688, %1690 : vector<8x256xf32>
    %1692 = vector.broadcast %103 : f32 to vector<8x256xf32>
    %1693 = arith.mulf %1356, %1692 : vector<8x256xf32>
    %1694 = arith.addf %1691, %1693 : vector<8x256xf32>
    %1695 = vector.broadcast %104 : f32 to vector<8x256xf32>
    %1696 = arith.mulf %1358, %1695 : vector<8x256xf32>
    %1697 = arith.addf %1694, %1696 : vector<8x256xf32>
    %1698 = vector.broadcast %105 : f32 to vector<8x256xf32>
    %1699 = arith.mulf %1360, %1698 : vector<8x256xf32>
    %1700 = arith.addf %1697, %1699 : vector<8x256xf32>
    %1701 = vector.broadcast %106 : f32 to vector<8x256xf32>
    %1702 = arith.mulf %1362, %1701 : vector<8x256xf32>
    %1703 = arith.addf %1700, %1702 : vector<8x256xf32>
    %1704 = vector.broadcast %107 : f32 to vector<8x256xf32>
    %1705 = arith.mulf %1364, %1704 : vector<8x256xf32>
    %1706 = arith.addf %1703, %1705 : vector<8x256xf32>
    %1707 = vector.broadcast %108 : f32 to vector<8x256xf32>
    %1708 = arith.mulf %1366, %1707 : vector<8x256xf32>
    %1709 = arith.addf %1706, %1708 : vector<8x256xf32>
    %1710 = vector.broadcast %172 : f32 to vector<8x256xf32>
    %1711 = arith.addf %1709, %1710 : vector<8x256xf32>
    %cst_114 = arith.constant 0.00999999977 : f32
    %1712 = vector.broadcast %cst_114 : f32 to vector<8x256xf32>
    %1713 = arith.mulf %1712, %1711 : vector<8x256xf32>
    %1714 = arith.maximumf %1711, %1713 : vector<8x256xf32>
    %1715 = vector.extract_strided_slice %1367 {offsets = [9, 0], sizes = [1, 256], strides = [1, 1]} : vector<16x256xf32> to vector<1x256xf32>
    %1716 = vector.broadcast %1715 : vector<1x256xf32> to vector<8x256xf32>
    %1717 = arith.mulf %1714, %1716 : vector<8x256xf32>
    %1718 = arith.addf %1683, %1717 : vector<8x256xf32>
    %1719 = vector.broadcast %109 : f32 to vector<8x256xf32>
    %1720 = arith.mulf %1350, %1719 : vector<8x256xf32>
    %1721 = vector.broadcast %110 : f32 to vector<8x256xf32>
    %1722 = arith.mulf %1352, %1721 : vector<8x256xf32>
    %1723 = arith.addf %1720, %1722 : vector<8x256xf32>
    %1724 = vector.broadcast %111 : f32 to vector<8x256xf32>
    %1725 = arith.mulf %1354, %1724 : vector<8x256xf32>
    %1726 = arith.addf %1723, %1725 : vector<8x256xf32>
    %1727 = vector.broadcast %112 : f32 to vector<8x256xf32>
    %1728 = arith.mulf %1356, %1727 : vector<8x256xf32>
    %1729 = arith.addf %1726, %1728 : vector<8x256xf32>
    %1730 = vector.broadcast %113 : f32 to vector<8x256xf32>
    %1731 = arith.mulf %1358, %1730 : vector<8x256xf32>
    %1732 = arith.addf %1729, %1731 : vector<8x256xf32>
    %1733 = vector.broadcast %114 : f32 to vector<8x256xf32>
    %1734 = arith.mulf %1360, %1733 : vector<8x256xf32>
    %1735 = arith.addf %1732, %1734 : vector<8x256xf32>
    %1736 = vector.broadcast %115 : f32 to vector<8x256xf32>
    %1737 = arith.mulf %1362, %1736 : vector<8x256xf32>
    %1738 = arith.addf %1735, %1737 : vector<8x256xf32>
    %1739 = vector.broadcast %116 : f32 to vector<8x256xf32>
    %1740 = arith.mulf %1364, %1739 : vector<8x256xf32>
    %1741 = arith.addf %1738, %1740 : vector<8x256xf32>
    %1742 = vector.broadcast %117 : f32 to vector<8x256xf32>
    %1743 = arith.mulf %1366, %1742 : vector<8x256xf32>
    %1744 = arith.addf %1741, %1743 : vector<8x256xf32>
    %1745 = vector.broadcast %173 : f32 to vector<8x256xf32>
    %1746 = arith.addf %1744, %1745 : vector<8x256xf32>
    %cst_115 = arith.constant 0.00999999977 : f32
    %1747 = vector.broadcast %cst_115 : f32 to vector<8x256xf32>
    %1748 = arith.mulf %1747, %1746 : vector<8x256xf32>
    %1749 = arith.maximumf %1746, %1748 : vector<8x256xf32>
    %1750 = vector.extract_strided_slice %1367 {offsets = [10, 0], sizes = [1, 256], strides = [1, 1]} : vector<16x256xf32> to vector<1x256xf32>
    %1751 = vector.broadcast %1750 : vector<1x256xf32> to vector<8x256xf32>
    %1752 = arith.mulf %1749, %1751 : vector<8x256xf32>
    %1753 = arith.addf %1718, %1752 : vector<8x256xf32>
    %1754 = vector.broadcast %118 : f32 to vector<8x256xf32>
    %1755 = arith.mulf %1350, %1754 : vector<8x256xf32>
    %1756 = vector.broadcast %119 : f32 to vector<8x256xf32>
    %1757 = arith.mulf %1352, %1756 : vector<8x256xf32>
    %1758 = arith.addf %1755, %1757 : vector<8x256xf32>
    %1759 = vector.broadcast %120 : f32 to vector<8x256xf32>
    %1760 = arith.mulf %1354, %1759 : vector<8x256xf32>
    %1761 = arith.addf %1758, %1760 : vector<8x256xf32>
    %1762 = vector.broadcast %121 : f32 to vector<8x256xf32>
    %1763 = arith.mulf %1356, %1762 : vector<8x256xf32>
    %1764 = arith.addf %1761, %1763 : vector<8x256xf32>
    %1765 = vector.broadcast %122 : f32 to vector<8x256xf32>
    %1766 = arith.mulf %1358, %1765 : vector<8x256xf32>
    %1767 = arith.addf %1764, %1766 : vector<8x256xf32>
    %1768 = vector.broadcast %123 : f32 to vector<8x256xf32>
    %1769 = arith.mulf %1360, %1768 : vector<8x256xf32>
    %1770 = arith.addf %1767, %1769 : vector<8x256xf32>
    %1771 = vector.broadcast %124 : f32 to vector<8x256xf32>
    %1772 = arith.mulf %1362, %1771 : vector<8x256xf32>
    %1773 = arith.addf %1770, %1772 : vector<8x256xf32>
    %1774 = vector.broadcast %125 : f32 to vector<8x256xf32>
    %1775 = arith.mulf %1364, %1774 : vector<8x256xf32>
    %1776 = arith.addf %1773, %1775 : vector<8x256xf32>
    %1777 = vector.broadcast %126 : f32 to vector<8x256xf32>
    %1778 = arith.mulf %1366, %1777 : vector<8x256xf32>
    %1779 = arith.addf %1776, %1778 : vector<8x256xf32>
    %1780 = vector.broadcast %174 : f32 to vector<8x256xf32>
    %1781 = arith.addf %1779, %1780 : vector<8x256xf32>
    %cst_116 = arith.constant 0.00999999977 : f32
    %1782 = vector.broadcast %cst_116 : f32 to vector<8x256xf32>
    %1783 = arith.mulf %1782, %1781 : vector<8x256xf32>
    %1784 = arith.maximumf %1781, %1783 : vector<8x256xf32>
    %1785 = vector.extract_strided_slice %1367 {offsets = [11, 0], sizes = [1, 256], strides = [1, 1]} : vector<16x256xf32> to vector<1x256xf32>
    %1786 = vector.broadcast %1785 : vector<1x256xf32> to vector<8x256xf32>
    %1787 = arith.mulf %1784, %1786 : vector<8x256xf32>
    %1788 = arith.addf %1753, %1787 : vector<8x256xf32>
    %1789 = vector.broadcast %127 : f32 to vector<8x256xf32>
    %1790 = arith.mulf %1350, %1789 : vector<8x256xf32>
    %1791 = vector.broadcast %128 : f32 to vector<8x256xf32>
    %1792 = arith.mulf %1352, %1791 : vector<8x256xf32>
    %1793 = arith.addf %1790, %1792 : vector<8x256xf32>
    %1794 = vector.broadcast %129 : f32 to vector<8x256xf32>
    %1795 = arith.mulf %1354, %1794 : vector<8x256xf32>
    %1796 = arith.addf %1793, %1795 : vector<8x256xf32>
    %1797 = vector.broadcast %130 : f32 to vector<8x256xf32>
    %1798 = arith.mulf %1356, %1797 : vector<8x256xf32>
    %1799 = arith.addf %1796, %1798 : vector<8x256xf32>
    %1800 = vector.broadcast %131 : f32 to vector<8x256xf32>
    %1801 = arith.mulf %1358, %1800 : vector<8x256xf32>
    %1802 = arith.addf %1799, %1801 : vector<8x256xf32>
    %1803 = vector.broadcast %132 : f32 to vector<8x256xf32>
    %1804 = arith.mulf %1360, %1803 : vector<8x256xf32>
    %1805 = arith.addf %1802, %1804 : vector<8x256xf32>
    %1806 = vector.broadcast %133 : f32 to vector<8x256xf32>
    %1807 = arith.mulf %1362, %1806 : vector<8x256xf32>
    %1808 = arith.addf %1805, %1807 : vector<8x256xf32>
    %1809 = vector.broadcast %134 : f32 to vector<8x256xf32>
    %1810 = arith.mulf %1364, %1809 : vector<8x256xf32>
    %1811 = arith.addf %1808, %1810 : vector<8x256xf32>
    %1812 = vector.broadcast %135 : f32 to vector<8x256xf32>
    %1813 = arith.mulf %1366, %1812 : vector<8x256xf32>
    %1814 = arith.addf %1811, %1813 : vector<8x256xf32>
    %1815 = vector.broadcast %175 : f32 to vector<8x256xf32>
    %1816 = arith.addf %1814, %1815 : vector<8x256xf32>
    %cst_117 = arith.constant 0.00999999977 : f32
    %1817 = vector.broadcast %cst_117 : f32 to vector<8x256xf32>
    %1818 = arith.mulf %1817, %1816 : vector<8x256xf32>
    %1819 = arith.maximumf %1816, %1818 : vector<8x256xf32>
    %1820 = vector.extract_strided_slice %1367 {offsets = [12, 0], sizes = [1, 256], strides = [1, 1]} : vector<16x256xf32> to vector<1x256xf32>
    %1821 = vector.broadcast %1820 : vector<1x256xf32> to vector<8x256xf32>
    %1822 = arith.mulf %1819, %1821 : vector<8x256xf32>
    %1823 = arith.addf %1788, %1822 : vector<8x256xf32>
    %1824 = vector.broadcast %136 : f32 to vector<8x256xf32>
    %1825 = arith.mulf %1350, %1824 : vector<8x256xf32>
    %1826 = vector.broadcast %137 : f32 to vector<8x256xf32>
    %1827 = arith.mulf %1352, %1826 : vector<8x256xf32>
    %1828 = arith.addf %1825, %1827 : vector<8x256xf32>
    %1829 = vector.broadcast %138 : f32 to vector<8x256xf32>
    %1830 = arith.mulf %1354, %1829 : vector<8x256xf32>
    %1831 = arith.addf %1828, %1830 : vector<8x256xf32>
    %1832 = vector.broadcast %139 : f32 to vector<8x256xf32>
    %1833 = arith.mulf %1356, %1832 : vector<8x256xf32>
    %1834 = arith.addf %1831, %1833 : vector<8x256xf32>
    %1835 = vector.broadcast %140 : f32 to vector<8x256xf32>
    %1836 = arith.mulf %1358, %1835 : vector<8x256xf32>
    %1837 = arith.addf %1834, %1836 : vector<8x256xf32>
    %1838 = vector.broadcast %141 : f32 to vector<8x256xf32>
    %1839 = arith.mulf %1360, %1838 : vector<8x256xf32>
    %1840 = arith.addf %1837, %1839 : vector<8x256xf32>
    %1841 = vector.broadcast %142 : f32 to vector<8x256xf32>
    %1842 = arith.mulf %1362, %1841 : vector<8x256xf32>
    %1843 = arith.addf %1840, %1842 : vector<8x256xf32>
    %1844 = vector.broadcast %143 : f32 to vector<8x256xf32>
    %1845 = arith.mulf %1364, %1844 : vector<8x256xf32>
    %1846 = arith.addf %1843, %1845 : vector<8x256xf32>
    %1847 = vector.broadcast %144 : f32 to vector<8x256xf32>
    %1848 = arith.mulf %1366, %1847 : vector<8x256xf32>
    %1849 = arith.addf %1846, %1848 : vector<8x256xf32>
    %1850 = vector.broadcast %176 : f32 to vector<8x256xf32>
    %1851 = arith.addf %1849, %1850 : vector<8x256xf32>
    %cst_118 = arith.constant 0.00999999977 : f32
    %1852 = vector.broadcast %cst_118 : f32 to vector<8x256xf32>
    %1853 = arith.mulf %1852, %1851 : vector<8x256xf32>
    %1854 = arith.maximumf %1851, %1853 : vector<8x256xf32>
    %1855 = vector.extract_strided_slice %1367 {offsets = [13, 0], sizes = [1, 256], strides = [1, 1]} : vector<16x256xf32> to vector<1x256xf32>
    %1856 = vector.broadcast %1855 : vector<1x256xf32> to vector<8x256xf32>
    %1857 = arith.mulf %1854, %1856 : vector<8x256xf32>
    %1858 = arith.addf %1823, %1857 : vector<8x256xf32>
    %1859 = vector.broadcast %145 : f32 to vector<8x256xf32>
    %1860 = arith.mulf %1350, %1859 : vector<8x256xf32>
    %1861 = vector.broadcast %146 : f32 to vector<8x256xf32>
    %1862 = arith.mulf %1352, %1861 : vector<8x256xf32>
    %1863 = arith.addf %1860, %1862 : vector<8x256xf32>
    %1864 = vector.broadcast %147 : f32 to vector<8x256xf32>
    %1865 = arith.mulf %1354, %1864 : vector<8x256xf32>
    %1866 = arith.addf %1863, %1865 : vector<8x256xf32>
    %1867 = vector.broadcast %148 : f32 to vector<8x256xf32>
    %1868 = arith.mulf %1356, %1867 : vector<8x256xf32>
    %1869 = arith.addf %1866, %1868 : vector<8x256xf32>
    %1870 = vector.broadcast %149 : f32 to vector<8x256xf32>
    %1871 = arith.mulf %1358, %1870 : vector<8x256xf32>
    %1872 = arith.addf %1869, %1871 : vector<8x256xf32>
    %1873 = vector.broadcast %150 : f32 to vector<8x256xf32>
    %1874 = arith.mulf %1360, %1873 : vector<8x256xf32>
    %1875 = arith.addf %1872, %1874 : vector<8x256xf32>
    %1876 = vector.broadcast %151 : f32 to vector<8x256xf32>
    %1877 = arith.mulf %1362, %1876 : vector<8x256xf32>
    %1878 = arith.addf %1875, %1877 : vector<8x256xf32>
    %1879 = vector.broadcast %152 : f32 to vector<8x256xf32>
    %1880 = arith.mulf %1364, %1879 : vector<8x256xf32>
    %1881 = arith.addf %1878, %1880 : vector<8x256xf32>
    %1882 = vector.broadcast %153 : f32 to vector<8x256xf32>
    %1883 = arith.mulf %1366, %1882 : vector<8x256xf32>
    %1884 = arith.addf %1881, %1883 : vector<8x256xf32>
    %1885 = vector.broadcast %177 : f32 to vector<8x256xf32>
    %1886 = arith.addf %1884, %1885 : vector<8x256xf32>
    %cst_119 = arith.constant 0.00999999977 : f32
    %1887 = vector.broadcast %cst_119 : f32 to vector<8x256xf32>
    %1888 = arith.mulf %1887, %1886 : vector<8x256xf32>
    %1889 = arith.maximumf %1886, %1888 : vector<8x256xf32>
    %1890 = vector.extract_strided_slice %1367 {offsets = [14, 0], sizes = [1, 256], strides = [1, 1]} : vector<16x256xf32> to vector<1x256xf32>
    %1891 = vector.broadcast %1890 : vector<1x256xf32> to vector<8x256xf32>
    %1892 = arith.mulf %1889, %1891 : vector<8x256xf32>
    %1893 = arith.addf %1858, %1892 : vector<8x256xf32>
    %1894 = vector.broadcast %154 : f32 to vector<8x256xf32>
    %1895 = arith.mulf %1350, %1894 : vector<8x256xf32>
    %1896 = vector.broadcast %155 : f32 to vector<8x256xf32>
    %1897 = arith.mulf %1352, %1896 : vector<8x256xf32>
    %1898 = arith.addf %1895, %1897 : vector<8x256xf32>
    %1899 = vector.broadcast %156 : f32 to vector<8x256xf32>
    %1900 = arith.mulf %1354, %1899 : vector<8x256xf32>
    %1901 = arith.addf %1898, %1900 : vector<8x256xf32>
    %1902 = vector.broadcast %157 : f32 to vector<8x256xf32>
    %1903 = arith.mulf %1356, %1902 : vector<8x256xf32>
    %1904 = arith.addf %1901, %1903 : vector<8x256xf32>
    %1905 = vector.broadcast %158 : f32 to vector<8x256xf32>
    %1906 = arith.mulf %1358, %1905 : vector<8x256xf32>
    %1907 = arith.addf %1904, %1906 : vector<8x256xf32>
    %1908 = vector.broadcast %159 : f32 to vector<8x256xf32>
    %1909 = arith.mulf %1360, %1908 : vector<8x256xf32>
    %1910 = arith.addf %1907, %1909 : vector<8x256xf32>
    %1911 = vector.broadcast %160 : f32 to vector<8x256xf32>
    %1912 = arith.mulf %1362, %1911 : vector<8x256xf32>
    %1913 = arith.addf %1910, %1912 : vector<8x256xf32>
    %1914 = vector.broadcast %161 : f32 to vector<8x256xf32>
    %1915 = arith.mulf %1364, %1914 : vector<8x256xf32>
    %1916 = arith.addf %1913, %1915 : vector<8x256xf32>
    %1917 = vector.broadcast %162 : f32 to vector<8x256xf32>
    %1918 = arith.mulf %1366, %1917 : vector<8x256xf32>
    %1919 = arith.addf %1916, %1918 : vector<8x256xf32>
    %1920 = vector.broadcast %178 : f32 to vector<8x256xf32>
    %1921 = arith.addf %1919, %1920 : vector<8x256xf32>
    %cst_120 = arith.constant 0.00999999977 : f32
    %1922 = vector.broadcast %cst_120 : f32 to vector<8x256xf32>
    %1923 = arith.mulf %1922, %1921 : vector<8x256xf32>
    %1924 = arith.maximumf %1921, %1923 : vector<8x256xf32>
    %1925 = vector.extract_strided_slice %1367 {offsets = [15, 0], sizes = [1, 256], strides = [1, 1]} : vector<16x256xf32> to vector<1x256xf32>
    %1926 = vector.broadcast %1925 : vector<1x256xf32> to vector<8x256xf32>
    %1927 = arith.mulf %1924, %1926 : vector<8x256xf32>
    %1928 = arith.addf %1893, %1927 : vector<8x256xf32>
    %cst_121 = arith.constant dense<0.000000e+00> : vector<8xf32>
    %1929 = vector.multi_reduction <add>, %1928, %cst_121 [1] : vector<8x256xf32> to vector<8xf32>
    %1930 = vector.shape_cast %1929 : vector<8xf32> to vector<8x1xf32>
    %1931 = arith.addf %1348, %1930 : vector<8x1xf32>
    %1932 = arith.index_cast %181 : i32 to index
    %c768 = arith.constant 768 : index
    %1933 = vector.load %arg7[%1932, %c768] : memref<8x896xf32, #tpu.memory_space<vmem>>, vector<8x128xf32>
    %1934 = arith.index_cast %181 : i32 to index
    %c768_122 = arith.constant 768 : index
    %1935 = vector.load %arg8[%1934, %c768_122] : memref<8x896xf32, #tpu.memory_space<vmem>>, vector<8x128xf32>
    %1936 = arith.index_cast %181 : i32 to index
    %c768_123 = arith.constant 768 : index
    %1937 = vector.load %arg9[%1936, %c768_123] : memref<8x896xf32, #tpu.memory_space<vmem>>, vector<8x128xf32>
    %1938 = arith.index_cast %181 : i32 to index
    %c768_124 = arith.constant 768 : index
    %1939 = vector.load %arg10[%1938, %c768_124] : memref<8x896xf32, #tpu.memory_space<vmem>>, vector<8x128xf32>
    %1940 = arith.index_cast %181 : i32 to index
    %c768_125 = arith.constant 768 : index
    %1941 = vector.load %arg11[%1940, %c768_125] : memref<8x896xf32, #tpu.memory_space<vmem>>, vector<8x128xf32>
    %1942 = arith.index_cast %181 : i32 to index
    %c768_126 = arith.constant 768 : index
    %1943 = vector.load %arg12[%1942, %c768_126] : memref<8x896xf32, #tpu.memory_space<vmem>>, vector<8x128xf32>
    %1944 = arith.index_cast %181 : i32 to index
    %c768_127 = arith.constant 768 : index
    %1945 = vector.load %arg13[%1944, %c768_127] : memref<8x896xf32, #tpu.memory_space<vmem>>, vector<8x128xf32>
    %1946 = arith.index_cast %181 : i32 to index
    %c768_128 = arith.constant 768 : index
    %1947 = vector.load %arg14[%1946, %c768_128] : memref<8x896xf32, #tpu.memory_space<vmem>>, vector<8x128xf32>
    %1948 = arith.index_cast %181 : i32 to index
    %c768_129 = arith.constant 768 : index
    %1949 = vector.load %arg15[%1948, %c768_129] : memref<8x896xf32, #tpu.memory_space<vmem>>, vector<8x128xf32>
    %c0_130 = arith.constant 0 : index
    %c768_131 = arith.constant 768 : index
    %1950 = vector.load %arg2[%c0_130, %c768_131] : memref<16x896xf32, #tpu.memory_space<vmem>>, vector<16x128xf32>
    %cst_132 = arith.constant 0.000000e+00 : f32
    %1951 = vector.broadcast %cst_132 : f32 to vector<8x128xf32>
    %1952 = vector.broadcast %19 : f32 to vector<8x128xf32>
    %1953 = arith.mulf %1933, %1952 : vector<8x128xf32>
    %1954 = vector.broadcast %20 : f32 to vector<8x128xf32>
    %1955 = arith.mulf %1935, %1954 : vector<8x128xf32>
    %1956 = arith.addf %1953, %1955 : vector<8x128xf32>
    %1957 = vector.broadcast %21 : f32 to vector<8x128xf32>
    %1958 = arith.mulf %1937, %1957 : vector<8x128xf32>
    %1959 = arith.addf %1956, %1958 : vector<8x128xf32>
    %1960 = vector.broadcast %22 : f32 to vector<8x128xf32>
    %1961 = arith.mulf %1939, %1960 : vector<8x128xf32>
    %1962 = arith.addf %1959, %1961 : vector<8x128xf32>
    %1963 = vector.broadcast %23 : f32 to vector<8x128xf32>
    %1964 = arith.mulf %1941, %1963 : vector<8x128xf32>
    %1965 = arith.addf %1962, %1964 : vector<8x128xf32>
    %1966 = vector.broadcast %24 : f32 to vector<8x128xf32>
    %1967 = arith.mulf %1943, %1966 : vector<8x128xf32>
    %1968 = arith.addf %1965, %1967 : vector<8x128xf32>
    %1969 = vector.broadcast %25 : f32 to vector<8x128xf32>
    %1970 = arith.mulf %1945, %1969 : vector<8x128xf32>
    %1971 = arith.addf %1968, %1970 : vector<8x128xf32>
    %1972 = vector.broadcast %26 : f32 to vector<8x128xf32>
    %1973 = arith.mulf %1947, %1972 : vector<8x128xf32>
    %1974 = arith.addf %1971, %1973 : vector<8x128xf32>
    %1975 = vector.broadcast %27 : f32 to vector<8x128xf32>
    %1976 = arith.mulf %1949, %1975 : vector<8x128xf32>
    %1977 = arith.addf %1974, %1976 : vector<8x128xf32>
    %1978 = vector.broadcast %163 : f32 to vector<8x128xf32>
    %1979 = arith.addf %1977, %1978 : vector<8x128xf32>
    %cst_133 = arith.constant 0.00999999977 : f32
    %1980 = vector.broadcast %cst_133 : f32 to vector<8x128xf32>
    %1981 = arith.mulf %1980, %1979 : vector<8x128xf32>
    %1982 = arith.maximumf %1979, %1981 : vector<8x128xf32>
    %1983 = vector.extract_strided_slice %1950 {offsets = [0, 0], sizes = [1, 128], strides = [1, 1]} : vector<16x128xf32> to vector<1x128xf32>
    %1984 = vector.broadcast %1983 : vector<1x128xf32> to vector<8x128xf32>
    %1985 = arith.mulf %1982, %1984 : vector<8x128xf32>
    %1986 = arith.addf %1951, %1985 : vector<8x128xf32>
    %1987 = vector.broadcast %28 : f32 to vector<8x128xf32>
    %1988 = arith.mulf %1933, %1987 : vector<8x128xf32>
    %1989 = vector.broadcast %29 : f32 to vector<8x128xf32>
    %1990 = arith.mulf %1935, %1989 : vector<8x128xf32>
    %1991 = arith.addf %1988, %1990 : vector<8x128xf32>
    %1992 = vector.broadcast %30 : f32 to vector<8x128xf32>
    %1993 = arith.mulf %1937, %1992 : vector<8x128xf32>
    %1994 = arith.addf %1991, %1993 : vector<8x128xf32>
    %1995 = vector.broadcast %31 : f32 to vector<8x128xf32>
    %1996 = arith.mulf %1939, %1995 : vector<8x128xf32>
    %1997 = arith.addf %1994, %1996 : vector<8x128xf32>
    %1998 = vector.broadcast %32 : f32 to vector<8x128xf32>
    %1999 = arith.mulf %1941, %1998 : vector<8x128xf32>
    %2000 = arith.addf %1997, %1999 : vector<8x128xf32>
    %2001 = vector.broadcast %33 : f32 to vector<8x128xf32>
    %2002 = arith.mulf %1943, %2001 : vector<8x128xf32>
    %2003 = arith.addf %2000, %2002 : vector<8x128xf32>
    %2004 = vector.broadcast %34 : f32 to vector<8x128xf32>
    %2005 = arith.mulf %1945, %2004 : vector<8x128xf32>
    %2006 = arith.addf %2003, %2005 : vector<8x128xf32>
    %2007 = vector.broadcast %35 : f32 to vector<8x128xf32>
    %2008 = arith.mulf %1947, %2007 : vector<8x128xf32>
    %2009 = arith.addf %2006, %2008 : vector<8x128xf32>
    %2010 = vector.broadcast %36 : f32 to vector<8x128xf32>
    %2011 = arith.mulf %1949, %2010 : vector<8x128xf32>
    %2012 = arith.addf %2009, %2011 : vector<8x128xf32>
    %2013 = vector.broadcast %164 : f32 to vector<8x128xf32>
    %2014 = arith.addf %2012, %2013 : vector<8x128xf32>
    %cst_134 = arith.constant 0.00999999977 : f32
    %2015 = vector.broadcast %cst_134 : f32 to vector<8x128xf32>
    %2016 = arith.mulf %2015, %2014 : vector<8x128xf32>
    %2017 = arith.maximumf %2014, %2016 : vector<8x128xf32>
    %2018 = vector.extract_strided_slice %1950 {offsets = [1, 0], sizes = [1, 128], strides = [1, 1]} : vector<16x128xf32> to vector<1x128xf32>
    %2019 = vector.broadcast %2018 : vector<1x128xf32> to vector<8x128xf32>
    %2020 = arith.mulf %2017, %2019 : vector<8x128xf32>
    %2021 = arith.addf %1986, %2020 : vector<8x128xf32>
    %2022 = vector.broadcast %37 : f32 to vector<8x128xf32>
    %2023 = arith.mulf %1933, %2022 : vector<8x128xf32>
    %2024 = vector.broadcast %38 : f32 to vector<8x128xf32>
    %2025 = arith.mulf %1935, %2024 : vector<8x128xf32>
    %2026 = arith.addf %2023, %2025 : vector<8x128xf32>
    %2027 = vector.broadcast %39 : f32 to vector<8x128xf32>
    %2028 = arith.mulf %1937, %2027 : vector<8x128xf32>
    %2029 = arith.addf %2026, %2028 : vector<8x128xf32>
    %2030 = vector.broadcast %40 : f32 to vector<8x128xf32>
    %2031 = arith.mulf %1939, %2030 : vector<8x128xf32>
    %2032 = arith.addf %2029, %2031 : vector<8x128xf32>
    %2033 = vector.broadcast %41 : f32 to vector<8x128xf32>
    %2034 = arith.mulf %1941, %2033 : vector<8x128xf32>
    %2035 = arith.addf %2032, %2034 : vector<8x128xf32>
    %2036 = vector.broadcast %42 : f32 to vector<8x128xf32>
    %2037 = arith.mulf %1943, %2036 : vector<8x128xf32>
    %2038 = arith.addf %2035, %2037 : vector<8x128xf32>
    %2039 = vector.broadcast %43 : f32 to vector<8x128xf32>
    %2040 = arith.mulf %1945, %2039 : vector<8x128xf32>
    %2041 = arith.addf %2038, %2040 : vector<8x128xf32>
    %2042 = vector.broadcast %44 : f32 to vector<8x128xf32>
    %2043 = arith.mulf %1947, %2042 : vector<8x128xf32>
    %2044 = arith.addf %2041, %2043 : vector<8x128xf32>
    %2045 = vector.broadcast %45 : f32 to vector<8x128xf32>
    %2046 = arith.mulf %1949, %2045 : vector<8x128xf32>
    %2047 = arith.addf %2044, %2046 : vector<8x128xf32>
    %2048 = vector.broadcast %165 : f32 to vector<8x128xf32>
    %2049 = arith.addf %2047, %2048 : vector<8x128xf32>
    %cst_135 = arith.constant 0.00999999977 : f32
    %2050 = vector.broadcast %cst_135 : f32 to vector<8x128xf32>
    %2051 = arith.mulf %2050, %2049 : vector<8x128xf32>
    %2052 = arith.maximumf %2049, %2051 : vector<8x128xf32>
    %2053 = vector.extract_strided_slice %1950 {offsets = [2, 0], sizes = [1, 128], strides = [1, 1]} : vector<16x128xf32> to vector<1x128xf32>
    %2054 = vector.broadcast %2053 : vector<1x128xf32> to vector<8x128xf32>
    %2055 = arith.mulf %2052, %2054 : vector<8x128xf32>
    %2056 = arith.addf %2021, %2055 : vector<8x128xf32>
    %2057 = vector.broadcast %46 : f32 to vector<8x128xf32>
    %2058 = arith.mulf %1933, %2057 : vector<8x128xf32>
    %2059 = vector.broadcast %47 : f32 to vector<8x128xf32>
    %2060 = arith.mulf %1935, %2059 : vector<8x128xf32>
    %2061 = arith.addf %2058, %2060 : vector<8x128xf32>
    %2062 = vector.broadcast %48 : f32 to vector<8x128xf32>
    %2063 = arith.mulf %1937, %2062 : vector<8x128xf32>
    %2064 = arith.addf %2061, %2063 : vector<8x128xf32>
    %2065 = vector.broadcast %49 : f32 to vector<8x128xf32>
    %2066 = arith.mulf %1939, %2065 : vector<8x128xf32>
    %2067 = arith.addf %2064, %2066 : vector<8x128xf32>
    %2068 = vector.broadcast %50 : f32 to vector<8x128xf32>
    %2069 = arith.mulf %1941, %2068 : vector<8x128xf32>
    %2070 = arith.addf %2067, %2069 : vector<8x128xf32>
    %2071 = vector.broadcast %51 : f32 to vector<8x128xf32>
    %2072 = arith.mulf %1943, %2071 : vector<8x128xf32>
    %2073 = arith.addf %2070, %2072 : vector<8x128xf32>
    %2074 = vector.broadcast %52 : f32 to vector<8x128xf32>
    %2075 = arith.mulf %1945, %2074 : vector<8x128xf32>
    %2076 = arith.addf %2073, %2075 : vector<8x128xf32>
    %2077 = vector.broadcast %53 : f32 to vector<8x128xf32>
    %2078 = arith.mulf %1947, %2077 : vector<8x128xf32>
    %2079 = arith.addf %2076, %2078 : vector<8x128xf32>
    %2080 = vector.broadcast %54 : f32 to vector<8x128xf32>
    %2081 = arith.mulf %1949, %2080 : vector<8x128xf32>
    %2082 = arith.addf %2079, %2081 : vector<8x128xf32>
    %2083 = vector.broadcast %166 : f32 to vector<8x128xf32>
    %2084 = arith.addf %2082, %2083 : vector<8x128xf32>
    %cst_136 = arith.constant 0.00999999977 : f32
    %2085 = vector.broadcast %cst_136 : f32 to vector<8x128xf32>
    %2086 = arith.mulf %2085, %2084 : vector<8x128xf32>
    %2087 = arith.maximumf %2084, %2086 : vector<8x128xf32>
    %2088 = vector.extract_strided_slice %1950 {offsets = [3, 0], sizes = [1, 128], strides = [1, 1]} : vector<16x128xf32> to vector<1x128xf32>
    %2089 = vector.broadcast %2088 : vector<1x128xf32> to vector<8x128xf32>
    %2090 = arith.mulf %2087, %2089 : vector<8x128xf32>
    %2091 = arith.addf %2056, %2090 : vector<8x128xf32>
    %2092 = vector.broadcast %55 : f32 to vector<8x128xf32>
    %2093 = arith.mulf %1933, %2092 : vector<8x128xf32>
    %2094 = vector.broadcast %56 : f32 to vector<8x128xf32>
    %2095 = arith.mulf %1935, %2094 : vector<8x128xf32>
    %2096 = arith.addf %2093, %2095 : vector<8x128xf32>
    %2097 = vector.broadcast %57 : f32 to vector<8x128xf32>
    %2098 = arith.mulf %1937, %2097 : vector<8x128xf32>
    %2099 = arith.addf %2096, %2098 : vector<8x128xf32>
    %2100 = vector.broadcast %58 : f32 to vector<8x128xf32>
    %2101 = arith.mulf %1939, %2100 : vector<8x128xf32>
    %2102 = arith.addf %2099, %2101 : vector<8x128xf32>
    %2103 = vector.broadcast %59 : f32 to vector<8x128xf32>
    %2104 = arith.mulf %1941, %2103 : vector<8x128xf32>
    %2105 = arith.addf %2102, %2104 : vector<8x128xf32>
    %2106 = vector.broadcast %60 : f32 to vector<8x128xf32>
    %2107 = arith.mulf %1943, %2106 : vector<8x128xf32>
    %2108 = arith.addf %2105, %2107 : vector<8x128xf32>
    %2109 = vector.broadcast %61 : f32 to vector<8x128xf32>
    %2110 = arith.mulf %1945, %2109 : vector<8x128xf32>
    %2111 = arith.addf %2108, %2110 : vector<8x128xf32>
    %2112 = vector.broadcast %62 : f32 to vector<8x128xf32>
    %2113 = arith.mulf %1947, %2112 : vector<8x128xf32>
    %2114 = arith.addf %2111, %2113 : vector<8x128xf32>
    %2115 = vector.broadcast %63 : f32 to vector<8x128xf32>
    %2116 = arith.mulf %1949, %2115 : vector<8x128xf32>
    %2117 = arith.addf %2114, %2116 : vector<8x128xf32>
    %2118 = vector.broadcast %167 : f32 to vector<8x128xf32>
    %2119 = arith.addf %2117, %2118 : vector<8x128xf32>
    %cst_137 = arith.constant 0.00999999977 : f32
    %2120 = vector.broadcast %cst_137 : f32 to vector<8x128xf32>
    %2121 = arith.mulf %2120, %2119 : vector<8x128xf32>
    %2122 = arith.maximumf %2119, %2121 : vector<8x128xf32>
    %2123 = vector.extract_strided_slice %1950 {offsets = [4, 0], sizes = [1, 128], strides = [1, 1]} : vector<16x128xf32> to vector<1x128xf32>
    %2124 = vector.broadcast %2123 : vector<1x128xf32> to vector<8x128xf32>
    %2125 = arith.mulf %2122, %2124 : vector<8x128xf32>
    %2126 = arith.addf %2091, %2125 : vector<8x128xf32>
    %2127 = vector.broadcast %64 : f32 to vector<8x128xf32>
    %2128 = arith.mulf %1933, %2127 : vector<8x128xf32>
    %2129 = vector.broadcast %65 : f32 to vector<8x128xf32>
    %2130 = arith.mulf %1935, %2129 : vector<8x128xf32>
    %2131 = arith.addf %2128, %2130 : vector<8x128xf32>
    %2132 = vector.broadcast %66 : f32 to vector<8x128xf32>
    %2133 = arith.mulf %1937, %2132 : vector<8x128xf32>
    %2134 = arith.addf %2131, %2133 : vector<8x128xf32>
    %2135 = vector.broadcast %67 : f32 to vector<8x128xf32>
    %2136 = arith.mulf %1939, %2135 : vector<8x128xf32>
    %2137 = arith.addf %2134, %2136 : vector<8x128xf32>
    %2138 = vector.broadcast %68 : f32 to vector<8x128xf32>
    %2139 = arith.mulf %1941, %2138 : vector<8x128xf32>
    %2140 = arith.addf %2137, %2139 : vector<8x128xf32>
    %2141 = vector.broadcast %69 : f32 to vector<8x128xf32>
    %2142 = arith.mulf %1943, %2141 : vector<8x128xf32>
    %2143 = arith.addf %2140, %2142 : vector<8x128xf32>
    %2144 = vector.broadcast %70 : f32 to vector<8x128xf32>
    %2145 = arith.mulf %1945, %2144 : vector<8x128xf32>
    %2146 = arith.addf %2143, %2145 : vector<8x128xf32>
    %2147 = vector.broadcast %71 : f32 to vector<8x128xf32>
    %2148 = arith.mulf %1947, %2147 : vector<8x128xf32>
    %2149 = arith.addf %2146, %2148 : vector<8x128xf32>
    %2150 = vector.broadcast %72 : f32 to vector<8x128xf32>
    %2151 = arith.mulf %1949, %2150 : vector<8x128xf32>
    %2152 = arith.addf %2149, %2151 : vector<8x128xf32>
    %2153 = vector.broadcast %168 : f32 to vector<8x128xf32>
    %2154 = arith.addf %2152, %2153 : vector<8x128xf32>
    %cst_138 = arith.constant 0.00999999977 : f32
    %2155 = vector.broadcast %cst_138 : f32 to vector<8x128xf32>
    %2156 = arith.mulf %2155, %2154 : vector<8x128xf32>
    %2157 = arith.maximumf %2154, %2156 : vector<8x128xf32>
    %2158 = vector.extract_strided_slice %1950 {offsets = [5, 0], sizes = [1, 128], strides = [1, 1]} : vector<16x128xf32> to vector<1x128xf32>
    %2159 = vector.broadcast %2158 : vector<1x128xf32> to vector<8x128xf32>
    %2160 = arith.mulf %2157, %2159 : vector<8x128xf32>
    %2161 = arith.addf %2126, %2160 : vector<8x128xf32>
    %2162 = vector.broadcast %73 : f32 to vector<8x128xf32>
    %2163 = arith.mulf %1933, %2162 : vector<8x128xf32>
    %2164 = vector.broadcast %74 : f32 to vector<8x128xf32>
    %2165 = arith.mulf %1935, %2164 : vector<8x128xf32>
    %2166 = arith.addf %2163, %2165 : vector<8x128xf32>
    %2167 = vector.broadcast %75 : f32 to vector<8x128xf32>
    %2168 = arith.mulf %1937, %2167 : vector<8x128xf32>
    %2169 = arith.addf %2166, %2168 : vector<8x128xf32>
    %2170 = vector.broadcast %76 : f32 to vector<8x128xf32>
    %2171 = arith.mulf %1939, %2170 : vector<8x128xf32>
    %2172 = arith.addf %2169, %2171 : vector<8x128xf32>
    %2173 = vector.broadcast %77 : f32 to vector<8x128xf32>
    %2174 = arith.mulf %1941, %2173 : vector<8x128xf32>
    %2175 = arith.addf %2172, %2174 : vector<8x128xf32>
    %2176 = vector.broadcast %78 : f32 to vector<8x128xf32>
    %2177 = arith.mulf %1943, %2176 : vector<8x128xf32>
    %2178 = arith.addf %2175, %2177 : vector<8x128xf32>
    %2179 = vector.broadcast %79 : f32 to vector<8x128xf32>
    %2180 = arith.mulf %1945, %2179 : vector<8x128xf32>
    %2181 = arith.addf %2178, %2180 : vector<8x128xf32>
    %2182 = vector.broadcast %80 : f32 to vector<8x128xf32>
    %2183 = arith.mulf %1947, %2182 : vector<8x128xf32>
    %2184 = arith.addf %2181, %2183 : vector<8x128xf32>
    %2185 = vector.broadcast %81 : f32 to vector<8x128xf32>
    %2186 = arith.mulf %1949, %2185 : vector<8x128xf32>
    %2187 = arith.addf %2184, %2186 : vector<8x128xf32>
    %2188 = vector.broadcast %169 : f32 to vector<8x128xf32>
    %2189 = arith.addf %2187, %2188 : vector<8x128xf32>
    %cst_139 = arith.constant 0.00999999977 : f32
    %2190 = vector.broadcast %cst_139 : f32 to vector<8x128xf32>
    %2191 = arith.mulf %2190, %2189 : vector<8x128xf32>
    %2192 = arith.maximumf %2189, %2191 : vector<8x128xf32>
    %2193 = vector.extract_strided_slice %1950 {offsets = [6, 0], sizes = [1, 128], strides = [1, 1]} : vector<16x128xf32> to vector<1x128xf32>
    %2194 = vector.broadcast %2193 : vector<1x128xf32> to vector<8x128xf32>
    %2195 = arith.mulf %2192, %2194 : vector<8x128xf32>
    %2196 = arith.addf %2161, %2195 : vector<8x128xf32>
    %2197 = vector.broadcast %82 : f32 to vector<8x128xf32>
    %2198 = arith.mulf %1933, %2197 : vector<8x128xf32>
    %2199 = vector.broadcast %83 : f32 to vector<8x128xf32>
    %2200 = arith.mulf %1935, %2199 : vector<8x128xf32>
    %2201 = arith.addf %2198, %2200 : vector<8x128xf32>
    %2202 = vector.broadcast %84 : f32 to vector<8x128xf32>
    %2203 = arith.mulf %1937, %2202 : vector<8x128xf32>
    %2204 = arith.addf %2201, %2203 : vector<8x128xf32>
    %2205 = vector.broadcast %85 : f32 to vector<8x128xf32>
    %2206 = arith.mulf %1939, %2205 : vector<8x128xf32>
    %2207 = arith.addf %2204, %2206 : vector<8x128xf32>
    %2208 = vector.broadcast %86 : f32 to vector<8x128xf32>
    %2209 = arith.mulf %1941, %2208 : vector<8x128xf32>
    %2210 = arith.addf %2207, %2209 : vector<8x128xf32>
    %2211 = vector.broadcast %87 : f32 to vector<8x128xf32>
    %2212 = arith.mulf %1943, %2211 : vector<8x128xf32>
    %2213 = arith.addf %2210, %2212 : vector<8x128xf32>
    %2214 = vector.broadcast %88 : f32 to vector<8x128xf32>
    %2215 = arith.mulf %1945, %2214 : vector<8x128xf32>
    %2216 = arith.addf %2213, %2215 : vector<8x128xf32>
    %2217 = vector.broadcast %89 : f32 to vector<8x128xf32>
    %2218 = arith.mulf %1947, %2217 : vector<8x128xf32>
    %2219 = arith.addf %2216, %2218 : vector<8x128xf32>
    %2220 = vector.broadcast %90 : f32 to vector<8x128xf32>
    %2221 = arith.mulf %1949, %2220 : vector<8x128xf32>
    %2222 = arith.addf %2219, %2221 : vector<8x128xf32>
    %2223 = vector.broadcast %170 : f32 to vector<8x128xf32>
    %2224 = arith.addf %2222, %2223 : vector<8x128xf32>
    %cst_140 = arith.constant 0.00999999977 : f32
    %2225 = vector.broadcast %cst_140 : f32 to vector<8x128xf32>
    %2226 = arith.mulf %2225, %2224 : vector<8x128xf32>
    %2227 = arith.maximumf %2224, %2226 : vector<8x128xf32>
    %2228 = vector.extract_strided_slice %1950 {offsets = [7, 0], sizes = [1, 128], strides = [1, 1]} : vector<16x128xf32> to vector<1x128xf32>
    %2229 = vector.broadcast %2228 : vector<1x128xf32> to vector<8x128xf32>
    %2230 = arith.mulf %2227, %2229 : vector<8x128xf32>
    %2231 = arith.addf %2196, %2230 : vector<8x128xf32>
    %2232 = vector.broadcast %91 : f32 to vector<8x128xf32>
    %2233 = arith.mulf %1933, %2232 : vector<8x128xf32>
    %2234 = vector.broadcast %92 : f32 to vector<8x128xf32>
    %2235 = arith.mulf %1935, %2234 : vector<8x128xf32>
    %2236 = arith.addf %2233, %2235 : vector<8x128xf32>
    %2237 = vector.broadcast %93 : f32 to vector<8x128xf32>
    %2238 = arith.mulf %1937, %2237 : vector<8x128xf32>
    %2239 = arith.addf %2236, %2238 : vector<8x128xf32>
    %2240 = vector.broadcast %94 : f32 to vector<8x128xf32>
    %2241 = arith.mulf %1939, %2240 : vector<8x128xf32>
    %2242 = arith.addf %2239, %2241 : vector<8x128xf32>
    %2243 = vector.broadcast %95 : f32 to vector<8x128xf32>
    %2244 = arith.mulf %1941, %2243 : vector<8x128xf32>
    %2245 = arith.addf %2242, %2244 : vector<8x128xf32>
    %2246 = vector.broadcast %96 : f32 to vector<8x128xf32>
    %2247 = arith.mulf %1943, %2246 : vector<8x128xf32>
    %2248 = arith.addf %2245, %2247 : vector<8x128xf32>
    %2249 = vector.broadcast %97 : f32 to vector<8x128xf32>
    %2250 = arith.mulf %1945, %2249 : vector<8x128xf32>
    %2251 = arith.addf %2248, %2250 : vector<8x128xf32>
    %2252 = vector.broadcast %98 : f32 to vector<8x128xf32>
    %2253 = arith.mulf %1947, %2252 : vector<8x128xf32>
    %2254 = arith.addf %2251, %2253 : vector<8x128xf32>
    %2255 = vector.broadcast %99 : f32 to vector<8x128xf32>
    %2256 = arith.mulf %1949, %2255 : vector<8x128xf32>
    %2257 = arith.addf %2254, %2256 : vector<8x128xf32>
    %2258 = vector.broadcast %171 : f32 to vector<8x128xf32>
    %2259 = arith.addf %2257, %2258 : vector<8x128xf32>
    %cst_141 = arith.constant 0.00999999977 : f32
    %2260 = vector.broadcast %cst_141 : f32 to vector<8x128xf32>
    %2261 = arith.mulf %2260, %2259 : vector<8x128xf32>
    %2262 = arith.maximumf %2259, %2261 : vector<8x128xf32>
    %2263 = vector.extract_strided_slice %1950 {offsets = [8, 0], sizes = [1, 128], strides = [1, 1]} : vector<16x128xf32> to vector<1x128xf32>
    %2264 = vector.broadcast %2263 : vector<1x128xf32> to vector<8x128xf32>
    %2265 = arith.mulf %2262, %2264 : vector<8x128xf32>
    %2266 = arith.addf %2231, %2265 : vector<8x128xf32>
    %2267 = vector.broadcast %100 : f32 to vector<8x128xf32>
    %2268 = arith.mulf %1933, %2267 : vector<8x128xf32>
    %2269 = vector.broadcast %101 : f32 to vector<8x128xf32>
    %2270 = arith.mulf %1935, %2269 : vector<8x128xf32>
    %2271 = arith.addf %2268, %2270 : vector<8x128xf32>
    %2272 = vector.broadcast %102 : f32 to vector<8x128xf32>
    %2273 = arith.mulf %1937, %2272 : vector<8x128xf32>
    %2274 = arith.addf %2271, %2273 : vector<8x128xf32>
    %2275 = vector.broadcast %103 : f32 to vector<8x128xf32>
    %2276 = arith.mulf %1939, %2275 : vector<8x128xf32>
    %2277 = arith.addf %2274, %2276 : vector<8x128xf32>
    %2278 = vector.broadcast %104 : f32 to vector<8x128xf32>
    %2279 = arith.mulf %1941, %2278 : vector<8x128xf32>
    %2280 = arith.addf %2277, %2279 : vector<8x128xf32>
    %2281 = vector.broadcast %105 : f32 to vector<8x128xf32>
    %2282 = arith.mulf %1943, %2281 : vector<8x128xf32>
    %2283 = arith.addf %2280, %2282 : vector<8x128xf32>
    %2284 = vector.broadcast %106 : f32 to vector<8x128xf32>
    %2285 = arith.mulf %1945, %2284 : vector<8x128xf32>
    %2286 = arith.addf %2283, %2285 : vector<8x128xf32>
    %2287 = vector.broadcast %107 : f32 to vector<8x128xf32>
    %2288 = arith.mulf %1947, %2287 : vector<8x128xf32>
    %2289 = arith.addf %2286, %2288 : vector<8x128xf32>
    %2290 = vector.broadcast %108 : f32 to vector<8x128xf32>
    %2291 = arith.mulf %1949, %2290 : vector<8x128xf32>
    %2292 = arith.addf %2289, %2291 : vector<8x128xf32>
    %2293 = vector.broadcast %172 : f32 to vector<8x128xf32>
    %2294 = arith.addf %2292, %2293 : vector<8x128xf32>
    %cst_142 = arith.constant 0.00999999977 : f32
    %2295 = vector.broadcast %cst_142 : f32 to vector<8x128xf32>
    %2296 = arith.mulf %2295, %2294 : vector<8x128xf32>
    %2297 = arith.maximumf %2294, %2296 : vector<8x128xf32>
    %2298 = vector.extract_strided_slice %1950 {offsets = [9, 0], sizes = [1, 128], strides = [1, 1]} : vector<16x128xf32> to vector<1x128xf32>
    %2299 = vector.broadcast %2298 : vector<1x128xf32> to vector<8x128xf32>
    %2300 = arith.mulf %2297, %2299 : vector<8x128xf32>
    %2301 = arith.addf %2266, %2300 : vector<8x128xf32>
    %2302 = vector.broadcast %109 : f32 to vector<8x128xf32>
    %2303 = arith.mulf %1933, %2302 : vector<8x128xf32>
    %2304 = vector.broadcast %110 : f32 to vector<8x128xf32>
    %2305 = arith.mulf %1935, %2304 : vector<8x128xf32>
    %2306 = arith.addf %2303, %2305 : vector<8x128xf32>
    %2307 = vector.broadcast %111 : f32 to vector<8x128xf32>
    %2308 = arith.mulf %1937, %2307 : vector<8x128xf32>
    %2309 = arith.addf %2306, %2308 : vector<8x128xf32>
    %2310 = vector.broadcast %112 : f32 to vector<8x128xf32>
    %2311 = arith.mulf %1939, %2310 : vector<8x128xf32>
    %2312 = arith.addf %2309, %2311 : vector<8x128xf32>
    %2313 = vector.broadcast %113 : f32 to vector<8x128xf32>
    %2314 = arith.mulf %1941, %2313 : vector<8x128xf32>
    %2315 = arith.addf %2312, %2314 : vector<8x128xf32>
    %2316 = vector.broadcast %114 : f32 to vector<8x128xf32>
    %2317 = arith.mulf %1943, %2316 : vector<8x128xf32>
    %2318 = arith.addf %2315, %2317 : vector<8x128xf32>
    %2319 = vector.broadcast %115 : f32 to vector<8x128xf32>
    %2320 = arith.mulf %1945, %2319 : vector<8x128xf32>
    %2321 = arith.addf %2318, %2320 : vector<8x128xf32>
    %2322 = vector.broadcast %116 : f32 to vector<8x128xf32>
    %2323 = arith.mulf %1947, %2322 : vector<8x128xf32>
    %2324 = arith.addf %2321, %2323 : vector<8x128xf32>
    %2325 = vector.broadcast %117 : f32 to vector<8x128xf32>
    %2326 = arith.mulf %1949, %2325 : vector<8x128xf32>
    %2327 = arith.addf %2324, %2326 : vector<8x128xf32>
    %2328 = vector.broadcast %173 : f32 to vector<8x128xf32>
    %2329 = arith.addf %2327, %2328 : vector<8x128xf32>
    %cst_143 = arith.constant 0.00999999977 : f32
    %2330 = vector.broadcast %cst_143 : f32 to vector<8x128xf32>
    %2331 = arith.mulf %2330, %2329 : vector<8x128xf32>
    %2332 = arith.maximumf %2329, %2331 : vector<8x128xf32>
    %2333 = vector.extract_strided_slice %1950 {offsets = [10, 0], sizes = [1, 128], strides = [1, 1]} : vector<16x128xf32> to vector<1x128xf32>
    %2334 = vector.broadcast %2333 : vector<1x128xf32> to vector<8x128xf32>
    %2335 = arith.mulf %2332, %2334 : vector<8x128xf32>
    %2336 = arith.addf %2301, %2335 : vector<8x128xf32>
    %2337 = vector.broadcast %118 : f32 to vector<8x128xf32>
    %2338 = arith.mulf %1933, %2337 : vector<8x128xf32>
    %2339 = vector.broadcast %119 : f32 to vector<8x128xf32>
    %2340 = arith.mulf %1935, %2339 : vector<8x128xf32>
    %2341 = arith.addf %2338, %2340 : vector<8x128xf32>
    %2342 = vector.broadcast %120 : f32 to vector<8x128xf32>
    %2343 = arith.mulf %1937, %2342 : vector<8x128xf32>
    %2344 = arith.addf %2341, %2343 : vector<8x128xf32>
    %2345 = vector.broadcast %121 : f32 to vector<8x128xf32>
    %2346 = arith.mulf %1939, %2345 : vector<8x128xf32>
    %2347 = arith.addf %2344, %2346 : vector<8x128xf32>
    %2348 = vector.broadcast %122 : f32 to vector<8x128xf32>
    %2349 = arith.mulf %1941, %2348 : vector<8x128xf32>
    %2350 = arith.addf %2347, %2349 : vector<8x128xf32>
    %2351 = vector.broadcast %123 : f32 to vector<8x128xf32>
    %2352 = arith.mulf %1943, %2351 : vector<8x128xf32>
    %2353 = arith.addf %2350, %2352 : vector<8x128xf32>
    %2354 = vector.broadcast %124 : f32 to vector<8x128xf32>
    %2355 = arith.mulf %1945, %2354 : vector<8x128xf32>
    %2356 = arith.addf %2353, %2355 : vector<8x128xf32>
    %2357 = vector.broadcast %125 : f32 to vector<8x128xf32>
    %2358 = arith.mulf %1947, %2357 : vector<8x128xf32>
    %2359 = arith.addf %2356, %2358 : vector<8x128xf32>
    %2360 = vector.broadcast %126 : f32 to vector<8x128xf32>
    %2361 = arith.mulf %1949, %2360 : vector<8x128xf32>
    %2362 = arith.addf %2359, %2361 : vector<8x128xf32>
    %2363 = vector.broadcast %174 : f32 to vector<8x128xf32>
    %2364 = arith.addf %2362, %2363 : vector<8x128xf32>
    %cst_144 = arith.constant 0.00999999977 : f32
    %2365 = vector.broadcast %cst_144 : f32 to vector<8x128xf32>
    %2366 = arith.mulf %2365, %2364 : vector<8x128xf32>
    %2367 = arith.maximumf %2364, %2366 : vector<8x128xf32>
    %2368 = vector.extract_strided_slice %1950 {offsets = [11, 0], sizes = [1, 128], strides = [1, 1]} : vector<16x128xf32> to vector<1x128xf32>
    %2369 = vector.broadcast %2368 : vector<1x128xf32> to vector<8x128xf32>
    %2370 = arith.mulf %2367, %2369 : vector<8x128xf32>
    %2371 = arith.addf %2336, %2370 : vector<8x128xf32>
    %2372 = vector.broadcast %127 : f32 to vector<8x128xf32>
    %2373 = arith.mulf %1933, %2372 : vector<8x128xf32>
    %2374 = vector.broadcast %128 : f32 to vector<8x128xf32>
    %2375 = arith.mulf %1935, %2374 : vector<8x128xf32>
    %2376 = arith.addf %2373, %2375 : vector<8x128xf32>
    %2377 = vector.broadcast %129 : f32 to vector<8x128xf32>
    %2378 = arith.mulf %1937, %2377 : vector<8x128xf32>
    %2379 = arith.addf %2376, %2378 : vector<8x128xf32>
    %2380 = vector.broadcast %130 : f32 to vector<8x128xf32>
    %2381 = arith.mulf %1939, %2380 : vector<8x128xf32>
    %2382 = arith.addf %2379, %2381 : vector<8x128xf32>
    %2383 = vector.broadcast %131 : f32 to vector<8x128xf32>
    %2384 = arith.mulf %1941, %2383 : vector<8x128xf32>
    %2385 = arith.addf %2382, %2384 : vector<8x128xf32>
    %2386 = vector.broadcast %132 : f32 to vector<8x128xf32>
    %2387 = arith.mulf %1943, %2386 : vector<8x128xf32>
    %2388 = arith.addf %2385, %2387 : vector<8x128xf32>
    %2389 = vector.broadcast %133 : f32 to vector<8x128xf32>
    %2390 = arith.mulf %1945, %2389 : vector<8x128xf32>
    %2391 = arith.addf %2388, %2390 : vector<8x128xf32>
    %2392 = vector.broadcast %134 : f32 to vector<8x128xf32>
    %2393 = arith.mulf %1947, %2392 : vector<8x128xf32>
    %2394 = arith.addf %2391, %2393 : vector<8x128xf32>
    %2395 = vector.broadcast %135 : f32 to vector<8x128xf32>
    %2396 = arith.mulf %1949, %2395 : vector<8x128xf32>
    %2397 = arith.addf %2394, %2396 : vector<8x128xf32>
    %2398 = vector.broadcast %175 : f32 to vector<8x128xf32>
    %2399 = arith.addf %2397, %2398 : vector<8x128xf32>
    %cst_145 = arith.constant 0.00999999977 : f32
    %2400 = vector.broadcast %cst_145 : f32 to vector<8x128xf32>
    %2401 = arith.mulf %2400, %2399 : vector<8x128xf32>
    %2402 = arith.maximumf %2399, %2401 : vector<8x128xf32>
    %2403 = vector.extract_strided_slice %1950 {offsets = [12, 0], sizes = [1, 128], strides = [1, 1]} : vector<16x128xf32> to vector<1x128xf32>
    %2404 = vector.broadcast %2403 : vector<1x128xf32> to vector<8x128xf32>
    %2405 = arith.mulf %2402, %2404 : vector<8x128xf32>
    %2406 = arith.addf %2371, %2405 : vector<8x128xf32>
    %2407 = vector.broadcast %136 : f32 to vector<8x128xf32>
    %2408 = arith.mulf %1933, %2407 : vector<8x128xf32>
    %2409 = vector.broadcast %137 : f32 to vector<8x128xf32>
    %2410 = arith.mulf %1935, %2409 : vector<8x128xf32>
    %2411 = arith.addf %2408, %2410 : vector<8x128xf32>
    %2412 = vector.broadcast %138 : f32 to vector<8x128xf32>
    %2413 = arith.mulf %1937, %2412 : vector<8x128xf32>
    %2414 = arith.addf %2411, %2413 : vector<8x128xf32>
    %2415 = vector.broadcast %139 : f32 to vector<8x128xf32>
    %2416 = arith.mulf %1939, %2415 : vector<8x128xf32>
    %2417 = arith.addf %2414, %2416 : vector<8x128xf32>
    %2418 = vector.broadcast %140 : f32 to vector<8x128xf32>
    %2419 = arith.mulf %1941, %2418 : vector<8x128xf32>
    %2420 = arith.addf %2417, %2419 : vector<8x128xf32>
    %2421 = vector.broadcast %141 : f32 to vector<8x128xf32>
    %2422 = arith.mulf %1943, %2421 : vector<8x128xf32>
    %2423 = arith.addf %2420, %2422 : vector<8x128xf32>
    %2424 = vector.broadcast %142 : f32 to vector<8x128xf32>
    %2425 = arith.mulf %1945, %2424 : vector<8x128xf32>
    %2426 = arith.addf %2423, %2425 : vector<8x128xf32>
    %2427 = vector.broadcast %143 : f32 to vector<8x128xf32>
    %2428 = arith.mulf %1947, %2427 : vector<8x128xf32>
    %2429 = arith.addf %2426, %2428 : vector<8x128xf32>
    %2430 = vector.broadcast %144 : f32 to vector<8x128xf32>
    %2431 = arith.mulf %1949, %2430 : vector<8x128xf32>
    %2432 = arith.addf %2429, %2431 : vector<8x128xf32>
    %2433 = vector.broadcast %176 : f32 to vector<8x128xf32>
    %2434 = arith.addf %2432, %2433 : vector<8x128xf32>
    %cst_146 = arith.constant 0.00999999977 : f32
    %2435 = vector.broadcast %cst_146 : f32 to vector<8x128xf32>
    %2436 = arith.mulf %2435, %2434 : vector<8x128xf32>
    %2437 = arith.maximumf %2434, %2436 : vector<8x128xf32>
    %2438 = vector.extract_strided_slice %1950 {offsets = [13, 0], sizes = [1, 128], strides = [1, 1]} : vector<16x128xf32> to vector<1x128xf32>
    %2439 = vector.broadcast %2438 : vector<1x128xf32> to vector<8x128xf32>
    %2440 = arith.mulf %2437, %2439 : vector<8x128xf32>
    %2441 = arith.addf %2406, %2440 : vector<8x128xf32>
    %2442 = vector.broadcast %145 : f32 to vector<8x128xf32>
    %2443 = arith.mulf %1933, %2442 : vector<8x128xf32>
    %2444 = vector.broadcast %146 : f32 to vector<8x128xf32>
    %2445 = arith.mulf %1935, %2444 : vector<8x128xf32>
    %2446 = arith.addf %2443, %2445 : vector<8x128xf32>
    %2447 = vector.broadcast %147 : f32 to vector<8x128xf32>
    %2448 = arith.mulf %1937, %2447 : vector<8x128xf32>
    %2449 = arith.addf %2446, %2448 : vector<8x128xf32>
    %2450 = vector.broadcast %148 : f32 to vector<8x128xf32>
    %2451 = arith.mulf %1939, %2450 : vector<8x128xf32>
    %2452 = arith.addf %2449, %2451 : vector<8x128xf32>
    %2453 = vector.broadcast %149 : f32 to vector<8x128xf32>
    %2454 = arith.mulf %1941, %2453 : vector<8x128xf32>
    %2455 = arith.addf %2452, %2454 : vector<8x128xf32>
    %2456 = vector.broadcast %150 : f32 to vector<8x128xf32>
    %2457 = arith.mulf %1943, %2456 : vector<8x128xf32>
    %2458 = arith.addf %2455, %2457 : vector<8x128xf32>
    %2459 = vector.broadcast %151 : f32 to vector<8x128xf32>
    %2460 = arith.mulf %1945, %2459 : vector<8x128xf32>
    %2461 = arith.addf %2458, %2460 : vector<8x128xf32>
    %2462 = vector.broadcast %152 : f32 to vector<8x128xf32>
    %2463 = arith.mulf %1947, %2462 : vector<8x128xf32>
    %2464 = arith.addf %2461, %2463 : vector<8x128xf32>
    %2465 = vector.broadcast %153 : f32 to vector<8x128xf32>
    %2466 = arith.mulf %1949, %2465 : vector<8x128xf32>
    %2467 = arith.addf %2464, %2466 : vector<8x128xf32>
    %2468 = vector.broadcast %177 : f32 to vector<8x128xf32>
    %2469 = arith.addf %2467, %2468 : vector<8x128xf32>
    %cst_147 = arith.constant 0.00999999977 : f32
    %2470 = vector.broadcast %cst_147 : f32 to vector<8x128xf32>
    %2471 = arith.mulf %2470, %2469 : vector<8x128xf32>
    %2472 = arith.maximumf %2469, %2471 : vector<8x128xf32>
    %2473 = vector.extract_strided_slice %1950 {offsets = [14, 0], sizes = [1, 128], strides = [1, 1]} : vector<16x128xf32> to vector<1x128xf32>
    %2474 = vector.broadcast %2473 : vector<1x128xf32> to vector<8x128xf32>
    %2475 = arith.mulf %2472, %2474 : vector<8x128xf32>
    %2476 = arith.addf %2441, %2475 : vector<8x128xf32>
    %2477 = vector.broadcast %154 : f32 to vector<8x128xf32>
    %2478 = arith.mulf %1933, %2477 : vector<8x128xf32>
    %2479 = vector.broadcast %155 : f32 to vector<8x128xf32>
    %2480 = arith.mulf %1935, %2479 : vector<8x128xf32>
    %2481 = arith.addf %2478, %2480 : vector<8x128xf32>
    %2482 = vector.broadcast %156 : f32 to vector<8x128xf32>
    %2483 = arith.mulf %1937, %2482 : vector<8x128xf32>
    %2484 = arith.addf %2481, %2483 : vector<8x128xf32>
    %2485 = vector.broadcast %157 : f32 to vector<8x128xf32>
    %2486 = arith.mulf %1939, %2485 : vector<8x128xf32>
    %2487 = arith.addf %2484, %2486 : vector<8x128xf32>
    %2488 = vector.broadcast %158 : f32 to vector<8x128xf32>
    %2489 = arith.mulf %1941, %2488 : vector<8x128xf32>
    %2490 = arith.addf %2487, %2489 : vector<8x128xf32>
    %2491 = vector.broadcast %159 : f32 to vector<8x128xf32>
    %2492 = arith.mulf %1943, %2491 : vector<8x128xf32>
    %2493 = arith.addf %2490, %2492 : vector<8x128xf32>
    %2494 = vector.broadcast %160 : f32 to vector<8x128xf32>
    %2495 = arith.mulf %1945, %2494 : vector<8x128xf32>
    %2496 = arith.addf %2493, %2495 : vector<8x128xf32>
    %2497 = vector.broadcast %161 : f32 to vector<8x128xf32>
    %2498 = arith.mulf %1947, %2497 : vector<8x128xf32>
    %2499 = arith.addf %2496, %2498 : vector<8x128xf32>
    %2500 = vector.broadcast %162 : f32 to vector<8x128xf32>
    %2501 = arith.mulf %1949, %2500 : vector<8x128xf32>
    %2502 = arith.addf %2499, %2501 : vector<8x128xf32>
    %2503 = vector.broadcast %178 : f32 to vector<8x128xf32>
    %2504 = arith.addf %2502, %2503 : vector<8x128xf32>
    %cst_148 = arith.constant 0.00999999977 : f32
    %2505 = vector.broadcast %cst_148 : f32 to vector<8x128xf32>
    %2506 = arith.mulf %2505, %2504 : vector<8x128xf32>
    %2507 = arith.maximumf %2504, %2506 : vector<8x128xf32>
    %2508 = vector.extract_strided_slice %1950 {offsets = [15, 0], sizes = [1, 128], strides = [1, 1]} : vector<16x128xf32> to vector<1x128xf32>
    %2509 = vector.broadcast %2508 : vector<1x128xf32> to vector<8x128xf32>
    %2510 = arith.mulf %2507, %2509 : vector<8x128xf32>
    %2511 = arith.addf %2476, %2510 : vector<8x128xf32>
    %cst_149 = arith.constant dense<0.000000e+00> : vector<8xf32>
    %2512 = vector.multi_reduction <add>, %2511, %cst_149 [1] : vector<8x128xf32> to vector<8xf32>
    %2513 = vector.shape_cast %2512 : vector<8xf32> to vector<8x1xf32>
    %2514 = arith.addf %1931, %2513 : vector<8x1xf32>
    %2515 = vector.broadcast %179 : f32 to vector<8x1xf32>
    %2516 = arith.addf %2514, %2515 : vector<8x1xf32>
    %2517 = arith.index_cast %181 : i32 to index
    %c0_150 = arith.constant 0 : index
    %2518 = vector.load %arg6[%2517, %c0_150] : memref<8x1xf32, #tpu.memory_space<vmem>>, vector<8x1xf32>
    tpu.vector_store %arg6[%2517, %c0_150], %2516 {strides = array<i32>} : memref<8x1xf32, #tpu.memory_space<vmem>>, vector<8x1xf32>,
    %c1_i32 = arith.constant 1 : i32
    return
  }
  func.func @transform_0(%arg0: i32) -> (i32, i32) {
    %c0_i32 = arith.constant 0 : i32
    %c0_i32_0 = arith.constant 0 : i32
    return %arg0, %c0_i32 : i32, i32
  }
  func.func @transform_1(%arg0: i32) -> (i32, i32) {
    %c0_i32 = arith.constant 0 : i32
    %c0_i32_0 = arith.constant 0 : i32
    %c0_i32_1 = arith.constant 0 : i32
    return %c0_i32, %c0_i32_0 : i32, i32
  }
  func.func @transform_2(%arg0: i32) -> i32 {
    %c0_i32 = arith.constant 0 : i32
    %c0_i32_0 = arith.constant 0 : i32
    return %c0_i32 : i32
  }
  func.func @transform_3(%arg0: i32) -> i32 {
    %c0_i32 = arith.constant 0 : i32
    %c0_i32_0 = arith.constant 0 : i32
    return %c0_i32 : i32
  }
  func.func @transform_4(%arg0: i32) -> i32 {
    %c0_i32 = arith.constant 0 : i32
    %c0_i32_0 = arith.constant 0 : i32
    return %c0_i32 : i32
  }
  func.func @transform_5(%arg0: i32) -> (i32, i32) {
    %c0_i32 = arith.constant 0 : i32
    %c0_i32_0 = arith.constant 0 : i32
    return %arg0, %c0_i32 : i32, i32
  }
}

</mosaic_0001>

<llo_original>
// kernel: squeeze.22
$region0: #{squeeze.22}
  %s0 = inlined_call_operand.vmem [shape: f32[16,1,3,3], index: 0, kind: input, shape index: {}]
  %s1 = inlined_call_operand.vmem [shape: f32[144], index: 1, kind: output, shape index: {}]
  $region1: #{squeeze.22} parent=0
    #allocation0 [shape = 'u8[4096]{0}', space=vmem, size = 0x1000, scoped, tag = 'scoped mem for output reshape']
    #allocation1 [shape = 'u8[65536]{0}', space=vmem, size = 0x10000, scoped, tag = 'scoped mem for input reshape']
    %s3 = ssub.s32 16, 1
    %s4 = scalar_lea.vmem %s0, 60
    %v5 = vld [vmem:[%s4] sm:%s3]
    %s6 = scalar_lea.vmem [#allocation1], 120
    %7 = vst [vmem:[%s6] sm:%s3] %v5
    %s8 = scalar_lea.vmem %s0, 56
    %v9 = vld [vmem:[%s8] sm:%s3]
    %s10 = scalar_lea.vmem [#allocation1], 112
    %11 = vst [vmem:[%s10] sm:%s3] %v9
    %s12 = scalar_lea.vmem %s0, 52
    %v13 = vld [vmem:[%s12] sm:%s3]
    %s14 = scalar_lea.vmem [#allocation1], 104
    %15 = vst [vmem:[%s14] sm:%s3] %v13
    %s16 = scalar_lea.vmem %s0, 48
    %v17 = vld [vmem:[%s16] sm:%s3]
    %s18 = scalar_lea.vmem [#allocation1], 96
    %19 = vst [vmem:[%s18] sm:%s3] %v17
    %s20 = scalar_lea.vmem %s0, 44
    %v21 = vld [vmem:[%s20] sm:%s3]
    %s22 = scalar_lea.vmem [#allocation1], 88
    %23 = vst [vmem:[%s22] sm:%s3] %v21
    %s24 = scalar_lea.vmem %s0, 40
    %v25 = vld [vmem:[%s24] sm:%s3]
    %s26 = scalar_lea.vmem [#allocation1], 80
    %27 = vst [vmem:[%s26] sm:%s3] %v25
    %s28 = scalar_lea.vmem %s0, 36
    %v29 = vld [vmem:[%s28] sm:%s3]
    %s30 = scalar_lea.vmem [#allocation1], 72
    %31 = vst [vmem:[%s30] sm:%s3] %v29
    %s32 = scalar_lea.vmem %s0, 32
    %v33 = vld [vmem:[%s32] sm:%s3]
    %s34 = scalar_lea.vmem [#allocation1], 64
    %35 = vst [vmem:[%s34] sm:%s3] %v33
    %s36 = scalar_lea.vmem %s0, 28
    %v37 = vld [vmem:[%s36] sm:%s3]
    %s38 = scalar_lea.vmem [#allocation1], 56
    %39 = vst [vmem:[%s38] sm:%s3] %v37
    %s40 = scalar_lea.vmem %s0, 24
    %v41 = vld [vmem:[%s40] sm:%s3]
    %s42 = scalar_lea.vmem [#allocation1], 48
    %43 = vst [vmem:[%s42] sm:%s3] %v41
    %s44 = scalar_lea.vmem %s0, 20
    %v45 = vld [vmem:[%s44] sm:%s3]
    %s46 = scalar_lea.vmem [#allocation1], 40
    %47 = vst [vmem:[%s46] sm:%s3] %v45
    %s48 = scalar_lea.vmem %s0, 16
    %v49 = vld [vmem:[%s48] sm:%s3]
    %s50 = scalar_lea.vmem [#allocation1], 32
    %51 = vst [vmem:[%s50] sm:%s3] %v49
    %s52 = scalar_lea.vmem %s0, 12
    %v53 = vld [vmem:[%s52] sm:%s3]
    %s54 = scalar_lea.vmem [#allocation1], 24
    %55 = vst [vmem:[%s54] sm:%s3] %v53
    %s56 = scalar_lea.vmem %s0, 8
    %v57 = vld [vmem:[%s56] sm:%s3]
    %s58 = scalar_lea.vmem [#allocation1], 16
    %59 = vst [vmem:[%s58] sm:%s3] %v57
    %s60 = scalar_lea.vmem %s0, 4
    %v61 = vld [vmem:[%s60] sm:%s3]
    %s62 = scalar_lea.vmem [#allocation1], 8
    %63 = vst [vmem:[%s62] sm:%s3] %v61
    %v64 = vld [vmem:[%s0] sm:%s3]
    %65 = vst [vmem:[#allocation1] sm:%s3] %v64
    %v66 = vld [vmem:[#allocation1] sm:$0x1]
    %vm67 = vcmask 23552
    %68 = vst.msk [vmem:[#allocation0] sm:$0x1] %vm67, %v66
    %s69 = scalar_lea.vmem [#allocation1], 112
    %v70 = vld [vmem:[%s69] sm:$0x1]
    %s71 = scalar_lea.vmem [#allocation1], 112
    %v72 = vld [vmem:[%s71] sm:$0x1]
    %vm73 = vcmask 15360
    %v74 = vsel %vm73, %v72, %v70
    %75 = vrot.lane.b32.xlu0 %v74, 126
    %v76 = vpop.permute.xlu0 %75
    %vm77 = vcmask 7168
    %s78 = scalar_lea.vmem [#allocation0], 1
    %79 = vst.msk [vmem:[%s78] sm:$0x1] %vm77, %v76
    %vm80 = vcmask 1048560
    %81 = vst.msk [vmem:[#allocation0] sm:$0x1] %vm80, %v76
    %s82 = scalar_lea.vmem [#allocation1], 106
    %v83 = vld [vmem:[%s82] sm:$0x1]
    %84 = vrot.lane.b32.xlu0 %v83, 123
    %v85 = vpop.permute.xlu0 %84
    %vm86 = vcmask 1032152
    %87 = vst.msk [vmem:[#allocation0] sm:$0x1] %vm86, %v85
    %s88 = scalar_lea.vmem [#allocation1], 105
    %v89 = vld [vmem:[%s88] sm:$0x1]
    %90 = vrot.lane.b32.xlu0 %v89, 120
    %v91 = vpop.permute.xlu0 %90
    %vm92 = vcmask 1007552
    %93 = vst.msk [vmem:[#allocation0] sm:$0x1] %vm92, %v91
    %s94 = scalar_lea.vmem [#allocation1], 104
    %v95 = vld [vmem:[%s94] sm:$0x1]
    %96 = vrot.lane.b32.xlu0 %v95, 117
    %v97 = vpop.permute.xlu0 %96
    %vm98 = vcmask 982952
    %99 = vst.msk [vmem:[#allocation0] sm:$0x1] %vm98, %v97
    %s100 = scalar_lea.vmem [#allocation1], 98
    %v101 = vld [vmem:[%s100] sm:$0x1]
    %102 = vrot.lane.b32.xlu0 %v101, 114
    %v103 = vpop.permute.xlu0 %102
    %vm104 = vcmask 958352
    %105 = vst.msk [vmem:[#allocation0] sm:$0x1] %vm104, %v103
    %s106 = scalar_lea.vmem [#allocation1], 97
    %v107 = vld [vmem:[%s106] sm:$0x1]
    %108 = vrot.lane.b32.xlu0 %v107, 111
    %v109 = vpop.permute.xlu0 %108
    %vm110 = vcmask 933752
    %111 = vst.msk [vmem:[#allocation0] sm:$0x1] %vm110, %v109
    %s112 = scalar_lea.vmem [#allocation1], 96
    %v113 = vld [vmem:[%s112] sm:$0x1]
    %114 = vrot.lane.b32.xlu0 %v113, 108
    %v115 = vpop.permute.xlu0 %114
    %vm116 = vcmask 909152
    %117 = vst.msk [vmem:[#allocation0] sm:$0x1] %vm116, %v115
    %s118 = scalar_lea.vmem [#allocation1], 90
    %v119 = vld [vmem:[%s118] sm:$0x1]
    %120 = vrot.lane.b32.xlu0 %v119, 105
    %v121 = vpop.permute.xlu0 %120
    %vm122 = vcmask 884552
    %123 = vst.msk [vmem:[#allocation0] sm:$0x1] %vm122, %v121
    %s124 = scalar_lea.vmem [#allocation1], 89
    %v125 = vld [vmem:[%s124] sm:$0x1]
    %126 = vrot.lane.b32.xlu0 %v125, 102
    %v127 = vpop.permute.xlu0 %126
    %vm128 = vcmask 859952
    %129 = vst.msk [vmem:[#allocation0] sm:$0x1] %vm128, %v127
    %s130 = scalar_lea.vmem [#allocation1], 88
    %v131 = vld [vmem:[%s130] sm:$0x1]
    %132 = vrot.lane.b32.xlu0 %v131, 99
    %v133 = vpop.permute.xlu0 %132
    %vm134 = vcmask 835352
    %135 = vst.msk [vmem:[#allocation0] sm:$0x1] %vm134, %v133
    %s136 = scalar_lea.vmem [#allocation1], 82
    %v137 = vld [vmem:[%s136] sm:$0x1]
    %138 = vrot.lane.b32.xlu0 %v137, 96
    %v139 = vpop.permute.xlu0 %138
    %vm140 = vcmask 810752
    %141 = vst.msk [vmem:[#allocation0] sm:$0x1] %vm140, %v139
    %s142 = scalar_lea.vmem [#allocation1], 81
    %v143 = vld [vmem:[%s142] sm:$0x1]
    %144 = vrot.lane.b32.xlu0 %v143, 93
    %v145 = vpop.permute.xlu0 %144
    %vm146 = vcmask 786152
    %147 = vst.msk [vmem:[#allocation0] sm:$0x1] %vm146, %v145
    %s148 = scalar_lea.vmem [#allocation1], 80
    %v149 = vld [vmem:[%s148] sm:$0x1]
    %150 = vrot.lane.b32.xlu0 %v149, 90
    %v151 = vpop.permute.xlu0 %150
    %vm152 = vcmask 761552
    %153 = vst.msk [vmem:[#allocation0] sm:$0x1] %vm152, %v151
    %s154 = scalar_lea.vmem [#allocation1], 74
    %v155 = vld [vmem:[%s154] sm:$0x1]
    %156 = vrot.lane.b32.xlu0 %v155, 87
    %v157 = vpop.permute.xlu0 %156
    %vm158 = vcmask 736952
    %159 = vst.msk [vmem:[#allocation0] sm:$0x1] %vm158, %v157
    %s160 = scalar_lea.vmem [#allocation1], 73
    %v161 = vld [vmem:[%s160] sm:$0x1]
    %162 = vrot.lane.b32.xlu0 %v161, 84
    %v163 = vpop.permute.xlu0 %162
    %vm164 = vcmask 712352
    %165 = vst.msk [vmem:[#allocation0] sm:$0x1] %vm164, %v163
    %s166 = scalar_lea.vmem [#allocation1], 72
    %v167 = vld [vmem:[%s166] sm:$0x1]
    %168 = vrot.lane.b32.xlu0 %v167, 81
    %v169 = vpop.permute.xlu0 %168
    %vm170 = vcmask 687752
    %171 = vst.msk [vmem:[#allocation0] sm:$0x1] %vm170, %v169
    %s172 = scalar_lea.vmem [#allocation1], 66
    %v173 = vld [vmem:[%s172] sm:$0x1]
    %174 = vrot.lane.b32.xlu0 %v173, 78
    %v175 = vpop.permute.xlu0 %174
    %vm176 = vcmask 663152
    %177 = vst.msk [vmem:[#allocation0] sm:$0x1] %vm176, %v175
    %s178 = scalar_lea.vmem [#allocation1], 65
    %v179 = vld [vmem:[%s178] sm:$0x1]
    %180 = vrot.lane.b32.xlu0 %v179, 75
    %v181 = vpop.permute.xlu0 %180
    %vm182 = vcmask 638552
    %183 = vst.msk [vmem:[#allocation0] sm:$0x1] %vm182, %v181
    %s184 = scalar_lea.vmem [#allocation1], 64
    %v185 = vld [vmem:[%s184] sm:$0x1]
    %186 = vrot.lane.b32.xlu0 %v185, 72
    %v187 = vpop.permute.xlu0 %186
    %vm188 = vcmask 613952
    %189 = vst.msk [vmem:[#allocation0] sm:$0x1] %vm188, %v187
    %s190 = scalar_lea.vmem [#allocation1], 58
    %v191 = vld [vmem:[%s190] sm:$0x1]
    %192 = vrot.lane.b32.xlu0 %v191, 69
    %v193 = vpop.permute.xlu0 %192
    %vm194 = vcmask 589352
    %195 = vst.msk [vmem:[#allocation0] sm:$0x1] %vm194, %v193
    %s196 = scalar_lea.vmem [#allocation1], 57
    %v197 = vld [vmem:[%s196] sm:$0x1]
    %198 = vrot.lane.b32.xlu0 %v197, 66
    %v199 = vpop.permute.xlu0 %198
    %vm200 = vcmask 564752
    %201 = vst.msk [vmem:[#allocation0] sm:$0x1] %vm200, %v199
    %s202 = scalar_lea.vmem [#allocation1], 56
    %v203 = vld [vmem:[%s202] sm:$0x1]
    %204 = vrot.lane.b32.xlu0 %v203, 63
    %v205 = vpop.permute.xlu0 %204
    %vm206 = vcmask 540152
    %207 = vst.msk [vmem:[#allocation0] sm:$0x1] %vm206, %v205
    %s208 = scalar_lea.vmem [#allocation1], 50
    %v209 = vld [vmem:[%s208] sm:$0x1]
    %210 = vrot.lane.b32.xlu0 %v209, 60
    %v211 = vpop.permute.xlu0 %210
    %vm212 = vcmask 515552
    %213 = vst.msk [vmem:[#allocation0] sm:$0x1] %vm212, %v211
    %s214 = scalar_lea.vmem [#allocation1], 49
    %v215 = vld [vmem:[%s214] sm:$0x1]
    %216 = vrot.lane.b32.xlu0 %v215, 57
    %v217 = vpop.permute.xlu0 %216
    %vm218 = vcmask 490952
    %219 = vst.msk [vmem:[#allocation0] sm:$0x1] %vm218, %v217
    %s220 = scalar_lea.vmem [#allocation1], 48
    %v221 = vld [vmem:[%s220] sm:$0x1]
    %222 = vrot.lane.b32.xlu0 %v221, 54
    %v223 = vpop.permute.xlu0 %222
    %vm224 = vcmask 466352
    %225 = vst.msk [vmem:[#allocation0] sm:$0x1] %vm224, %v223
    %s226 = scalar_lea.vmem [#allocation1], 42
    %v227 = vld [vmem:[%s226] sm:$0x1]
    %228 = vrot.lane.b32.xlu0 %v227, 51
    %v229 = vpop.permute.xlu0 %228
    %vm230 = vcmask 441752
    %231 = vst.msk [vmem:[#allocation0] sm:$0x1] %vm230, %v229
    %s232 = scalar_lea.vmem [#allocation1], 41
    %v233 = vld [vmem:[%s232] sm:$0x1]
    %234 = vrot.lane.b32.xlu0 %v233, 48
    %v235 = vpop.permute.xlu0 %234
    %vm236 = vcmask 417152
    %237 = vst.msk [vmem:[#allocation0] sm:$0x1] %vm236, %v235
    %s238 = scalar_lea.vmem [#allocation1], 40
    %v239 = vld [vmem:[%s238] sm:$0x1]
    %240 = vrot.lane.b32.xlu0 %v239, 45
    %v241 = vpop.permute.xlu0 %240
    %vm242 = vcmask 392552
    %243 = vst.msk [vmem:[#allocation0] sm:$0x1] %vm242, %v241
    %s244 = scalar_lea.vmem [#allocation1], 34
    %v245 = vld [vmem:[%s244] sm:$0x1]
    %246 = vrot.lane.b32.xlu0 %v245, 42
    %v247 = vpop.permute.xlu0 %246
    %vm248 = vcmask 367952
    %249 = vst.msk [vmem:[#allocation0] sm:$0x1] %vm248, %v247
    %s250 = scalar_lea.vmem [#allocation1], 33
    %v251 = vld [vmem:[%s250] sm:$0x1]
    %252 = vrot.lane.b32.xlu0 %v251, 39
    %v253 = vpop.permute.xlu0 %252
    %vm254 = vcmask 343352
    %255 = vst.msk [vmem:[#allocation0] sm:$0x1] %vm254, %v253
    %s256 = scalar_lea.vmem [#allocation1], 32
    %v257 = vld [vmem:[%s256] sm:$0x1]
    %258 = vrot.lane.b32.xlu0 %v257, 36
    %v259 = vpop.permute.xlu0 %258
    %vm260 = vcmask 318752
    %261 = vst.msk [vmem:[#allocation0] sm:$0x1] %vm260, %v259
    %s262 = scalar_lea.vmem [#allocation1], 26
    %v263 = vld [vmem:[%s262] sm:$0x1]
    %264 = vrot.lane.b32.xlu0 %v263, 33
    %v265 = vpop.permute.xlu0 %264
    %vm266 = vcmask 294152
    %267 = vst.msk [vmem:[#allocation0] sm:$0x1] %vm266, %v265
    %s268 = scalar_lea.vmem [#allocation1], 25
    %v269 = vld [vmem:[%s268] sm:$0x1]
    %270 = vrot.lane.b32.xlu0 %v269, 30
    %v271 = vpop.permute.xlu0 %270
    %vm272 = vcmask 269552
    %273 = vst.msk [vmem:[#allocation0] sm:$0x1] %vm272, %v271
    %s274 = scalar_lea.vmem [#allocation1], 24
    %v275 = vld [vmem:[%s274] sm:$0x1]
    %276 = vrot.lane.b32.xlu0 %v275, 27
    %v277 = vpop.permute.xlu0 %276
    %vm278 = vcmask 244952
    %279 = vst.msk [vmem:[#allocation0] sm:$0x1] %vm278, %v277
    %s280 = scalar_lea.vmem [#allocation1], 18
    %v281 = vld [vmem:[%s280] sm:$0x1]
    %282 = vrot.lane.b32.xlu0 %v281, 24
    %v283 = vpop.permute.xlu0 %282
    %vm284 = vcmask 220352
    %285 = vst.msk [vmem:[#allocation0] sm:$0x1] %vm284, %v283
    %s286 = scalar_lea.vmem [#allocation1], 17
    %v287 = vld [vmem:[%s286] sm:$0x1]
    %288 = vrot.lane.b32.xlu0 %v287, 21
    %v289 = vpop.permute.xlu0 %288
    %vm290 = vcmask 195752
    %291 = vst.msk [vmem:[#allocation0] sm:$0x1] %vm290, %v289
    %s292 = scalar_lea.vmem [#allocation1], 16
    %v293 = vld [vmem:[%s292] sm:$0x1]
    %294 = vrot.lane.b32.xlu0 %v293, 18
    %v295 = vpop.permute.xlu0 %294
    %vm296 = vcmask 171152
    %297 = vst.msk [vmem:[#allocation0] sm:$0x1] %vm296, %v295
    %s298 = scalar_lea.vmem [#allocation1], 10
    %v299 = vld [vmem:[%s298] sm:$0x1]
    %300 = vrot.lane.b32.xlu0 %v299, 15
    %v301 = vpop.permute.xlu0 %300
    %vm302 = vcmask 146552
    %303 = vst.msk [vmem:[#allocation0] sm:$0x1] %vm302, %v301
    %s304 = scalar_lea.vmem [#allocation1], 122
    %v305 = vld [vmem:[%s304] sm:$0x1]
    %306 = vrot.lane.b32.xlu0 %v305, 13
    %v307 = vpop.permute.xlu0 %306
    %vm308 = vcmask 130152
    %s309 = scalar_lea.vmem [#allocation0], 1
    %310 = vst.msk [vmem:[%s309] sm:$0x1] %vm308, %v307
    %s311 = scalar_lea.vmem [#allocation1], 9
    %v312 = vld [vmem:[%s311] sm:$0x1]
    %313 = vrot.lane.b32.xlu0 %v312, 12
    %v314 = vpop.permute.xlu0 %313
    %vm315 = vcmask 121952
    %316 = vst.msk [vmem:[#allocation0] sm:$0x1] %vm315, %v314
    %s317 = scalar_lea.vmem [#allocation1], 121
    %v318 = vld [vmem:[%s317] sm:$0x1]
    %319 = vrot.lane.b32.xlu0 %v318, 10
    %v320 = vpop.permute.xlu0 %319
    %vm321 = vcmask 105552
    %s322 = scalar_lea.vmem [#allocation0], 1
    %323 = vst.msk [vmem:[%s322] sm:$0x1] %vm321, %v320
    %s324 = scalar_lea.vmem [#allocation1], 8
    %v325 = vld [vmem:[%s324] sm:$0x1]
    %326 = vrot.lane.b32.xlu0 %v325, 9
    %v327 = vpop.permute.xlu0 %326
    %vm328 = vcmask 97352
    %329 = vst.msk [vmem:[#allocation0] sm:$0x1] %vm328, %v327
    %s330 = scalar_lea.vmem [#allocation1], 120
    %v331 = vld [vmem:[%s330] sm:$0x1]
    %332 = vrot.lane.b32.xlu0 %v331, 7
    %v333 = vpop.permute.xlu0 %332
    %vm334 = vcmask 80952
    %s335 = scalar_lea.vmem [#allocation0], 1
    %336 = vst.msk [vmem:[%s335] sm:$0x1] %vm334, %v333
    %s337 = scalar_lea.vmem [#allocation1], 2
    %v338 = vld [vmem:[%s337] sm:$0x1]
    %339 = vrot.lane.b32.xlu0 %v338, 6
    %v340 = vpop.permute.xlu0 %339
    %vm341 = vcmask 72752
    %342 = vst.msk [vmem:[#allocation0] sm:$0x1] %vm341, %v340
    %s343 = scalar_lea.vmem [#allocation1], 114
    %v344 = vld [vmem:[%s343] sm:$0x1]
    %345 = vrot.lane.b32.xlu0 %v344, 4
    %v346 = vpop.permute.xlu0 %345
    %vm347 = vcmask 56352
    %s348 = scalar_lea.vmem [#allocation0], 1
    %349 = vst.msk [vmem:[%s348] sm:$0x1] %vm347, %v346
    %s350 = scalar_lea.vmem [#allocation1], 1
    %v351 = vld [vmem:[%s350] sm:$0x1]
    %352 = vrot.lane.b32.xlu0 %v351, 3
    %v353 = vpop.permute.xlu0 %352
    %vm354 = vcmask 48152
    %355 = vst.msk [vmem:[#allocation0] sm:$0x1] %vm354, %v353
    %s356 = scalar_lea.vmem [#allocation1], 113
    %v357 = vld [vmem:[%s356] sm:$0x1]
    %358 = vrot.lane.b32.xlu0 %v357, 1
    %v359 = vpop.permute.xlu0 %358
    %vm360 = vcmask 31752
    %s361 = scalar_lea.vmem [#allocation0], 1
    %362 = vst.msk [vmem:[%s361] sm:$0x1] %vm360, %v359
    %s364 = ssub.s32 4, 1
    %v365 = vld [vmem:[#allocation0] sm:%s364]
    %s367 = ssub.s32 4, 1
    %368 = vst [vmem:[%s1] sm:%s367] %v365

// kernel: discriminator_forward.1
$region0: #{discriminator_forward.1}
  #allocation0 [shape = 'u32[]', space=smem, size = 0x4, offset = 0x4, fixed_abs, tag = 'smem constant byte address 0x4 - core index']
  #allocation1 [shape = 'u32[72,128]{1,0:T(1,128)}', space=vmem, size = 0x9000, scoped, tag = 'internal scratch']
  #allocation2 [shape = 'f32[8,896]{1,0:T(8,128)}', space=vmem, size = 0x7000, scoped, tag = 'scratch operand']
  #allocation3 [shape = 'f32[8,896]{1,0:T(8,128)}', space=vmem, size = 0x7000, scoped, tag = 'scratch operand']
  #allocation4 [shape = 'f32[8,896]{1,0:T(8,128)}', space=vmem, size = 0x7000, scoped, tag = 'scratch operand']
  #allocation5 [shape = 'f32[8,896]{1,0:T(8,128)}', space=vmem, size = 0x7000, scoped, tag = 'scratch operand']
  #allocation6 [shape = 'f32[8,896]{1,0:T(8,128)}', space=vmem, size = 0x7000, scoped, tag = 'scratch operand']
  #allocation7 [shape = 'f32[8,896]{1,0:T(8,128)}', space=vmem, size = 0x7000, scoped, tag = 'scratch operand']
  #allocation8 [shape = 'f32[8,896]{1,0:T(8,128)}', space=vmem, size = 0x7000, scoped, tag = 'scratch operand']
  #allocation9 [shape = 'f32[8,896]{1,0:T(8,128)}', space=vmem, size = 0x7000, scoped, tag = 'scratch operand']
  #allocation10 [shape = 'f32[8,896]{1,0:T(8,128)}', space=vmem, size = 0x7000, scoped, tag = 'scratch operand']
  #allocation11 [shape = 'f32[1]{0:T(128)S(6)}', space=smem, size = 0x200, scoped, tag = 'scoped memory for discriminator_forward.1']
  %s0 = inlined_call_operand.vmem [shape: f32[8,1024], index: 0, kind: input, shape index: {}]
  %s1 = inlined_call_operand.vmem [shape: f32[16,896], index: 1, kind: input, shape index: {}]
  %s2 = inlined_call_operand.vmem [shape: f32[144], index: 2, kind: input, shape index: {}]
  %s3 = inlined_call_operand.vmem [shape: f32[16], index: 3, kind: input, shape index: {}]
  %s4 = inlined_call_operand.<no memory space> [shape: f32[1], index: 4, kind: input, shape index: {}]
  %s5 = inlined_call_operand.vmem [shape: f32[8,1], index: 5, kind: output, shape index: {}]
  %s6 = sld [smem:[#allocation0]]
  $region38: #{discriminator_forward.1} parent=0
    _
  %s8 = ssub.s32 1, %s6
  %s9 = scalar_select 0, %s8, %s6
  %10 = sst [smem:[#allocation11]] %s4
  $region1: #{discriminator_forward.1} parent=0
    #allocation12 [shape = 'u8[1024]{0}', space=smem, size = 0x400, scoped, tag = 'input window, operand 2, single buffered']
    #allocation13 [shape = 's32[1]{0}', space=sflag, size = 0x4, scoped, tag = 'scoped memory for discriminator_forward.1']
    #allocation14 [shape = 'u8[512]{0}', space=smem, size = 0x200, scoped, tag = 'input window, operand 3, single buffered']
    #allocation15 [shape = 's32[1]{0}', space=sflag, size = 0x4, scoped, tag = 'scoped memory for discriminator_forward.1']
    %11 = vsyncpa [#allocation13], 0
    %12 = vsyncpa [#allocation15], 0
    // Predicated region
    $region2: #{discriminator_forward.1} parent=1 // pred_check
      _
    $region3: #{discriminator_forward.1} parent=1 // pred_check_branch
      %14 = sbr.rel (0) target = $region5
    $region4: #{discriminator_forward.1} parent=1 // pred_region
      _
    $region5: #{discriminator_forward.1} parent=1 // pred_fallthru
      _
    // Predicated region
    $region6: #{discriminator_forward.1} parent=1 // pred_check
      _
    $region7: #{discriminator_forward.1} parent=1 // pred_check_branch
      %16 = sbr.rel (0) target = $region9
    $region8: #{discriminator_forward.1} parent=1 // pred_region
      _
    $region9: #{discriminator_forward.1} parent=1 // pred_fallthru
      _
    // Predicated region
    $region10: #{discriminator_forward.1} parent=1 // pred_check
      _
    $region11: #{discriminator_forward.1} parent=1 // pred_check_branch
      %18 = sbr.rel (0) target = $region13
    $region12: #{discriminator_forward.1} parent=1 // pred_region
      %20 = vsyncadd [#allocation13], 0
      %s22 = sshll.u32 %s2, 4
      %s23 = int_to_ptr.vmem [resolvable:$true] %s22
      %25 = dma.vmem_to_smem %s23, 32, [#allocation12], [#allocation13]
    $region13: #{discriminator_forward.1} parent=1 // pred_fallthru
      _
    // Predicated region
    $region14: #{discriminator_forward.1} parent=1 // pred_check
      _
    $region15: #{discriminator_forward.1} parent=1 // pred_check_branch
      %27 = sbr.rel (0) target = $region17
    $region16: #{discriminator_forward.1} parent=1 // pred_region
      %29 = vsyncadd [#allocation15], 0
      %s31 = sshll.u32 %s3, 4
      %s32 = int_to_ptr.vmem [resolvable:$true] %s31
      %34 = dma.vmem_to_smem %s32, 16, [#allocation14], [#allocation15]
    $region17: #{discriminator_forward.1} parent=1 // pred_fallthru
      _
    // Predicated region
    $region18: #{discriminator_forward.1} parent=1 // pred_check
      _
    $region19: #{discriminator_forward.1} parent=1 // pred_check_branch
      %36 = sbr.rel (0) target = $region21
    $region20: #{discriminator_forward.1} parent=1 // pred_region
      _
    $region21: #{discriminator_forward.1} parent=1 // pred_fallthru
      _
    // Predicated region
    $region22: #{discriminator_forward.1} parent=1 // pred_check
      _
    $region23: #{discriminator_forward.1} parent=1 // pred_check_branch
      %38 = sbr.rel (0) target = $region25
    $region24: #{discriminator_forward.1} parent=1 // pred_region
      %40 = dma.done [#allocation13], 32
    $region25: #{discriminator_forward.1} parent=1 // pred_fallthru
      _
    // Predicated region
    $region26: #{discriminator_forward.1} parent=1 // pred_check
      _
    $region27: #{discriminator_forward.1} parent=1 // pred_check_branch
      %42 = sbr.rel (0) target = $region29
    $region28: #{discriminator_forward.1} parent=1 // pred_region
      %44 = dma.done [#allocation15], 16
    $region29: #{discriminator_forward.1} parent=1 // pred_fallthru
      _
    %45 = sfence
    %v46 = vld [vmem:[%s0] sm:$0xff]
    %v47 = vld [vmem:[%s0 + $0x8] sm:$0xff]
    %v48 = vld [vmem:[%s0 + $0x10] sm:$0xff]
    %v49 = vld [vmem:[%s0 + $0x18] sm:$0xff]
    %v50 = vld [vmem:[%s0 + $0x20] sm:$0xff]
    %v51 = vld [vmem:[%s0 + $0x28] sm:$0xff]
    %v52 = vld [vmem:[%s0 + $0x30] sm:$0xff]
    %v53 = vld [vmem:[%s0 + $0x38] sm:$0xff]
    %54 = vst [vmem:[#allocation2] sm:$0xff] %v46
    %55 = vst [vmem:[#allocation2 + $0x8] sm:$0xff] %v47
    %56 = vst [vmem:[#allocation2 + $0x10] sm:$0xff] %v48
    %57 = vst [vmem:[#allocation2 + $0x18] sm:$0xff] %v49
    %58 = vst [vmem:[#allocation2 + $0x20] sm:$0xff] %v50
    %59 = vst [vmem:[#allocation2 + $0x28] sm:$0xff] %v51
    %60 = vst [vmem:[#allocation2 + $0x30] sm:$0xff] %v52
    %69 = vrot.lane.b32.xlu0 %v46, 127
    %v70 = vpop.permute.xlu0 %69
    %71 = vrot.lane.b32.xlu0 %v47, 127
    %v72 = vpop.permute.xlu0 %71
    %73 = vrot.lane.b32.xlu0 %v48, 127
    %v74 = vpop.permute.xlu0 %73
    %75 = vrot.lane.b32.xlu0 %v49, 127
    %v76 = vpop.permute.xlu0 %75
    %77 = vrot.lane.b32.xlu0 %v50, 127
    %v78 = vpop.permute.xlu0 %77
    %79 = vrot.lane.b32.xlu0 %v51, 127
    %v80 = vpop.permute.xlu0 %79
    %81 = vrot.lane.b32.xlu0 %v52, 127
    %v82 = vpop.permute.xlu0 %81
    %83 = vrot.lane.b32.xlu0 %v53, 127
    %v84 = vpop.permute.xlu0 %83
    %vm85 = vcmask 1039360
    %v86 = vsel %vm85, %v70, %v72
    %v87 = vsel %vm85, %v72, %v74
    %v88 = vsel %vm85, %v74, %v76
    %v89 = vsel %vm85, %v76, %v78
    %v90 = vsel %vm85, %v78, %v80
    %v91 = vsel %vm85, %v80, %v82
    %v92 = vsel %vm85, %v82, %v84
    %100 = vst [vmem:[#allocation3] sm:$0xff] %v86
    %101 = vst [vmem:[#allocation3 + $0x8] sm:$0xff] %v87
    %102 = vst [vmem:[#allocation3 + $0x10] sm:$0xff] %v88
    %103 = vst [vmem:[#allocation3 + $0x18] sm:$0xff] %v89
    %104 = vst [vmem:[#allocation3 + $0x20] sm:$0xff] %v90
    %105 = vst [vmem:[#allocation3 + $0x28] sm:$0xff] %v91
    %106 = vst [vmem:[#allocation3 + $0x30] sm:$0xff] %v92
    %107 = vrot.lane.b32.xlu0 %v46, 126
    %v108 = vpop.permute.xlu0 %107
    %109 = vrot.lane.b32.xlu0 %v47, 126
    %v110 = vpop.permute.xlu0 %109
    %111 = vrot.lane.b32.xlu0 %v48, 126
    %v112 = vpop.permute.xlu0 %111
    %113 = vrot.lane.b32.xlu0 %v49, 126
    %v114 = vpop.permute.xlu0 %113
    %115 = vrot.lane.b32.xlu0 %v50, 126
    %v116 = vpop.permute.xlu0 %115
    %117 = vrot.lane.b32.xlu0 %v51, 126
    %v118 = vpop.permute.xlu0 %117
    %119 = vrot.lane.b32.xlu0 %v52, 126
    %v120 = vpop.permute.xlu0 %119
    %121 = vrot.lane.b32.xlu0 %v53, 126
    %v122 = vpop.permute.xlu0 %121
    %vm123 = vcmask 1031168
    %v124 = vsel %vm123, %v108, %v110
    %v125 = vsel %vm123, %v110, %v112
    %v126 = vsel %vm123, %v112, %v114
    %v127 = vsel %vm123, %v114, %v116
    %v128 = vsel %vm123, %v116, %v118
    %v129 = vsel %vm123, %v118, %v120
    %v130 = vsel %vm123, %v120, %v122
    %138 = vst [vmem:[#allocation4] sm:$0xff] %v124
    %139 = vst [vmem:[#allocation4 + $0x8] sm:$0xff] %v125
    %140 = vst [vmem:[#allocation4 + $0x10] sm:$0xff] %v126
    %141 = vst [vmem:[#allocation4 + $0x18] sm:$0xff] %v127
    %142 = vst [vmem:[#allocation4 + $0x20] sm:$0xff] %v128
    %143 = vst [vmem:[#allocation4 + $0x28] sm:$0xff] %v129
    %144 = vst [vmem:[#allocation4 + $0x30] sm:$0xff] %v130
    %145 = vrot.lane.b32.xlu0 %v46, 98
    %v146 = vpop.permute.xlu0 %145
    %147 = vrot.lane.b32.xlu0 %v47, 98
    %v148 = vpop.permute.xlu0 %147
    %149 = vrot.lane.b32.xlu0 %v48, 98
    %v150 = vpop.permute.xlu0 %149
    %151 = vrot.lane.b32.xlu0 %v49, 98
    %v152 = vpop.permute.xlu0 %151
    %153 = vrot.lane.b32.xlu0 %v50, 98
    %v154 = vpop.permute.xlu0 %153
    %155 = vrot.lane.b32.xlu0 %v51, 98
    %v156 = vpop.permute.xlu0 %155
    %157 = vrot.lane.b32.xlu0 %v52, 98
    %v158 = vpop.permute.xlu0 %157
    %159 = vrot.lane.b32.xlu0 %v53, 98
    %v160 = vpop.permute.xlu0 %159
    %vm161 = vcmask 801792
    %v162 = vsel %vm161, %v146, %v148
    %v163 = vsel %vm161, %v148, %v150
    %v164 = vsel %vm161, %v150, %v152
    %v165 = vsel %vm161, %v152, %v154
    %v166 = vsel %vm161, %v154, %v156
    %v167 = vsel %vm161, %v156, %v158
    %v168 = vsel %vm161, %v158, %v160
    %176 = vst [vmem:[#allocation5] sm:$0xff] %v162
    %177 = vst [vmem:[#allocation5 + $0x8] sm:$0xff] %v163
    %178 = vst [vmem:[#allocation5 + $0x10] sm:$0xff] %v164
    %179 = vst [vmem:[#allocation5 + $0x18] sm:$0xff] %v165
    %180 = vst [vmem:[#allocation5 + $0x20] sm:$0xff] %v166
    %181 = vst [vmem:[#allocation5 + $0x28] sm:$0xff] %v167
    %182 = vst [vmem:[#allocation5 + $0x30] sm:$0xff] %v168
    %183 = vrot.lane.b32.xlu0 %v46, 97
    %v184 = vpop.permute.xlu0 %183
    %185 = vrot.lane.b32.xlu0 %v47, 97
    %v186 = vpop.permute.xlu0 %185
    %187 = vrot.lane.b32.xlu0 %v48, 97
    %v188 = vpop.permute.xlu0 %187
    %189 = vrot.lane.b32.xlu0 %v49, 97
    %v190 = vpop.permute.xlu0 %189
    %191 = vrot.lane.b32.xlu0 %v50, 97
    %v192 = vpop.permute.xlu0 %191
    %193 = vrot.lane.b32.xlu0 %v51, 97
    %v194 = vpop.permute.xlu0 %193
    %195 = vrot.lane.b32.xlu0 %v52, 97
    %v196 = vpop.permute.xlu0 %195
    %197 = vrot.lane.b32.xlu0 %v53, 97
    %v198 = vpop.permute.xlu0 %197
    %vm199 = vcmask 793600
    %v200 = vsel %vm199, %v184, %v186
    %v201 = vsel %vm199, %v186, %v188
    %v202 = vsel %vm199, %v188, %v190
    %v203 = vsel %vm199, %v190, %v192
    %v204 = vsel %vm199, %v192, %v194
    %v205 = vsel %vm199, %v194, %v196
    %v206 = vsel %vm199, %v196, %v198
    %214 = vst [vmem:[#allocation6] sm:$0xff] %v200
    %215 = vst [vmem:[#allocation6 + $0x8] sm:$0xff] %v201
    %216 = vst [vmem:[#allocation6 + $0x10] sm:$0xff] %v202
    %217 = vst [vmem:[#allocation6 + $0x18] sm:$0xff] %v203
    %218 = vst [vmem:[#allocation6 + $0x20] sm:$0xff] %v204
    %219 = vst [vmem:[#allocation6 + $0x28] sm:$0xff] %v205
    %220 = vst [vmem:[#allocation6 + $0x30] sm:$0xff] %v206
    %221 = vrot.lane.b32.xlu0 %v46, 96
    %v222 = vpop.permute.xlu0 %221
    %223 = vrot.lane.b32.xlu0 %v47, 96
    %v224 = vpop.permute.xlu0 %223
    %225 = vrot.lane.b32.xlu0 %v48, 96
    %v226 = vpop.permute.xlu0 %225
    %227 = vrot.lane.b32.xlu0 %v49, 96
    %v228 = vpop.permute.xlu0 %227
    %229 = vrot.lane.b32.xlu0 %v50, 96
    %v230 = vpop.permute.xlu0 %229
    %231 = vrot.lane.b32.xlu0 %v51, 96
    %v232 = vpop.permute.xlu0 %231
    %233 = vrot.lane.b32.xlu0 %v52, 96
    %v234 = vpop.permute.xlu0 %233
    %235 = vrot.lane.b32.xlu0 %v53, 96
    %v236 = vpop.permute.xlu0 %235
    %vm237 = vcmask 785408
    %v238 = vsel %vm237, %v222, %v224
    %v239 = vsel %vm237, %v224, %v226
    %v240 = vsel %vm237, %v226, %v228
    %v241 = vsel %vm237, %v228, %v230
    %v242 = vsel %vm237, %v230, %v232
    %v243 = vsel %vm237, %v232, %v234
    %v244 = vsel %vm237, %v234, %v236
    %252 = vst [vmem:[#allocation7] sm:$0xff] %v238
    %253 = vst [vmem:[#allocation7 + $0x8] sm:$0xff] %v239
    %254 = vst [vmem:[#allocation7 + $0x10] sm:$0xff] %v240
    %255 = vst [vmem:[#allocation7 + $0x18] sm:$0xff] %v241
    %256 = vst [vmem:[#allocation7 + $0x20] sm:$0xff] %v242
    %257 = vst [vmem:[#allocation7 + $0x28] sm:$0xff] %v243
    %258 = vst [vmem:[#allocation7 + $0x30] sm:$0xff] %v244
    %259 = vrot.lane.b32.xlu0 %v46, 68
    %v260 = vpop.permute.xlu0 %259
    %261 = vrot.lane.b32.xlu0 %v47, 68
    %v262 = vpop.permute.xlu0 %261
    %263 = vrot.lane.b32.xlu0 %v48, 68
    %v264 = vpop.permute.xlu0 %263
    %265 = vrot.lane.b32.xlu0 %v49, 68
    %v266 = vpop.permute.xlu0 %265
    %267 = vrot.lane.b32.xlu0 %v50, 68
    %v268 = vpop.permute.xlu0 %267
    %269 = vrot.lane.b32.xlu0 %v51, 68
    %v270 = vpop.permute.xlu0 %269
    %271 = vrot.lane.b32.xlu0 %v52, 68
    %v272 = vpop.permute.xlu0 %271
    %273 = vrot.lane.b32.xlu0 %v53, 68
    %v274 = vpop.permute.xlu0 %273
    %vm275 = vcmask 556032
    %v276 = vsel %vm275, %v260, %v262
    %v277 = vsel %vm275, %v262, %v264
    %v278 = vsel %vm275, %v264, %v266
    %v279 = vsel %vm275, %v266, %v268
    %v280 = vsel %vm275, %v268, %v270
    %v281 = vsel %vm275, %v270, %v272
    %v282 = vsel %vm275, %v272, %v274
    %290 = vst [vmem:[#allocation8] sm:$0xff] %v276
    %291 = vst [vmem:[#allocation8 + $0x8] sm:$0xff] %v277
    %292 = vst [vmem:[#allocation8 + $0x10] sm:$0xff] %v278
    %293 = vst [vmem:[#allocation8 + $0x18] sm:$0xff] %v279
    %294 = vst [vmem:[#allocation8 + $0x20] sm:$0xff] %v280
    %295 = vst [vmem:[#allocation8 + $0x28] sm:$0xff] %v281
    %296 = vst [vmem:[#allocation8 + $0x30] sm:$0xff] %v282
    %297 = vrot.lane.b32.xlu0 %v46, 67
    %v298 = vpop.permute.xlu0 %297
    %299 = vrot.lane.b32.xlu0 %v47, 67
    %v300 = vpop.permute.xlu0 %299
    %301 = vrot.lane.b32.xlu0 %v48, 67
    %v302 = vpop.permute.xlu0 %301
    %303 = vrot.lane.b32.xlu0 %v49, 67
    %v304 = vpop.permute.xlu0 %303
    %305 = vrot.lane.b32.xlu0 %v50, 67
    %v306 = vpop.permute.xlu0 %305
    %307 = vrot.lane.b32.xlu0 %v51, 67
    %v308 = vpop.permute.xlu0 %307
    %309 = vrot.lane.b32.xlu0 %v52, 67
    %v310 = vpop.permute.xlu0 %309
    %311 = vrot.lane.b32.xlu0 %v53, 67
    %v312 = vpop.permute.xlu0 %311
    %vm313 = vcmask 547840
    %v314 = vsel %vm313, %v298, %v300
    %v315 = vsel %vm313, %v300, %v302
    %v316 = vsel %vm313, %v302, %v304
    %v317 = vsel %vm313, %v304, %v306
    %v318 = vsel %vm313, %v306, %v308
    %v319 = vsel %vm313, %v308, %v310
    %v320 = vsel %vm313, %v310, %v312
    %328 = vst [vmem:[#allocation9] sm:$0xff] %v314
    %329 = vst [vmem:[#allocation9 + $0x8] sm:$0xff] %v315
    %330 = vst [vmem:[#allocation9 + $0x10] sm:$0xff] %v316
    %331 = vst [vmem:[#allocation9 + $0x18] sm:$0xff] %v317
    %332 = vst [vmem:[#allocation9 + $0x20] sm:$0xff] %v318
    %333 = vst [vmem:[#allocation9 + $0x28] sm:$0xff] %v319
    %334 = vst [vmem:[#allocation9 + $0x30] sm:$0xff] %v320
    %335 = vrot.lane.b32.xlu0 %v46, 66
    %v336 = vpop.permute.xlu0 %335
    %337 = vrot.lane.b32.xlu0 %v47, 66
    %v338 = vpop.permute.xlu0 %337
    %339 = vrot.lane.b32.xlu0 %v48, 66
    %v340 = vpop.permute.xlu0 %339
    %341 = vrot.lane.b32.xlu0 %v49, 66
    %v342 = vpop.permute.xlu0 %341
    %343 = vrot.lane.b32.xlu0 %v50, 66
    %v344 = vpop.permute.xlu0 %343
    %345 = vrot.lane.b32.xlu0 %v51, 66
    %v346 = vpop.permute.xlu0 %345
    %347 = vrot.lane.b32.xlu0 %v52, 66
    %v348 = vpop.permute.xlu0 %347
    %349 = vrot.lane.b32.xlu0 %v53, 66
    %v350 = vpop.permute.xlu0 %349
    %vm351 = vcmask 539648
    %v352 = vsel %vm351, %v336, %v338
    %v353 = vsel %vm351, %v338, %v340
    %v354 = vsel %vm351, %v340, %v342
    %v355 = vsel %vm351, %v342, %v344
    %v356 = vsel %vm351, %v344, %v346
    %v357 = vsel %vm351, %v346, %v348
    %v358 = vsel %vm351, %v348, %v350
    %366 = vst [vmem:[#allocation10] sm:$0xff] %v352
    %367 = vst [vmem:[#allocation10 + $0x8] sm:$0xff] %v353
    %368 = vst [vmem:[#allocation10 + $0x10] sm:$0xff] %v354
    %369 = vst [vmem:[#allocation10 + $0x18] sm:$0xff] %v355
    %370 = vst [vmem:[#allocation10 + $0x20] sm:$0xff] %v356
    %371 = vst [vmem:[#allocation10 + $0x28] sm:$0xff] %v357
    %372 = vst [vmem:[#allocation10 + $0x30] sm:$0xff] %v358
    %s373 = sld [smem:[#allocation12]]
    %s374 = sld [smem:[#allocation12 + $0x1]]
    %s375 = sld [smem:[#allocation12 + $0x2]]
    %s376 = sld [smem:[#allocation12 + $0x3]]
    %s377 = sld [smem:[#allocation12 + $0x4]]
    %s378 = sld [smem:[#allocation12 + $0x5]]
    %s379 = sld [smem:[#allocation12 + $0x6]]
    %s380 = sld [smem:[#allocation12 + $0x7]]
    %s381 = sld [smem:[#allocation12 + $0x8]]
    %s382 = sld [smem:[#allocation12 + $0x9]]
    %s383 = sld [smem:[#allocation12 + $0xa]]
    %s384 = sld [smem:[#allocation12 + $0xb]]
    %s385 = sld [smem:[#allocation12 + $0xc]]
    %s386 = sld [smem:[#allocation12 + $0xd]]
    %s387 = sld [smem:[#allocation12 + $0xe]]
    %s388 = sld [smem:[#allocation12 + $0xf]]
    %s389 = sld [smem:[#allocation12 + $0x10]]
    %s390 = sld [smem:[#allocation12 + $0x11]]
    %s391 = sld [smem:[#allocation12 + $0x12]]
    %s392 = sld [smem:[#allocation12 + $0x13]]
    %s393 = sld [smem:[#allocation12 + $0x14]]
    %s394 = sld [smem:[#allocation12 + $0x15]]
    %s395 = sld [smem:[#allocation12 + $0x16]]
    %s396 = sld [smem:[#allocation12 + $0x17]]
    %s397 = sld [smem:[#allocation12 + $0x18]]
    %s398 = sld [smem:[#allocation12 + $0x19]]
    %s399 = sld [smem:[#allocation12 + $0x1a]]
    %s400 = sld [smem:[#allocation12 + $0x1b]]
    %s401 = sld [smem:[#allocation12 + $0x1c]]
    %s402 = sld [smem:[#allocation12 + $0x1d]]
    %s403 = sld [smem:[#allocation12 + $0x1e]]
    %s404 = sld [smem:[#allocation12 + $0x1f]]
    %s405 = sld [smem:[#allocation12 + $0x20]]
    %s406 = sld [smem:[#allocation12 + $0x21]]
    %s407 = sld [smem:[#allocation12 + $0x22]]
    %s408 = sld [smem:[#allocation12 + $0x23]]
    %s409 = sld [smem:[#allocation12 + $0x24]]
    %s410 = sld [smem:[#allocation12 + $0x25]]
    %s411 = sld [smem:[#allocation12 + $0x26]]
    %s412 = sld [smem:[#allocation12 + $0x27]]
    %s413 = sld [smem:[#allocation12 + $0x28]]
    %s414 = sld [smem:[#allocation12 + $0x29]]
    %s415 = sld [smem:[#allocation12 + $0x2a]]
    %s416 = sld [smem:[#allocation12 + $0x2b]]
    %s417 = sld [smem:[#allocation12 + $0x2c]]
    %s418 = sld [smem:[#allocation12 + $0x2d]]
    %s419 = sld [smem:[#allocation12 + $0x2e]]
    %s420 = sld [smem:[#allocation12 + $0x2f]]
    %s421 = sld [smem:[#allocation12 + $0x30]]
    %s422 = sld [smem:[#allocation12 + $0x31]]
    %s423 = sld [smem:[#allocation12 + $0x32]]
    %s424 = sld [smem:[#allocation12 + $0x33]]
    %s425 = sld [smem:[#allocation12 + $0x34]]
    %s426 = sld [smem:[#allocation12 + $0x35]]
    %s427 = sld [smem:[#allocation12 + $0x36]]
    %s428 = sld [smem:[#allocation12 + $0x37]]
    %s429 = sld [smem:[#allocation12 + $0x38]]
    %s430 = sld [smem:[#allocation12 + $0x39]]
    %s431 = sld [smem:[#allocation12 + $0x3a]]
    %s432 = sld [smem:[#allocation12 + $0x3b]]
    %s433 = sld [smem:[#allocation12 + $0x3c]]
    %s434 = sld [smem:[#allocation12 + $0x3d]]
    %s435 = sld [smem:[#allocation12 + $0x3e]]
    %s436 = sld [smem:[#allocation12 + $0x3f]]
    %s437 = sld [smem:[#allocation12 + $0x40]]
    %s438 = sld [smem:[#allocation12 + $0x41]]
    %s439 = sld [smem:[#allocation12 + $0x42]]
    %s440 = sld [smem:[#allocation12 + $0x43]]
    %s441 = sld [smem:[#allocation12 + $0x44]]
    %s442 = sld [smem:[#allocation12 + $0x45]]
    %s443 = sld [smem:[#allocation12 + $0x46]]
    %s444 = sld [smem:[#allocation12 + $0x47]]
    %s445 = sld [smem:[#allocation12 + $0x48]]
    %s446 = sld [smem:[#allocation12 + $0x49]]
    %s447 = sld [smem:[#allocation12 + $0x4a]]
    %s448 = sld [smem:[#allocation12 + $0x4b]]
    %s449 = sld [smem:[#allocation12 + $0x4c]]
    %s450 = sld [smem:[#allocation12 + $0x4d]]
    %s451 = sld [smem:[#allocation12 + $0x4e]]
    %s452 = sld [smem:[#allocation12 + $0x4f]]
    %s453 = sld [smem:[#allocation12 + $0x50]]
    %s454 = sld [smem:[#allocation12 + $0x51]]
    %s455 = sld [smem:[#allocation12 + $0x52]]
    %s456 = sld [smem:[#allocation12 + $0x53]]
    %s457 = sld [smem:[#allocation12 + $0x54]]
    %s458 = sld [smem:[#allocation12 + $0x55]]
    %s459 = sld [smem:[#allocation12 + $0x56]]
    %s460 = sld [smem:[#allocation12 + $0x57]]
    %s461 = sld [smem:[#allocation12 + $0x58]]
    %s462 = sld [smem:[#allocation12 + $0x59]]
    %s463 = sld [smem:[#allocation12 + $0x5a]]
    %s464 = sld [smem:[#allocation12 + $0x5b]]
    %s465 = sld [smem:[#allocation12 + $0x5c]]
    %s466 = sld [smem:[#allocation12 + $0x5d]]
    %s467 = sld [smem:[#allocation12 + $0x5e]]
    %s468 = sld [smem:[#allocation12 + $0x5f]]
    %s469 = sld [smem:[#allocation12 + $0x60]]
    %s470 = sld [smem:[#allocation12 + $0x61]]
    %s471 = sld [smem:[#allocation12 + $0x62]]
    %s472 = sld [smem:[#allocation12 + $0x63]]
    %s473 = sld [smem:[#allocation12 + $0x64]]
    %s474 = sld [smem:[#allocation12 + $0x65]]
    %s475 = sld [smem:[#allocation12 + $0x66]]
    %s476 = sld [smem:[#allocation12 + $0x67]]
    %s477 = sld [smem:[#allocation12 + $0x68]]
    %s478 = sld [smem:[#allocation12 + $0x69]]
    %s479 = sld [smem:[#allocation12 + $0x6a]]
    %s480 = sld [smem:[#allocation12 + $0x6b]]
    %s481 = sld [smem:[#allocation12 + $0x6c]]
    %s482 = sld [smem:[#allocation12 + $0x6d]]
    %s483 = sld [smem:[#allocation12 + $0x6e]]
    %s484 = sld [smem:[#allocation12 + $0x6f]]
    %s485 = sld [smem:[#allocation12 + $0x70]]
    %s486 = sld [smem:[#allocation12 + $0x71]]
    %s487 = sld [smem:[#allocation12 + $0x72]]
    %s488 = sld [smem:[#allocation12 + $0x73]]
    %s489 = sld [smem:[#allocation12 + $0x74]]
    %s490 = sld [smem:[#allocation12 + $0x75]]
    %s491 = sld [smem:[#allocation12 + $0x76]]
    %s492 = sld [smem:[#allocation12 + $0x77]]
    %s493 = sld [smem:[#allocation12 + $0x78]]
    %s494 = sld [smem:[#allocation12 + $0x79]]
    %s495 = sld [smem:[#allocation12 + $0x7a]]
    %s496 = sld [smem:[#allocation12 + $0x7b]]
    %s497 = sld [smem:[#allocation12 + $0x7c]]
    %s498 = sld [smem:[#allocation12 + $0x7d]]
    %s499 = sld [smem:[#allocation12 + $0x7e]]
    %s500 = sld [smem:[#allocation12 + $0x7f]]
    %s501 = sld [smem:[#allocation12 + $0x80]]
    %s502 = sld [smem:[#allocation12 + $0x81]]
    %s503 = sld [smem:[#allocation12 + $0x82]]
    %s504 = sld [smem:[#allocation12 + $0x83]]
    %s505 = sld [smem:[#allocation12 + $0x84]]
    %s506 = sld [smem:[#allocation12 + $0x85]]
    %s507 = sld [smem:[#allocation12 + $0x86]]
    %s508 = sld [smem:[#allocation12 + $0x87]]
    %s509 = sld [smem:[#allocation12 + $0x88]]
    %s510 = sld [smem:[#allocation12 + $0x89]]
    %s511 = sld [smem:[#allocation12 + $0x8a]]
    %s512 = sld [smem:[#allocation12 + $0x8b]]
    %s513 = sld [smem:[#allocation12 + $0x8c]]
    %s514 = sld [smem:[#allocation12 + $0x8d]]
    %s515 = sld [smem:[#allocation12 + $0x8e]]
    %s516 = sld [smem:[#allocation12 + $0x8f]]
    %s517 = sld [smem:[#allocation14]]
    %s518 = sld [smem:[#allocation14 + $0x1]]
    %s519 = sld [smem:[#allocation14 + $0x2]]
    %s520 = sld [smem:[#allocation14 + $0x3]]
    %s521 = sld [smem:[#allocation14 + $0x4]]
    %s522 = sld [smem:[#allocation14 + $0x5]]
    %s523 = sld [smem:[#allocation14 + $0x6]]
    %s524 = sld [smem:[#allocation14 + $0x7]]
    %s525 = sld [smem:[#allocation14 + $0x8]]
    %s526 = sld [smem:[#allocation14 + $0x9]]
    %s527 = sld [smem:[#allocation14 + $0xa]]
    %s528 = sld [smem:[#allocation14 + $0xb]]
    %s529 = sld [smem:[#allocation14 + $0xc]]
    %s530 = sld [smem:[#allocation14 + $0xd]]
    %s531 = sld [smem:[#allocation14 + $0xe]]
    %s532 = sld [smem:[#allocation14 + $0xf]]
    %s533 = sld [smem:[#allocation11]]
    %s534 = smul.u32 0, 7
    %s535 = smul.addr %s534, 8
    %s536 = scalar_lea.vmem [#allocation2], %s535
    %v537 = vld [vmem:[%s536] sm:$0xff]
    %v538 = vld [vmem:[%s536 + $0x8] sm:$0xff]
    %s539 = smul.addr %s534, 8
    %s540 = scalar_lea.vmem [#allocation3], %s539
    %v541 = vld [vmem:[%s540] sm:$0xff]
    %v542 = vld [vmem:[%s540 + $0x8] sm:$0xff]
    %s543 = smul.addr %s534, 8
    %s544 = scalar_lea.vmem [#allocation4], %s543
    %v545 = vld [vmem:[%s544] sm:$0xff]
    %v546 = vld [vmem:[%s544 + $0x8] sm:$0xff]
    %s547 = smul.addr %s534, 8
    %s548 = scalar_lea.vmem [#allocation5], %s547
    %v549 = vld [vmem:[%s548] sm:$0xff]
    %v550 = vld [vmem:[%s548 + $0x8] sm:$0xff]
    %s551 = smul.addr %s534, 8
    %s552 = scalar_lea.vmem [#allocation6], %s551
    %v553 = vld [vmem:[%s552] sm:$0xff]
    %v554 = vld [vmem:[%s552 + $0x8] sm:$0xff]
    %s555 = smul.addr %s534, 8
    %s556 = scalar_lea.vmem [#allocation7], %s555
    %v557 = vld [vmem:[%s556] sm:$0xff]
    %v558 = vld [vmem:[%s556 + $0x8] sm:$0xff]
    %s559 = smul.addr %s534, 8
    %s560 = scalar_lea.vmem [#allocation8], %s559
    %v561 = vld [vmem:[%s560] sm:$0xff]
    %v562 = vld [vmem:[%s560 + $0x8] sm:$0xff]
    %s563 = smul.addr %s534, 8
    %s564 = scalar_lea.vmem [#allocation9], %s563
    %v565 = vld [vmem:[%s564] sm:$0xff]
    %v566 = vld [vmem:[%s564 + $0x8] sm:$0xff]
    %s567 = smul.addr %s534, 8
    %s568 = scalar_lea.vmem [#allocation10], %s567
    %v569 = vld [vmem:[%s568] sm:$0xff]
    %v570 = vld [vmem:[%s568 + $0x8] sm:$0xff]
    %v571 = vld [vmem:[%s1] sm:$0xff]
    %v572 = vld [vmem:[%s1 + $0x8] sm:$0xff]
    %v573 = vld [vmem:[%s1 + $0x38] sm:$0xff]
    %v574 = vld [vmem:[%s1 + $0x40] sm:$0xff]
    %v575 = vstv %s373
    %v576 = vmul.f32 %v537, %v575
    %v577 = vmul.f32 %v538, %v575
    %v578 = vstv %s374
    %v579 = vmul.f32 %v541, %v578
    %v580 = vmul.f32 %v542, %v578
    %v581 = vadd.f32 %v576, %v579
    %v582 = vadd.f32 %v577, %v580
    %v583 = vstv %s375
    %v584 = vmul.f32 %v545, %v583
    %v585 = vmul.f32 %v546, %v583
    %v586 = vadd.f32 %v581, %v584
    %v587 = vadd.f32 %v582, %v585
    %v588 = vstv %s376
    %v589 = vmul.f32 %v549, %v588
    %v590 = vmul.f32 %v550, %v588
    %v591 = vadd.f32 %v586, %v589
    %v592 = vadd.f32 %v587, %v590
    %v593 = vstv %s377
    %v594 = vmul.f32 %v553, %v593
    %v595 = vmul.f32 %v554, %v593
    %v596 = vadd.f32 %v591, %v594
    %v597 = vadd.f32 %v592, %v595
    %v598 = vstv %s378
    %v599 = vmul.f32 %v557, %v598
    %v600 = vmul.f32 %v558, %v598
    %v601 = vadd.f32 %v596, %v599
    %v602 = vadd.f32 %v597, %v600
    %v603 = vstv %s379
    %v604 = vmul.f32 %v561, %v603
    %v605 = vmul.f32 %v562, %v603
    %v606 = vadd.f32 %v601, %v604
    %v607 = vadd.f32 %v602, %v605
    %v608 = vstv %s380
    %v609 = vmul.f32 %v565, %v608
    %v610 = vmul.f32 %v566, %v608
    %v611 = vadd.f32 %v606, %v609
    %v612 = vadd.f32 %v607, %v610
    %v613 = vstv %s381
    %v614 = vmul.f32 %v569, %v613
    %v615 = vmul.f32 %v570, %v613
    %v616 = vadd.f32 %v611, %v614
    %v617 = vadd.f32 %v612, %v615
    %v618 = vstv %s517
    %v619 = vadd.f32 %v616, %v618
    %v620 = vadd.f32 %v617, %v618
    %v621 = vmul.f32 %v619, 0.01
    %v622 = vmul.f32 %v620, 0.01
    %v623 = vmax.f32 %v619, %v621
    %v624 = vmax.f32 %v620, %v622
    %v625 = vperm.slane %v571, 0
    %v626 = vperm.slane %v572, 0
    %v627 = vmul.f32 %v623, %v625
    %v628 = vmul.f32 %v624, %v626
    %v629 = vadd.f32 %v627, 0.0
    %v630 = vadd.f32 %v628, 0.0
    %v631 = vstv %s382
    %v632 = vmul.f32 %v537, %v631
    %v633 = vmul.f32 %v538, %v631
    %v634 = vstv %s383
    %v635 = vmul.f32 %v541, %v634
    %v636 = vmul.f32 %v542, %v634
    %v637 = vadd.f32 %v632, %v635
    %v638 = vadd.f32 %v633, %v636
    %v639 = vstv %s384
    %v640 = vmul.f32 %v545, %v639
    %v641 = vmul.f32 %v546, %v639
    %v642 = vadd.f32 %v637, %v640
    %v643 = vadd.f32 %v638, %v641
    %v644 = vstv %s385
    %v645 = vmul.f32 %v549, %v644
    %v646 = vmul.f32 %v550, %v644
    %v647 = vadd.f32 %v642, %v645
    %v648 = vadd.f32 %v643, %v646
    %v649 = vstv %s386
    %v650 = vmul.f32 %v553, %v649
    %v651 = vmul.f32 %v554, %v649
    %v652 = vadd.f32 %v647, %v650
    %v653 = vadd.f32 %v648, %v651
    %v654 = vstv %s387
    %v655 = vmul.f32 %v557, %v654
    %v656 = vmul.f32 %v558, %v654
    %v657 = vadd.f32 %v652, %v655
    %v658 = vadd.f32 %v653, %v656
    %v659 = vstv %s388
    %v660 = vmul.f32 %v561, %v659
    %v661 = vmul.f32 %v562, %v659
    %v662 = vadd.f32 %v657, %v660
    %v663 = vadd.f32 %v658, %v661
    %v664 = vstv %s389
    %v665 = vmul.f32 %v565, %v664
    %v666 = vmul.f32 %v566, %v664
    %v667 = vadd.f32 %v662, %v665
    %v668 = vadd.f32 %v663, %v666
    %v669 = vstv %s390
    %v670 = vmul.f32 %v569, %v669
    %v671 = vmul.f32 %v570, %v669
    %v672 = vadd.f32 %v667, %v670
    %v673 = vadd.f32 %v668, %v671
    %v674 = vstv %s518
    %v675 = vadd.f32 %v672, %v674
    %v676 = vadd.f32 %v673, %v674
    %v677 = vmul.f32 %v675, 0.01
    %v678 = vmul.f32 %v676, 0.01
    %v679 = vmax.f32 %v675, %v677
    %v680 = vmax.f32 %v676, %v678
    %v681 = vperm.slane %v571, 1
    %v682 = vperm.slane %v572, 1
    %v683 = vmul.f32 %v679, %v681
    %v684 = vmul.f32 %v680, %v682
    %v685 = vadd.f32 %v629, %v683
    %v686 = vadd.f32 %v630, %v684
    %v687 = vstv %s391
    %v688 = vmul.f32 %v537, %v687
    %v689 = vmul.f32 %v538, %v687
    %v690 = vstv %s392
    %v691 = vmul.f32 %v541, %v690
    %v692 = vmul.f32 %v542, %v690
    %v693 = vadd.f32 %v688, %v691
    %v694 = vadd.f32 %v689, %v692
    %v695 = vstv %s393
    %v696 = vmul.f32 %v545, %v695
    %v697 = vmul.f32 %v546, %v695
    %v698 = vadd.f32 %v693, %v696
    %v699 = vadd.f32 %v694, %v697
    %v700 = vstv %s394
    %v701 = vmul.f32 %v549, %v700
    %v702 = vmul.f32 %v550, %v700
    %v703 = vadd.f32 %v698, %v701
    %v704 = vadd.f32 %v699, %v702
    %v705 = vstv %s395
    %v706 = vmul.f32 %v553, %v705
    %v707 = vmul.f32 %v554, %v705
    %v708 = vadd.f32 %v703, %v706
    %v709 = vadd.f32 %v704, %v707
    %v710 = vstv %s396
    %v711 = vmul.f32 %v557, %v710
    %v712 = vmul.f32 %v558, %v710
    %v713 = vadd.f32 %v708, %v711
    %v714 = vadd.f32 %v709, %v712
    %v715 = vstv %s397
    %v716 = vmul.f32 %v561, %v715
    %v717 = vmul.f32 %v562, %v715
    %v718 = vadd.f32 %v713, %v716
    %v719 = vadd.f32 %v714, %v717
    %v720 = vstv %s398
    %v721 = vmul.f32 %v565, %v720
    %v722 = vmul.f32 %v566, %v720
    %v723 = vadd.f32 %v718, %v721
    %v724 = vadd.f32 %v719, %v722
    %v725 = vstv %s399
    %v726 = vmul.f32 %v569, %v725
    %v727 = vmul.f32 %v570, %v725
    %v728 = vadd.f32 %v723, %v726
    %v729 = vadd.f32 %v724, %v727
    %v730 = vstv %s519
    %v731 = vadd.f32 %v728, %v730
    %v732 = vadd.f32 %v729, %v730
    %v733 = vmul.f32 %v731, 0.01
    %v734 = vmul.f32 %v732, 0.01
    %v735 = vmax.f32 %v731, %v733
    %v736 = vmax.f32 %v732, %v734
    %v737 = vperm.slane %v571, 2
    %v738 = vperm.slane %v572, 2
    %v739 = vmul.f32 %v735, %v737
    %v740 = vmul.f32 %v736, %v738
    %v741 = vadd.f32 %v685, %v739
    %v742 = vadd.f32 %v686, %v740
    %v743 = vstv %s400
    %v744 = vmul.f32 %v537, %v743
    %v745 = vmul.f32 %v538, %v743
    %v746 = vstv %s401
    %v747 = vmul.f32 %v541, %v746
    %v748 = vmul.f32 %v542, %v746
    %v749 = vadd.f32 %v744, %v747
    %v750 = vadd.f32 %v745, %v748
    %v751 = vstv %s402
    %v752 = vmul.f32 %v545, %v751
    %v753 = vmul.f32 %v546, %v751
    %v754 = vadd.f32 %v749, %v752
    %v755 = vadd.f32 %v750, %v753
    %v756 = vstv %s403
    %v757 = vmul.f32 %v549, %v756
    %v758 = vmul.f32 %v550, %v756
    %v759 = vadd.f32 %v754, %v757
    %v760 = vadd.f32 %v755, %v758
    %v761 = vstv %s404
    %v762 = vmul.f32 %v553, %v761
    %v763 = vmul.f32 %v554, %v761
    %v764 = vadd.f32 %v759, %v762
    %v765 = vadd.f32 %v760, %v763
    %v766 = vstv %s405
    %v767 = vmul.f32 %v557, %v766
    %v768 = vmul.f32 %v558, %v766
    %v769 = vadd.f32 %v764, %v767
    %v770 = vadd.f32 %v765, %v768
    %v771 = vstv %s406
    %v772 = vmul.f32 %v561, %v771
    %v773 = vmul.f32 %v562, %v771
    %v774 = vadd.f32 %v769, %v772
    %v775 = vadd.f32 %v770, %v773
    %v776 = vstv %s407
    %v777 = vmul.f32 %v565, %v776
    %v778 = vmul.f32 %v566, %v776
    %v779 = vadd.f32 %v774, %v777
    %v780 = vadd.f32 %v775, %v778
    %v781 = vstv %s408
    %v782 = vmul.f32 %v569, %v781
    %v783 = vmul.f32 %v570, %v781
    %v784 = vadd.f32 %v779, %v782
    %v785 = vadd.f32 %v780, %v783
    %v786 = vstv %s520
    %v787 = vadd.f32 %v784, %v786
    %v788 = vadd.f32 %v785, %v786
    %v789 = vmul.f32 %v787, 0.01
    %v790 = vmul.f32 %v788, 0.01
    %v791 = vmax.f32 %v787, %v789
    %v792 = vmax.f32 %v788, %v790
    %v793 = vperm.slane %v571, 3
    %v794 = vperm.slane %v572, 3
    %v795 = vmul.f32 %v791, %v793
    %v796 = vmul.f32 %v792, %v794
    %v797 = vadd.f32 %v741, %v795
    %v798 = vadd.f32 %v742, %v796
    %v799 = vstv %s409
    %v800 = vmul.f32 %v537, %v799
    %v801 = vmul.f32 %v538, %v799
    %v802 = vstv %s410
    %v803 = vmul.f32 %v541, %v802
    %v804 = vmul.f32 %v542, %v802
    %v805 = vadd.f32 %v800, %v803
    %v806 = vadd.f32 %v801, %v804
    %v807 = vstv %s411
    %v808 = vmul.f32 %v545, %v807
    %v809 = vmul.f32 %v546, %v807
    %v810 = vadd.f32 %v805, %v808
    %v811 = vadd.f32 %v806, %v809
    %v812 = vstv %s412
    %v813 = vmul.f32 %v549, %v812
    %v814 = vmul.f32 %v550, %v812
    %v815 = vadd.f32 %v810, %v813
    %v816 = vadd.f32 %v811, %v814
    %v817 = vstv %s413
    %v818 = vmul.f32 %v553, %v817
    %v819 = vmul.f32 %v554, %v817
    %v820 = vadd.f32 %v815, %v818
    %v821 = vadd.f32 %v816, %v819
    %v822 = vstv %s414
    %v823 = vmul.f32 %v557, %v822
    %v824 = vmul.f32 %v558, %v822
    %v825 = vadd.f32 %v820, %v823
    %v826 = vadd.f32 %v821, %v824
    %v827 = vstv %s415
    %v828 = vmul.f32 %v561, %v827
    %v829 = vmul.f32 %v562, %v827
    %v830 = vadd.f32 %v825, %v828
    %v831 = vadd.f32 %v826, %v829
    %v832 = vstv %s416
    %v833 = vmul.f32 %v565, %v832
    %v834 = vmul.f32 %v566, %v832
    %v835 = vadd.f32 %v830, %v833
    %v836 = vadd.f32 %v831, %v834
    %v837 = vstv %s417
    %v838 = vmul.f32 %v569, %v837
    %v839 = vmul.f32 %v570, %v837
    %v840 = vadd.f32 %v835, %v838
    %v841 = vadd.f32 %v836, %v839
    %v842 = vstv %s521
    %v843 = vadd.f32 %v840, %v842
    %v844 = vadd.f32 %v841, %v842
    %v845 = vmul.f32 %v843, 0.01
    %v846 = vmul.f32 %v844, 0.01
    %v847 = vmax.f32 %v843, %v845
    %v848 = vmax.f32 %v844, %v846
    %v849 = vperm.slane %v571, 4
    %v850 = vperm.slane %v572, 4
    %v851 = vmul.f32 %v847, %v849
    %v852 = vmul.f32 %v848, %v850
    %v853 = vadd.f32 %v797, %v851
    %v854 = vadd.f32 %v798, %v852
    %v855 = vstv %s418
    %v856 = vmul.f32 %v537, %v855
    %v857 = vmul.f32 %v538, %v855
    %v858 = vstv %s419
    %v859 = vmul.f32 %v541, %v858
    %v860 = vmul.f32 %v542, %v858
    %v861 = vadd.f32 %v856, %v859
    %v862 = vadd.f32 %v857, %v860
    %v863 = vstv %s420
    %v864 = vmul.f32 %v545, %v863
    %v865 = vmul.f32 %v546, %v863
    %v866 = vadd.f32 %v861, %v864
    %v867 = vadd.f32 %v862, %v865
    %v868 = vstv %s421
    %v869 = vmul.f32 %v549, %v868
    %v870 = vmul.f32 %v550, %v868
    %v871 = vadd.f32 %v866, %v869
    %v872 = vadd.f32 %v867, %v870
    %v873 = vstv %s422
    %v874 = vmul.f32 %v553, %v873
    %v875 = vmul.f32 %v554, %v873
    %v876 = vadd.f32 %v871, %v874
    %v877 = vadd.f32 %v872, %v875
    %v878 = vstv %s423
    %v879 = vmul.f32 %v557, %v878
    %v880 = vmul.f32 %v558, %v878
    %v881 = vadd.f32 %v876, %v879
    %v882 = vadd.f32 %v877, %v880
    %v883 = vstv %s424
    %v884 = vmul.f32 %v561, %v883
    %v885 = vmul.f32 %v562, %v883
    %v886 = vadd.f32 %v881, %v884
    %v887 = vadd.f32 %v882, %v885
    %v888 = vstv %s425
    %v889 = vmul.f32 %v565, %v888
    %v890 = vmul.f32 %v566, %v888
    %v891 = vadd.f32 %v886, %v889
    %v892 = vadd.f32 %v887, %v890
    %v893 = vstv %s426
    %v894 = vmul.f32 %v569, %v893
    %v895 = vmul.f32 %v570, %v893
    %v896 = vadd.f32 %v891, %v894
    %v897 = vadd.f32 %v892, %v895
    %v898 = vstv %s522
    %v899 = vadd.f32 %v896, %v898
    %v900 = vadd.f32 %v897, %v898
    %v901 = vmul.f32 %v899, 0.01
    %v902 = vmul.f32 %v900, 0.01
    %v903 = vmax.f32 %v899, %v901
    %v904 = vmax.f32 %v900, %v902
    %v905 = vperm.slane %v571, 5
    %v906 = vperm.slane %v572, 5
    %v907 = vmul.f32 %v903, %v905
    %v908 = vmul.f32 %v904, %v906
    %v909 = vadd.f32 %v853, %v907
    %v910 = vadd.f32 %v854, %v908
    %v911 = vstv %s427
    %v912 = vmul.f32 %v537, %v911
    %v913 = vmul.f32 %v538, %v911
    %v914 = vstv %s428
    %v915 = vmul.f32 %v541, %v914
    %v916 = vmul.f32 %v542, %v914
    %v917 = vadd.f32 %v912, %v915
    %v918 = vadd.f32 %v913, %v916
    %v919 = vstv %s429
    %v920 = vmul.f32 %v545, %v919
    %v921 = vmul.f32 %v546, %v919
    %v922 = vadd.f32 %v917, %v920
    %v923 = vadd.f32 %v918, %v921
    %v924 = vstv %s430
    %v925 = vmul.f32 %v549, %v924
    %v926 = vmul.f32 %v550, %v924
    %v927 = vadd.f32 %v922, %v925
    %v928 = vadd.f32 %v923, %v926
    %v929 = vstv %s431
    %v930 = vmul.f32 %v553, %v929
    %v931 = vmul.f32 %v554, %v929
    %v932 = vadd.f32 %v927, %v930
    %v933 = vadd.f32 %v928, %v931
    %v934 = vstv %s432
    %v935 = vmul.f32 %v557, %v934
    %v936 = vmul.f32 %v558, %v934
    %v937 = vadd.f32 %v932, %v935
    %v938 = vadd.f32 %v933, %v936
    %v939 = vstv %s433
    %v940 = vmul.f32 %v561, %v939
    %v941 = vmul.f32 %v562, %v939
    %v942 = vadd.f32 %v937, %v940
    %v943 = vadd.f32 %v938, %v941
    %v944 = vstv %s434
    %v945 = vmul.f32 %v565, %v944
    %v946 = vmul.f32 %v566, %v944
    %v947 = vadd.f32 %v942, %v945
    %v948 = vadd.f32 %v943, %v946
    %v949 = vstv %s435
    %v950 = vmul.f32 %v569, %v949
    %v951 = vmul.f32 %v570, %v949
    %v952 = vadd.f32 %v947, %v950
    %v953 = vadd.f32 %v948, %v951
    %v954 = vstv %s523
    %v955 = vadd.f32 %v952, %v954
    %v956 = vadd.f32 %v953, %v954
    %v957 = vmul.f32 %v955, 0.01
    %v958 = vmul.f32 %v956, 0.01
    %v959 = vmax.f32 %v955, %v957
    %v960 = vmax.f32 %v956, %v958
    %v961 = vperm.slane %v571, 6
    %v962 = vperm.slane %v572, 6
    %v963 = vmul.f32 %v959, %v961
    %v964 = vmul.f32 %v960, %v962
    %v965 = vadd.f32 %v909, %v963
    %v966 = vadd.f32 %v910, %v964
    %v967 = vstv %s436
    %v968 = vmul.f32 %v537, %v967
    %v969 = vmul.f32 %v538, %v967
    %v970 = vstv %s437
    %v971 = vmul.f32 %v541, %v970
    %v972 = vmul.f32 %v542, %v970
    %v973 = vadd.f32 %v968, %v971
    %v974 = vadd.f32 %v969, %v972
    %v975 = vstv %s438
    %v976 = vmul.f32 %v545, %v975
    %v977 = vmul.f32 %v546, %v975
    %v978 = vadd.f32 %v973, %v976
    %v979 = vadd.f32 %v974, %v977
    %v980 = vstv %s439
    %v981 = vmul.f32 %v549, %v980
    %v982 = vmul.f32 %v550, %v980
    %v983 = vadd.f32 %v978, %v981
    %v984 = vadd.f32 %v979, %v982
    %v985 = vstv %s440
    %v986 = vmul.f32 %v553, %v985
    %v987 = vmul.f32 %v554, %v985
    %v988 = vadd.f32 %v983, %v986
    %v989 = vadd.f32 %v984, %v987
    %v990 = vstv %s441
    %v991 = vmul.f32 %v557, %v990
    %v992 = vmul.f32 %v558, %v990
    %v993 = vadd.f32 %v988, %v991
    %v994 = vadd.f32 %v989, %v992
    %v995 = vstv %s442
    %v996 = vmul.f32 %v561, %v995
    %v997 = vmul.f32 %v562, %v995
    %v998 = vadd.f32 %v993, %v996
    %v999 = vadd.f32 %v994, %v997
    %v1000 = vstv %s443
    %v1001 = vmul.f32 %v565, %v1000
    %v1002 = vmul.f32 %v566, %v1000
    %v1003 = vadd.f32 %v998, %v1001
    %v1004 = vadd.f32 %v999, %v1002
    %v1005 = vstv %s444
    %v1006 = vmul.f32 %v569, %v1005
    %v1007 = vmul.f32 %v570, %v1005
    %v1008 = vadd.f32 %v1003, %v1006
    %v1009 = vadd.f32 %v1004, %v1007
    %v1010 = vstv %s524
    %v1011 = vadd.f32 %v1008, %v1010
    %v1012 = vadd.f32 %v1009, %v1010
    %v1013 = vmul.f32 %v1011, 0.01
    %v1014 = vmul.f32 %v1012, 0.01
    %v1015 = vmax.f32 %v1011, %v1013
    %v1016 = vmax.f32 %v1012, %v1014
    %v1017 = vperm.slane %v571, 7
    %v1018 = vperm.slane %v572, 7
    %v1019 = vmul.f32 %v1015, %v1017
    %v1020 = vmul.f32 %v1016, %v1018
    %v1021 = vadd.f32 %v965, %v1019
    %v1022 = vadd.f32 %v966, %v1020
    %v1023 = vstv %s445
    %v1024 = vmul.f32 %v537, %v1023
    %v1025 = vmul.f32 %v538, %v1023
    %v1026 = vstv %s446
    %v1027 = vmul.f32 %v541, %v1026
    %v1028 = vmul.f32 %v542, %v1026
    %v1029 = vadd.f32 %v1024, %v1027
    %v1030 = vadd.f32 %v1025, %v1028
    %v1031 = vstv %s447
    %v1032 = vmul.f32 %v545, %v1031
    %v1033 = vmul.f32 %v546, %v1031
    %v1034 = vadd.f32 %v1029, %v1032
    %v1035 = vadd.f32 %v1030, %v1033
    %v1036 = vstv %s448
    %v1037 = vmul.f32 %v549, %v1036
    %v1038 = vmul.f32 %v550, %v1036
    %v1039 = vadd.f32 %v1034, %v1037
    %v1040 = vadd.f32 %v1035, %v1038
    %v1041 = vstv %s449
    %v1042 = vmul.f32 %v553, %v1041
    %v1043 = vmul.f32 %v554, %v1041
    %v1044 = vadd.f32 %v1039, %v1042
    %v1045 = vadd.f32 %v1040, %v1043
    %v1046 = vstv %s450
    %v1047 = vmul.f32 %v557, %v1046
    %v1048 = vmul.f32 %v558, %v1046
    %v1049 = vadd.f32 %v1044, %v1047
    %v1050 = vadd.f32 %v1045, %v1048
    %v1051 = vstv %s451
    %v1052 = vmul.f32 %v561, %v1051
    %v1053 = vmul.f32 %v562, %v1051
    %v1054 = vadd.f32 %v1049, %v1052
    %v1055 = vadd.f32 %v1050, %v1053
    %v1056 = vstv %s452
    %v1057 = vmul.f32 %v565, %v1056
    %v1058 = vmul.f32 %v566, %v1056
    %v1059 = vadd.f32 %v1054, %v1057
    %v1060 = vadd.f32 %v1055, %v1058
    %v1061 = vstv %s453
    %v1062 = vmul.f32 %v569, %v1061
    %v1063 = vmul.f32 %v570, %v1061
    %v1064 = vadd.f32 %v1059, %v1062
    %v1065 = vadd.f32 %v1060, %v1063
    %v1066 = vstv %s525
    %v1067 = vadd.f32 %v1064, %v1066
    %v1068 = vadd.f32 %v1065, %v1066
    %v1069 = vmul.f32 %v1067, 0.01
    %v1070 = vmul.f32 %v1068, 0.01
    %v1071 = vmax.f32 %v1067, %v1069
    %v1072 = vmax.f32 %v1068, %v1070
    %v1073 = vperm.slane %v573, 0
    %v1074 = vperm.slane %v574, 0
    %v1075 = vmul.f32 %v1071, %v1073
    %v1076 = vmul.f32 %v1072, %v1074
    %v1077 = vadd.f32 %v1021, %v1075
    %v1078 = vadd.f32 %v1022, %v1076
    %v1079 = vstv %s454
    %v1080 = vmul.f32 %v537, %v1079
    %v1081 = vmul.f32 %v538, %v1079
    %v1082 = vstv %s455
    %v1083 = vmul.f32 %v541, %v1082
    %v1084 = vmul.f32 %v542, %v1082
    %v1085 = vadd.f32 %v1080, %v1083
    %v1086 = vadd.f32 %v1081, %v1084
    %v1087 = vstv %s456
    %v1088 = vmul.f32 %v545, %v1087
    %v1089 = vmul.f32 %v546, %v1087
    %v1090 = vadd.f32 %v1085, %v1088
    %v1091 = vadd.f32 %v1086, %v1089
    %v1092 = vstv %s457
    %v1093 = vmul.f32 %v549, %v1092
    %v1094 = vmul.f32 %v550, %v1092
    %v1095 = vadd.f32 %v1090, %v1093
    %v1096 = vadd.f32 %v1091, %v1094
    %v1097 = vstv %s458
    %v1098 = vmul.f32 %v553, %v1097
    %v1099 = vmul.f32 %v554, %v1097
    %v1100 = vadd.f32 %v1095, %v1098
    %v1101 = vadd.f32 %v1096, %v1099
    %v1102 = vstv %s459
    %v1103 = vmul.f32 %v557, %v1102
    %v1104 = vmul.f32 %v558, %v1102
    %v1105 = vadd.f32 %v1100, %v1103
    %v1106 = vadd.f32 %v1101, %v1104
    %v1107 = vstv %s460
    %v1108 = vmul.f32 %v561, %v1107
    %v1109 = vmul.f32 %v562, %v1107
    %v1110 = vadd.f32 %v1105, %v1108
    %v1111 = vadd.f32 %v1106, %v1109
    %v1112 = vstv %s461
    %v1113 = vmul.f32 %v565, %v1112
    %v1114 = vmul.f32 %v566, %v1112
    %v1115 = vadd.f32 %v1110, %v1113
    %v1116 = vadd.f32 %v1111, %v1114
    %v1117 = vstv %s462
    %v1118 = vmul.f32 %v569, %v1117
    %v1119 = vmul.f32 %v570, %v1117
    %v1120 = vadd.f32 %v1115, %v1118
    %v1121 = vadd.f32 %v1116, %v1119
    %v1122 = vstv %s526
    %v1123 = vadd.f32 %v1120, %v1122
    %v1124 = vadd.f32 %v1121, %v1122
    %v1125 = vmul.f32 %v1123, 0.01
    %v1126 = vmul.f32 %v1124, 0.01
    %v1127 = vmax.f32 %v1123, %v1125
    %v1128 = vmax.f32 %v1124, %v1126
    %v1129 = vperm.slane %v573, 1
    %v1130 = vperm.slane %v574, 1
    %v1131 = vmul.f32 %v1127, %v1129
    %v1132 = vmul.f32 %v1128, %v1130
    %v1133 = vadd.f32 %v1077, %v1131
    %v1134 = vadd.f32 %v1078, %v1132
    %v1135 = vstv %s463
    %v1136 = vmul.f32 %v537, %v1135
    %v1137 = vmul.f32 %v538, %v1135
    %v1138 = vstv %s464
    %v1139 = vmul.f32 %v541, %v1138
    %v1140 = vmul.f32 %v542, %v1138
    %v1141 = vadd.f32 %v1136, %v1139
    %v1142 = vadd.f32 %v1137, %v1140
    %v1143 = vstv %s465
    %v1144 = vmul.f32 %v545, %v1143
    %v1145 = vmul.f32 %v546, %v1143
    %v1146 = vadd.f32 %v1141, %v1144
    %v1147 = vadd.f32 %v1142, %v1145
    %v1148 = vstv %s466
    %v1149 = vmul.f32 %v549, %v1148
    %v1150 = vmul.f32 %v550, %v1148
    %v1151 = vadd.f32 %v1146, %v1149
    %v1152 = vadd.f32 %v1147, %v1150
    %v1153 = vstv %s467
    %v1154 = vmul.f32 %v553, %v1153
    %v1155 = vmul.f32 %v554, %v1153
    %v1156 = vadd.f32 %v1151, %v1154
    %v1157 = vadd.f32 %v1152, %v1155
    %v1158 = vstv %s468
    %v1159 = vmul.f32 %v557, %v1158
    %v1160 = vmul.f32 %v558, %v1158
    %v1161 = vadd.f32 %v1156, %v1159
    %v1162 = vadd.f32 %v1157, %v1160
    %v1163 = vstv %s469
    %v1164 = vmul.f32 %v561, %v1163
    %v1165 = vmul.f32 %v562, %v1163
    %v1166 = vadd.f32 %v1161, %v1164
    %v1167 = vadd.f32 %v1162, %v1165
    %v1168 = vstv %s470
    %v1169 = vmul.f32 %v565, %v1168
    %v1170 = vmul.f32 %v566, %v1168
    %v1171 = vadd.f32 %v1166, %v1169
    %v1172 = vadd.f32 %v1167, %v1170
    %v1173 = vstv %s471
    %v1174 = vmul.f32 %v569, %v1173
    %v1175 = vmul.f32 %v570, %v1173
    %v1176 = vadd.f32 %v1171, %v1174
    %v1177 = vadd.f32 %v1172, %v1175
    %v1178 = vstv %s527
    %v1179 = vadd.f32 %v1176, %v1178
    %v1180 = vadd.f32 %v1177, %v1178
    %v1181 = vmul.f32 %v1179, 0.01
    %v1182 = vmul.f32 %v1180, 0.01
    %v1183 = vmax.f32 %v1179, %v1181
    %v1184 = vmax.f32 %v1180, %v1182
    %v1185 = vperm.slane %v573, 2
    %v1186 = vperm.slane %v574, 2
    %v1187 = vmul.f32 %v1183, %v1185
    %v1188 = vmul.f32 %v1184, %v1186
    %v1189 = vadd.f32 %v1133, %v1187
    %v1190 = vadd.f32 %v1134, %v1188
    %v1191 = vstv %s472
    %v1192 = vmul.f32 %v537, %v1191
    %v1193 = vmul.f32 %v538, %v1191
    %v1194 = vstv %s473
    %v1195 = vmul.f32 %v541, %v1194
    %v1196 = vmul.f32 %v542, %v1194
    %v1197 = vadd.f32 %v1192, %v1195
    %v1198 = vadd.f32 %v1193, %v1196
    %v1199 = vstv %s474
    %v1200 = vmul.f32 %v545, %v1199
    %v1201 = vmul.f32 %v546, %v1199
    %v1202 = vadd.f32 %v1197, %v1200
    %v1203 = vadd.f32 %v1198, %v1201
    %v1204 = vstv %s475
    %v1205 = vmul.f32 %v549, %v1204
    %v1206 = vmul.f32 %v550, %v1204
    %v1207 = vadd.f32 %v1202, %v1205
    %v1208 = vadd.f32 %v1203, %v1206
    %v1209 = vstv %s476
    %v1210 = vmul.f32 %v553, %v1209
    %v1211 = vmul.f32 %v554, %v1209
    %v1212 = vadd.f32 %v1207, %v1210
    %v1213 = vadd.f32 %v1208, %v1211
    %v1214 = vstv %s477
    %v1215 = vmul.f32 %v557, %v1214
    %v1216 = vmul.f32 %v558, %v1214
    %v1217 = vadd.f32 %v1212, %v1215
    %v1218 = vadd.f32 %v1213, %v1216
    %v1219 = vstv %s478
    %v1220 = vmul.f32 %v561, %v1219
    %v1221 = vmul.f32 %v562, %v1219
    %v1222 = vadd.f32 %v1217, %v1220
    %v1223 = vadd.f32 %v1218, %v1221
    %v1224 = vstv %s479
    %v1225 = vmul.f32 %v565, %v1224
    %v1226 = vmul.f32 %v566, %v1224
    %v1227 = vadd.f32 %v1222, %v1225
    %v1228 = vadd.f32 %v1223, %v1226
    %v1229 = vstv %s480
    %v1230 = vmul.f32 %v569, %v1229
    %v1231 = vmul.f32 %v570, %v1229
    %v1232 = vadd.f32 %v1227, %v1230
    %v1233 = vadd.f32 %v1228, %v1231
    %v1234 = vstv %s528
    %v1235 = vadd.f32 %v1232, %v1234
    %v1236 = vadd.f32 %v1233, %v1234
    %v1237 = vmul.f32 %v1235, 0.01
    %v1238 = vmul.f32 %v1236, 0.01
    %v1239 = vmax.f32 %v1235, %v1237
    %v1240 = vmax.f32 %v1236, %v1238
    %v1241 = vperm.slane %v573, 3
    %v1242 = vperm.slane %v574, 3
    %v1243 = vmul.f32 %v1239, %v1241
    %v1244 = vmul.f32 %v1240, %v1242
    %v1245 = vadd.f32 %v1189, %v1243
    %v1246 = vadd.f32 %v1190, %v1244
    %v1247 = vstv %s481
    %v1248 = vmul.f32 %v537, %v1247
    %v1249 = vmul.f32 %v538, %v1247
    %v1250 = vstv %s482
    %v1251 = vmul.f32 %v541, %v1250
    %v1252 = vmul.f32 %v542, %v1250
    %v1253 = vadd.f32 %v1248, %v1251
    %v1254 = vadd.f32 %v1249, %v1252
    %v1255 = vstv %s483
    %v1256 = vmul.f32 %v545, %v1255
    %v1257 = vmul.f32 %v546, %v1255
    %v1258 = vadd.f32 %v1253, %v1256
    %v1259 = vadd.f32 %v1254, %v1257
    %v1260 = vstv %s484
    %v1261 = vmul.f32 %v549, %v1260
    %v1262 = vmul.f32 %v550, %v1260
    %v1263 = vadd.f32 %v1258, %v1261
    %v1264 = vadd.f32 %v1259, %v1262
    %v1265 = vstv %s485
    %v1266 = vmul.f32 %v553, %v1265
    %v1267 = vmul.f32 %v554, %v1265
    %v1268 = vadd.f32 %v1263, %v1266
    %v1269 = vadd.f32 %v1264, %v1267
    %v1270 = vstv %s486
    %v1271 = vmul.f32 %v557, %v1270
    %v1272 = vmul.f32 %v558, %v1270
    %v1273 = vadd.f32 %v1268, %v1271
    %v1274 = vadd.f32 %v1269, %v1272
    %v1275 = vstv %s487
    %v1276 = vmul.f32 %v561, %v1275
    %v1277 = vmul.f32 %v562, %v1275
    %v1278 = vadd.f32 %v1273, %v1276
    %v1279 = vadd.f32 %v1274, %v1277
    %v1280 = vstv %s488
    %v1281 = vmul.f32 %v565, %v1280
    %v1282 = vmul.f32 %v566, %v1280
    %v1283 = vadd.f32 %v1278, %v1281
    %v1284 = vadd.f32 %v1279, %v1282
    %v1285 = vstv %s489
    %v1286 = vmul.f32 %v569, %v1285
    %v1287 = vmul.f32 %v570, %v1285
    %v1288 = vadd.f32 %v1283, %v1286
    %v1289 = vadd.f32 %v1284, %v1287
    %v1290 = vstv %s529
    %v1291 = vadd.f32 %v1288, %v1290
    %v1292 = vadd.f32 %v1289, %v1290
    %v1293 = vmul.f32 %v1291, 0.01
    %v1294 = vmul.f32 %v1292, 0.01
    %v1295 = vmax.f32 %v1291, %v1293
    %v1296 = vmax.f32 %v1292, %v1294
    %v1297 = vperm.slane %v573, 4
    %v1298 = vperm.slane %v574, 4
    %v1299 = vmul.f32 %v1295, %v1297
    %v1300 = vmul.f32 %v1296, %v1298
    %v1301 = vadd.f32 %v1245, %v1299
    %v1302 = vadd.f32 %v1246, %v1300
    %v1303 = vstv %s490
    %v1304 = vmul.f32 %v537, %v1303
    %v1305 = vmul.f32 %v538, %v1303
    %v1306 = vstv %s491
    %v1307 = vmul.f32 %v541, %v1306
    %v1308 = vmul.f32 %v542, %v1306
    %v1309 = vadd.f32 %v1304, %v1307
    %v1310 = vadd.f32 %v1305, %v1308
    %v1311 = vstv %s492
    %v1312 = vmul.f32 %v545, %v1311
    %v1313 = vmul.f32 %v546, %v1311
    %v1314 = vadd.f32 %v1309, %v1312
    %v1315 = vadd.f32 %v1310, %v1313
    %v1316 = vstv %s493
    %v1317 = vmul.f32 %v549, %v1316
    %v1318 = vmul.f32 %v550, %v1316
    %v1319 = vadd.f32 %v1314, %v1317
    %v1320 = vadd.f32 %v1315, %v1318
    %v1321 = vstv %s494
    %v1322 = vmul.f32 %v553, %v1321
    %v1323 = vmul.f32 %v554, %v1321
    %v1324 = vadd.f32 %v1319, %v1322
    %v1325 = vadd.f32 %v1320, %v1323
    %v1326 = vstv %s495
    %v1327 = vmul.f32 %v557, %v1326
    %v1328 = vmul.f32 %v558, %v1326
    %v1329 = vadd.f32 %v1324, %v1327
    %v1330 = vadd.f32 %v1325, %v1328
    %v1331 = vstv %s496
    %v1332 = vmul.f32 %v561, %v1331
    %v1333 = vmul.f32 %v562, %v1331
    %v1334 = vadd.f32 %v1329, %v1332
    %v1335 = vadd.f32 %v1330, %v1333
    %v1336 = vstv %s497
    %v1337 = vmul.f32 %v565, %v1336
    %v1338 = vmul.f32 %v566, %v1336
    %v1339 = vadd.f32 %v1334, %v1337
    %v1340 = vadd.f32 %v1335, %v1338
    %v1341 = vstv %s498
    %v1342 = vmul.f32 %v569, %v1341
    %v1343 = vmul.f32 %v570, %v1341
    %v1344 = vadd.f32 %v1339, %v1342
    %v1345 = vadd.f32 %v1340, %v1343
    %v1346 = vstv %s530
    %v1347 = vadd.f32 %v1344, %v1346
    %v1348 = vadd.f32 %v1345, %v1346
    %v1349 = vmul.f32 %v1347, 0.01
    %v1350 = vmul.f32 %v1348, 0.01
    %v1351 = vmax.f32 %v1347, %v1349
    %v1352 = vmax.f32 %v1348, %v1350
    %v1353 = vperm.slane %v573, 5
    %v1354 = vperm.slane %v574, 5
    %v1355 = vmul.f32 %v1351, %v1353
    %v1356 = vmul.f32 %v1352, %v1354
    %v1357 = vadd.f32 %v1301, %v1355
    %v1358 = vadd.f32 %v1302, %v1356
    %v1359 = vstv %s499
    %v1360 = vmul.f32 %v537, %v1359
    %v1361 = vmul.f32 %v538, %v1359
    %v1362 = vstv %s500
    %v1363 = vmul.f32 %v541, %v1362
    %v1364 = vmul.f32 %v542, %v1362
    %v1365 = vadd.f32 %v1360, %v1363
    %v1366 = vadd.f32 %v1361, %v1364
    %v1367 = vstv %s501
    %v1368 = vmul.f32 %v545, %v1367
    %v1369 = vmul.f32 %v546, %v1367
    %v1370 = vadd.f32 %v1365, %v1368
    %v1371 = vadd.f32 %v1366, %v1369
    %v1372 = vstv %s502
    %v1373 = vmul.f32 %v549, %v1372
    %v1374 = vmul.f32 %v550, %v1372
    %v1375 = vadd.f32 %v1370, %v1373
    %v1376 = vadd.f32 %v1371, %v1374
    %v1377 = vstv %s503
    %v1378 = vmul.f32 %v553, %v1377
    %v1379 = vmul.f32 %v554, %v1377
    %v1380 = vadd.f32 %v1375, %v1378
    %v1381 = vadd.f32 %v1376, %v1379
    %v1382 = vstv %s504
    %v1383 = vmul.f32 %v557, %v1382
    %v1384 = vmul.f32 %v558, %v1382
    %v1385 = vadd.f32 %v1380, %v1383
    %v1386 = vadd.f32 %v1381, %v1384
    %v1387 = vstv %s505
    %v1388 = vmul.f32 %v561, %v1387
    %v1389 = vmul.f32 %v562, %v1387
    %v1390 = vadd.f32 %v1385, %v1388
    %v1391 = vadd.f32 %v1386, %v1389
    %v1392 = vstv %s506
    %v1393 = vmul.f32 %v565, %v1392
    %v1394 = vmul.f32 %v566, %v1392
    %v1395 = vadd.f32 %v1390, %v1393
    %v1396 = vadd.f32 %v1391, %v1394
    %v1397 = vstv %s507
    %v1398 = vmul.f32 %v569, %v1397
    %v1399 = vmul.f32 %v570, %v1397
    %v1400 = vadd.f32 %v1395, %v1398
    %v1401 = vadd.f32 %v1396, %v1399
    %v1402 = vstv %s531
    %v1403 = vadd.f32 %v1400, %v1402
    %v1404 = vadd.f32 %v1401, %v1402
    %v1405 = vmul.f32 %v1403, 0.01
    %v1406 = vmul.f32 %v1404, 0.01
    %v1407 = vmax.f32 %v1403, %v1405
    %v1408 = vmax.f32 %v1404, %v1406
    %v1409 = vperm.slane %v573, 6
    %v1410 = vperm.slane %v574, 6
    %v1411 = vmul.f32 %v1407, %v1409
    %v1412 = vmul.f32 %v1408, %v1410
    %v1413 = vadd.f32 %v1357, %v1411
    %v1414 = vadd.f32 %v1358, %v1412
    %v1415 = vstv %s508
    %v1416 = vmul.f32 %v537, %v1415
    %v1417 = vmul.f32 %v538, %v1415
    %v1418 = vstv %s509
    %v1419 = vmul.f32 %v541, %v1418
    %v1420 = vmul.f32 %v542, %v1418
    %v1421 = vadd.f32 %v1416, %v1419
    %v1422 = vadd.f32 %v1417, %v1420
    %v1423 = vstv %s510
    %v1424 = vmul.f32 %v545, %v1423
    %v1425 = vmul.f32 %v546, %v1423
    %v1426 = vadd.f32 %v1421, %v1424
    %v1427 = vadd.f32 %v1422, %v1425
    %v1428 = vstv %s511
    %v1429 = vmul.f32 %v549, %v1428
    %v1430 = vmul.f32 %v550, %v1428
    %v1431 = vadd.f32 %v1426, %v1429
    %v1432 = vadd.f32 %v1427, %v1430
    %v1433 = vstv %s512
    %v1434 = vmul.f32 %v553, %v1433
    %v1435 = vmul.f32 %v554, %v1433
    %v1436 = vadd.f32 %v1431, %v1434
    %v1437 = vadd.f32 %v1432, %v1435
    %v1438 = vstv %s513
    %v1439 = vmul.f32 %v557, %v1438
    %v1440 = vmul.f32 %v558, %v1438
    %v1441 = vadd.f32 %v1436, %v1439
    %v1442 = vadd.f32 %v1437, %v1440
    %v1443 = vstv %s514
    %v1444 = vmul.f32 %v561, %v1443
    %v1445 = vmul.f32 %v562, %v1443
    %v1446 = vadd.f32 %v1441, %v1444
    %v1447 = vadd.f32 %v1442, %v1445
    %v1448 = vstv %s515
    %v1449 = vmul.f32 %v565, %v1448
    %v1450 = vmul.f32 %v566, %v1448
    %v1451 = vadd.f32 %v1446, %v1449
    %v1452 = vadd.f32 %v1447, %v1450
    %v1453 = vstv %s516
    %v1454 = vmul.f32 %v569, %v1453
    %v1455 = vmul.f32 %v570, %v1453
    %v1456 = vadd.f32 %v1451, %v1454
    %v1457 = vadd.f32 %v1452, %v1455
    %v1458 = vstv %s532
    %v1459 = vadd.f32 %v1456, %v1458
    %v1460 = vadd.f32 %v1457, %v1458
    %v1461 = vmul.f32 %v1459, 0.01
    %v1462 = vmul.f32 %v1460, 0.01
    %v1463 = vmax.f32 %v1459, %v1461
    %v1464 = vmax.f32 %v1460, %v1462
    %v1465 = vperm.slane %v573, 7
    %v1466 = vperm.slane %v574, 7
    %v1467 = vmul.f32 %v1463, %v1465
    %v1468 = vmul.f32 %v1464, %v1466
    %v1469 = vadd.f32 %v1413, %v1467
    %v1470 = vadd.f32 %v1414, %v1468
    %v1471 = vadd.f32 %v1469, %v1470
    %1472 = vadd.xlane.f32.xlu0 %v1471
    %v1473 = vpop.xlane.xlu0 %1472
    %v1474 = vadd.f32 %v1473, 0.0
    %v1475 = vld [vmem:[%s536 + $0x10] sm:$0xff]
    %v1476 = vld [vmem:[%s536 + $0x18] sm:$0xff]
    %v1477 = vld [vmem:[%s540 + $0x10] sm:$0xff]
    %v1478 = vld [vmem:[%s540 + $0x18] sm:$0xff]
    %v1479 = vld [vmem:[%s544 + $0x10] sm:$0xff]
    %v1480 = vld [vmem:[%s544 + $0x18] sm:$0xff]
    %v1481 = vld [vmem:[%s548 + $0x10] sm:$0xff]
    %v1482 = vld [vmem:[%s548 + $0x18] sm:$0xff]
    %v1483 = vld [vmem:[%s552 + $0x10] sm:$0xff]
    %v1484 = vld [vmem:[%s552 + $0x18] sm:$0xff]
    %v1485 = vld [vmem:[%s556 + $0x10] sm:$0xff]
    %v1486 = vld [vmem:[%s556 + $0x18] sm:$0xff]
    %v1487 = vld [vmem:[%s560 + $0x10] sm:$0xff]
    %v1488 = vld [vmem:[%s560 + $0x18] sm:$0xff]
    %v1489 = vld [vmem:[%s564 + $0x10] sm:$0xff]
    %v1490 = vld [vmem:[%s564 + $0x18] sm:$0xff]
    %v1491 = vld [vmem:[%s568 + $0x10] sm:$0xff]
    %v1492 = vld [vmem:[%s568 + $0x18] sm:$0xff]
    %v1493 = vld [vmem:[%s1 + $0x10] sm:$0xff]
    %v1494 = vld [vmem:[%s1 + $0x18] sm:$0xff]
    %v1495 = vld [vmem:[%s1 + $0x48] sm:$0xff]
    %v1496 = vld [vmem:[%s1 + $0x50] sm:$0xff]
    %v1497 = vmul.f32 %v1475, %v575
    %v1498 = vmul.f32 %v1476, %v575
    %v1499 = vmul.f32 %v1477, %v578
    %v1500 = vmul.f32 %v1478, %v578
    %v1501 = vadd.f32 %v1497, %v1499
    %v1502 = vadd.f32 %v1498, %v1500
    %v1503 = vmul.f32 %v1479, %v583
    %v1504 = vmul.f32 %v1480, %v583
    %v1505 = vadd.f32 %v1501, %v1503
    %v1506 = vadd.f32 %v1502, %v1504
    %v1507 = vmul.f32 %v1481, %v588
    %v1508 = vmul.f32 %v1482, %v588
    %v1509 = vadd.f32 %v1505, %v1507
    %v1510 = vadd.f32 %v1506, %v1508
    %v1511 = vmul.f32 %v1483, %v593
    %v1512 = vmul.f32 %v1484, %v593
    %v1513 = vadd.f32 %v1509, %v1511
    %v1514 = vadd.f32 %v1510, %v1512
    %v1515 = vmul.f32 %v1485, %v598
    %v1516 = vmul.f32 %v1486, %v598
    %v1517 = vadd.f32 %v1513, %v1515
    %v1518 = vadd.f32 %v1514, %v1516
    %v1519 = vmul.f32 %v1487, %v603
    %v1520 = vmul.f32 %v1488, %v603
    %v1521 = vadd.f32 %v1517, %v1519
    %v1522 = vadd.f32 %v1518, %v1520
    %v1523 = vmul.f32 %v1489, %v608
    %v1524 = vmul.f32 %v1490, %v608
    %v1525 = vadd.f32 %v1521, %v1523
    %v1526 = vadd.f32 %v1522, %v1524
    %v1527 = vmul.f32 %v1491, %v613
    %v1528 = vmul.f32 %v1492, %v613
    %v1529 = vadd.f32 %v1525, %v1527
    %v1530 = vadd.f32 %v1526, %v1528
    %v1531 = vadd.f32 %v1529, %v618
    %v1532 = vadd.f32 %v1530, %v618
    %v1533 = vmul.f32 %v1531, 0.01
    %v1534 = vmul.f32 %v1532, 0.01
    %v1535 = vmax.f32 %v1531, %v1533
    %v1536 = vmax.f32 %v1532, %v1534
    %v1537 = vperm.slane %v1493, 0
    %v1538 = vperm.slane %v1494, 0
    %v1539 = vmul.f32 %v1535, %v1537
    %v1540 = vmul.f32 %v1536, %v1538
    %v1541 = vadd.f32 %v1539, 0.0
    %v1542 = vadd.f32 %v1540, 0.0
    %v1543 = vmul.f32 %v1475, %v631
    %v1544 = vmul.f32 %v1476, %v631
    %v1545 = vmul.f32 %v1477, %v634
    %v1546 = vmul.f32 %v1478, %v634
    %v1547 = vadd.f32 %v1543, %v1545
    %v1548 = vadd.f32 %v1544, %v1546
    %v1549 = vmul.f32 %v1479, %v639
    %v1550 = vmul.f32 %v1480, %v639
    %v1551 = vadd.f32 %v1547, %v1549
    %v1552 = vadd.f32 %v1548, %v1550
    %v1553 = vmul.f32 %v1481, %v644
    %v1554 = vmul.f32 %v1482, %v644
    %v1555 = vadd.f32 %v1551, %v1553
    %v1556 = vadd.f32 %v1552, %v1554
    %v1557 = vmul.f32 %v1483, %v649
    %v1558 = vmul.f32 %v1484, %v649
    %v1559 = vadd.f32 %v1555, %v1557
    %v1560 = vadd.f32 %v1556, %v1558
    %v1561 = vmul.f32 %v1485, %v654
    %v1562 = vmul.f32 %v1486, %v654
    %v1563 = vadd.f32 %v1559, %v1561
    %v1564 = vadd.f32 %v1560, %v1562
    %v1565 = vmul.f32 %v1487, %v659
    %v1566 = vmul.f32 %v1488, %v659
    %v1567 = vadd.f32 %v1563, %v1565
    %v1568 = vadd.f32 %v1564, %v1566
    %v1569 = vmul.f32 %v1489, %v664
    %v1570 = vmul.f32 %v1490, %v664
    %v1571 = vadd.f32 %v1567, %v1569
    %v1572 = vadd.f32 %v1568, %v1570
    %v1573 = vmul.f32 %v1491, %v669
    %v1574 = vmul.f32 %v1492, %v669
    %v1575 = vadd.f32 %v1571, %v1573
    %v1576 = vadd.f32 %v1572, %v1574
    %v1577 = vadd.f32 %v1575, %v674
    %v1578 = vadd.f32 %v1576, %v674
    %v1579 = vmul.f32 %v1577, 0.01
    %v1580 = vmul.f32 %v1578, 0.01
    %v1581 = vmax.f32 %v1577, %v1579
    %v1582 = vmax.f32 %v1578, %v1580
    %v1583 = vperm.slane %v1493, 1
    %v1584 = vperm.slane %v1494, 1
    %v1585 = vmul.f32 %v1581, %v1583
    %v1586 = vmul.f32 %v1582, %v1584
    %v1587 = vadd.f32 %v1541, %v1585
    %v1588 = vadd.f32 %v1542, %v1586
    %v1589 = vmul.f32 %v1475, %v687
    %v1590 = vmul.f32 %v1476, %v687
    %v1591 = vmul.f32 %v1477, %v690
    %v1592 = vmul.f32 %v1478, %v690
    %v1593 = vadd.f32 %v1589, %v1591
    %v1594 = vadd.f32 %v1590, %v1592
    %v1595 = vmul.f32 %v1479, %v695
    %v1596 = vmul.f32 %v1480, %v695
    %v1597 = vadd.f32 %v1593, %v1595
    %v1598 = vadd.f32 %v1594, %v1596
    %v1599 = vmul.f32 %v1481, %v700
    %v1600 = vmul.f32 %v1482, %v700
    %v1601 = vadd.f32 %v1597, %v1599
    %v1602 = vadd.f32 %v1598, %v1600
    %v1603 = vmul.f32 %v1483, %v705
    %v1604 = vmul.f32 %v1484, %v705
    %v1605 = vadd.f32 %v1601, %v1603
    %v1606 = vadd.f32 %v1602, %v1604
    %v1607 = vmul.f32 %v1485, %v710
    %v1608 = vmul.f32 %v1486, %v710
    %v1609 = vadd.f32 %v1605, %v1607
    %v1610 = vadd.f32 %v1606, %v1608
    %v1611 = vmul.f32 %v1487, %v715
    %v1612 = vmul.f32 %v1488, %v715
    %v1613 = vadd.f32 %v1609, %v1611
    %v1614 = vadd.f32 %v1610, %v1612
    %v1615 = vmul.f32 %v1489, %v720
    %v1616 = vmul.f32 %v1490, %v720
    %v1617 = vadd.f32 %v1613, %v1615
    %v1618 = vadd.f32 %v1614, %v1616
    %v1619 = vmul.f32 %v1491, %v725
    %v1620 = vmul.f32 %v1492, %v725
    %v1621 = vadd.f32 %v1617, %v1619
    %v1622 = vadd.f32 %v1618, %v1620
    %v1623 = vadd.f32 %v1621, %v730
    %v1624 = vadd.f32 %v1622, %v730
    %v1625 = vmul.f32 %v1623, 0.01
    %v1626 = vmul.f32 %v1624, 0.01
    %v1627 = vmax.f32 %v1623, %v1625
    %v1628 = vmax.f32 %v1624, %v1626
    %v1629 = vperm.slane %v1493, 2
    %v1630 = vperm.slane %v1494, 2
    %v1631 = vmul.f32 %v1627, %v1629
    %v1632 = vmul.f32 %v1628, %v1630
    %v1633 = vadd.f32 %v1587, %v1631
    %v1634 = vadd.f32 %v1588, %v1632
    %v1635 = vmul.f32 %v1475, %v743
    %v1636 = vmul.f32 %v1476, %v743
    %v1637 = vmul.f32 %v1477, %v746
    %v1638 = vmul.f32 %v1478, %v746
    %v1639 = vadd.f32 %v1635, %v1637
    %v1640 = vadd.f32 %v1636, %v1638
    %v1641 = vmul.f32 %v1479, %v751
    %v1642 = vmul.f32 %v1480, %v751
    %v1643 = vadd.f32 %v1639, %v1641
    %v1644 = vadd.f32 %v1640, %v1642
    %v1645 = vmul.f32 %v1481, %v756
    %v1646 = vmul.f32 %v1482, %v756
    %v1647 = vadd.f32 %v1643, %v1645
    %v1648 = vadd.f32 %v1644, %v1646
    %v1649 = vmul.f32 %v1483, %v761
    %v1650 = vmul.f32 %v1484, %v761
    %v1651 = vadd.f32 %v1647, %v1649
    %v1652 = vadd.f32 %v1648, %v1650
    %v1653 = vmul.f32 %v1485, %v766
    %v1654 = vmul.f32 %v1486, %v766
    %v1655 = vadd.f32 %v1651, %v1653
    %v1656 = vadd.f32 %v1652, %v1654
    %v1657 = vmul.f32 %v1487, %v771
    %v1658 = vmul.f32 %v1488, %v771
    %v1659 = vadd.f32 %v1655, %v1657
    %v1660 = vadd.f32 %v1656, %v1658
    %v1661 = vmul.f32 %v1489, %v776
    %v1662 = vmul.f32 %v1490, %v776
    %v1663 = vadd.f32 %v1659, %v1661
    %v1664 = vadd.f32 %v1660, %v1662
    %v1665 = vmul.f32 %v1491, %v781
    %v1666 = vmul.f32 %v1492, %v781
    %v1667 = vadd.f32 %v1663, %v1665
    %v1668 = vadd.f32 %v1664, %v1666
    %v1669 = vadd.f32 %v1667, %v786
    %v1670 = vadd.f32 %v1668, %v786
    %v1671 = vmul.f32 %v1669, 0.01
    %v1672 = vmul.f32 %v1670, 0.01
    %v1673 = vmax.f32 %v1669, %v1671
    %v1674 = vmax.f32 %v1670, %v1672
    %v1675 = vperm.slane %v1493, 3
    %v1676 = vperm.slane %v1494, 3
    %v1677 = vmul.f32 %v1673, %v1675
    %v1678 = vmul.f32 %v1674, %v1676
    %v1679 = vadd.f32 %v1633, %v1677
    %v1680 = vadd.f32 %v1634, %v1678
    %v1681 = vmul.f32 %v1475, %v799
    %v1682 = vmul.f32 %v1476, %v799
    %v1683 = vmul.f32 %v1477, %v802
    %v1684 = vmul.f32 %v1478, %v802
    %v1685 = vadd.f32 %v1681, %v1683
    %v1686 = vadd.f32 %v1682, %v1684
    %v1687 = vmul.f32 %v1479, %v807
    %v1688 = vmul.f32 %v1480, %v807
    %v1689 = vadd.f32 %v1685, %v1687
    %v1690 = vadd.f32 %v1686, %v1688
    %v1691 = vmul.f32 %v1481, %v812
    %v1692 = vmul.f32 %v1482, %v812
    %v1693 = vadd.f32 %v1689, %v1691
    %v1694 = vadd.f32 %v1690, %v1692
    %v1695 = vmul.f32 %v1483, %v817
    %v1696 = vmul.f32 %v1484, %v817
    %v1697 = vadd.f32 %v1693, %v1695
    %v1698 = vadd.f32 %v1694, %v1696
    %v1699 = vmul.f32 %v1485, %v822
    %v1700 = vmul.f32 %v1486, %v822
    %v1701 = vadd.f32 %v1697, %v1699
    %v1702 = vadd.f32 %v1698, %v1700
    %v1703 = vmul.f32 %v1487, %v827
    %v1704 = vmul.f32 %v1488, %v827
    %v1705 = vadd.f32 %v1701, %v1703
    %v1706 = vadd.f32 %v1702, %v1704
    %v1707 = vmul.f32 %v1489, %v832
    %v1708 = vmul.f32 %v1490, %v832
    %v1709 = vadd.f32 %v1705, %v1707
    %v1710 = vadd.f32 %v1706, %v1708
    %v1711 = vmul.f32 %v1491, %v837
    %v1712 = vmul.f32 %v1492, %v837
    %v1713 = vadd.f32 %v1709, %v1711
    %v1714 = vadd.f32 %v1710, %v1712
    %v1715 = vadd.f32 %v1713, %v842
    %v1716 = vadd.f32 %v1714, %v842
    %v1717 = vmul.f32 %v1715, 0.01
    %v1718 = vmul.f32 %v1716, 0.01
    %v1719 = vmax.f32 %v1715, %v1717
    %v1720 = vmax.f32 %v1716, %v1718
    %v1721 = vperm.slane %v1493, 4
    %v1722 = vperm.slane %v1494, 4
    %v1723 = vmul.f32 %v1719, %v1721
    %v1724 = vmul.f32 %v1720, %v1722
    %v1725 = vadd.f32 %v1679, %v1723
    %v1726 = vadd.f32 %v1680, %v1724
    %v1727 = vmul.f32 %v1475, %v855
    %v1728 = vmul.f32 %v1476, %v855
    %v1729 = vmul.f32 %v1477, %v858
    %v1730 = vmul.f32 %v1478, %v858
    %v1731 = vadd.f32 %v1727, %v1729
    %v1732 = vadd.f32 %v1728, %v1730
    %v1733 = vmul.f32 %v1479, %v863
    %v1734 = vmul.f32 %v1480, %v863
    %v1735 = vadd.f32 %v1731, %v1733
    %v1736 = vadd.f32 %v1732, %v1734
    %v1737 = vmul.f32 %v1481, %v868
    %v1738 = vmul.f32 %v1482, %v868
    %v1739 = vadd.f32 %v1735, %v1737
    %v1740 = vadd.f32 %v1736, %v1738
    %v1741 = vmul.f32 %v1483, %v873
    %v1742 = vmul.f32 %v1484, %v873
    %v1743 = vadd.f32 %v1739, %v1741
    %v1744 = vadd.f32 %v1740, %v1742
    %v1745 = vmul.f32 %v1485, %v878
    %v1746 = vmul.f32 %v1486, %v878
    %v1747 = vadd.f32 %v1743, %v1745
    %v1748 = vadd.f32 %v1744, %v1746
    %v1749 = vmul.f32 %v1487, %v883
    %v1750 = vmul.f32 %v1488, %v883
    %v1751 = vadd.f32 %v1747, %v1749
    %v1752 = vadd.f32 %v1748, %v1750
    %v1753 = vmul.f32 %v1489, %v888
    %v1754 = vmul.f32 %v1490, %v888
    %v1755 = vadd.f32 %v1751, %v1753
    %v1756 = vadd.f32 %v1752, %v1754
    %v1757 = vmul.f32 %v1491, %v893
    %v1758 = vmul.f32 %v1492, %v893
    %v1759 = vadd.f32 %v1755, %v1757
    %v1760 = vadd.f32 %v1756, %v1758
    %v1761 = vadd.f32 %v1759, %v898
    %v1762 = vadd.f32 %v1760, %v898
    %v1763 = vmul.f32 %v1761, 0.01
    %v1764 = vmul.f32 %v1762, 0.01
    %v1765 = vmax.f32 %v1761, %v1763
    %v1766 = vmax.f32 %v1762, %v1764
    %v1767 = vperm.slane %v1493, 5
    %v1768 = vperm.slane %v1494, 5
    %v1769 = vmul.f32 %v1765, %v1767
    %v1770 = vmul.f32 %v1766, %v1768
    %v1771 = vadd.f32 %v1725, %v1769
    %v1772 = vadd.f32 %v1726, %v1770
    %v1773 = vmul.f32 %v1475, %v911
    %v1774 = vmul.f32 %v1476, %v911
    %v1775 = vmul.f32 %v1477, %v914
    %v1776 = vmul.f32 %v1478, %v914
    %v1777 = vadd.f32 %v1773, %v1775
    %v1778 = vadd.f32 %v1774, %v1776
    %v1779 = vmul.f32 %v1479, %v919
    %v1780 = vmul.f32 %v1480, %v919
    %v1781 = vadd.f32 %v1777, %v1779
    %v1782 = vadd.f32 %v1778, %v1780
    %v1783 = vmul.f32 %v1481, %v924
    %v1784 = vmul.f32 %v1482, %v924
    %v1785 = vadd.f32 %v1781, %v1783
    %v1786 = vadd.f32 %v1782, %v1784
    %v1787 = vmul.f32 %v1483, %v929
    %v1788 = vmul.f32 %v1484, %v929
    %v1789 = vadd.f32 %v1785, %v1787
    %v1790 = vadd.f32 %v1786, %v1788
    %v1791 = vmul.f32 %v1485, %v934
    %v1792 = vmul.f32 %v1486, %v934
    %v1793 = vadd.f32 %v1789, %v1791
    %v1794 = vadd.f32 %v1790, %v1792
    %v1795 = vmul.f32 %v1487, %v939
    %v1796 = vmul.f32 %v1488, %v939
    %v1797 = vadd.f32 %v1793, %v1795
    %v1798 = vadd.f32 %v1794, %v1796
    %v1799 = vmul.f32 %v1489, %v944
    %v1800 = vmul.f32 %v1490, %v944
    %v1801 = vadd.f32 %v1797, %v1799
    %v1802 = vadd.f32 %v1798, %v1800
    %v1803 = vmul.f32 %v1491, %v949
    %v1804 = vmul.f32 %v1492, %v949
    %v1805 = vadd.f32 %v1801, %v1803
    %v1806 = vadd.f32 %v1802, %v1804
    %v1807 = vadd.f32 %v1805, %v954
    %v1808 = vadd.f32 %v1806, %v954
    %v1809 = vmul.f32 %v1807, 0.01
    %v1810 = vmul.f32 %v1808, 0.01
    %v1811 = vmax.f32 %v1807, %v1809
    %v1812 = vmax.f32 %v1808, %v1810
    %v1813 = vperm.slane %v1493, 6
    %v1814 = vperm.slane %v1494, 6
    %v1815 = vmul.f32 %v1811, %v1813
    %v1816 = vmul.f32 %v1812, %v1814
    %v1817 = vadd.f32 %v1771, %v1815
    %v1818 = vadd.f32 %v1772, %v1816
    %v1819 = vmul.f32 %v1475, %v967
    %v1820 = vmul.f32 %v1476, %v967
    %v1821 = vmul.f32 %v1477, %v970
    %v1822 = vmul.f32 %v1478, %v970
    %v1823 = vadd.f32 %v1819, %v1821
    %v1824 = vadd.f32 %v1820, %v1822
    %v1825 = vmul.f32 %v1479, %v975
    %v1826 = vmul.f32 %v1480, %v975
    %v1827 = vadd.f32 %v1823, %v1825
    %v1828 = vadd.f32 %v1824, %v1826
    %v1829 = vmul.f32 %v1481, %v980
    %v1830 = vmul.f32 %v1482, %v980
    %v1831 = vadd.f32 %v1827, %v1829
    %v1832 = vadd.f32 %v1828, %v1830
    %v1833 = vmul.f32 %v1483, %v985
    %v1834 = vmul.f32 %v1484, %v985
    %v1835 = vadd.f32 %v1831, %v1833
    %v1836 = vadd.f32 %v1832, %v1834
    %v1837 = vmul.f32 %v1485, %v990
    %v1838 = vmul.f32 %v1486, %v990
    %v1839 = vadd.f32 %v1835, %v1837
    %v1840 = vadd.f32 %v1836, %v1838
    %v1841 = vmul.f32 %v1487, %v995
    %v1842 = vmul.f32 %v1488, %v995
    %v1843 = vadd.f32 %v1839, %v1841
    %v1844 = vadd.f32 %v1840, %v1842
    %v1845 = vmul.f32 %v1489, %v1000
    %v1846 = vmul.f32 %v1490, %v1000
    %v1847 = vadd.f32 %v1843, %v1845
    %v1848 = vadd.f32 %v1844, %v1846
    %v1849 = vmul.f32 %v1491, %v1005
    %v1850 = vmul.f32 %v1492, %v1005
    %v1851 = vadd.f32 %v1847, %v1849
    %v1852 = vadd.f32 %v1848, %v1850
    %v1853 = vadd.f32 %v1851, %v1010
    %v1854 = vadd.f32 %v1852, %v1010
    %v1855 = vmul.f32 %v1853, 0.01
    %v1856 = vmul.f32 %v1854, 0.01
    %v1857 = vmax.f32 %v1853, %v1855
    %v1858 = vmax.f32 %v1854, %v1856
    %v1859 = vperm.slane %v1493, 7
    %v1860 = vperm.slane %v1494, 7
    %v1861 = vmul.f32 %v1857, %v1859
    %v1862 = vmul.f32 %v1858, %v1860
    %v1863 = vadd.f32 %v1817, %v1861
    %v1864 = vadd.f32 %v1818, %v1862
    %v1865 = vmul.f32 %v1475, %v1023
    %v1866 = vmul.f32 %v1476, %v1023
    %v1867 = vmul.f32 %v1477, %v1026
    %v1868 = vmul.f32 %v1478, %v1026
    %v1869 = vadd.f32 %v1865, %v1867
    %v1870 = vadd.f32 %v1866, %v1868
    %v1871 = vmul.f32 %v1479, %v1031
    %v1872 = vmul.f32 %v1480, %v1031
    %v1873 = vadd.f32 %v1869, %v1871
    %v1874 = vadd.f32 %v1870, %v1872
    %v1875 = vmul.f32 %v1481, %v1036
    %v1876 = vmul.f32 %v1482, %v1036
    %v1877 = vadd.f32 %v1873, %v1875
    %v1878 = vadd.f32 %v1874, %v1876
    %v1879 = vmul.f32 %v1483, %v1041
    %v1880 = vmul.f32 %v1484, %v1041
    %v1881 = vadd.f32 %v1877, %v1879
    %v1882 = vadd.f32 %v1878, %v1880
    %v1883 = vmul.f32 %v1485, %v1046
    %v1884 = vmul.f32 %v1486, %v1046
    %v1885 = vadd.f32 %v1881, %v1883
    %v1886 = vadd.f32 %v1882, %v1884
    %v1887 = vmul.f32 %v1487, %v1051
    %v1888 = vmul.f32 %v1488, %v1051
    %v1889 = vadd.f32 %v1885, %v1887
    %v1890 = vadd.f32 %v1886, %v1888
    %v1891 = vmul.f32 %v1489, %v1056
    %v1892 = vmul.f32 %v1490, %v1056
    %v1893 = vadd.f32 %v1889, %v1891
    %v1894 = vadd.f32 %v1890, %v1892
    %v1895 = vmul.f32 %v1491, %v1061
    %v1896 = vmul.f32 %v1492, %v1061
    %v1897 = vadd.f32 %v1893, %v1895
    %v1898 = vadd.f32 %v1894, %v1896
    %v1899 = vadd.f32 %v1897, %v1066
    %v1900 = vadd.f32 %v1898, %v1066
    %v1901 = vmul.f32 %v1899, 0.01
    %v1902 = vmul.f32 %v1900, 0.01
    %v1903 = vmax.f32 %v1899, %v1901
    %v1904 = vmax.f32 %v1900, %v1902
    %v1905 = vperm.slane %v1495, 0
    %v1906 = vperm.slane %v1496, 0
    %v1907 = vmul.f32 %v1903, %v1905
    %v1908 = vmul.f32 %v1904, %v1906
    %v1909 = vadd.f32 %v1863, %v1907
    %v1910 = vadd.f32 %v1864, %v1908
    %v1911 = vmul.f32 %v1475, %v1079
    %v1912 = vmul.f32 %v1476, %v1079
    %v1913 = vmul.f32 %v1477, %v1082
    %v1914 = vmul.f32 %v1478, %v1082
    %v1915 = vadd.f32 %v1911, %v1913
    %v1916 = vadd.f32 %v1912, %v1914
    %v1917 = vmul.f32 %v1479, %v1087
    %v1918 = vmul.f32 %v1480, %v1087
    %v1919 = vadd.f32 %v1915, %v1917
    %v1920 = vadd.f32 %v1916, %v1918
    %v1921 = vmul.f32 %v1481, %v1092
    %v1922 = vmul.f32 %v1482, %v1092
    %v1923 = vadd.f32 %v1919, %v1921
    %v1924 = vadd.f32 %v1920, %v1922
    %v1925 = vmul.f32 %v1483, %v1097
    %v1926 = vmul.f32 %v1484, %v1097
    %v1927 = vadd.f32 %v1923, %v1925
    %v1928 = vadd.f32 %v1924, %v1926
    %v1929 = vmul.f32 %v1485, %v1102
    %v1930 = vmul.f32 %v1486, %v1102
    %v1931 = vadd.f32 %v1927, %v1929
    %v1932 = vadd.f32 %v1928, %v1930
    %v1933 = vmul.f32 %v1487, %v1107
    %v1934 = vmul.f32 %v1488, %v1107
    %v1935 = vadd.f32 %v1931, %v1933
    %v1936 = vadd.f32 %v1932, %v1934
    %v1937 = vmul.f32 %v1489, %v1112
    %v1938 = vmul.f32 %v1490, %v1112
    %v1939 = vadd.f32 %v1935, %v1937
    %v1940 = vadd.f32 %v1936, %v1938
    %v1941 = vmul.f32 %v1491, %v1117
    %v1942 = vmul.f32 %v1492, %v1117
    %v1943 = vadd.f32 %v1939, %v1941
    %v1944 = vadd.f32 %v1940, %v1942
    %v1945 = vadd.f32 %v1943, %v1122
    %v1946 = vadd.f32 %v1944, %v1122
    %v1947 = vmul.f32 %v1945, 0.01
    %v1948 = vmul.f32 %v1946, 0.01
    %v1949 = vmax.f32 %v1945, %v1947
    %v1950 = vmax.f32 %v1946, %v1948
    %v1951 = vperm.slane %v1495, 1
    %v1952 = vperm.slane %v1496, 1
    %v1953 = vmul.f32 %v1949, %v1951
    %v1954 = vmul.f32 %v1950, %v1952
    %v1955 = vadd.f32 %v1909, %v1953
    %v1956 = vadd.f32 %v1910, %v1954
    %v1957 = vmul.f32 %v1475, %v1135
    %v1958 = vmul.f32 %v1476, %v1135
    %v1959 = vmul.f32 %v1477, %v1138
    %v1960 = vmul.f32 %v1478, %v1138
    %v1961 = vadd.f32 %v1957, %v1959
    %v1962 = vadd.f32 %v1958, %v1960
    %v1963 = vmul.f32 %v1479, %v1143
    %v1964 = vmul.f32 %v1480, %v1143
    %v1965 = vadd.f32 %v1961, %v1963
    %v1966 = vadd.f32 %v1962, %v1964
    %v1967 = vmul.f32 %v1481, %v1148
    %v1968 = vmul.f32 %v1482, %v1148
    %v1969 = vadd.f32 %v1965, %v1967
    %v1970 = vadd.f32 %v1966, %v1968
    %v1971 = vmul.f32 %v1483, %v1153
    %v1972 = vmul.f32 %v1484, %v1153
    %v1973 = vadd.f32 %v1969, %v1971
    %v1974 = vadd.f32 %v1970, %v1972
    %v1975 = vmul.f32 %v1485, %v1158
    %v1976 = vmul.f32 %v1486, %v1158
    %v1977 = vadd.f32 %v1973, %v1975
    %v1978 = vadd.f32 %v1974, %v1976
    %v1979 = vmul.f32 %v1487, %v1163
    %v1980 = vmul.f32 %v1488, %v1163
    %v1981 = vadd.f32 %v1977, %v1979
    %v1982 = vadd.f32 %v1978, %v1980
    %v1983 = vmul.f32 %v1489, %v1168
    %v1984 = vmul.f32 %v1490, %v1168
    %v1985 = vadd.f32 %v1981, %v1983
    %v1986 = vadd.f32 %v1982, %v1984
    %v1987 = vmul.f32 %v1491, %v1173
    %v1988 = vmul.f32 %v1492, %v1173
    %v1989 = vadd.f32 %v1985, %v1987
    %v1990 = vadd.f32 %v1986, %v1988
    %v1991 = vadd.f32 %v1989, %v1178
    %v1992 = vadd.f32 %v1990, %v1178
    %v1993 = vmul.f32 %v1991, 0.01
    %v1994 = vmul.f32 %v1992, 0.01
    %v1995 = vmax.f32 %v1991, %v1993
    %v1996 = vmax.f32 %v1992, %v1994
    %v1997 = vperm.slane %v1495, 2
    %v1998 = vperm.slane %v1496, 2
    %v1999 = vmul.f32 %v1995, %v1997
    %v2000 = vmul.f32 %v1996, %v1998
    %v2001 = vadd.f32 %v1955, %v1999
    %v2002 = vadd.f32 %v1956, %v2000
    %v2003 = vmul.f32 %v1475, %v1191
    %v2004 = vmul.f32 %v1476, %v1191
    %v2005 = vmul.f32 %v1477, %v1194
    %v2006 = vmul.f32 %v1478, %v1194
    %v2007 = vadd.f32 %v2003, %v2005
    %v2008 = vadd.f32 %v2004, %v2006
    %v2009 = vmul.f32 %v1479, %v1199
    %v2010 = vmul.f32 %v1480, %v1199
    %v2011 = vadd.f32 %v2007, %v2009
    %v2012 = vadd.f32 %v2008, %v2010
    %v2013 = vmul.f32 %v1481, %v1204
    %v2014 = vmul.f32 %v1482, %v1204
    %v2015 = vadd.f32 %v2011, %v2013
    %v2016 = vadd.f32 %v2012, %v2014
    %v2017 = vmul.f32 %v1483, %v1209
    %v2018 = vmul.f32 %v1484, %v1209
    %v2019 = vadd.f32 %v2015, %v2017
    %v2020 = vadd.f32 %v2016, %v2018
    %v2021 = vmul.f32 %v1485, %v1214
    %v2022 = vmul.f32 %v1486, %v1214
    %v2023 = vadd.f32 %v2019, %v2021
    %v2024 = vadd.f32 %v2020, %v2022
    %v2025 = vmul.f32 %v1487, %v1219
    %v2026 = vmul.f32 %v1488, %v1219
    %v2027 = vadd.f32 %v2023, %v2025
    %v2028 = vadd.f32 %v2024, %v2026
    %v2029 = vmul.f32 %v1489, %v1224
    %v2030 = vmul.f32 %v1490, %v1224
    %v2031 = vadd.f32 %v2027, %v2029
    %v2032 = vadd.f32 %v2028, %v2030
    %v2033 = vmul.f32 %v1491, %v1229
    %v2034 = vmul.f32 %v1492, %v1229
    %v2035 = vadd.f32 %v2031, %v2033
    %v2036 = vadd.f32 %v2032, %v2034
    %v2037 = vadd.f32 %v2035, %v1234
    %v2038 = vadd.f32 %v2036, %v1234
    %v2039 = vmul.f32 %v2037, 0.01
    %v2040 = vmul.f32 %v2038, 0.01
    %v2041 = vmax.f32 %v2037, %v2039
    %v2042 = vmax.f32 %v2038, %v2040
    %v2043 = vperm.slane %v1495, 3
    %v2044 = vperm.slane %v1496, 3
    %v2045 = vmul.f32 %v2041, %v2043
    %v2046 = vmul.f32 %v2042, %v2044
    %v2047 = vadd.f32 %v2001, %v2045
    %v2048 = vadd.f32 %v2002, %v2046
    %v2049 = vmul.f32 %v1475, %v1247
    %v2050 = vmul.f32 %v1476, %v1247
    %v2051 = vmul.f32 %v1477, %v1250
    %v2052 = vmul.f32 %v1478, %v1250
    %v2053 = vadd.f32 %v2049, %v2051
    %v2054 = vadd.f32 %v2050, %v2052
    %v2055 = vmul.f32 %v1479, %v1255
    %v2056 = vmul.f32 %v1480, %v1255
    %v2057 = vadd.f32 %v2053, %v2055
    %v2058 = vadd.f32 %v2054, %v2056
    %v2059 = vmul.f32 %v1481, %v1260
    %v2060 = vmul.f32 %v1482, %v1260
    %v2061 = vadd.f32 %v2057, %v2059
    %v2062 = vadd.f32 %v2058, %v2060
    %v2063 = vmul.f32 %v1483, %v1265
    %v2064 = vmul.f32 %v1484, %v1265
    %v2065 = vadd.f32 %v2061, %v2063
    %v2066 = vadd.f32 %v2062, %v2064
    %v2067 = vmul.f32 %v1485, %v1270
    %v2068 = vmul.f32 %v1486, %v1270
    %v2069 = vadd.f32 %v2065, %v2067
    %v2070 = vadd.f32 %v2066, %v2068
    %v2071 = vmul.f32 %v1487, %v1275
    %v2072 = vmul.f32 %v1488, %v1275
    %v2073 = vadd.f32 %v2069, %v2071
    %v2074 = vadd.f32 %v2070, %v2072
    %v2075 = vmul.f32 %v1489, %v1280
    %v2076 = vmul.f32 %v1490, %v1280
    %v2077 = vadd.f32 %v2073, %v2075
    %v2078 = vadd.f32 %v2074, %v2076
    %v2079 = vmul.f32 %v1491, %v1285
    %v2080 = vmul.f32 %v1492, %v1285
    %v2081 = vadd.f32 %v2077, %v2079
    %v2082 = vadd.f32 %v2078, %v2080
    %v2083 = vadd.f32 %v2081, %v1290
    %v2084 = vadd.f32 %v2082, %v1290
    %v2085 = vmul.f32 %v2083, 0.01
    %v2086 = vmul.f32 %v2084, 0.01
    %v2087 = vmax.f32 %v2083, %v2085
    %v2088 = vmax.f32 %v2084, %v2086
    %v2089 = vperm.slane %v1495, 4
    %v2090 = vperm.slane %v1496, 4
    %v2091 = vmul.f32 %v2087, %v2089
    %v2092 = vmul.f32 %v2088, %v2090
    %v2093 = vadd.f32 %v2047, %v2091
    %v2094 = vadd.f32 %v2048, %v2092
    %v2095 = vmul.f32 %v1475, %v1303
    %v2096 = vmul.f32 %v1476, %v1303
    %v2097 = vmul.f32 %v1477, %v1306
    %v2098 = vmul.f32 %v1478, %v1306
    %v2099 = vadd.f32 %v2095, %v2097
    %v2100 = vadd.f32 %v2096, %v2098
    %v2101 = vmul.f32 %v1479, %v1311
    %v2102 = vmul.f32 %v1480, %v1311
    %v2103 = vadd.f32 %v2099, %v2101
    %v2104 = vadd.f32 %v2100, %v2102
    %v2105 = vmul.f32 %v1481, %v1316
    %v2106 = vmul.f32 %v1482, %v1316
    %v2107 = vadd.f32 %v2103, %v2105
    %v2108 = vadd.f32 %v2104, %v2106
    %v2109 = vmul.f32 %v1483, %v1321
    %v2110 = vmul.f32 %v1484, %v1321
    %v2111 = vadd.f32 %v2107, %v2109
    %v2112 = vadd.f32 %v2108, %v2110
    %v2113 = vmul.f32 %v1485, %v1326
    %v2114 = vmul.f32 %v1486, %v1326
    %v2115 = vadd.f32 %v2111, %v2113
    %v2116 = vadd.f32 %v2112, %v2114
    %v2117 = vmul.f32 %v1487, %v1331
    %v2118 = vmul.f32 %v1488, %v1331
    %v2119 = vadd.f32 %v2115, %v2117
    %v2120 = vadd.f32 %v2116, %v2118
    %v2121 = vmul.f32 %v1489, %v1336
    %v2122 = vmul.f32 %v1490, %v1336
    %v2123 = vadd.f32 %v2119, %v2121
    %v2124 = vadd.f32 %v2120, %v2122
    %v2125 = vmul.f32 %v1491, %v1341
    %v2126 = vmul.f32 %v1492, %v1341
    %v2127 = vadd.f32 %v2123, %v2125
    %v2128 = vadd.f32 %v2124, %v2126
    %v2129 = vadd.f32 %v2127, %v1346
    %v2130 = vadd.f32 %v2128, %v1346
    %v2131 = vmul.f32 %v2129, 0.01
    %v2132 = vmul.f32 %v2130, 0.01
    %v2133 = vmax.f32 %v2129, %v2131
    %v2134 = vmax.f32 %v2130, %v2132
    %v2135 = vperm.slane %v1495, 5
    %v2136 = vperm.slane %v1496, 5
    %v2137 = vmul.f32 %v2133, %v2135
    %v2138 = vmul.f32 %v2134, %v2136
    %v2139 = vadd.f32 %v2093, %v2137
    %v2140 = vadd.f32 %v2094, %v2138
    %v2141 = vmul.f32 %v1475, %v1359
    %v2142 = vmul.f32 %v1476, %v1359
    %v2143 = vmul.f32 %v1477, %v1362
    %v2144 = vmul.f32 %v1478, %v1362
    %v2145 = vadd.f32 %v2141, %v2143
    %v2146 = vadd.f32 %v2142, %v2144
    %v2147 = vmul.f32 %v1479, %v1367
    %v2148 = vmul.f32 %v1480, %v1367
    %v2149 = vadd.f32 %v2145, %v2147
    %v2150 = vadd.f32 %v2146, %v2148
    %v2151 = vmul.f32 %v1481, %v1372
    %v2152 = vmul.f32 %v1482, %v1372
    %v2153 = vadd.f32 %v2149, %v2151
    %v2154 = vadd.f32 %v2150, %v2152
    %v2155 = vmul.f32 %v1483, %v1377
    %v2156 = vmul.f32 %v1484, %v1377
    %v2157 = vadd.f32 %v2153, %v2155
    %v2158 = vadd.f32 %v2154, %v2156
    %v2159 = vmul.f32 %v1485, %v1382
    %v2160 = vmul.f32 %v1486, %v1382
    %v2161 = vadd.f32 %v2157, %v2159
    %v2162 = vadd.f32 %v2158, %v2160
    %v2163 = vmul.f32 %v1487, %v1387
    %v2164 = vmul.f32 %v1488, %v1387
    %v2165 = vadd.f32 %v2161, %v2163
    %v2166 = vadd.f32 %v2162, %v2164
    %v2167 = vmul.f32 %v1489, %v1392
    %v2168 = vmul.f32 %v1490, %v1392
    %v2169 = vadd.f32 %v2165, %v2167
    %v2170 = vadd.f32 %v2166, %v2168
    %v2171 = vmul.f32 %v1491, %v1397
    %v2172 = vmul.f32 %v1492, %v1397
    %v2173 = vadd.f32 %v2169, %v2171
    %v2174 = vadd.f32 %v2170, %v2172
    %v2175 = vadd.f32 %v2173, %v1402
    %v2176 = vadd.f32 %v2174, %v1402
    %v2177 = vmul.f32 %v2175, 0.01
    %v2178 = vmul.f32 %v2176, 0.01
    %v2179 = vmax.f32 %v2175, %v2177
    %v2180 = vmax.f32 %v2176, %v2178
    %v2181 = vperm.slane %v1495, 6
    %v2182 = vperm.slane %v1496, 6
    %v2183 = vmul.f32 %v2179, %v2181
    %v2184 = vmul.f32 %v2180, %v2182
    %v2185 = vadd.f32 %v2139, %v2183
    %v2186 = vadd.f32 %v2140, %v2184
    %v2187 = vmul.f32 %v1475, %v1415
    %v2188 = vmul.f32 %v1476, %v1415
    %v2189 = vmul.f32 %v1477, %v1418
    %v2190 = vmul.f32 %v1478, %v1418
    %v2191 = vadd.f32 %v2187, %v2189
    %v2192 = vadd.f32 %v2188, %v2190
    %v2193 = vmul.f32 %v1479, %v1423
    %v2194 = vmul.f32 %v1480, %v1423
    %v2195 = vadd.f32 %v2191, %v2193
    %v2196 = vadd.f32 %v2192, %v2194
    %v2197 = vmul.f32 %v1481, %v1428
    %v2198 = vmul.f32 %v1482, %v1428
    %v2199 = vadd.f32 %v2195, %v2197
    %v2200 = vadd.f32 %v2196, %v2198
    %v2201 = vmul.f32 %v1483, %v1433
    %v2202 = vmul.f32 %v1484, %v1433
    %v2203 = vadd.f32 %v2199, %v2201
    %v2204 = vadd.f32 %v2200, %v2202
    %v2205 = vmul.f32 %v1485, %v1438
    %v2206 = vmul.f32 %v1486, %v1438
    %v2207 = vadd.f32 %v2203, %v2205
    %v2208 = vadd.f32 %v2204, %v2206
    %v2209 = vmul.f32 %v1487, %v1443
    %v2210 = vmul.f32 %v1488, %v1443
    %v2211 = vadd.f32 %v2207, %v2209
    %v2212 = vadd.f32 %v2208, %v2210
    %v2213 = vmul.f32 %v1489, %v1448
    %v2214 = vmul.f32 %v1490, %v1448
    %v2215 = vadd.f32 %v2211, %v2213
    %v2216 = vadd.f32 %v2212, %v2214
    %v2217 = vmul.f32 %v1491, %v1453
    %v2218 = vmul.f32 %v1492, %v1453
    %v2219 = vadd.f32 %v2215, %v2217
    %v2220 = vadd.f32 %v2216, %v2218
    %v2221 = vadd.f32 %v2219, %v1458
    %v2222 = vadd.f32 %v2220, %v1458
    %v2223 = vmul.f32 %v2221, 0.01
    %v2224 = vmul.f32 %v2222, 0.01
    %v2225 = vmax.f32 %v2221, %v2223
    %v2226 = vmax.f32 %v2222, %v2224
    %v2227 = vperm.slane %v1495, 7
    %v2228 = vperm.slane %v1496, 7
    %v2229 = vmul.f32 %v2225, %v2227
    %v2230 = vmul.f32 %v2226, %v2228
    %v2231 = vadd.f32 %v2185, %v2229
    %v2232 = vadd.f32 %v2186, %v2230
    %v2233 = vadd.f32 %v2231, %v2232
    %2234 = vadd.xlane.f32.xlu0 %v2233
    %v2235 = vpop.xlane.xlu0 %2234
    %v2236 = vadd.f32 %v1474, %v2235
    %v2237 = vld [vmem:[%s536 + $0x20] sm:$0xff]
    %v2238 = vld [vmem:[%s536 + $0x28] sm:$0xff]
    %v2239 = vld [vmem:[%s540 + $0x20] sm:$0xff]
    %v2240 = vld [vmem:[%s540 + $0x28] sm:$0xff]
    %v2241 = vld [vmem:[%s544 + $0x20] sm:$0xff]
    %v2242 = vld [vmem:[%s544 + $0x28] sm:$0xff]
    %v2243 = vld [vmem:[%s548 + $0x20] sm:$0xff]
    %v2244 = vld [vmem:[%s548 + $0x28] sm:$0xff]
    %v2245 = vld [vmem:[%s552 + $0x20] sm:$0xff]
    %v2246 = vld [vmem:[%s552 + $0x28] sm:$0xff]
    %v2247 = vld [vmem:[%s556 + $0x20] sm:$0xff]
    %v2248 = vld [vmem:[%s556 + $0x28] sm:$0xff]
    %v2249 = vld [vmem:[%s560 + $0x20] sm:$0xff]
    %v2250 = vld [vmem:[%s560 + $0x28] sm:$0xff]
    %v2251 = vld [vmem:[%s564 + $0x20] sm:$0xff]
    %v2252 = vld [vmem:[%s564 + $0x28] sm:$0xff]
    %v2253 = vld [vmem:[%s568 + $0x20] sm:$0xff]
    %v2254 = vld [vmem:[%s568 + $0x28] sm:$0xff]
    %v2255 = vld [vmem:[%s1 + $0x20] sm:$0xff]
    %v2256 = vld [vmem:[%s1 + $0x28] sm:$0xff]
    %v2257 = vld [vmem:[%s1 + $0x58] sm:$0xff]
    %v2258 = vld [vmem:[%s1 + $0x60] sm:$0xff]
    %v2259 = vmul.f32 %v2237, %v575
    %v2260 = vmul.f32 %v2238, %v575
    %v2261 = vmul.f32 %v2239, %v578
    %v2262 = vmul.f32 %v2240, %v578
    %v2263 = vadd.f32 %v2259, %v2261
    %v2264 = vadd.f32 %v2260, %v2262
    %v2265 = vmul.f32 %v2241, %v583
    %v2266 = vmul.f32 %v2242, %v583
    %v2267 = vadd.f32 %v2263, %v2265
    %v2268 = vadd.f32 %v2264, %v2266
    %v2269 = vmul.f32 %v2243, %v588
    %v2270 = vmul.f32 %v2244, %v588
    %v2271 = vadd.f32 %v2267, %v2269
    %v2272 = vadd.f32 %v2268, %v2270
    %v2273 = vmul.f32 %v2245, %v593
    %v2274 = vmul.f32 %v2246, %v593
    %v2275 = vadd.f32 %v2271, %v2273
    %v2276 = vadd.f32 %v2272, %v2274
    %v2277 = vmul.f32 %v2247, %v598
    %v2278 = vmul.f32 %v2248, %v598
    %v2279 = vadd.f32 %v2275, %v2277
    %v2280 = vadd.f32 %v2276, %v2278
    %v2281 = vmul.f32 %v2249, %v603
    %v2282 = vmul.f32 %v2250, %v603
    %v2283 = vadd.f32 %v2279, %v2281
    %v2284 = vadd.f32 %v2280, %v2282
    %v2285 = vmul.f32 %v2251, %v608
    %v2286 = vmul.f32 %v2252, %v608
    %v2287 = vadd.f32 %v2283, %v2285
    %v2288 = vadd.f32 %v2284, %v2286
    %v2289 = vmul.f32 %v2253, %v613
    %v2290 = vmul.f32 %v2254, %v613
    %v2291 = vadd.f32 %v2287, %v2289
    %v2292 = vadd.f32 %v2288, %v2290
    %v2293 = vadd.f32 %v2291, %v618
    %v2294 = vadd.f32 %v2292, %v618
    %v2295 = vmul.f32 %v2293, 0.01
    %v2296 = vmul.f32 %v2294, 0.01
    %v2297 = vmax.f32 %v2293, %v2295
    %v2298 = vmax.f32 %v2294, %v2296
    %v2299 = vperm.slane %v2255, 0
    %v2300 = vperm.slane %v2256, 0
    %v2301 = vmul.f32 %v2297, %v2299
    %v2302 = vmul.f32 %v2298, %v2300
    %v2303 = vadd.f32 %v2301, 0.0
    %v2304 = vadd.f32 %v2302, 0.0
    %v2305 = vmul.f32 %v2237, %v631
    %v2306 = vmul.f32 %v2238, %v631
    %v2307 = vmul.f32 %v2239, %v634
    %v2308 = vmul.f32 %v2240, %v634
    %v2309 = vadd.f32 %v2305, %v2307
    %v2310 = vadd.f32 %v2306, %v2308
    %v2311 = vmul.f32 %v2241, %v639
    %v2312 = vmul.f32 %v2242, %v639
    %v2313 = vadd.f32 %v2309, %v2311
    %v2314 = vadd.f32 %v2310, %v2312
    %v2315 = vmul.f32 %v2243, %v644
    %v2316 = vmul.f32 %v2244, %v644
    %v2317 = vadd.f32 %v2313, %v2315
    %v2318 = vadd.f32 %v2314, %v2316
    %v2319 = vmul.f32 %v2245, %v649
    %v2320 = vmul.f32 %v2246, %v649
    %v2321 = vadd.f32 %v2317, %v2319
    %v2322 = vadd.f32 %v2318, %v2320
    %v2323 = vmul.f32 %v2247, %v654
    %v2324 = vmul.f32 %v2248, %v654
    %v2325 = vadd.f32 %v2321, %v2323
    %v2326 = vadd.f32 %v2322, %v2324
    %v2327 = vmul.f32 %v2249, %v659
    %v2328 = vmul.f32 %v2250, %v659
    %v2329 = vadd.f32 %v2325, %v2327
    %v2330 = vadd.f32 %v2326, %v2328
    %v2331 = vmul.f32 %v2251, %v664
    %v2332 = vmul.f32 %v2252, %v664
    %v2333 = vadd.f32 %v2329, %v2331
    %v2334 = vadd.f32 %v2330, %v2332
    %v2335 = vmul.f32 %v2253, %v669
    %v2336 = vmul.f32 %v2254, %v669
    %v2337 = vadd.f32 %v2333, %v2335
    %v2338 = vadd.f32 %v2334, %v2336
    %v2339 = vadd.f32 %v2337, %v674
    %v2340 = vadd.f32 %v2338, %v674
    %v2341 = vmul.f32 %v2339, 0.01
    %v2342 = vmul.f32 %v2340, 0.01
    %v2343 = vmax.f32 %v2339, %v2341
    %v2344 = vmax.f32 %v2340, %v2342
    %v2345 = vperm.slane %v2255, 1
    %v2346 = vperm.slane %v2256, 1
    %v2347 = vmul.f32 %v2343, %v2345
    %v2348 = vmul.f32 %v2344, %v2346
    %v2349 = vadd.f32 %v2303, %v2347
    %v2350 = vadd.f32 %v2304, %v2348
    %v2351 = vmul.f32 %v2237, %v687
    %v2352 = vmul.f32 %v2238, %v687
    %v2353 = vmul.f32 %v2239, %v690
    %v2354 = vmul.f32 %v2240, %v690
    %v2355 = vadd.f32 %v2351, %v2353
    %v2356 = vadd.f32 %v2352, %v2354
    %v2357 = vmul.f32 %v2241, %v695
    %v2358 = vmul.f32 %v2242, %v695
    %v2359 = vadd.f32 %v2355, %v2357
    %v2360 = vadd.f32 %v2356, %v2358
    %v2361 = vmul.f32 %v2243, %v700
    %v2362 = vmul.f32 %v2244, %v700
    %v2363 = vadd.f32 %v2359, %v2361
    %v2364 = vadd.f32 %v2360, %v2362
    %v2365 = vmul.f32 %v2245, %v705
    %v2366 = vmul.f32 %v2246, %v705
    %v2367 = vadd.f32 %v2363, %v2365
    %v2368 = vadd.f32 %v2364, %v2366
    %v2369 = vmul.f32 %v2247, %v710
    %v2370 = vmul.f32 %v2248, %v710
    %v2371 = vadd.f32 %v2367, %v2369
    %v2372 = vadd.f32 %v2368, %v2370
    %v2373 = vmul.f32 %v2249, %v715
    %v2374 = vmul.f32 %v2250, %v715
    %v2375 = vadd.f32 %v2371, %v2373
    %v2376 = vadd.f32 %v2372, %v2374
    %v2377 = vmul.f32 %v2251, %v720
    %v2378 = vmul.f32 %v2252, %v720
    %v2379 = vadd.f32 %v2375, %v2377
    %v2380 = vadd.f32 %v2376, %v2378
    %v2381 = vmul.f32 %v2253, %v725
    %v2382 = vmul.f32 %v2254, %v725
    %v2383 = vadd.f32 %v2379, %v2381
    %v2384 = vadd.f32 %v2380, %v2382
    %v2385 = vadd.f32 %v2383, %v730
    %v2386 = vadd.f32 %v2384, %v730
    %v2387 = vmul.f32 %v2385, 0.01
    %v2388 = vmul.f32 %v2386, 0.01
    %v2389 = vmax.f32 %v2385, %v2387
    %v2390 = vmax.f32 %v2386, %v2388
    %v2391 = vperm.slane %v2255, 2
    %v2392 = vperm.slane %v2256, 2
    %v2393 = vmul.f32 %v2389, %v2391
    %v2394 = vmul.f32 %v2390, %v2392
    %v2395 = vadd.f32 %v2349, %v2393
    %v2396 = vadd.f32 %v2350, %v2394
    %v2397 = vmul.f32 %v2237, %v743
    %v2398 = vmul.f32 %v2238, %v743
    %v2399 = vmul.f32 %v2239, %v746
    %v2400 = vmul.f32 %v2240, %v746
    %v2401 = vadd.f32 %v2397, %v2399
    %v2402 = vadd.f32 %v2398, %v2400
    %v2403 = vmul.f32 %v2241, %v751
    %v2404 = vmul.f32 %v2242, %v751
    %v2405 = vadd.f32 %v2401, %v2403
    %v2406 = vadd.f32 %v2402, %v2404
    %v2407 = vmul.f32 %v2243, %v756
    %v2408 = vmul.f32 %v2244, %v756
    %v2409 = vadd.f32 %v2405, %v2407
    %v2410 = vadd.f32 %v2406, %v2408
    %v2411 = vmul.f32 %v2245, %v761
    %v2412 = vmul.f32 %v2246, %v761
    %v2413 = vadd.f32 %v2409, %v2411
    %v2414 = vadd.f32 %v2410, %v2412
    %v2415 = vmul.f32 %v2247, %v766
    %v2416 = vmul.f32 %v2248, %v766
    %v2417 = vadd.f32 %v2413, %v2415
    %v2418 = vadd.f32 %v2414, %v2416
    %v2419 = vmul.f32 %v2249, %v771
    %v2420 = vmul.f32 %v2250, %v771
    %v2421 = vadd.f32 %v2417, %v2419
    %v2422 = vadd.f32 %v2418, %v2420
    %v2423 = vmul.f32 %v2251, %v776
    %v2424 = vmul.f32 %v2252, %v776
    %v2425 = vadd.f32 %v2421, %v2423
    %v2426 = vadd.f32 %v2422, %v2424
    %v2427 = vmul.f32 %v2253, %v781
    %v2428 = vmul.f32 %v2254, %v781
    %v2429 = vadd.f32 %v2425, %v2427
    %v2430 = vadd.f32 %v2426, %v2428
    %v2431 = vadd.f32 %v2429, %v786
    %v2432 = vadd.f32 %v2430, %v786
    %v2433 = vmul.f32 %v2431, 0.01
    %v2434 = vmul.f32 %v2432, 0.01
    %v2435 = vmax.f32 %v2431, %v2433
    %v2436 = vmax.f32 %v2432, %v2434
    %v2437 = vperm.slane %v2255, 3
    %v2438 = vperm.slane %v2256, 3
    %v2439 = vmul.f32 %v2435, %v2437
    %v2440 = vmul.f32 %v2436, %v2438
    %v2441 = vadd.f32 %v2395, %v2439
    %v2442 = vadd.f32 %v2396, %v2440
    %v2443 = vmul.f32 %v2237, %v799
    %v2444 = vmul.f32 %v2238, %v799
    %v2445 = vmul.f32 %v2239, %v802
    %v2446 = vmul.f32 %v2240, %v802
    %v2447 = vadd.f32 %v2443, %v2445
    %v2448 = vadd.f32 %v2444, %v2446
    %v2449 = vmul.f32 %v2241, %v807
    %v2450 = vmul.f32 %v2242, %v807
    %v2451 = vadd.f32 %v2447, %v2449
    %v2452 = vadd.f32 %v2448, %v2450
    %v2453 = vmul.f32 %v2243, %v812
    %v2454 = vmul.f32 %v2244, %v812
    %v2455 = vadd.f32 %v2451, %v2453
    %v2456 = vadd.f32 %v2452, %v2454
    %v2457 = vmul.f32 %v2245, %v817
    %v2458 = vmul.f32 %v2246, %v817
    %v2459 = vadd.f32 %v2455, %v2457
    %v2460 = vadd.f32 %v2456, %v2458
    %v2461 = vmul.f32 %v2247, %v822
    %v2462 = vmul.f32 %v2248, %v822
    %v2463 = vadd.f32 %v2459, %v2461
    %v2464 = vadd.f32 %v2460, %v2462
    %v2465 = vmul.f32 %v2249, %v827
    %v2466 = vmul.f32 %v2250, %v827
    %v2467 = vadd.f32 %v2463, %v2465
    %v2468 = vadd.f32 %v2464, %v2466
    %v2469 = vmul.f32 %v2251, %v832
    %v2470 = vmul.f32 %v2252, %v832
    %v2471 = vadd.f32 %v2467, %v2469
    %v2472 = vadd.f32 %v2468, %v2470
    %v2473 = vmul.f32 %v2253, %v837
    %v2474 = vmul.f32 %v2254, %v837
    %v2475 = vadd.f32 %v2471, %v2473
    %v2476 = vadd.f32 %v2472, %v2474
    %v2477 = vadd.f32 %v2475, %v842
    %v2478 = vadd.f32 %v2476, %v842
    %v2479 = vmul.f32 %v2477, 0.01
    %v2480 = vmul.f32 %v2478, 0.01
    %v2481 = vmax.f32 %v2477, %v2479
    %v2482 = vmax.f32 %v2478, %v2480
    %v2483 = vperm.slane %v2255, 4
    %v2484 = vperm.slane %v2256, 4
    %v2485 = vmul.f32 %v2481, %v2483
    %v2486 = vmul.f32 %v2482, %v2484
    %v2487 = vadd.f32 %v2441, %v2485
    %v2488 = vadd.f32 %v2442, %v2486
    %v2489 = vmul.f32 %v2237, %v855
    %v2490 = vmul.f32 %v2238, %v855
    %v2491 = vmul.f32 %v2239, %v858
    %v2492 = vmul.f32 %v2240, %v858
    %v2493 = vadd.f32 %v2489, %v2491
    %v2494 = vadd.f32 %v2490, %v2492
    %v2495 = vmul.f32 %v2241, %v863
    %v2496 = vmul.f32 %v2242, %v863
    %v2497 = vadd.f32 %v2493, %v2495
    %v2498 = vadd.f32 %v2494, %v2496
    %v2499 = vmul.f32 %v2243, %v868
    %v2500 = vmul.f32 %v2244, %v868
    %v2501 = vadd.f32 %v2497, %v2499
    %v2502 = vadd.f32 %v2498, %v2500
    %v2503 = vmul.f32 %v2245, %v873
    %v2504 = vmul.f32 %v2246, %v873
    %v2505 = vadd.f32 %v2501, %v2503
    %v2506 = vadd.f32 %v2502, %v2504
    %v2507 = vmul.f32 %v2247, %v878
    %v2508 = vmul.f32 %v2248, %v878
    %v2509 = vadd.f32 %v2505, %v2507
    %v2510 = vadd.f32 %v2506, %v2508
    %v2511 = vmul.f32 %v2249, %v883
    %v2512 = vmul.f32 %v2250, %v883
    %v2513 = vadd.f32 %v2509, %v2511
    %v2514 = vadd.f32 %v2510, %v2512
    %v2515 = vmul.f32 %v2251, %v888
    %v2516 = vmul.f32 %v2252, %v888
    %v2517 = vadd.f32 %v2513, %v2515
    %v2518 = vadd.f32 %v2514, %v2516
    %v2519 = vmul.f32 %v2253, %v893
    %v2520 = vmul.f32 %v2254, %v893
    %v2521 = vadd.f32 %v2517, %v2519
    %v2522 = vadd.f32 %v2518, %v2520
    %v2523 = vadd.f32 %v2521, %v898
    %v2524 = vadd.f32 %v2522, %v898
    %v2525 = vmul.f32 %v2523, 0.01
    %v2526 = vmul.f32 %v2524, 0.01
    %v2527 = vmax.f32 %v2523, %v2525
    %v2528 = vmax.f32 %v2524, %v2526
    %v2529 = vperm.slane %v2255, 5
    %v2530 = vperm.slane %v2256, 5
    %v2531 = vmul.f32 %v2527, %v2529
    %v2532 = vmul.f32 %v2528, %v2530
    %v2533 = vadd.f32 %v2487, %v2531
    %v2534 = vadd.f32 %v2488, %v2532
    %v2535 = vmul.f32 %v2237, %v911
    %v2536 = vmul.f32 %v2238, %v911
    %v2537 = vmul.f32 %v2239, %v914
    %v2538 = vmul.f32 %v2240, %v914
    %v2539 = vadd.f32 %v2535, %v2537
    %v2540 = vadd.f32 %v2536, %v2538
    %v2541 = vmul.f32 %v2241, %v919
    %v2542 = vmul.f32 %v2242, %v919
    %v2543 = vadd.f32 %v2539, %v2541
    %v2544 = vadd.f32 %v2540, %v2542
    %v2545 = vmul.f32 %v2243, %v924
    %v2546 = vmul.f32 %v2244, %v924
    %v2547 = vadd.f32 %v2543, %v2545
    %v2548 = vadd.f32 %v2544, %v2546
    %v2549 = vmul.f32 %v2245, %v929
    %v2550 = vmul.f32 %v2246, %v929
    %v2551 = vadd.f32 %v2547, %v2549
    %v2552 = vadd.f32 %v2548, %v2550
    %v2553 = vmul.f32 %v2247, %v934
    %v2554 = vmul.f32 %v2248, %v934
    %v2555 = vadd.f32 %v2551, %v2553
    %v2556 = vadd.f32 %v2552, %v2554
    %v2557 = vmul.f32 %v2249, %v939
    %v2558 = vmul.f32 %v2250, %v939
    %v2559 = vadd.f32 %v2555, %v2557
    %v2560 = vadd.f32 %v2556, %v2558
    %v2561 = vmul.f32 %v2251, %v944
    %v2562 = vmul.f32 %v2252, %v944
    %v2563 = vadd.f32 %v2559, %v2561
    %v2564 = vadd.f32 %v2560, %v2562
    %v2565 = vmul.f32 %v2253, %v949
    %v2566 = vmul.f32 %v2254, %v949
    %v2567 = vadd.f32 %v2563, %v2565
    %v2568 = vadd.f32 %v2564, %v2566
    %v2569 = vadd.f32 %v2567, %v954
    %v2570 = vadd.f32 %v2568, %v954
    %v2571 = vmul.f32 %v2569, 0.01
    %v2572 = vmul.f32 %v2570, 0.01
    %v2573 = vmax.f32 %v2569, %v2571
    %v2574 = vmax.f32 %v2570, %v2572
    %v2575 = vperm.slane %v2255, 6
    %v2576 = vperm.slane %v2256, 6
    %v2577 = vmul.f32 %v2573, %v2575
    %v2578 = vmul.f32 %v2574, %v2576
    %v2579 = vadd.f32 %v2533, %v2577
    %v2580 = vadd.f32 %v2534, %v2578
    %v2581 = vmul.f32 %v2237, %v967
    %v2582 = vmul.f32 %v2238, %v967
    %v2583 = vmul.f32 %v2239, %v970
    %v2584 = vmul.f32 %v2240, %v970
    %v2585 = vadd.f32 %v2581, %v2583
    %v2586 = vadd.f32 %v2582, %v2584
    %v2587 = vmul.f32 %v2241, %v975
    %v2588 = vmul.f32 %v2242, %v975
    %v2589 = vadd.f32 %v2585, %v2587
    %v2590 = vadd.f32 %v2586, %v2588
    %v2591 = vmul.f32 %v2243, %v980
    %v2592 = vmul.f32 %v2244, %v980
    %v2593 = vadd.f32 %v2589, %v2591
    %v2594 = vadd.f32 %v2590, %v2592
    %v2595 = vmul.f32 %v2245, %v985
    %v2596 = vmul.f32 %v2246, %v985
    %v2597 = vadd.f32 %v2593, %v2595
    %v2598 = vadd.f32 %v2594, %v2596
    %v2599 = vmul.f32 %v2247, %v990
    %v2600 = vmul.f32 %v2248, %v990
    %v2601 = vadd.f32 %v2597, %v2599
    %v2602 = vadd.f32 %v2598, %v2600
    %v2603 = vmul.f32 %v2249, %v995
    %v2604 = vmul.f32 %v2250, %v995
    %v2605 = vadd.f32 %v2601, %v2603
    %v2606 = vadd.f32 %v2602, %v2604
    %v2607 = vmul.f32 %v2251, %v1000
    %v2608 = vmul.f32 %v2252, %v1000
    %v2609 = vadd.f32 %v2605, %v2607
    %v2610 = vadd.f32 %v2606, %v2608
    %v2611 = vmul.f32 %v2253, %v1005
    %v2612 = vmul.f32 %v2254, %v1005
    %v2613 = vadd.f32 %v2609, %v2611
    %v2614 = vadd.f32 %v2610, %v2612
    %v2615 = vadd.f32 %v2613, %v1010
    %v2616 = vadd.f32 %v2614, %v1010
    %v2617 = vmul.f32 %v2615, 0.01
    %v2618 = vmul.f32 %v2616, 0.01
    %v2619 = vmax.f32 %v2615, %v2617
    %v2620 = vmax.f32 %v2616, %v2618
    %v2621 = vperm.slane %v2255, 7
    %v2622 = vperm.slane %v2256, 7
    %v2623 = vmul.f32 %v2619, %v2621
    %v2624 = vmul.f32 %v2620, %v2622
    %v2625 = vadd.f32 %v2579, %v2623
    %v2626 = vadd.f32 %v2580, %v2624
    %v2627 = vmul.f32 %v2237, %v1023
    %v2628 = vmul.f32 %v2238, %v1023
    %v2629 = vmul.f32 %v2239, %v1026
    %v2630 = vmul.f32 %v2240, %v1026
    %v2631 = vadd.f32 %v2627, %v2629
    %v2632 = vadd.f32 %v2628, %v2630
    %v2633 = vmul.f32 %v2241, %v1031
    %v2634 = vmul.f32 %v2242, %v1031
    %v2635 = vadd.f32 %v2631, %v2633
    %v2636 = vadd.f32 %v2632, %v2634
    %v2637 = vmul.f32 %v2243, %v1036
    %v2638 = vmul.f32 %v2244, %v1036
    %v2639 = vadd.f32 %v2635, %v2637
    %v2640 = vadd.f32 %v2636, %v2638
    %v2641 = vmul.f32 %v2245, %v1041
    %v2642 = vmul.f32 %v2246, %v1041
    %v2643 = vadd.f32 %v2639, %v2641
    %v2644 = vadd.f32 %v2640, %v2642
    %v2645 = vmul.f32 %v2247, %v1046
    %v2646 = vmul.f32 %v2248, %v1046
    %v2647 = vadd.f32 %v2643, %v2645
    %v2648 = vadd.f32 %v2644, %v2646
    %v2649 = vmul.f32 %v2249, %v1051
    %v2650 = vmul.f32 %v2250, %v1051
    %v2651 = vadd.f32 %v2647, %v2649
    %v2652 = vadd.f32 %v2648, %v2650
    %v2653 = vmul.f32 %v2251, %v1056
    %v2654 = vmul.f32 %v2252, %v1056
    %v2655 = vadd.f32 %v2651, %v2653
    %v2656 = vadd.f32 %v2652, %v2654
    %v2657 = vmul.f32 %v2253, %v1061
    %v2658 = vmul.f32 %v2254, %v1061
    %v2659 = vadd.f32 %v2655, %v2657
    %v2660 = vadd.f32 %v2656, %v2658
    %v2661 = vadd.f32 %v2659, %v1066
    %v2662 = vadd.f32 %v2660, %v1066
    %v2663 = vmul.f32 %v2661, 0.01
    %v2664 = vmul.f32 %v2662, 0.01
    %v2665 = vmax.f32 %v2661, %v2663
    %v2666 = vmax.f32 %v2662, %v2664
    %v2667 = vperm.slane %v2257, 0
    %v2668 = vperm.slane %v2258, 0
    %v2669 = vmul.f32 %v2665, %v2667
    %v2670 = vmul.f32 %v2666, %v2668
    %v2671 = vadd.f32 %v2625, %v2669
    %v2672 = vadd.f32 %v2626, %v2670
    %v2673 = vmul.f32 %v2237, %v1079
    %v2674 = vmul.f32 %v2238, %v1079
    %v2675 = vmul.f32 %v2239, %v1082
    %v2676 = vmul.f32 %v2240, %v1082
    %v2677 = vadd.f32 %v2673, %v2675
    %v2678 = vadd.f32 %v2674, %v2676
    %v2679 = vmul.f32 %v2241, %v1087
    %v2680 = vmul.f32 %v2242, %v1087
    %v2681 = vadd.f32 %v2677, %v2679
    %v2682 = vadd.f32 %v2678, %v2680
    %v2683 = vmul.f32 %v2243, %v1092
    %v2684 = vmul.f32 %v2244, %v1092
    %v2685 = vadd.f32 %v2681, %v2683
    %v2686 = vadd.f32 %v2682, %v2684
    %v2687 = vmul.f32 %v2245, %v1097
    %v2688 = vmul.f32 %v2246, %v1097
    %v2689 = vadd.f32 %v2685, %v2687
    %v2690 = vadd.f32 %v2686, %v2688
    %v2691 = vmul.f32 %v2247, %v1102
    %v2692 = vmul.f32 %v2248, %v1102
    %v2693 = vadd.f32 %v2689, %v2691
    %v2694 = vadd.f32 %v2690, %v2692
    %v2695 = vmul.f32 %v2249, %v1107
    %v2696 = vmul.f32 %v2250, %v1107
    %v2697 = vadd.f32 %v2693, %v2695
    %v2698 = vadd.f32 %v2694, %v2696
    %v2699 = vmul.f32 %v2251, %v1112
    %v2700 = vmul.f32 %v2252, %v1112
    %v2701 = vadd.f32 %v2697, %v2699
    %v2702 = vadd.f32 %v2698, %v2700
    %v2703 = vmul.f32 %v2253, %v1117
    %v2704 = vmul.f32 %v2254, %v1117
    %v2705 = vadd.f32 %v2701, %v2703
    %v2706 = vadd.f32 %v2702, %v2704
    %v2707 = vadd.f32 %v2705, %v1122
    %v2708 = vadd.f32 %v2706, %v1122
    %v2709 = vmul.f32 %v2707, 0.01
    %v2710 = vmul.f32 %v2708, 0.01
    %v2711 = vmax.f32 %v2707, %v2709
    %v2712 = vmax.f32 %v2708, %v2710
    %v2713 = vperm.slane %v2257, 1
    %v2714 = vperm.slane %v2258, 1
    %v2715 = vmul.f32 %v2711, %v2713
    %v2716 = vmul.f32 %v2712, %v2714
    %v2717 = vadd.f32 %v2671, %v2715
    %v2718 = vadd.f32 %v2672, %v2716
    %v2719 = vmul.f32 %v2237, %v1135
    %v2720 = vmul.f32 %v2238, %v1135
    %v2721 = vmul.f32 %v2239, %v1138
    %v2722 = vmul.f32 %v2240, %v1138
    %v2723 = vadd.f32 %v2719, %v2721
    %v2724 = vadd.f32 %v2720, %v2722
    %v2725 = vmul.f32 %v2241, %v1143
    %v2726 = vmul.f32 %v2242, %v1143
    %v2727 = vadd.f32 %v2723, %v2725
    %v2728 = vadd.f32 %v2724, %v2726
    %v2729 = vmul.f32 %v2243, %v1148
    %v2730 = vmul.f32 %v2244, %v1148
    %v2731 = vadd.f32 %v2727, %v2729
    %v2732 = vadd.f32 %v2728, %v2730
    %v2733 = vmul.f32 %v2245, %v1153
    %v2734 = vmul.f32 %v2246, %v1153
    %v2735 = vadd.f32 %v2731, %v2733
    %v2736 = vadd.f32 %v2732, %v2734
    %v2737 = vmul.f32 %v2247, %v1158
    %v2738 = vmul.f32 %v2248, %v1158
    %v2739 = vadd.f32 %v2735, %v2737
    %v2740 = vadd.f32 %v2736, %v2738
    %v2741 = vmul.f32 %v2249, %v1163
    %v2742 = vmul.f32 %v2250, %v1163
    %v2743 = vadd.f32 %v2739, %v2741
    %v2744 = vadd.f32 %v2740, %v2742
    %v2745 = vmul.f32 %v2251, %v1168
    %v2746 = vmul.f32 %v2252, %v1168
    %v2747 = vadd.f32 %v2743, %v2745
    %v2748 = vadd.f32 %v2744, %v2746
    %v2749 = vmul.f32 %v2253, %v1173
    %v2750 = vmul.f32 %v2254, %v1173
    %v2751 = vadd.f32 %v2747, %v2749
    %v2752 = vadd.f32 %v2748, %v2750
    %v2753 = vadd.f32 %v2751, %v1178
    %v2754 = vadd.f32 %v2752, %v1178
    %v2755 = vmul.f32 %v2753, 0.01
    %v2756 = vmul.f32 %v2754, 0.01
    %v2757 = vmax.f32 %v2753, %v2755
    %v2758 = vmax.f32 %v2754, %v2756
    %v2759 = vperm.slane %v2257, 2
    %v2760 = vperm.slane %v2258, 2
    %v2761 = vmul.f32 %v2757, %v2759
    %v2762 = vmul.f32 %v2758, %v2760
    %v2763 = vadd.f32 %v2717, %v2761
    %v2764 = vadd.f32 %v2718, %v2762
    %v2765 = vmul.f32 %v2237, %v1191
    %v2766 = vmul.f32 %v2238, %v1191
    %v2767 = vmul.f32 %v2239, %v1194
    %v2768 = vmul.f32 %v2240, %v1194
    %v2769 = vadd.f32 %v2765, %v2767
    %v2770 = vadd.f32 %v2766, %v2768
    %v2771 = vmul.f32 %v2241, %v1199
    %v2772 = vmul.f32 %v2242, %v1199
    %v2773 = vadd.f32 %v2769, %v2771
    %v2774 = vadd.f32 %v2770, %v2772
    %v2775 = vmul.f32 %v2243, %v1204
    %v2776 = vmul.f32 %v2244, %v1204
    %v2777 = vadd.f32 %v2773, %v2775
    %v2778 = vadd.f32 %v2774, %v2776
    %v2779 = vmul.f32 %v2245, %v1209
    %v2780 = vmul.f32 %v2246, %v1209
    %v2781 = vadd.f32 %v2777, %v2779
    %v2782 = vadd.f32 %v2778, %v2780
    %v2783 = vmul.f32 %v2247, %v1214
    %v2784 = vmul.f32 %v2248, %v1214
    %v2785 = vadd.f32 %v2781, %v2783
    %v2786 = vadd.f32 %v2782, %v2784
    %v2787 = vmul.f32 %v2249, %v1219
    %v2788 = vmul.f32 %v2250, %v1219
    %v2789 = vadd.f32 %v2785, %v2787
    %v2790 = vadd.f32 %v2786, %v2788
    %v2791 = vmul.f32 %v2251, %v1224
    %v2792 = vmul.f32 %v2252, %v1224
    %v2793 = vadd.f32 %v2789, %v2791
    %v2794 = vadd.f32 %v2790, %v2792
    %v2795 = vmul.f32 %v2253, %v1229
    %v2796 = vmul.f32 %v2254, %v1229
    %v2797 = vadd.f32 %v2793, %v2795
    %v2798 = vadd.f32 %v2794, %v2796
    %v2799 = vadd.f32 %v2797, %v1234
    %v2800 = vadd.f32 %v2798, %v1234
    %v2801 = vmul.f32 %v2799, 0.01
    %v2802 = vmul.f32 %v2800, 0.01
    %v2803 = vmax.f32 %v2799, %v2801
    %v2804 = vmax.f32 %v2800, %v2802
    %v2805 = vperm.slane %v2257, 3
    %v2806 = vperm.slane %v2258, 3
    %v2807 = vmul.f32 %v2803, %v2805
    %v2808 = vmul.f32 %v2804, %v2806
    %v2809 = vadd.f32 %v2763, %v2807
    %v2810 = vadd.f32 %v2764, %v2808
    %v2811 = vmul.f32 %v2237, %v1247
    %v2812 = vmul.f32 %v2238, %v1247
    %v2813 = vmul.f32 %v2239, %v1250
    %v2814 = vmul.f32 %v2240, %v1250
    %v2815 = vadd.f32 %v2811, %v2813
    %v2816 = vadd.f32 %v2812, %v2814
    %v2817 = vmul.f32 %v2241, %v1255
    %v2818 = vmul.f32 %v2242, %v1255
    %v2819 = vadd.f32 %v2815, %v2817
    %v2820 = vadd.f32 %v2816, %v2818
    %v2821 = vmul.f32 %v2243, %v1260
    %v2822 = vmul.f32 %v2244, %v1260
    %v2823 = vadd.f32 %v2819, %v2821
    %v2824 = vadd.f32 %v2820, %v2822
    %v2825 = vmul.f32 %v2245, %v1265
    %v2826 = vmul.f32 %v2246, %v1265
    %v2827 = vadd.f32 %v2823, %v2825
    %v2828 = vadd.f32 %v2824, %v2826
    %v2829 = vmul.f32 %v2247, %v1270
    %v2830 = vmul.f32 %v2248, %v1270
    %v2831 = vadd.f32 %v2827, %v2829
    %v2832 = vadd.f32 %v2828, %v2830
    %v2833 = vmul.f32 %v2249, %v1275
    %v2834 = vmul.f32 %v2250, %v1275
    %v2835 = vadd.f32 %v2831, %v2833
    %v2836 = vadd.f32 %v2832, %v2834
    %v2837 = vmul.f32 %v2251, %v1280
    %v2838 = vmul.f32 %v2252, %v1280
    %v2839 = vadd.f32 %v2835, %v2837
    %v2840 = vadd.f32 %v2836, %v2838
    %v2841 = vmul.f32 %v2253, %v1285
    %v2842 = vmul.f32 %v2254, %v1285
    %v2843 = vadd.f32 %v2839, %v2841
    %v2844 = vadd.f32 %v2840, %v2842
    %v2845 = vadd.f32 %v2843, %v1290
    %v2846 = vadd.f32 %v2844, %v1290
    %v2847 = vmul.f32 %v2845, 0.01
    %v2848 = vmul.f32 %v2846, 0.01
    %v2849 = vmax.f32 %v2845, %v2847
    %v2850 = vmax.f32 %v2846, %v2848
    %v2851 = vperm.slane %v2257, 4
    %v2852 = vperm.slane %v2258, 4
    %v2853 = vmul.f32 %v2849, %v2851
    %v2854 = vmul.f32 %v2850, %v2852
    %v2855 = vadd.f32 %v2809, %v2853
    %v2856 = vadd.f32 %v2810, %v2854
    %v2857 = vmul.f32 %v2237, %v1303
    %v2858 = vmul.f32 %v2238, %v1303
    %v2859 = vmul.f32 %v2239, %v1306
    %v2860 = vmul.f32 %v2240, %v1306
    %v2861 = vadd.f32 %v2857, %v2859
    %v2862 = vadd.f32 %v2858, %v2860
    %v2863 = vmul.f32 %v2241, %v1311
    %v2864 = vmul.f32 %v2242, %v1311
    %v2865 = vadd.f32 %v2861, %v2863
    %v2866 = vadd.f32 %v2862, %v2864
    %v2867 = vmul.f32 %v2243, %v1316
    %v2868 = vmul.f32 %v2244, %v1316
    %v2869 = vadd.f32 %v2865, %v2867
    %v2870 = vadd.f32 %v2866, %v2868
    %v2871 = vmul.f32 %v2245, %v1321
    %v2872 = vmul.f32 %v2246, %v1321
    %v2873 = vadd.f32 %v2869, %v2871
    %v2874 = vadd.f32 %v2870, %v2872
    %v2875 = vmul.f32 %v2247, %v1326
    %v2876 = vmul.f32 %v2248, %v1326
    %v2877 = vadd.f32 %v2873, %v2875
    %v2878 = vadd.f32 %v2874, %v2876
    %v2879 = vmul.f32 %v2249, %v1331
    %v2880 = vmul.f32 %v2250, %v1331
    %v2881 = vadd.f32 %v2877, %v2879
    %v2882 = vadd.f32 %v2878, %v2880
    %v2883 = vmul.f32 %v2251, %v1336
    %v2884 = vmul.f32 %v2252, %v1336
    %v2885 = vadd.f32 %v2881, %v2883
    %v2886 = vadd.f32 %v2882, %v2884
    %v2887 = vmul.f32 %v2253, %v1341
    %v2888 = vmul.f32 %v2254, %v1341
    %v2889 = vadd.f32 %v2885, %v2887
    %v2890 = vadd.f32 %v2886, %v2888
    %v2891 = vadd.f32 %v2889, %v1346
    %v2892 = vadd.f32 %v2890, %v1346
    %v2893 = vmul.f32 %v2891, 0.01
    %v2894 = vmul.f32 %v2892, 0.01
    %v2895 = vmax.f32 %v2891, %v2893
    %v2896 = vmax.f32 %v2892, %v2894
    %v2897 = vperm.slane %v2257, 5
    %v2898 = vperm.slane %v2258, 5
    %v2899 = vmul.f32 %v2895, %v2897
    %v2900 = vmul.f32 %v2896, %v2898
    %v2901 = vadd.f32 %v2855, %v2899
    %v2902 = vadd.f32 %v2856, %v2900
    %v2903 = vmul.f32 %v2237, %v1359
    %v2904 = vmul.f32 %v2238, %v1359
    %v2905 = vmul.f32 %v2239, %v1362
    %v2906 = vmul.f32 %v2240, %v1362
    %v2907 = vadd.f32 %v2903, %v2905
    %v2908 = vadd.f32 %v2904, %v2906
    %v2909 = vmul.f32 %v2241, %v1367
    %v2910 = vmul.f32 %v2242, %v1367
    %v2911 = vadd.f32 %v2907, %v2909
    %v2912 = vadd.f32 %v2908, %v2910
    %v2913 = vmul.f32 %v2243, %v1372
    %v2914 = vmul.f32 %v2244, %v1372
    %v2915 = vadd.f32 %v2911, %v2913
    %v2916 = vadd.f32 %v2912, %v2914
    %v2917 = vmul.f32 %v2245, %v1377
    %v2918 = vmul.f32 %v2246, %v1377
    %v2919 = vadd.f32 %v2915, %v2917
    %v2920 = vadd.f32 %v2916, %v2918
    %v2921 = vmul.f32 %v2247, %v1382
    %v2922 = vmul.f32 %v2248, %v1382
    %v2923 = vadd.f32 %v2919, %v2921
    %v2924 = vadd.f32 %v2920, %v2922
    %v2925 = vmul.f32 %v2249, %v1387
    %v2926 = vmul.f32 %v2250, %v1387
    %v2927 = vadd.f32 %v2923, %v2925
    %v2928 = vadd.f32 %v2924, %v2926
    %v2929 = vmul.f32 %v2251, %v1392
    %v2930 = vmul.f32 %v2252, %v1392
    %v2931 = vadd.f32 %v2927, %v2929
    %v2932 = vadd.f32 %v2928, %v2930
    %v2933 = vmul.f32 %v2253, %v1397
    %v2934 = vmul.f32 %v2254, %v1397
    %v2935 = vadd.f32 %v2931, %v2933
    %v2936 = vadd.f32 %v2932, %v2934
    %v2937 = vadd.f32 %v2935, %v1402
    %v2938 = vadd.f32 %v2936, %v1402
    %v2939 = vmul.f32 %v2937, 0.01
    %v2940 = vmul.f32 %v2938, 0.01
    %v2941 = vmax.f32 %v2937, %v2939
    %v2942 = vmax.f32 %v2938, %v2940
    %v2943 = vperm.slane %v2257, 6
    %v2944 = vperm.slane %v2258, 6
    %v2945 = vmul.f32 %v2941, %v2943
    %v2946 = vmul.f32 %v2942, %v2944
    %v2947 = vadd.f32 %v2901, %v2945
    %v2948 = vadd.f32 %v2902, %v2946
    %v2949 = vmul.f32 %v2237, %v1415
    %v2950 = vmul.f32 %v2238, %v1415
    %v2951 = vmul.f32 %v2239, %v1418
    %v2952 = vmul.f32 %v2240, %v1418
    %v2953 = vadd.f32 %v2949, %v2951
    %v2954 = vadd.f32 %v2950, %v2952
    %v2955 = vmul.f32 %v2241, %v1423
    %v2956 = vmul.f32 %v2242, %v1423
    %v2957 = vadd.f32 %v2953, %v2955
    %v2958 = vadd.f32 %v2954, %v2956
    %v2959 = vmul.f32 %v2243, %v1428
    %v2960 = vmul.f32 %v2244, %v1428
    %v2961 = vadd.f32 %v2957, %v2959
    %v2962 = vadd.f32 %v2958, %v2960
    %v2963 = vmul.f32 %v2245, %v1433
    %v2964 = vmul.f32 %v2246, %v1433
    %v2965 = vadd.f32 %v2961, %v2963
    %v2966 = vadd.f32 %v2962, %v2964
    %v2967 = vmul.f32 %v2247, %v1438
    %v2968 = vmul.f32 %v2248, %v1438
    %v2969 = vadd.f32 %v2965, %v2967
    %v2970 = vadd.f32 %v2966, %v2968
    %v2971 = vmul.f32 %v2249, %v1443
    %v2972 = vmul.f32 %v2250, %v1443
    %v2973 = vadd.f32 %v2969, %v2971
    %v2974 = vadd.f32 %v2970, %v2972
    %v2975 = vmul.f32 %v2251, %v1448
    %v2976 = vmul.f32 %v2252, %v1448
    %v2977 = vadd.f32 %v2973, %v2975
    %v2978 = vadd.f32 %v2974, %v2976
    %v2979 = vmul.f32 %v2253, %v1453
    %v2980 = vmul.f32 %v2254, %v1453
    %v2981 = vadd.f32 %v2977, %v2979
    %v2982 = vadd.f32 %v2978, %v2980
    %v2983 = vadd.f32 %v2981, %v1458
    %v2984 = vadd.f32 %v2982, %v1458
    %v2985 = vmul.f32 %v2983, 0.01
    %v2986 = vmul.f32 %v2984, 0.01
    %v2987 = vmax.f32 %v2983, %v2985
    %v2988 = vmax.f32 %v2984, %v2986
    %v2989 = vperm.slane %v2257, 7
    %v2990 = vperm.slane %v2258, 7
    %v2991 = vmul.f32 %v2987, %v2989
    %v2992 = vmul.f32 %v2988, %v2990
    %v2993 = vadd.f32 %v2947, %v2991
    %v2994 = vadd.f32 %v2948, %v2992
    %v2995 = vadd.f32 %v2993, %v2994
    %2996 = vadd.xlane.f32.xlu0 %v2995
    %v2997 = vpop.xlane.xlu0 %2996
    %v2998 = vadd.f32 %v2236, %v2997
    %v2999 = vld [vmem:[%s536 + $0x30] sm:$0xff]
    %v3000 = vld [vmem:[%s540 + $0x30] sm:$0xff]
    %v3001 = vld [vmem:[%s544 + $0x30] sm:$0xff]
    %v3002 = vld [vmem:[%s548 + $0x30] sm:$0xff]
    %v3003 = vld [vmem:[%s552 + $0x30] sm:$0xff]
    %v3004 = vld [vmem:[%s556 + $0x30] sm:$0xff]
    %v3005 = vld [vmem:[%s560 + $0x30] sm:$0xff]
    %v3006 = vld [vmem:[%s564 + $0x30] sm:$0xff]
    %v3007 = vld [vmem:[%s568 + $0x30] sm:$0xff]
    %v3008 = vld [vmem:[%s1 + $0x30] sm:$0xff]
    %v3009 = vld [vmem:[%s1 + $0x68] sm:$0xff]
    %v3010 = vmul.f32 %v2999, %v575
    %v3011 = vmul.f32 %v3000, %v578
    %v3012 = vadd.f32 %v3010, %v3011
    %v3013 = vmul.f32 %v3001, %v583
    %v3014 = vadd.f32 %v3012, %v3013
    %v3015 = vmul.f32 %v3002, %v588
    %v3016 = vadd.f32 %v3014, %v3015
    %v3017 = vmul.f32 %v3003, %v593
    %v3018 = vadd.f32 %v3016, %v3017
    %v3019 = vmul.f32 %v3004, %v598
    %v3020 = vadd.f32 %v3018, %v3019
    %v3021 = vmul.f32 %v3005, %v603
    %v3022 = vadd.f32 %v3020, %v3021
    %v3023 = vmul.f32 %v3006, %v608
    %v3024 = vadd.f32 %v3022, %v3023
    %v3025 = vmul.f32 %v3007, %v613
    %v3026 = vadd.f32 %v3024, %v3025
    %v3027 = vadd.f32 %v3026, %v618
    %v3028 = vmul.f32 %v3027, 0.01
    %v3029 = vmax.f32 %v3027, %v3028
    %v3030 = vperm.slane %v3008, 0
    %v3031 = vmul.f32 %v3029, %v3030
    %v3032 = vadd.f32 %v3031, 0.0
    %v3033 = vmul.f32 %v2999, %v631
    %v3034 = vmul.f32 %v3000, %v634
    %v3035 = vadd.f32 %v3033, %v3034
    %v3036 = vmul.f32 %v3001, %v639
    %v3037 = vadd.f32 %v3035, %v3036
    %v3038 = vmul.f32 %v3002, %v644
    %v3039 = vadd.f32 %v3037, %v3038
    %v3040 = vmul.f32 %v3003, %v649
    %v3041 = vadd.f32 %v3039, %v3040
    %v3042 = vmul.f32 %v3004, %v654
    %v3043 = vadd.f32 %v3041, %v3042
    %v3044 = vmul.f32 %v3005, %v659
    %v3045 = vadd.f32 %v3043, %v3044
    %v3046 = vmul.f32 %v3006, %v664
    %v3047 = vadd.f32 %v3045, %v3046
    %v3048 = vmul.f32 %v3007, %v669
    %v3049 = vadd.f32 %v3047, %v3048
    %v3050 = vadd.f32 %v3049, %v674
    %v3051 = vmul.f32 %v3050, 0.01
    %v3052 = vmax.f32 %v3050, %v3051
    %v3053 = vperm.slane %v3008, 1
    %v3054 = vmul.f32 %v3052, %v3053
    %v3055 = vadd.f32 %v3032, %v3054
    %v3056 = vmul.f32 %v2999, %v687
    %v3057 = vmul.f32 %v3000, %v690
    %v3058 = vadd.f32 %v3056, %v3057
    %v3059 = vmul.f32 %v3001, %v695
    %v3060 = vadd.f32 %v3058, %v3059
    %v3061 = vmul.f32 %v3002, %v700
    %v3062 = vadd.f32 %v3060, %v3061
    %v3063 = vmul.f32 %v3003, %v705
    %v3064 = vadd.f32 %v3062, %v3063
    %v3065 = vmul.f32 %v3004, %v710
    %v3066 = vadd.f32 %v3064, %v3065
    %v3067 = vmul.f32 %v3005, %v715
    %v3068 = vadd.f32 %v3066, %v3067
    %v3069 = vmul.f32 %v3006, %v720
    %v3070 = vadd.f32 %v3068, %v3069
    %v3071 = vmul.f32 %v3007, %v725
    %v3072 = vadd.f32 %v3070, %v3071
    %v3073 = vadd.f32 %v3072, %v730
    %v3074 = vmul.f32 %v3073, 0.01
    %v3075 = vmax.f32 %v3073, %v3074
    %v3076 = vperm.slane %v3008, 2
    %v3077 = vmul.f32 %v3075, %v3076
    %v3078 = vadd.f32 %v3055, %v3077
    %v3079 = vmul.f32 %v2999, %v743
    %v3080 = vmul.f32 %v3000, %v746
    %v3081 = vadd.f32 %v3079, %v3080
    %v3082 = vmul.f32 %v3001, %v751
    %v3083 = vadd.f32 %v3081, %v3082
    %v3084 = vmul.f32 %v3002, %v756
    %v3085 = vadd.f32 %v3083, %v3084
    %v3086 = vmul.f32 %v3003, %v761
    %v3087 = vadd.f32 %v3085, %v3086
    %v3088 = vmul.f32 %v3004, %v766
    %v3089 = vadd.f32 %v3087, %v3088
    %v3090 = vmul.f32 %v3005, %v771
    %v3091 = vadd.f32 %v3089, %v3090
    %v3092 = vmul.f32 %v3006, %v776
    %v3093 = vadd.f32 %v3091, %v3092
    %v3094 = vmul.f32 %v3007, %v781
    %v3095 = vadd.f32 %v3093, %v3094
    %v3096 = vadd.f32 %v3095, %v786
    %v3097 = vmul.f32 %v3096, 0.01
    %v3098 = vmax.f32 %v3096, %v3097
    %v3099 = vperm.slane %v3008, 3
    %v3100 = vmul.f32 %v3098, %v3099
    %v3101 = vadd.f32 %v3078, %v3100
    %v3102 = vmul.f32 %v2999, %v799
    %v3103 = vmul.f32 %v3000, %v802
    %v3104 = vadd.f32 %v3102, %v3103
    %v3105 = vmul.f32 %v3001, %v807
    %v3106 = vadd.f32 %v3104, %v3105
    %v3107 = vmul.f32 %v3002, %v812
    %v3108 = vadd.f32 %v3106, %v3107
    %v3109 = vmul.f32 %v3003, %v817
    %v3110 = vadd.f32 %v3108, %v3109
    %v3111 = vmul.f32 %v3004, %v822
    %v3112 = vadd.f32 %v3110, %v3111
    %v3113 = vmul.f32 %v3005, %v827
    %v3114 = vadd.f32 %v3112, %v3113
    %v3115 = vmul.f32 %v3006, %v832
    %v3116 = vadd.f32 %v3114, %v3115
    %v3117 = vmul.f32 %v3007, %v837
    %v3118 = vadd.f32 %v3116, %v3117
    %v3119 = vadd.f32 %v3118, %v842
    %v3120 = vmul.f32 %v3119, 0.01
    %v3121 = vmax.f32 %v3119, %v3120
    %v3122 = vperm.slane %v3008, 4
    %v3123 = vmul.f32 %v3121, %v3122
    %v3124 = vadd.f32 %v3101, %v3123
    %v3125 = vmul.f32 %v2999, %v855
    %v3126 = vmul.f32 %v3000, %v858
    %v3127 = vadd.f32 %v3125, %v3126
    %v3128 = vmul.f32 %v3001, %v863
    %v3129 = vadd.f32 %v3127, %v3128
    %v3130 = vmul.f32 %v3002, %v868
    %v3131 = vadd.f32 %v3129, %v3130
    %v3132 = vmul.f32 %v3003, %v873
    %v3133 = vadd.f32 %v3131, %v3132
    %v3134 = vmul.f32 %v3004, %v878
    %v3135 = vadd.f32 %v3133, %v3134
    %v3136 = vmul.f32 %v3005, %v883
    %v3137 = vadd.f32 %v3135, %v3136
    %v3138 = vmul.f32 %v3006, %v888
    %v3139 = vadd.f32 %v3137, %v3138
    %v3140 = vmul.f32 %v3007, %v893
    %v3141 = vadd.f32 %v3139, %v3140
    %v3142 = vadd.f32 %v3141, %v898
    %v3143 = vmul.f32 %v3142, 0.01
    %v3144 = vmax.f32 %v3142, %v3143
    %v3145 = vperm.slane %v3008, 5
    %v3146 = vmul.f32 %v3144, %v3145
    %v3147 = vadd.f32 %v3124, %v3146
    %v3148 = vmul.f32 %v2999, %v911
    %v3149 = vmul.f32 %v3000, %v914
    %v3150 = vadd.f32 %v3148, %v3149
    %v3151 = vmul.f32 %v3001, %v919
    %v3152 = vadd.f32 %v3150, %v3151
    %v3153 = vmul.f32 %v3002, %v924
    %v3154 = vadd.f32 %v3152, %v3153
    %v3155 = vmul.f32 %v3003, %v929
    %v3156 = vadd.f32 %v3154, %v3155
    %v3157 = vmul.f32 %v3004, %v934
    %v3158 = vadd.f32 %v3156, %v3157
    %v3159 = vmul.f32 %v3005, %v939
    %v3160 = vadd.f32 %v3158, %v3159
    %v3161 = vmul.f32 %v3006, %v944
    %v3162 = vadd.f32 %v3160, %v3161
    %v3163 = vmul.f32 %v3007, %v949
    %v3164 = vadd.f32 %v3162, %v3163
    %v3165 = vadd.f32 %v3164, %v954
    %v3166 = vmul.f32 %v3165, 0.01
    %v3167 = vmax.f32 %v3165, %v3166
    %v3168 = vperm.slane %v3008, 6
    %v3169 = vmul.f32 %v3167, %v3168
    %v3170 = vadd.f32 %v3147, %v3169
    %v3171 = vmul.f32 %v2999, %v967
    %v3172 = vmul.f32 %v3000, %v970
    %v3173 = vadd.f32 %v3171, %v3172
    %v3174 = vmul.f32 %v3001, %v975
    %v3175 = vadd.f32 %v3173, %v3174
    %v3176 = vmul.f32 %v3002, %v980
    %v3177 = vadd.f32 %v3175, %v3176
    %v3178 = vmul.f32 %v3003, %v985
    %v3179 = vadd.f32 %v3177, %v3178
    %v3180 = vmul.f32 %v3004, %v990
    %v3181 = vadd.f32 %v3179, %v3180
    %v3182 = vmul.f32 %v3005, %v995
    %v3183 = vadd.f32 %v3181, %v3182
    %v3184 = vmul.f32 %v3006, %v1000
    %v3185 = vadd.f32 %v3183, %v3184
    %v3186 = vmul.f32 %v3007, %v1005
    %v3187 = vadd.f32 %v3185, %v3186
    %v3188 = vadd.f32 %v3187, %v1010
    %v3189 = vmul.f32 %v3188, 0.01
    %v3190 = vmax.f32 %v3188, %v3189
    %v3191 = vperm.slane %v3008, 7
    %v3192 = vmul.f32 %v3190, %v3191
    %v3193 = vadd.f32 %v3170, %v3192
    %v3194 = vmul.f32 %v2999, %v1023
    %v3195 = vmul.f32 %v3000, %v1026
    %v3196 = vadd.f32 %v3194, %v3195
    %v3197 = vmul.f32 %v3001, %v1031
    %v3198 = vadd.f32 %v3196, %v3197
    %v3199 = vmul.f32 %v3002, %v1036
    %v3200 = vadd.f32 %v3198, %v3199
    %v3201 = vmul.f32 %v3003, %v1041
    %v3202 = vadd.f32 %v3200, %v3201
    %v3203 = vmul.f32 %v3004, %v1046
    %v3204 = vadd.f32 %v3202, %v3203
    %v3205 = vmul.f32 %v3005, %v1051
    %v3206 = vadd.f32 %v3204, %v3205
    %v3207 = vmul.f32 %v3006, %v1056
    %v3208 = vadd.f32 %v3206, %v3207
    %v3209 = vmul.f32 %v3007, %v1061
    %v3210 = vadd.f32 %v3208, %v3209
    %v3211 = vadd.f32 %v3210, %v1066
    %v3212 = vmul.f32 %v3211, 0.01
    %v3213 = vmax.f32 %v3211, %v3212
    %v3214 = vperm.slane %v3009, 0
    %v3215 = vmul.f32 %v3213, %v3214
    %v3216 = vadd.f32 %v3193, %v3215
    %v3217 = vmul.f32 %v2999, %v1079
    %v3218 = vmul.f32 %v3000, %v1082
    %v3219 = vadd.f32 %v3217, %v3218
    %v3220 = vmul.f32 %v3001, %v1087
    %v3221 = vadd.f32 %v3219, %v3220
    %v3222 = vmul.f32 %v3002, %v1092
    %v3223 = vadd.f32 %v3221, %v3222
    %v3224 = vmul.f32 %v3003, %v1097
    %v3225 = vadd.f32 %v3223, %v3224
    %v3226 = vmul.f32 %v3004, %v1102
    %v3227 = vadd.f32 %v3225, %v3226
    %v3228 = vmul.f32 %v3005, %v1107
    %v3229 = vadd.f32 %v3227, %v3228
    %v3230 = vmul.f32 %v3006, %v1112
    %v3231 = vadd.f32 %v3229, %v3230
    %v3232 = vmul.f32 %v3007, %v1117
    %v3233 = vadd.f32 %v3231, %v3232
    %v3234 = vadd.f32 %v3233, %v1122
    %v3235 = vmul.f32 %v3234, 0.01
    %v3236 = vmax.f32 %v3234, %v3235
    %v3237 = vperm.slane %v3009, 1
    %v3238 = vmul.f32 %v3236, %v3237
    %v3239 = vadd.f32 %v3216, %v3238
    %v3240 = vmul.f32 %v2999, %v1135
    %v3241 = vmul.f32 %v3000, %v1138
    %v3242 = vadd.f32 %v3240, %v3241
    %v3243 = vmul.f32 %v3001, %v1143
    %v3244 = vadd.f32 %v3242, %v3243
    %v3245 = vmul.f32 %v3002, %v1148
    %v3246 = vadd.f32 %v3244, %v3245
    %v3247 = vmul.f32 %v3003, %v1153
    %v3248 = vadd.f32 %v3246, %v3247
    %v3249 = vmul.f32 %v3004, %v1158
    %v3250 = vadd.f32 %v3248, %v3249
    %v3251 = vmul.f32 %v3005, %v1163
    %v3252 = vadd.f32 %v3250, %v3251
    %v3253 = vmul.f32 %v3006, %v1168
    %v3254 = vadd.f32 %v3252, %v3253
    %v3255 = vmul.f32 %v3007, %v1173
    %v3256 = vadd.f32 %v3254, %v3255
    %v3257 = vadd.f32 %v3256, %v1178
    %v3258 = vmul.f32 %v3257, 0.01
    %v3259 = vmax.f32 %v3257, %v3258
    %v3260 = vperm.slane %v3009, 2
    %v3261 = vmul.f32 %v3259, %v3260
    %v3262 = vadd.f32 %v3239, %v3261
    %v3263 = vmul.f32 %v2999, %v1191
    %v3264 = vmul.f32 %v3000, %v1194
    %v3265 = vadd.f32 %v3263, %v3264
    %v3266 = vmul.f32 %v3001, %v1199
    %v3267 = vadd.f32 %v3265, %v3266
    %v3268 = vmul.f32 %v3002, %v1204
    %v3269 = vadd.f32 %v3267, %v3268
    %v3270 = vmul.f32 %v3003, %v1209
    %v3271 = vadd.f32 %v3269, %v3270
    %v3272 = vmul.f32 %v3004, %v1214
    %v3273 = vadd.f32 %v3271, %v3272
    %v3274 = vmul.f32 %v3005, %v1219
    %v3275 = vadd.f32 %v3273, %v3274
    %v3276 = vmul.f32 %v3006, %v1224
    %v3277 = vadd.f32 %v3275, %v3276
    %v3278 = vmul.f32 %v3007, %v1229
    %v3279 = vadd.f32 %v3277, %v3278
    %v3280 = vadd.f32 %v3279, %v1234
    %v3281 = vmul.f32 %v3280, 0.01
    %v3282 = vmax.f32 %v3280, %v3281
    %v3283 = vperm.slane %v3009, 3
    %v3284 = vmul.f32 %v3282, %v3283
    %v3285 = vadd.f32 %v3262, %v3284
    %v3286 = vmul.f32 %v2999, %v1247
    %v3287 = vmul.f32 %v3000, %v1250
    %v3288 = vadd.f32 %v3286, %v3287
    %v3289 = vmul.f32 %v3001, %v1255
    %v3290 = vadd.f32 %v3288, %v3289
    %v3291 = vmul.f32 %v3002, %v1260
    %v3292 = vadd.f32 %v3290, %v3291
    %v3293 = vmul.f32 %v3003, %v1265
    %v3294 = vadd.f32 %v3292, %v3293
    %v3295 = vmul.f32 %v3004, %v1270
    %v3296 = vadd.f32 %v3294, %v3295
    %v3297 = vmul.f32 %v3005, %v1275
    %v3298 = vadd.f32 %v3296, %v3297
    %v3299 = vmul.f32 %v3006, %v1280
    %v3300 = vadd.f32 %v3298, %v3299
    %v3301 = vmul.f32 %v3007, %v1285
    %v3302 = vadd.f32 %v3300, %v3301
    %v3303 = vadd.f32 %v3302, %v1290
    %v3304 = vmul.f32 %v3303, 0.01
    %v3305 = vmax.f32 %v3303, %v3304
    %v3306 = vperm.slane %v3009, 4
    %v3307 = vmul.f32 %v3305, %v3306
    %v3308 = vadd.f32 %v3285, %v3307
    %v3309 = vmul.f32 %v2999, %v1303
    %v3310 = vmul.f32 %v3000, %v1306
    %v3311 = vadd.f32 %v3309, %v3310
    %v3312 = vmul.f32 %v3001, %v1311
    %v3313 = vadd.f32 %v3311, %v3312
    %v3314 = vmul.f32 %v3002, %v1316
    %v3315 = vadd.f32 %v3313, %v3314
    %v3316 = vmul.f32 %v3003, %v1321
    %v3317 = vadd.f32 %v3315, %v3316
    %v3318 = vmul.f32 %v3004, %v1326
    %v3319 = vadd.f32 %v3317, %v3318
    %v3320 = vmul.f32 %v3005, %v1331
    %v3321 = vadd.f32 %v3319, %v3320
    %v3322 = vmul.f32 %v3006, %v1336
    %v3323 = vadd.f32 %v3321, %v3322
    %v3324 = vmul.f32 %v3007, %v1341
    %v3325 = vadd.f32 %v3323, %v3324
    %v3326 = vadd.f32 %v3325, %v1346
    %v3327 = vmul.f32 %v3326, 0.01
    %v3328 = vmax.f32 %v3326, %v3327
    %v3329 = vperm.slane %v3009, 5
    %v3330 = vmul.f32 %v3328, %v3329
    %v3331 = vadd.f32 %v3308, %v3330
    %v3332 = vmul.f32 %v2999, %v1359
    %v3333 = vmul.f32 %v3000, %v1362
    %v3334 = vadd.f32 %v3332, %v3333
    %v3335 = vmul.f32 %v3001, %v1367
    %v3336 = vadd.f32 %v3334, %v3335
    %v3337 = vmul.f32 %v3002, %v1372
    %v3338 = vadd.f32 %v3336, %v3337
    %v3339 = vmul.f32 %v3003, %v1377
    %v3340 = vadd.f32 %v3338, %v3339
    %v3341 = vmul.f32 %v3004, %v1382
    %v3342 = vadd.f32 %v3340, %v3341
    %v3343 = vmul.f32 %v3005, %v1387
    %v3344 = vadd.f32 %v3342, %v3343
    %v3345 = vmul.f32 %v3006, %v1392
    %v3346 = vadd.f32 %v3344, %v3345
    %v3347 = vmul.f32 %v3007, %v1397
    %v3348 = vadd.f32 %v3346, %v3347
    %v3349 = vadd.f32 %v3348, %v1402
    %v3350 = vmul.f32 %v3349, 0.01
    %v3351 = vmax.f32 %v3349, %v3350
    %v3352 = vperm.slane %v3009, 6
    %v3353 = vmul.f32 %v3351, %v3352
    %v3354 = vadd.f32 %v3331, %v3353
    %v3355 = vmul.f32 %v2999, %v1415
    %v3356 = vmul.f32 %v3000, %v1418
    %v3357 = vadd.f32 %v3355, %v3356
    %v3358 = vmul.f32 %v3001, %v1423
    %v3359 = vadd.f32 %v3357, %v3358
    %v3360 = vmul.f32 %v3002, %v1428
    %v3361 = vadd.f32 %v3359, %v3360
    %v3362 = vmul.f32 %v3003, %v1433
    %v3363 = vadd.f32 %v3361, %v3362
    %v3364 = vmul.f32 %v3004, %v1438
    %v3365 = vadd.f32 %v3363, %v3364
    %v3366 = vmul.f32 %v3005, %v1443
    %v3367 = vadd.f32 %v3365, %v3366
    %v3368 = vmul.f32 %v3006, %v1448
    %v3369 = vadd.f32 %v3367, %v3368
    %v3370 = vmul.f32 %v3007, %v1453
    %v3371 = vadd.f32 %v3369, %v3370
    %v3372 = vadd.f32 %v3371, %v1458
    %v3373 = vmul.f32 %v3372, 0.01
    %v3374 = vmax.f32 %v3372, %v3373
    %v3375 = vperm.slane %v3009, 7
    %v3376 = vmul.f32 %v3374, %v3375
    %v3377 = vadd.f32 %v3354, %v3376
    %3378 = vadd.xlane.f32.xlu0 %v3377
    %v3379 = vpop.xlane.xlu0 %3378
    %v3380 = vadd.f32 %v2998, %v3379
    %v3381 = vstv %s533
    %v3382 = vadd.f32 %v3380, %v3381
    %vm3383 = vcmask 7168
    %3384 = vst.msk [vmem:[%s5] sm:$0xff] %vm3383, %v3382
    // Predicated region
    $region30: #{discriminator_forward.1} parent=1 // pred_check
      _
    $region31: #{discriminator_forward.1} parent=1 // pred_check_branch
      %3386 = sbr.rel (0) target = $region33
    $region32: #{discriminator_forward.1} parent=1 // pred_region
      _
    $region33: #{discriminator_forward.1} parent=1 // pred_fallthru
      _
    // Predicated region
    $region34: #{discriminator_forward.1} parent=1 // pred_check
      _
    $region35: #{discriminator_forward.1} parent=1 // pred_check_branch
      %3388 = sbr.rel (0) target = $region37
    $region36: #{discriminator_forward.1} parent=1 // pred_region
      _
    $region37: #{discriminator_forward.1} parent=1 // pred_fallthru
      _
    %3389 = vsyncpa [#allocation13], 1
    %3390 = vsyncpa [#allocation15], 1

</llo_original>
